<compile_context>
chip_gen: v7x
topology: tpu7x:2x2x1
jax: 0.10.0
libtpu: 0.0.40
codegen_flags: <defaults>
</compile_context>

<pallas_src>
import functools

import jax
import jax.numpy as jnp
from jax.experimental import pallas as pl
from jax.experimental.pallas import tpu as pltpu


# ---------------------------------------------------------------------------
# Model configuration (structure == deep_vo; dimensions scaled down /8).
# Original: channels 64,128,256,256,512,512,512,512,1024; hidden=1000;
#           flat = Linear(1024*6*20, 1000) which forces 6 x 384 x 1280 frames.
# ---------------------------------------------------------------------------
CONV_CFG = [
    # name,     cin, cout, k, stride, pad, relu_after_bn
    ("conv1",     6,    8, 7, 2, 3, True),
    ("conv2",     8,   16, 5, 2, 2, True),
    ("conv3",    16,   32, 5, 2, 2, True),
    ("conv3_1",  32,   32, 3, 1, 1, True),
    ("conv4",    32,   64, 3, 2, 1, True),
    ("conv4_1",  64,   64, 3, 1, 1, True),
    ("conv5",    64,   64, 3, 2, 1, True),
    ("conv5_1",  64,   64, 3, 1, 1, True),
    ("conv6",    64,  128, 3, 2, 1, False),   # no ReLU after the last conv's BN
]
IMG_H, IMG_W = 64, 64                 # total conv stride = 64 -> 1x1 spatial
HIDDEN = 128                          # LSTM / flat hidden (128-aligned)
HEAD_HIDDEN = 64                      # trans/rot head hidden (2*64 = 128 fused)
FLAT_IN = CONV_CFG[-1][2] * (IMG_H // 64) * (IMG_W // 64)


def _round_up(x, m):
    return (x + m - 1) // m * m


# ---------------------------------------------------------------------------
# Fused GEMM + scale/shift (+ReLU) Pallas kernel  (convs, flat, LSTM in-proj)
# ---------------------------------------------------------------------------
def _matmul_bn_relu_kernel(a_ref, b_ref, s_ref, t_ref, o_ref, acc_ref, *, relu):
    @pl.when(pl.program_id(2) == 0)
    def _():
        acc_ref[...] = jnp.zeros_like(acc_ref)

    acc_ref[...] += jnp.dot(a_ref[...], b_ref[...],
                            preferred_element_type=jnp.float32)

    @pl.when(pl.program_id(2) == pl.num_programs(2) - 1)
    def _():
        r = acc_ref[...] * s_ref[...] + t_ref[...]
        if relu:
            r = jnp.maximum(r, 0.0)
        o_ref[...] = r.astype(o_ref.dtype)


def _pick_tiles(M, Kp, Np):
    # bf16 native tile is (16,128): round tm to 16 (no half-populated sublane pairs);
    # conv GEMMs (large M) use tm=256. tk grows to 2048 so K reductions take few
    # grid steps; tn is as lane-dense as Np allows so small layers are a single step.
    tm = min(_round_up(max(M, 1), 16), 256)
    if Np % 512 == 0 and Np >= 512:
        tn = 512
    elif Np % 256 == 0 and Np >= 256:
        tn = 256
    else:
        tn = 128
    if Kp <= 2048:
        tk = Kp
    elif Kp % 2048 == 0:
        tk = 2048
    elif Kp % 1024 == 0:
        tk = 1024
    elif Kp % 512 == 0:
        tk = 512
    elif Kp % 256 == 0:
        tk = 256
    else:
        tk = 128
    return tm, tn, tk


def pallas_matmul(a, w_p, s_p, t_p, *, relu=False, out_dtype=jnp.bfloat16):
    """Returns the padded (Mp, Np) result of relu?((a @ w_p) * s_p + t_p).

    a:   (M, K) activations (bf16 preferred; cast is a no-op if already bf16).
    w_p: (Kp, Np) bf16 weight, pre-padded once (Kp, Np multiples of 128).
    s_p/t_p: (1, Np) f32 per-column scale / shift (BN fold or bias).
    Caller slices [:M, :n_out] only when it actually differs.
    """
    M, K = a.shape
    Kp, Np = w_p.shape
    tm, tn, tk = _pick_tiles(M, Kp, Np)
    Mp = _round_up(M, tm)

    a_p = a.astype(jnp.bfloat16)
    if Kp != K:
        a_p = jnp.pad(a_p, ((0, 0), (0, Kp - K)))
    if Mp != M:
        a_p = jnp.pad(a_p, ((0, Mp - M), (0, 0)))

    grid = (Mp // tm, Np // tn, Kp // tk)
    return pl.pallas_call(
        functools.partial(_matmul_bn_relu_kernel, relu=relu),
        out_shape=jax.ShapeDtypeStruct((Mp, Np), out_dtype),
        grid_spec=pltpu.PrefetchScalarGridSpec(
            num_scalar_prefetch=0,
            grid=grid,
            in_specs=[
                pl.BlockSpec((tm, tk), lambda i, j, k: (i, k)),
                pl.BlockSpec((tk, tn), lambda i, j, k: (k, j)),
                pl.BlockSpec((1, tn), lambda i, j, k: (0, j)),
                pl.BlockSpec((1, tn), lambda i, j, k: (0, j)),
            ],
            out_specs=pl.BlockSpec((tm, tn), lambda i, j, k: (i, j)),
            scratch_shapes=[pltpu.VMEM((tm, tn), jnp.float32)],
        ),
        compiler_params=pltpu.CompilerParams(
            dimension_semantics=("parallel", "parallel", "arbitrary")),
    )(a_p, w_p, s_p, t_p)


# ---------------------------------------------------------------------------
# LSTM recurrence kernel: input projection is precomputed outside; only
# h @ W_hh + gates_in and the cell nonlinearity run per timestep. W_hh stays
# resident in VMEM (constant index_map); h/c carried in VMEM scratch.
# ---------------------------------------------------------------------------
def _lstm_recur_kernel(gin_ref, whh_ref, out_ref, h_ref, c_ref, *, hidden):
    @pl.when(pl.program_id(0) == 0)
    def _():
        h_ref[...] = jnp.zeros_like(h_ref)
        c_ref[...] = jnp.zeros_like(c_ref)

    gates = gin_ref[0] + jnp.dot(h_ref[...].astype(jnp.bfloat16), whh_ref[...],
                                 preferred_element_type=jnp.float32)   # (B, 4H) f32
    i = jax.nn.sigmoid(gates[:, 0 * hidden:1 * hidden])
    f = jax.nn.sigmoid(gates[:, 1 * hidden:2 * hidden])
    g = jnp.tanh(gates[:, 2 * hidden:3 * hidden])
    o = jax.nn.sigmoid(gates[:, 3 * hidden:4 * hidden])
    c_new = f * c_ref[...] + i * g
    h_new = o * jnp.tanh(c_new)
    c_ref[...] = c_new
    h_ref[...] = h_new
    out_ref[0] = h_new.astype(out_ref.dtype)


def lstm_recurrence(gates_in, w_hh, hidden):
    """gates_in: (T, B, 4H) f32 (x @ W_ih + b already folded in) -> (T, B, H) bf16."""
    T, B, G = gates_in.shape
    return pl.pallas_call(
        functools.partial(_lstm_recur_kernel, hidden=hidden),
        out_shape=jax.ShapeDtypeStruct((T, B, hidden), jnp.bfloat16),
        grid_spec=pltpu.PrefetchScalarGridSpec(
            num_scalar_prefetch=0,
            grid=(T,),
            in_specs=[
                pl.BlockSpec((1, B, G), lambda t: (t, 0, 0)),
                pl.BlockSpec((hidden, G), lambda t: (0, 0)),   # resident W_hh
            ],
            out_specs=pl.BlockSpec((1, B, hidden), lambda t: (t, 0, 0)),
            scratch_shapes=[pltpu.VMEM((B, hidden), jnp.float32),   # h carry
                            pltpu.VMEM((B, hidden), jnp.float32)],  # c carry
        ),
        compiler_params=pltpu.CompilerParams(
            dimension_semantics=("arbitrary",)),
    )(gates_in, w_hh)


# ---------------------------------------------------------------------------
# Fused pose heads: [trans | rot] Linear -> ReLU -> block-diag Linear, one kernel.
# ---------------------------------------------------------------------------
def _pose_head_kernel(x_ref, w1_ref, b1_ref, w2_ref, b2_ref, o_ref):
    h1 = jnp.dot(x_ref[...], w1_ref[...],
                 preferred_element_type=jnp.float32) + b1_ref[...]
    h1 = jnp.maximum(h1, 0.0)
    out = jnp.dot(h1.astype(jnp.bfloat16), w2_ref[...],
                  preferred_element_type=jnp.float32) + b2_ref[...]
    o_ref[...] = out


def pose_heads(x_last, head):
    """x_last: (B, HIDDEN) bf16 -> (B, 6) f32 == cat(trans(x), rot(x))."""
    B, H = x_last.shape
    Mp = _round_up(B, 16)
    x_p = x_last.astype(jnp.bfloat16)
    if Mp != B:
        x_p = jnp.pad(x_p, ((0, Mp - B), (0, 0)))
    w1, b1, w2, b2 = head["w1"], head["b1"], head["w2"], head["b2"]
    N1, N2 = w1.shape[1], w2.shape[1]
    out = pl.pallas_call(
        _pose_head_kernel,
        out_shape=jax.ShapeDtypeStruct((Mp, N2), jnp.float32),
        grid_spec=pltpu.PrefetchScalarGridSpec(
            num_scalar_prefetch=0,
            grid=(1,),
            in_specs=[
                pl.BlockSpec((Mp, H), lambda i: (0, 0)),
                pl.BlockSpec((H, N1), lambda i: (0, 0)),
                pl.BlockSpec((1, N1), lambda i: (0, 0)),
                pl.BlockSpec((N1, N2), lambda i: (0, 0)),
                pl.BlockSpec((1, N2), lambda i: (0, 0)),
            ],
            out_specs=pl.BlockSpec((Mp, N2), lambda i: (0, 0)),
        ),
    )(x_p, w1, b1, w2, b2)
    return out[:B, :6]


# ---------------------------------------------------------------------------
# Conv lowering glue: im2col in plain JAX, built directly in the K-padded
# bf16 GEMM layout (zero columns concatenated in, no separate pad pass).
# ---------------------------------------------------------------------------
def _im2col_padded(x, kh, kw, stride, pad, kp):
    B, H, W, C = x.shape
    xp = jnp.pad(x, ((0, 0), (pad, pad), (pad, pad), (0, 0)))
    Ho = (H + 2 * pad - kh) // stride + 1
    Wo = (W + 2 * pad - kw) // stride + 1
    cols = []
    for i in range(kh):
        for j in range(kw):
            cols.append(xp[:, i:i + stride * Ho:stride, j:j + stride * Wo:stride, :])
    k_raw = kh * kw * C
    if kp > k_raw:
        cols.append(jnp.zeros((B, Ho, Wo, kp - k_raw), x.dtype))
    patches = jnp.concatenate(cols, axis=-1)
    return patches.reshape(B * Ho * Wo, kp), Ho, Wo


# ---------------------------------------------------------------------------
# Parameters: raw (PyTorch-like) init + one-time prep (fold BN, pad, bf16, fuse)
# ---------------------------------------------------------------------------
def make_params(key):
    p = {}

    def nxt():
        nonlocal key
        key, sub = jax.random.split(key)
        return sub

    for name, cin, cout, k, _, _, _ in CONV_CFG:
        fan_in = cin * k * k
        p[f"{name}_w"] = jax.random.normal(nxt(), (cout, cin, k, k), jnp.float32) * (2.0 / fan_in) ** 0.5
        p[f"{name}_bn_g"] = 1.0 + 0.1 * jax.random.normal(nxt(), (cout,), jnp.float32)
        p[f"{name}_bn_b"] = 0.1 * jax.random.normal(nxt(), (cout,), jnp.float32)
        p[f"{name}_bn_m"] = 0.1 * jax.random.normal(nxt(), (cout,), jnp.float32)
        p[f"{name}_bn_v"] = 1.0 + 0.1 * jnp.abs(jax.random.normal(nxt(), (cout,), jnp.float32))

    p["flat_w"] = jax.random.normal(nxt(), (FLAT_IN, HIDDEN), jnp.float32) * (1.0 / FLAT_IN) ** 0.5
    p["flat_b"] = 0.01 * jax.random.normal(nxt(), (HIDDEN,), jnp.float32)

    for l in range(2):
        p[f"lstm_wih_{l}"] = jax.random.normal(nxt(), (HIDDEN, 4 * HIDDEN), jnp.float32) * (1.0 / HIDDEN) ** 0.5
        p[f"lstm_whh_{l}"] = jax.random.normal(nxt(), (HIDDEN, 4 * HIDDEN), jnp.float32) * (1.0 / HIDDEN) ** 0.5
        p[f"lstm_bih_{l}"] = 0.01 * jax.random.normal(nxt(), (4 * HIDDEN,), jnp.float32)
        p[f"lstm_bhh_{l}"] = 0.01 * jax.random.normal(nxt(), (4 * HIDDEN,), jnp.float32)

    for head in ("trans", "rot"):
        p[f"{head}_w1"] = jax.random.normal(nxt(), (HIDDEN, HEAD_HIDDEN), jnp.float32) * (1.0 / HIDDEN) ** 0.5
        p[f"{head}_b1"] = 0.01 * jax.random.normal(nxt(), (HEAD_HIDDEN,), jnp.float32)
        p[f"{head}_w2"] = jax.random.normal(nxt(), (HEAD_HIDDEN, 3), jnp.float32) * (1.0 / HEAD_HIDDEN) ** 0.5
        p[f"{head}_b2"] = 0.01 * jax.random.normal(nxt(), (3,), jnp.float32)
    return p


def _prep_gemm(wm, scale, shift):
    """Pad weight to 128-aligned bf16 once; pack per-column scale/shift for epilogue."""
    K, N = wm.shape
    Kp, Np = _round_up(K, 128), _round_up(N, 128)
    w_p = jnp.pad(wm, ((0, Kp - K), (0, Np - N))).astype(jnp.bfloat16)
    s_p = jnp.pad(scale.astype(jnp.float32), (0, Np - N), constant_values=1.0).reshape(1, Np)
    t_p = jnp.pad(shift.astype(jnp.float32), (0, Np - N)).reshape(1, Np)
    return {"w": w_p, "s": s_p, "t": t_p, "n_out": N}


def prepare_params(raw):
    """One-time weight prep: BN fold, (kh,kw,Cin,O) GEMM layout, padding, bf16,
    fused LSTM biases, fused pose-head weights. Done once outside the jitted forward."""
    prep = {}
    for name, cin, cout, k, _, _, _ in CONV_CFG:
        wm = jnp.transpose(raw[f"{name}_w"], (2, 3, 1, 0)).reshape(k * k * cin, cout)
        scale = raw[f"{name}_bn_g"] / jnp.sqrt(raw[f"{name}_bn_v"] + 1e-5)
        shift = raw[f"{name}_bn_b"] - raw[f"{name}_bn_m"] * scale
        prep[name] = _prep_gemm(wm, scale, shift)

    prep["flat"] = _prep_gemm(raw["flat_w"], jnp.ones((HIDDEN,), jnp.float32), raw["flat_b"])

    for l in range(2):
        prep[f"lstm{l}"] = {
            "w_ih": raw[f"lstm_wih_{l}"].astype(jnp.bfloat16),              # (H, 4H)
            "w_hh": raw[f"lstm_whh_{l}"].astype(jnp.bfloat16),              # (H, 4H)
            "b": (raw[f"lstm_bih_{l}"] + raw[f"lstm_bhh_{l}"]).reshape(1, 4 * HIDDEN).astype(jnp.float32),
            "ones": jnp.ones((1, 4 * HIDDEN), jnp.float32),
        }

    # Fused pose heads: [trans | rot] layer 1, block-diagonal layer 2 (N padded to 128).
    w1 = jnp.concatenate([raw["trans_w1"], raw["rot_w1"]], axis=1)          # (H, 128)
    b1 = jnp.concatenate([raw["trans_b1"], raw["rot_b1"]])                  # (128,)
    w2 = jnp.zeros((2 * HEAD_HIDDEN, 6), jnp.float32)
    w2 = w2.at[:HEAD_HIDDEN, :3].set(raw["trans_w2"]).at[HEAD_HIDDEN:, 3:].set(raw["rot_w2"])
    b2 = jnp.concatenate([raw["trans_b2"], raw["rot_b2"]])                  # (6,)
    n2p = _round_up(6, 128)
    prep["head"] = {
        "w1": w1.astype(jnp.bfloat16),
        "b1": b1.reshape(1, 2 * HEAD_HIDDEN).astype(jnp.float32),
        "w2": jnp.pad(w2, ((0, 0), (0, n2p - 6))).astype(jnp.bfloat16),
        "b2": jnp.pad(b2, (0, n2p - 6)).reshape(1, n2p).astype(jnp.float32),
    }
    return prep


# ---------------------------------------------------------------------------
# Forward pass (semantics of deep_vo.forward)
# ---------------------------------------------------------------------------
def forward(prep, x_3d):
    B, T, C, H, W = x_3d.shape

    # --- CNN feature extractor: all T frames batched, bf16 activations throughout ---
    x = jnp.transpose(x_3d.reshape(B * T, C, H, W), (0, 2, 3, 1)).astype(jnp.bfloat16)
    for name, cin, cout, k, stride, pad, relu in CONV_CFG:
        cv = prep[name]
        a, Ho, Wo = _im2col_padded(x, k, k, stride, pad, cv["w"].shape[0])
        y = pallas_matmul(a, cv["w"], cv["s"], cv["t"], relu=relu)      # (Mp, Np) bf16
        M = B * T * Ho * Wo
        if y.shape[0] != M or y.shape[1] != cout:
            y = y[:M, :cout]
        x = y.reshape(B * T, Ho, Wo, cout)

    # torch.flatten(x, start_dim=1) on NCHW ordering, reordered t-major so the flat
    # Linear's output reshapes directly into the (T, B, H) sequence the LSTM wants.
    feat = jnp.transpose(x, (0, 3, 1, 2)).reshape(B, T, -1)
    feat = jnp.transpose(feat, (1, 0, 2)).reshape(T * B, -1)
    fl = prep["flat"]
    seq = pallas_matmul(feat, fl["w"], fl["s"], fl["t"])[:T * B, :HIDDEN]   # bf16

    # --- 2-layer LSTM, zero-initialised hidden, batch_first semantics ---
    # Input projection (x @ W_ih + b_ih + b_hh) hoisted out of the serial recurrence.
    h_seq = None
    for l in range(2):
        lyr = prep[f"lstm{l}"]
        gin = pallas_matmul(seq, lyr["w_ih"], lyr["ones"], lyr["b"],
                            out_dtype=jnp.float32)[:T * B, :4 * HIDDEN]
        gin = gin.reshape(T, B, 4 * HIDDEN)
        h_seq = lstm_recurrence(gin, lyr["w_hh"], HIDDEN)                # (T,B,H) bf16
        seq = h_seq.reshape(T * B, HIDDEN)

    x_last = h_seq[-1]                                                   # (B, HIDDEN) bf16

    # --- fused trans/rot heads: out = [trans(x) | rot(x)] in one kernel ---
    return pose_heads(x_last, prep["head"])                             # (B, 6) f32


# ---------------------------------------------------------------------------
if __name__ == "__main__":
    B, T = 2, 4
    key = jax.random.PRNGKey(0)
    pkey, xkey = jax.random.split(key)

    raw_params = make_params(pkey)
    prep_params = prepare_params(raw_params)      # one-time weight prep (no per-call pads)
    x_3d = jax.random.normal(xkey, (B, T, 6, IMG_H, IMG_W), jnp.float32)

    out = jax.jit(forward)(prep_params, x_3d)
    out = jax.block_until_ready(out)

    assert out.shape == (B, 6), out.shape
    assert bool(jnp.all(jnp.isfinite(out)))
    print("KERNEL_OK")
</pallas_src>

<mosaic_0001>
module attributes {stable_mosaic.version = 11 : i64} {
  func.func @_matmul_bn_relu_kernel(%arg0: i32, %arg1: i32, %arg2: i32, %arg3: memref<256x384xbf16, #tpu.memory_space<vmem>>, %arg4: memref<384x128xbf16, #tpu.memory_space<vmem>>, %arg5: memref<1x128xf32, #tpu.memory_space<vmem>>, %arg6: memref<1x128xf32, #tpu.memory_space<vmem>>, %arg7: memref<256x128xbf16, #tpu.memory_space<vmem>>, %arg8: memref<256x128xf32, #tpu.memory_space<vmem>>) attributes {dimension_semantics = [#tpu.dimension_semantics<parallel>, #tpu.dimension_semantics<parallel>, #tpu.dimension_semantics<arbitrary>], iteration_bounds = array<i64: 32, 1, 1>, scalar_prefetch = 0 : i64, scratch_operands = 1 : i64, tpu.core_type = #tpu.core_type<tc>, window_params = [{transform_indices = @transform_0, window_bounds = array<i64: 256, 384>}, {transform_indices = @transform_1, window_bounds = array<i64: 384, 128>}, {transform_indices = @transform_2, window_bounds = array<i64: 1, 128>}, {transform_indices = @transform_3, window_bounds = array<i64: 1, 128>}, {transform_indices = @transform_4, window_bounds = array<i64: 256, 128>}]} {
    %c0_i32 = arith.constant 0 : i32
    %0 = arith.cmpi eq, %arg2, %c0_i32 : i32
    %1 = arith.extui %0 : i1 to i32
    %c0_i32_0 = arith.constant 0 : i32
    %2 = arith.cmpi ne, %1, %c0_i32_0 : i32
    scf.if %2 {
      %cst_10 = arith.constant 0.000000e+00 : f32
      %12 = vector.broadcast %cst_10 : f32 to vector<256x128xf32>
      %c0_11 = arith.constant 0 : index
      %c0_12 = arith.constant 0 : index
      %13 = vector.load %arg8[%c0_11, %c0_12] : memref<256x128xf32, #tpu.memory_space<vmem>>, vector<256x128xf32>
      tpu.vector_store %arg8[%c0_11, %c0_12], %12 {strides = array<i32>} : memref<256x128xf32, #tpu.memory_space<vmem>>, vector<256x128xf32>,
    } else {
    }
    %c0 = arith.constant 0 : index
    %c0_1 = arith.constant 0 : index
    %3 = vector.load %arg8[%c0, %c0_1] : memref<256x128xf32, #tpu.memory_space<vmem>>, vector<256x128xf32>
    %c0_2 = arith.constant 0 : index
    %c0_3 = arith.constant 0 : index
    %4 = vector.load %arg3[%c0_2, %c0_3] : memref<256x384xbf16, #tpu.memory_space<vmem>>, vector<256x384xbf16>
    %c0_4 = arith.constant 0 : index
    %c0_5 = arith.constant 0 : index
    %5 = vector.load %arg4[%c0_4, %c0_5] : memref<384x128xbf16, #tpu.memory_space<vmem>>, vector<384x128xbf16>
    %cst = arith.constant dense<0.000000e+00> : vector<256x128xf32>
    %6 = tpu.matmul %4, %5, %cst {dimension_numbers = #tpu.dot_dimension_numbers<[1], [0], [0], [1], [0, 0, 1, 1], [], []>} : vector<256x384xbf16>, vector<384x128xbf16>, vector<256x128xf32> -> vector<256x128xf32>
    %7 = arith.addf %3, %6 : vector<256x128xf32>
    %c0_6 = arith.constant 0 : index
    %c0_7 = arith.constant 0 : index
    %8 = vector.load %arg8[%c0_6, %c0_7] : memref<256x128xf32, #tpu.memory_space<vmem>>, vector<256x128xf32>
    tpu.vector_store %arg8[%c0_6, %c0_7], %7 {strides = array<i32>} : memref<256x128xf32, #tpu.memory_space<vmem>>, vector<256x128xf32>,
    %c0_i32_8 = arith.constant 0 : i32
    %9 = arith.cmpi eq, %arg2, %c0_i32_8 : i32
    %10 = arith.extui %9 : i1 to i32
    %c0_i32_9 = arith.constant 0 : i32
    %11 = arith.cmpi ne, %10, %c0_i32_9 : i32
    scf.if %11 {
      %c0_10 = arith.constant 0 : index
      %c0_11 = arith.constant 0 : index
      %12 = vector.load %arg8[%c0_10, %c0_11] : memref<256x128xf32, #tpu.memory_space<vmem>>, vector<256x128xf32>
      %c0_12 = arith.constant 0 : index
      %c0_13 = arith.constant 0 : index
      %13 = vector.load %arg5[%c0_12, %c0_13] : memref<1x128xf32, #tpu.memory_space<vmem>>, vector<1x128xf32>
      %14 = vector.broadcast %13 : vector<1x128xf32> to vector<256x128xf32>
      %15 = arith.mulf %12, %14 : vector<256x128xf32>
      %c0_14 = arith.constant 0 : index
      %c0_15 = arith.constant 0 : index
      %16 = vector.load %arg6[%c0_14, %c0_15] : memref<1x128xf32, #tpu.memory_space<vmem>>, vector<1x128xf32>
      %17 = vector.broadcast %16 : vector<1x128xf32> to vector<256x128xf32>
      %18 = arith.addf %15, %17 : vector<256x128xf32>
      %cst_16 = arith.constant 0.000000e+00 : f32
      %19 = vector.broadcast %cst_16 : f32 to vector<256x128xf32>
      %20 = arith.maximumf %18, %19 : vector<256x128xf32>
      %21 = arith.truncf %20 : vector<256x128xf32> to vector<256x128xbf16>
      %c0_17 = arith.constant 0 : index
      %c0_18 = arith.constant 0 : index
      %22 = vector.load %arg7[%c0_17, %c0_18] : memref<256x128xbf16, #tpu.memory_space<vmem>>, vector<256x128xbf16>
      tpu.vector_store %arg7[%c0_17, %c0_18], %21 {strides = array<i32>} : memref<256x128xbf16, #tpu.memory_space<vmem>>, vector<256x128xbf16>,
    } else {
    }
    return
  }
  func.func @transform_0(%arg0: i32, %arg1: i32, %arg2: i32) -> (i32, i32) {
    %c0_i32 = arith.constant 0 : i32
    return %arg0, %arg2 : i32, i32
  }
  func.func @transform_1(%arg0: i32, %arg1: i32, %arg2: i32) -> (i32, i32) {
    %c0_i32 = arith.constant 0 : i32
    return %arg2, %arg1 : i32, i32
  }
  func.func @transform_2(%arg0: i32, %arg1: i32, %arg2: i32) -> (i32, i32) {
    %c0_i32 = arith.constant 0 : i32
    %c0_i32_0 = arith.constant 0 : i32
    return %c0_i32, %arg1 : i32, i32
  }
  func.func @transform_3(%arg0: i32, %arg1: i32, %arg2: i32) -> (i32, i32) {
    %c0_i32 = arith.constant 0 : i32
    %c0_i32_0 = arith.constant 0 : i32
    return %c0_i32, %arg1 : i32, i32
  }
  func.func @transform_4(%arg0: i32, %arg1: i32, %arg2: i32) -> (i32, i32) {
    %c0_i32 = arith.constant 0 : i32
    return %arg0, %arg1 : i32, i32
  }
}

module attributes {stable_mosaic.version = 11 : i64} {
  func.func @_matmul_bn_relu_kernel(%arg0: i32, %arg1: i32, %arg2: i32, %arg3: memref<256x256xbf16, #tpu.memory_space<vmem>>, %arg4: memref<256x128xbf16, #tpu.memory_space<vmem>>, %arg5: memref<1x128xf32, #tpu.memory_space<vmem>>, %arg6: memref<1x128xf32, #tpu.memory_space<vmem>>, %arg7: memref<256x128xbf16, #tpu.memory_space<vmem>>, %arg8: memref<256x128xf32, #tpu.memory_space<vmem>>) attributes {dimension_semantics = [#tpu.dimension_semantics<parallel>, #tpu.dimension_semantics<parallel>, #tpu.dimension_semantics<arbitrary>], iteration_bounds = array<i64: 8, 1, 1>, scalar_prefetch = 0 : i64, scratch_operands = 1 : i64, tpu.core_type = #tpu.core_type<tc>, window_params = [{transform_indices = @transform_0, window_bounds = array<i64: 256, 256>}, {transform_indices = @transform_1, window_bounds = array<i64: 256, 128>}, {transform_indices = @transform_2, window_bounds = array<i64: 1, 128>}, {transform_indices = @transform_3, window_bounds = array<i64: 1, 128>}, {transform_indices = @transform_4, window_bounds = array<i64: 256, 128>}]} {
    %c0_i32 = arith.constant 0 : i32
    %0 = arith.cmpi eq, %arg2, %c0_i32 : i32
    %1 = arith.extui %0 : i1 to i32
    %c0_i32_0 = arith.constant 0 : i32
    %2 = arith.cmpi ne, %1, %c0_i32_0 : i32
    scf.if %2 {
      %cst_10 = arith.constant 0.000000e+00 : f32
      %12 = vector.broadcast %cst_10 : f32 to vector<256x128xf32>
      %c0_11 = arith.constant 0 : index
      %c0_12 = arith.constant 0 : index
      %13 = vector.load %arg8[%c0_11, %c0_12] : memref<256x128xf32, #tpu.memory_space<vmem>>, vector<256x128xf32>
      tpu.vector_store %arg8[%c0_11, %c0_12], %12 {strides = array<i32>} : memref<256x128xf32, #tpu.memory_space<vmem>>, vector<256x128xf32>,
    } else {
    }
    %c0 = arith.constant 0 : index
    %c0_1 = arith.constant 0 : index
    %3 = vector.load %arg8[%c0, %c0_1] : memref<256x128xf32, #tpu.memory_space<vmem>>, vector<256x128xf32>
    %c0_2 = arith.constant 0 : index
    %c0_3 = arith.constant 0 : index
    %4 = vector.load %arg3[%c0_2, %c0_3] : memref<256x256xbf16, #tpu.memory_space<vmem>>, vector<256x256xbf16>
    %c0_4 = arith.constant 0 : index
    %c0_5 = arith.constant 0 : index
    %5 = vector.load %arg4[%c0_4, %c0_5] : memref<256x128xbf16, #tpu.memory_space<vmem>>, vector<256x128xbf16>
    %cst = arith.constant dense<0.000000e+00> : vector<256x128xf32>
    %6 = tpu.matmul %4, %5, %cst {dimension_numbers = #tpu.dot_dimension_numbers<[1], [0], [0], [1], [0, 0, 1, 1], [], []>} : vector<256x256xbf16>, vector<256x128xbf16>, vector<256x128xf32> -> vector<256x128xf32>
    %7 = arith.addf %3, %6 : vector<256x128xf32>
    %c0_6 = arith.constant 0 : index
    %c0_7 = arith.constant 0 : index
    %8 = vector.load %arg8[%c0_6, %c0_7] : memref<256x128xf32, #tpu.memory_space<vmem>>, vector<256x128xf32>
    tpu.vector_store %arg8[%c0_6, %c0_7], %7 {strides = array<i32>} : memref<256x128xf32, #tpu.memory_space<vmem>>, vector<256x128xf32>,
    %c0_i32_8 = arith.constant 0 : i32
    %9 = arith.cmpi eq, %arg2, %c0_i32_8 : i32
    %10 = arith.extui %9 : i1 to i32
    %c0_i32_9 = arith.constant 0 : i32
    %11 = arith.cmpi ne, %10, %c0_i32_9 : i32
    scf.if %11 {
      %c0_10 = arith.constant 0 : index
      %c0_11 = arith.constant 0 : index
      %12 = vector.load %arg8[%c0_10, %c0_11] : memref<256x128xf32, #tpu.memory_space<vmem>>, vector<256x128xf32>
      %c0_12 = arith.constant 0 : index
      %c0_13 = arith.constant 0 : index
      %13 = vector.load %arg5[%c0_12, %c0_13] : memref<1x128xf32, #tpu.memory_space<vmem>>, vector<1x128xf32>
      %14 = vector.broadcast %13 : vector<1x128xf32> to vector<256x128xf32>
      %15 = arith.mulf %12, %14 : vector<256x128xf32>
      %c0_14 = arith.constant 0 : index
      %c0_15 = arith.constant 0 : index
      %16 = vector.load %arg6[%c0_14, %c0_15] : memref<1x128xf32, #tpu.memory_space<vmem>>, vector<1x128xf32>
      %17 = vector.broadcast %16 : vector<1x128xf32> to vector<256x128xf32>
      %18 = arith.addf %15, %17 : vector<256x128xf32>
      %cst_16 = arith.constant 0.000000e+00 : f32
      %19 = vector.broadcast %cst_16 : f32 to vector<256x128xf32>
      %20 = arith.maximumf %18, %19 : vector<256x128xf32>
      %21 = arith.truncf %20 : vector<256x128xf32> to vector<256x128xbf16>
      %c0_17 = arith.constant 0 : index
      %c0_18 = arith.constant 0 : index
      %22 = vector.load %arg7[%c0_17, %c0_18] : memref<256x128xbf16, #tpu.memory_space<vmem>>, vector<256x128xbf16>
      tpu.vector_store %arg7[%c0_17, %c0_18], %21 {strides = array<i32>} : memref<256x128xbf16, #tpu.memory_space<vmem>>, vector<256x128xbf16>,
    } else {
    }
    return
  }
  func.func @transform_0(%arg0: i32, %arg1: i32, %arg2: i32) -> (i32, i32) {
    %c0_i32 = arith.constant 0 : i32
    return %arg0, %arg2 : i32, i32
  }
  func.func @transform_1(%arg0: i32, %arg1: i32, %arg2: i32) -> (i32, i32) {
    %c0_i32 = arith.constant 0 : i32
    return %arg2, %arg1 : i32, i32
  }
  func.func @transform_2(%arg0: i32, %arg1: i32, %arg2: i32) -> (i32, i32) {
    %c0_i32 = arith.constant 0 : i32
    %c0_i32_0 = arith.constant 0 : i32
    return %c0_i32, %arg1 : i32, i32
  }
  func.func @transform_3(%arg0: i32, %arg1: i32, %arg2: i32) -> (i32, i32) {
    %c0_i32 = arith.constant 0 : i32
    %c0_i32_0 = arith.constant 0 : i32
    return %c0_i32, %arg1 : i32, i32
  }
  func.func @transform_4(%arg0: i32, %arg1: i32, %arg2: i32) -> (i32, i32) {
    %c0_i32 = arith.constant 0 : i32
    return %arg0, %arg1 : i32, i32
  }
}

module attributes {stable_mosaic.version = 11 : i64} {
  func.func @_matmul_bn_relu_kernel(%arg0: i32, %arg1: i32, %arg2: i32, %arg3: memref<256x512xbf16, #tpu.memory_space<vmem>>, %arg4: memref<512x128xbf16, #tpu.memory_space<vmem>>, %arg5: memref<1x128xf32, #tpu.memory_space<vmem>>, %arg6: memref<1x128xf32, #tpu.memory_space<vmem>>, %arg7: memref<256x128xbf16, #tpu.memory_space<vmem>>, %arg8: memref<256x128xf32, #tpu.memory_space<vmem>>) attributes {dimension_semantics = [#tpu.dimension_semantics<parallel>, #tpu.dimension_semantics<parallel>, #tpu.dimension_semantics<arbitrary>], iteration_bounds = array<i64: 2, 1, 1>, scalar_prefetch = 0 : i64, scratch_operands = 1 : i64, tpu.core_type = #tpu.core_type<tc>, window_params = [{transform_indices = @transform_0, window_bounds = array<i64: 256, 512>}, {transform_indices = @transform_1, window_bounds = array<i64: 512, 128>}, {transform_indices = @transform_2, window_bounds = array<i64: 1, 128>}, {transform_indices = @transform_3, window_bounds = array<i64: 1, 128>}, {transform_indices = @transform_4, window_bounds = array<i64: 256, 128>}]} {
    %c0_i32 = arith.constant 0 : i32
    %0 = arith.cmpi eq, %arg2, %c0_i32 : i32
    %1 = arith.extui %0 : i1 to i32
    %c0_i32_0 = arith.constant 0 : i32
    %2 = arith.cmpi ne, %1, %c0_i32_0 : i32
    scf.if %2 {
      %cst_10 = arith.constant 0.000000e+00 : f32
      %12 = vector.broadcast %cst_10 : f32 to vector<256x128xf32>
      %c0_11 = arith.constant 0 : index
      %c0_12 = arith.constant 0 : index
      %13 = vector.load %arg8[%c0_11, %c0_12] : memref<256x128xf32, #tpu.memory_space<vmem>>, vector<256x128xf32>
      tpu.vector_store %arg8[%c0_11, %c0_12], %12 {strides = array<i32>} : memref<256x128xf32, #tpu.memory_space<vmem>>, vector<256x128xf32>,
    } else {
    }
    %c0 = arith.constant 0 : index
    %c0_1 = arith.constant 0 : index
    %3 = vector.load %arg8[%c0, %c0_1] : memref<256x128xf32, #tpu.memory_space<vmem>>, vector<256x128xf32>
    %c0_2 = arith.constant 0 : index
    %c0_3 = arith.constant 0 : index
    %4 = vector.load %arg3[%c0_2, %c0_3] : memref<256x512xbf16, #tpu.memory_space<vmem>>, vector<256x512xbf16>
    %c0_4 = arith.constant 0 : index
    %c0_5 = arith.constant 0 : index
    %5 = vector.load %arg4[%c0_4, %c0_5] : memref<512x128xbf16, #tpu.memory_space<vmem>>, vector<512x128xbf16>
    %cst = arith.constant dense<0.000000e+00> : vector<256x128xf32>
    %6 = tpu.matmul %4, %5, %cst {dimension_numbers = #tpu.dot_dimension_numbers<[1], [0], [0], [1], [0, 0, 1, 1], [], []>} : vector<256x512xbf16>, vector<512x128xbf16>, vector<256x128xf32> -> vector<256x128xf32>
    %7 = arith.addf %3, %6 : vector<256x128xf32>
    %c0_6 = arith.constant 0 : index
    %c0_7 = arith.constant 0 : index
    %8 = vector.load %arg8[%c0_6, %c0_7] : memref<256x128xf32, #tpu.memory_space<vmem>>, vector<256x128xf32>
    tpu.vector_store %arg8[%c0_6, %c0_7], %7 {strides = array<i32>} : memref<256x128xf32, #tpu.memory_space<vmem>>, vector<256x128xf32>,
    %c0_i32_8 = arith.constant 0 : i32
    %9 = arith.cmpi eq, %arg2, %c0_i32_8 : i32
    %10 = arith.extui %9 : i1 to i32
    %c0_i32_9 = arith.constant 0 : i32
    %11 = arith.cmpi ne, %10, %c0_i32_9 : i32
    scf.if %11 {
      %c0_10 = arith.constant 0 : index
      %c0_11 = arith.constant 0 : index
      %12 = vector.load %arg8[%c0_10, %c0_11] : memref<256x128xf32, #tpu.memory_space<vmem>>, vector<256x128xf32>
      %c0_12 = arith.constant 0 : index
      %c0_13 = arith.constant 0 : index
      %13 = vector.load %arg5[%c0_12, %c0_13] : memref<1x128xf32, #tpu.memory_space<vmem>>, vector<1x128xf32>
      %14 = vector.broadcast %13 : vector<1x128xf32> to vector<256x128xf32>
      %15 = arith.mulf %12, %14 : vector<256x128xf32>
      %c0_14 = arith.constant 0 : index
      %c0_15 = arith.constant 0 : index
      %16 = vector.load %arg6[%c0_14, %c0_15] : memref<1x128xf32, #tpu.memory_space<vmem>>, vector<1x128xf32>
      %17 = vector.broadcast %16 : vector<1x128xf32> to vector<256x128xf32>
      %18 = arith.addf %15, %17 : vector<256x128xf32>
      %cst_16 = arith.constant 0.000000e+00 : f32
      %19 = vector.broadcast %cst_16 : f32 to vector<256x128xf32>
      %20 = arith.maximumf %18, %19 : vector<256x128xf32>
      %21 = arith.truncf %20 : vector<256x128xf32> to vector<256x128xbf16>
      %c0_17 = arith.constant 0 : index
      %c0_18 = arith.constant 0 : index
      %22 = vector.load %arg7[%c0_17, %c0_18] : memref<256x128xbf16, #tpu.memory_space<vmem>>, vector<256x128xbf16>
      tpu.vector_store %arg7[%c0_17, %c0_18], %21 {strides = array<i32>} : memref<256x128xbf16, #tpu.memory_space<vmem>>, vector<256x128xbf16>,
    } else {
    }
    return
  }
  func.func @transform_0(%arg0: i32, %arg1: i32, %arg2: i32) -> (i32, i32) {
    %c0_i32 = arith.constant 0 : i32
    return %arg0, %arg2 : i32, i32
  }
  func.func @transform_1(%arg0: i32, %arg1: i32, %arg2: i32) -> (i32, i32) {
    %c0_i32 = arith.constant 0 : i32
    return %arg2, %arg1 : i32, i32
  }
  func.func @transform_2(%arg0: i32, %arg1: i32, %arg2: i32) -> (i32, i32) {
    %c0_i32 = arith.constant 0 : i32
    %c0_i32_0 = arith.constant 0 : i32
    return %c0_i32, %arg1 : i32, i32
  }
  func.func @transform_3(%arg0: i32, %arg1: i32, %arg2: i32) -> (i32, i32) {
    %c0_i32 = arith.constant 0 : i32
    %c0_i32_0 = arith.constant 0 : i32
    return %c0_i32, %arg1 : i32, i32
  }
  func.func @transform_4(%arg0: i32, %arg1: i32, %arg2: i32) -> (i32, i32) {
    %c0_i32 = arith.constant 0 : i32
    return %arg0, %arg1 : i32, i32
  }
}

module attributes {stable_mosaic.version = 11 : i64} {
  func.func @_matmul_bn_relu_kernel(%arg0: i32, %arg1: i32, %arg2: i32, %arg3: memref<256x384xbf16, #tpu.memory_space<vmem>>, %arg4: memref<384x128xbf16, #tpu.memory_space<vmem>>, %arg5: memref<1x128xf32, #tpu.memory_space<vmem>>, %arg6: memref<1x128xf32, #tpu.memory_space<vmem>>, %arg7: memref<256x128xbf16, #tpu.memory_space<vmem>>, %arg8: memref<256x128xf32, #tpu.memory_space<vmem>>) attributes {dimension_semantics = [#tpu.dimension_semantics<parallel>, #tpu.dimension_semantics<parallel>, #tpu.dimension_semantics<arbitrary>], iteration_bounds = array<i64: 2, 1, 1>, scalar_prefetch = 0 : i64, scratch_operands = 1 : i64, tpu.core_type = #tpu.core_type<tc>, window_params = [{transform_indices = @transform_0, window_bounds = array<i64: 256, 384>}, {transform_indices = @transform_1, window_bounds = array<i64: 384, 128>}, {transform_indices = @transform_2, window_bounds = array<i64: 1, 128>}, {transform_indices = @transform_3, window_bounds = array<i64: 1, 128>}, {transform_indices = @transform_4, window_bounds = array<i64: 256, 128>}]} {
    %c0_i32 = arith.constant 0 : i32
    %0 = arith.cmpi eq, %arg2, %c0_i32 : i32
    %1 = arith.extui %0 : i1 to i32
    %c0_i32_0 = arith.constant 0 : i32
    %2 = arith.cmpi ne, %1, %c0_i32_0 : i32
    scf.if %2 {
      %cst_10 = arith.constant 0.000000e+00 : f32
      %12 = vector.broadcast %cst_10 : f32 to vector<256x128xf32>
      %c0_11 = arith.constant 0 : index
      %c0_12 = arith.constant 0 : index
      %13 = vector.load %arg8[%c0_11, %c0_12] : memref<256x128xf32, #tpu.memory_space<vmem>>, vector<256x128xf32>
      tpu.vector_store %arg8[%c0_11, %c0_12], %12 {strides = array<i32>} : memref<256x128xf32, #tpu.memory_space<vmem>>, vector<256x128xf32>,
    } else {
    }
    %c0 = arith.constant 0 : index
    %c0_1 = arith.constant 0 : index
    %3 = vector.load %arg8[%c0, %c0_1] : memref<256x128xf32, #tpu.memory_space<vmem>>, vector<256x128xf32>
    %c0_2 = arith.constant 0 : index
    %c0_3 = arith.constant 0 : index
    %4 = vector.load %arg3[%c0_2, %c0_3] : memref<256x384xbf16, #tpu.memory_space<vmem>>, vector<256x384xbf16>
    %c0_4 = arith.constant 0 : index
    %c0_5 = arith.constant 0 : index
    %5 = vector.load %arg4[%c0_4, %c0_5] : memref<384x128xbf16, #tpu.memory_space<vmem>>, vector<384x128xbf16>
    %cst = arith.constant dense<0.000000e+00> : vector<256x128xf32>
    %6 = tpu.matmul %4, %5, %cst {dimension_numbers = #tpu.dot_dimension_numbers<[1], [0], [0], [1], [0, 0, 1, 1], [], []>} : vector<256x384xbf16>, vector<384x128xbf16>, vector<256x128xf32> -> vector<256x128xf32>
    %7 = arith.addf %3, %6 : vector<256x128xf32>
    %c0_6 = arith.constant 0 : index
    %c0_7 = arith.constant 0 : index
    %8 = vector.load %arg8[%c0_6, %c0_7] : memref<256x128xf32, #tpu.memory_space<vmem>>, vector<256x128xf32>
    tpu.vector_store %arg8[%c0_6, %c0_7], %7 {strides = array<i32>} : memref<256x128xf32, #tpu.memory_space<vmem>>, vector<256x128xf32>,
    %c0_i32_8 = arith.constant 0 : i32
    %9 = arith.cmpi eq, %arg2, %c0_i32_8 : i32
    %10 = arith.extui %9 : i1 to i32
    %c0_i32_9 = arith.constant 0 : i32
    %11 = arith.cmpi ne, %10, %c0_i32_9 : i32
    scf.if %11 {
      %c0_10 = arith.constant 0 : index
      %c0_11 = arith.constant 0 : index
      %12 = vector.load %arg8[%c0_10, %c0_11] : memref<256x128xf32, #tpu.memory_space<vmem>>, vector<256x128xf32>
      %c0_12 = arith.constant 0 : index
      %c0_13 = arith.constant 0 : index
      %13 = vector.load %arg5[%c0_12, %c0_13] : memref<1x128xf32, #tpu.memory_space<vmem>>, vector<1x128xf32>
      %14 = vector.broadcast %13 : vector<1x128xf32> to vector<256x128xf32>
      %15 = arith.mulf %12, %14 : vector<256x128xf32>
      %c0_14 = arith.constant 0 : index
      %c0_15 = arith.constant 0 : index
      %16 = vector.load %arg6[%c0_14, %c0_15] : memref<1x128xf32, #tpu.memory_space<vmem>>, vector<1x128xf32>
      %17 = vector.broadcast %16 : vector<1x128xf32> to vector<256x128xf32>
      %18 = arith.addf %15, %17 : vector<256x128xf32>
      %cst_16 = arith.constant 0.000000e+00 : f32
      %19 = vector.broadcast %cst_16 : f32 to vector<256x128xf32>
      %20 = arith.maximumf %18, %19 : vector<256x128xf32>
      %21 = arith.truncf %20 : vector<256x128xf32> to vector<256x128xbf16>
      %c0_17 = arith.constant 0 : index
      %c0_18 = arith.constant 0 : index
      %22 = vector.load %arg7[%c0_17, %c0_18] : memref<256x128xbf16, #tpu.memory_space<vmem>>, vector<256x128xbf16>
      tpu.vector_store %arg7[%c0_17, %c0_18], %21 {strides = array<i32>} : memref<256x128xbf16, #tpu.memory_space<vmem>>, vector<256x128xbf16>,
    } else {
    }
    return
  }
  func.func @transform_0(%arg0: i32, %arg1: i32, %arg2: i32) -> (i32, i32) {
    %c0_i32 = arith.constant 0 : i32
    return %arg0, %arg2 : i32, i32
  }
  func.func @transform_1(%arg0: i32, %arg1: i32, %arg2: i32) -> (i32, i32) {
    %c0_i32 = arith.constant 0 : i32
    return %arg2, %arg1 : i32, i32
  }
  func.func @transform_2(%arg0: i32, %arg1: i32, %arg2: i32) -> (i32, i32) {
    %c0_i32 = arith.constant 0 : i32
    %c0_i32_0 = arith.constant 0 : i32
    return %c0_i32, %arg1 : i32, i32
  }
  func.func @transform_3(%arg0: i32, %arg1: i32, %arg2: i32) -> (i32, i32) {
    %c0_i32 = arith.constant 0 : i32
    %c0_i32_0 = arith.constant 0 : i32
    return %c0_i32, %arg1 : i32, i32
  }
  func.func @transform_4(%arg0: i32, %arg1: i32, %arg2: i32) -> (i32, i32) {
    %c0_i32 = arith.constant 0 : i32
    return %arg0, %arg1 : i32, i32
  }
}

module attributes {stable_mosaic.version = 11 : i64} {
  func.func @_matmul_bn_relu_kernel(%arg0: i32, %arg1: i32, %arg2: i32, %arg3: memref<128x384xbf16, #tpu.memory_space<vmem>>, %arg4: memref<384x128xbf16, #tpu.memory_space<vmem>>, %arg5: memref<1x128xf32, #tpu.memory_space<vmem>>, %arg6: memref<1x128xf32, #tpu.memory_space<vmem>>, %arg7: memref<128x128xbf16, #tpu.memory_space<vmem>>, %arg8: memref<128x128xf32, #tpu.memory_space<vmem>>) attributes {dimension_semantics = [#tpu.dimension_semantics<parallel>, #tpu.dimension_semantics<parallel>, #tpu.dimension_semantics<arbitrary>], iteration_bounds = array<i64: 1, 1, 1>, scalar_prefetch = 0 : i64, scratch_operands = 1 : i64, tpu.core_type = #tpu.core_type<tc>, window_params = [{transform_indices = @transform_0, window_bounds = array<i64: 128, 384>}, {transform_indices = @transform_1, window_bounds = array<i64: 384, 128>}, {transform_indices = @transform_2, window_bounds = array<i64: 1, 128>}, {transform_indices = @transform_3, window_bounds = array<i64: 1, 128>}, {transform_indices = @transform_4, window_bounds = array<i64: 128, 128>}]} {
    %c0_i32 = arith.constant 0 : i32
    %0 = arith.cmpi eq, %arg2, %c0_i32 : i32
    %1 = arith.extui %0 : i1 to i32
    %c0_i32_0 = arith.constant 0 : i32
    %2 = arith.cmpi ne, %1, %c0_i32_0 : i32
    scf.if %2 {
      %cst_10 = arith.constant 0.000000e+00 : f32
      %12 = vector.broadcast %cst_10 : f32 to vector<128x128xf32>
      %c0_11 = arith.constant 0 : index
      %c0_12 = arith.constant 0 : index
      %13 = vector.load %arg8[%c0_11, %c0_12] : memref<128x128xf32, #tpu.memory_space<vmem>>, vector<128x128xf32>
      tpu.vector_store %arg8[%c0_11, %c0_12], %12 {strides = array<i32>} : memref<128x128xf32, #tpu.memory_space<vmem>>, vector<128x128xf32>,
    } else {
    }
    %c0 = arith.constant 0 : index
    %c0_1 = arith.constant 0 : index
    %3 = vector.load %arg8[%c0, %c0_1] : memref<128x128xf32, #tpu.memory_space<vmem>>, vector<128x128xf32>
    %c0_2 = arith.constant 0 : index
    %c0_3 = arith.constant 0 : index
    %4 = vector.load %arg3[%c0_2, %c0_3] : memref<128x384xbf16, #tpu.memory_space<vmem>>, vector<128x384xbf16>
    %c0_4 = arith.constant 0 : index
    %c0_5 = arith.constant 0 : index
    %5 = vector.load %arg4[%c0_4, %c0_5] : memref<384x128xbf16, #tpu.memory_space<vmem>>, vector<384x128xbf16>
    %cst = arith.constant dense<0.000000e+00> : vector<128x128xf32>
    %6 = tpu.matmul %4, %5, %cst {dimension_numbers = #tpu.dot_dimension_numbers<[1], [0], [0], [1], [0, 0, 1, 1], [], []>} : vector<128x384xbf16>, vector<384x128xbf16>, vector<128x128xf32> -> vector<128x128xf32>
    %7 = arith.addf %3, %6 : vector<128x128xf32>
    %c0_6 = arith.constant 0 : index
    %c0_7 = arith.constant 0 : index
    %8 = vector.load %arg8[%c0_6, %c0_7] : memref<128x128xf32, #tpu.memory_space<vmem>>, vector<128x128xf32>
    tpu.vector_store %arg8[%c0_6, %c0_7], %7 {strides = array<i32>} : memref<128x128xf32, #tpu.memory_space<vmem>>, vector<128x128xf32>,
    %c0_i32_8 = arith.constant 0 : i32
    %9 = arith.cmpi eq, %arg2, %c0_i32_8 : i32
    %10 = arith.extui %9 : i1 to i32
    %c0_i32_9 = arith.constant 0 : i32
    %11 = arith.cmpi ne, %10, %c0_i32_9 : i32
    scf.if %11 {
      %c0_10 = arith.constant 0 : index
      %c0_11 = arith.constant 0 : index
      %12 = vector.load %arg8[%c0_10, %c0_11] : memref<128x128xf32, #tpu.memory_space<vmem>>, vector<128x128xf32>
      %c0_12 = arith.constant 0 : index
      %c0_13 = arith.constant 0 : index
      %13 = vector.load %arg5[%c0_12, %c0_13] : memref<1x128xf32, #tpu.memory_space<vmem>>, vector<1x128xf32>
      %14 = vector.broadcast %13 : vector<1x128xf32> to vector<128x128xf32>
      %15 = arith.mulf %12, %14 : vector<128x128xf32>
      %c0_14 = arith.constant 0 : index
      %c0_15 = arith.constant 0 : index
      %16 = vector.load %arg6[%c0_14, %c0_15] : memref<1x128xf32, #tpu.memory_space<vmem>>, vector<1x128xf32>
      %17 = vector.broadcast %16 : vector<1x128xf32> to vector<128x128xf32>
      %18 = arith.addf %15, %17 : vector<128x128xf32>
      %cst_16 = arith.constant 0.000000e+00 : f32
      %19 = vector.broadcast %cst_16 : f32 to vector<128x128xf32>
      %20 = arith.maximumf %18, %19 : vector<128x128xf32>
      %21 = arith.truncf %20 : vector<128x128xf32> to vector<128x128xbf16>
      %c0_17 = arith.constant 0 : index
      %c0_18 = arith.constant 0 : index
      %22 = vector.load %arg7[%c0_17, %c0_18] : memref<128x128xbf16, #tpu.memory_space<vmem>>, vector<128x128xbf16>
      tpu.vector_store %arg7[%c0_17, %c0_18], %21 {strides = array<i32>} : memref<128x128xbf16, #tpu.memory_space<vmem>>, vector<128x128xbf16>,
    } else {
    }
    return
  }
  func.func @transform_0(%arg0: i32, %arg1: i32, %arg2: i32) -> (i32, i32) {
    %c0_i32 = arith.constant 0 : i32
    return %arg0, %arg2 : i32, i32
  }
  func.func @transform_1(%arg0: i32, %arg1: i32, %arg2: i32) -> (i32, i32) {
    %c0_i32 = arith.constant 0 : i32
    return %arg2, %arg1 : i32, i32
  }
  func.func @transform_2(%arg0: i32, %arg1: i32, %arg2: i32) -> (i32, i32) {
    %c0_i32 = arith.constant 0 : i32
    %c0_i32_0 = arith.constant 0 : i32
    return %c0_i32, %arg1 : i32, i32
  }
  func.func @transform_3(%arg0: i32, %arg1: i32, %arg2: i32) -> (i32, i32) {
    %c0_i32 = arith.constant 0 : i32
    %c0_i32_0 = arith.constant 0 : i32
    return %c0_i32, %arg1 : i32, i32
  }
  func.func @transform_4(%arg0: i32, %arg1: i32, %arg2: i32) -> (i32, i32) {
    %c0_i32 = arith.constant 0 : i32
    return %arg0, %arg1 : i32, i32
  }
}

module attributes {stable_mosaic.version = 11 : i64} {
  func.func @_matmul_bn_relu_kernel(%arg0: i32, %arg1: i32, %arg2: i32, %arg3: memref<128x640xbf16, #tpu.memory_space<vmem>>, %arg4: memref<640x128xbf16, #tpu.memory_space<vmem>>, %arg5: memref<1x128xf32, #tpu.memory_space<vmem>>, %arg6: memref<1x128xf32, #tpu.memory_space<vmem>>, %arg7: memref<128x128xbf16, #tpu.memory_space<vmem>>, %arg8: memref<128x128xf32, #tpu.memory_space<vmem>>) attributes {dimension_semantics = [#tpu.dimension_semantics<parallel>, #tpu.dimension_semantics<parallel>, #tpu.dimension_semantics<arbitrary>], iteration_bounds = array<i64: 1, 1, 1>, scalar_prefetch = 0 : i64, scratch_operands = 1 : i64, tpu.core_type = #tpu.core_type<tc>, window_params = [{transform_indices = @transform_0, window_bounds = array<i64: 128, 640>}, {transform_indices = @transform_1, window_bounds = array<i64: 640, 128>}, {transform_indices = @transform_2, window_bounds = array<i64: 1, 128>}, {transform_indices = @transform_3, window_bounds = array<i64: 1, 128>}, {transform_indices = @transform_4, window_bounds = array<i64: 128, 128>}]} {
    %c0_i32 = arith.constant 0 : i32
    %0 = arith.cmpi eq, %arg2, %c0_i32 : i32
    %1 = arith.extui %0 : i1 to i32
    %c0_i32_0 = arith.constant 0 : i32
    %2 = arith.cmpi ne, %1, %c0_i32_0 : i32
    scf.if %2 {
      %cst_10 = arith.constant 0.000000e+00 : f32
      %12 = vector.broadcast %cst_10 : f32 to vector<128x128xf32>
      %c0_11 = arith.constant 0 : index
      %c0_12 = arith.constant 0 : index
      %13 = vector.load %arg8[%c0_11, %c0_12] : memref<128x128xf32, #tpu.memory_space<vmem>>, vector<128x128xf32>
      tpu.vector_store %arg8[%c0_11, %c0_12], %12 {strides = array<i32>} : memref<128x128xf32, #tpu.memory_space<vmem>>, vector<128x128xf32>,
    } else {
    }
    %c0 = arith.constant 0 : index
    %c0_1 = arith.constant 0 : index
    %3 = vector.load %arg8[%c0, %c0_1] : memref<128x128xf32, #tpu.memory_space<vmem>>, vector<128x128xf32>
    %c0_2 = arith.constant 0 : index
    %c0_3 = arith.constant 0 : index
    %4 = vector.load %arg3[%c0_2, %c0_3] : memref<128x640xbf16, #tpu.memory_space<vmem>>, vector<128x640xbf16>
    %c0_4 = arith.constant 0 : index
    %c0_5 = arith.constant 0 : index
    %5 = vector.load %arg4[%c0_4, %c0_5] : memref<640x128xbf16, #tpu.memory_space<vmem>>, vector<640x128xbf16>
    %cst = arith.constant dense<0.000000e+00> : vector<128x128xf32>
    %6 = tpu.matmul %4, %5, %cst {dimension_numbers = #tpu.dot_dimension_numbers<[1], [0], [0], [1], [0, 0, 1, 1], [], []>} : vector<128x640xbf16>, vector<640x128xbf16>, vector<128x128xf32> -> vector<128x128xf32>
    %7 = arith.addf %3, %6 : vector<128x128xf32>
    %c0_6 = arith.constant 0 : index
    %c0_7 = arith.constant 0 : index
    %8 = vector.load %arg8[%c0_6, %c0_7] : memref<128x128xf32, #tpu.memory_space<vmem>>, vector<128x128xf32>
    tpu.vector_store %arg8[%c0_6, %c0_7], %7 {strides = array<i32>} : memref<128x128xf32, #tpu.memory_space<vmem>>, vector<128x128xf32>,
    %c0_i32_8 = arith.constant 0 : i32
    %9 = arith.cmpi eq, %arg2, %c0_i32_8 : i32
    %10 = arith.extui %9 : i1 to i32
    %c0_i32_9 = arith.constant 0 : i32
    %11 = arith.cmpi ne, %10, %c0_i32_9 : i32
    scf.if %11 {
      %c0_10 = arith.constant 0 : index
      %c0_11 = arith.constant 0 : index
      %12 = vector.load %arg8[%c0_10, %c0_11] : memref<128x128xf32, #tpu.memory_space<vmem>>, vector<128x128xf32>
      %c0_12 = arith.constant 0 : index
      %c0_13 = arith.constant 0 : index
      %13 = vector.load %arg5[%c0_12, %c0_13] : memref<1x128xf32, #tpu.memory_space<vmem>>, vector<1x128xf32>
      %14 = vector.broadcast %13 : vector<1x128xf32> to vector<128x128xf32>
      %15 = arith.mulf %12, %14 : vector<128x128xf32>
      %c0_14 = arith.constant 0 : index
      %c0_15 = arith.constant 0 : index
      %16 = vector.load %arg6[%c0_14, %c0_15] : memref<1x128xf32, #tpu.memory_space<vmem>>, vector<1x128xf32>
      %17 = vector.broadcast %16 : vector<1x128xf32> to vector<128x128xf32>
      %18 = arith.addf %15, %17 : vector<128x128xf32>
      %cst_16 = arith.constant 0.000000e+00 : f32
      %19 = vector.broadcast %cst_16 : f32 to vector<128x128xf32>
      %20 = arith.maximumf %18, %19 : vector<128x128xf32>
      %21 = arith.truncf %20 : vector<128x128xf32> to vector<128x128xbf16>
      %c0_17 = arith.constant 0 : index
      %c0_18 = arith.constant 0 : index
      %22 = vector.load %arg7[%c0_17, %c0_18] : memref<128x128xbf16, #tpu.memory_space<vmem>>, vector<128x128xbf16>
      tpu.vector_store %arg7[%c0_17, %c0_18], %21 {strides = array<i32>} : memref<128x128xbf16, #tpu.memory_space<vmem>>, vector<128x128xbf16>,
    } else {
    }
    return
  }
  func.func @transform_0(%arg0: i32, %arg1: i32, %arg2: i32) -> (i32, i32) {
    %c0_i32 = arith.constant 0 : i32
    return %arg0, %arg2 : i32, i32
  }
  func.func @transform_1(%arg0: i32, %arg1: i32, %arg2: i32) -> (i32, i32) {
    %c0_i32 = arith.constant 0 : i32
    return %arg2, %arg1 : i32, i32
  }
  func.func @transform_2(%arg0: i32, %arg1: i32, %arg2: i32) -> (i32, i32) {
    %c0_i32 = arith.constant 0 : i32
    %c0_i32_0 = arith.constant 0 : i32
    return %c0_i32, %arg1 : i32, i32
  }
  func.func @transform_3(%arg0: i32, %arg1: i32, %arg2: i32) -> (i32, i32) {
    %c0_i32 = arith.constant 0 : i32
    %c0_i32_0 = arith.constant 0 : i32
    return %c0_i32, %arg1 : i32, i32
  }
  func.func @transform_4(%arg0: i32, %arg1: i32, %arg2: i32) -> (i32, i32) {
    %c0_i32 = arith.constant 0 : i32
    return %arg0, %arg1 : i32, i32
  }
}

module attributes {stable_mosaic.version = 11 : i64} {
  func.func @_matmul_bn_relu_kernel(%arg0: i32, %arg1: i32, %arg2: i32, %arg3: memref<32x640xbf16, #tpu.memory_space<vmem>>, %arg4: memref<640x128xbf16, #tpu.memory_space<vmem>>, %arg5: memref<1x128xf32, #tpu.memory_space<vmem>>, %arg6: memref<1x128xf32, #tpu.memory_space<vmem>>, %arg7: memref<32x128xbf16, #tpu.memory_space<vmem>>, %arg8: memref<32x128xf32, #tpu.memory_space<vmem>>) attributes {dimension_semantics = [#tpu.dimension_semantics<parallel>, #tpu.dimension_semantics<parallel>, #tpu.dimension_semantics<arbitrary>], iteration_bounds = array<i64: 1, 1, 1>, scalar_prefetch = 0 : i64, scratch_operands = 1 : i64, tpu.core_type = #tpu.core_type<tc>, window_params = [{transform_indices = @transform_0, window_bounds = array<i64: 32, 640>}, {transform_indices = @transform_1, window_bounds = array<i64: 640, 128>}, {transform_indices = @transform_2, window_bounds = array<i64: 1, 128>}, {transform_indices = @transform_3, window_bounds = array<i64: 1, 128>}, {transform_indices = @transform_4, window_bounds = array<i64: 32, 128>}]} {
    %c0_i32 = arith.constant 0 : i32
    %0 = arith.cmpi eq, %arg2, %c0_i32 : i32
    %1 = arith.extui %0 : i1 to i32
    %c0_i32_0 = arith.constant 0 : i32
    %2 = arith.cmpi ne, %1, %c0_i32_0 : i32
    scf.if %2 {
      %cst_10 = arith.constant 0.000000e+00 : f32
      %12 = vector.broadcast %cst_10 : f32 to vector<32x128xf32>
      %c0_11 = arith.constant 0 : index
      %c0_12 = arith.constant 0 : index
      %13 = vector.load %arg8[%c0_11, %c0_12] : memref<32x128xf32, #tpu.memory_space<vmem>>, vector<32x128xf32>
      tpu.vector_store %arg8[%c0_11, %c0_12], %12 {strides = array<i32>} : memref<32x128xf32, #tpu.memory_space<vmem>>, vector<32x128xf32>,
    } else {
    }
    %c0 = arith.constant 0 : index
    %c0_1 = arith.constant 0 : index
    %3 = vector.load %arg8[%c0, %c0_1] : memref<32x128xf32, #tpu.memory_space<vmem>>, vector<32x128xf32>
    %c0_2 = arith.constant 0 : index
    %c0_3 = arith.constant 0 : index
    %4 = vector.load %arg3[%c0_2, %c0_3] : memref<32x640xbf16, #tpu.memory_space<vmem>>, vector<32x640xbf16>
    %c0_4 = arith.constant 0 : index
    %c0_5 = arith.constant 0 : index
    %5 = vector.load %arg4[%c0_4, %c0_5] : memref<640x128xbf16, #tpu.memory_space<vmem>>, vector<640x128xbf16>
    %cst = arith.constant dense<0.000000e+00> : vector<32x128xf32>
    %6 = tpu.matmul %4, %5, %cst {dimension_numbers = #tpu.dot_dimension_numbers<[1], [0], [0], [1], [0, 0, 1, 1], [], []>} : vector<32x640xbf16>, vector<640x128xbf16>, vector<32x128xf32> -> vector<32x128xf32>
    %7 = arith.addf %3, %6 : vector<32x128xf32>
    %c0_6 = arith.constant 0 : index
    %c0_7 = arith.constant 0 : index
    %8 = vector.load %arg8[%c0_6, %c0_7] : memref<32x128xf32, #tpu.memory_space<vmem>>, vector<32x128xf32>
    tpu.vector_store %arg8[%c0_6, %c0_7], %7 {strides = array<i32>} : memref<32x128xf32, #tpu.memory_space<vmem>>, vector<32x128xf32>,
    %c0_i32_8 = arith.constant 0 : i32
    %9 = arith.cmpi eq, %arg2, %c0_i32_8 : i32
    %10 = arith.extui %9 : i1 to i32
    %c0_i32_9 = arith.constant 0 : i32
    %11 = arith.cmpi ne, %10, %c0_i32_9 : i32
    scf.if %11 {
      %c0_10 = arith.constant 0 : index
      %c0_11 = arith.constant 0 : index
      %12 = vector.load %arg8[%c0_10, %c0_11] : memref<32x128xf32, #tpu.memory_space<vmem>>, vector<32x128xf32>
      %c0_12 = arith.constant 0 : index
      %c0_13 = arith.constant 0 : index
      %13 = vector.load %arg5[%c0_12, %c0_13] : memref<1x128xf32, #tpu.memory_space<vmem>>, vector<1x128xf32>
      %14 = vector.broadcast %13 : vector<1x128xf32> to vector<32x128xf32>
      %15 = arith.mulf %12, %14 : vector<32x128xf32>
      %c0_14 = arith.constant 0 : index
      %c0_15 = arith.constant 0 : index
      %16 = vector.load %arg6[%c0_14, %c0_15] : memref<1x128xf32, #tpu.memory_space<vmem>>, vector<1x128xf32>
      %17 = vector.broadcast %16 : vector<1x128xf32> to vector<32x128xf32>
      %18 = arith.addf %15, %17 : vector<32x128xf32>
      %cst_16 = arith.constant 0.000000e+00 : f32
      %19 = vector.broadcast %cst_16 : f32 to vector<32x128xf32>
      %20 = arith.maximumf %18, %19 : vector<32x128xf32>
      %21 = arith.truncf %20 : vector<32x128xf32> to vector<32x128xbf16>
      %c0_17 = arith.constant 0 : index
      %c0_18 = arith.constant 0 : index
      %22 = vector.load %arg7[%c0_17, %c0_18] : memref<32x128xbf16, #tpu.memory_space<vmem>>, vector<32x128xbf16>
      tpu.vector_store %arg7[%c0_17, %c0_18], %21 {strides = array<i32>} : memref<32x128xbf16, #tpu.memory_space<vmem>>, vector<32x128xbf16>,
    } else {
    }
    return
  }
  func.func @transform_0(%arg0: i32, %arg1: i32, %arg2: i32) -> (i32, i32) {
    %c0_i32 = arith.constant 0 : i32
    return %arg0, %arg2 : i32, i32
  }
  func.func @transform_1(%arg0: i32, %arg1: i32, %arg2: i32) -> (i32, i32) {
    %c0_i32 = arith.constant 0 : i32
    return %arg2, %arg1 : i32, i32
  }
  func.func @transform_2(%arg0: i32, %arg1: i32, %arg2: i32) -> (i32, i32) {
    %c0_i32 = arith.constant 0 : i32
    %c0_i32_0 = arith.constant 0 : i32
    return %c0_i32, %arg1 : i32, i32
  }
  func.func @transform_3(%arg0: i32, %arg1: i32, %arg2: i32) -> (i32, i32) {
    %c0_i32 = arith.constant 0 : i32
    %c0_i32_0 = arith.constant 0 : i32
    return %c0_i32, %arg1 : i32, i32
  }
  func.func @transform_4(%arg0: i32, %arg1: i32, %arg2: i32) -> (i32, i32) {
    %c0_i32 = arith.constant 0 : i32
    return %arg0, %arg1 : i32, i32
  }
}

module attributes {stable_mosaic.version = 11 : i64} {
  func.func @_matmul_bn_relu_kernel(%arg0: i32, %arg1: i32, %arg2: i32, %arg3: memref<16x640xbf16, #tpu.memory_space<vmem>>, %arg4: memref<640x128xbf16, #tpu.memory_space<vmem>>, %arg5: memref<1x128xf32, #tpu.memory_space<vmem>>, %arg6: memref<1x128xf32, #tpu.memory_space<vmem>>, %arg7: memref<16x128xbf16, #tpu.memory_space<vmem>>, %arg8: memref<16x128xf32, #tpu.memory_space<vmem>>) attributes {dimension_semantics = [#tpu.dimension_semantics<parallel>, #tpu.dimension_semantics<parallel>, #tpu.dimension_semantics<arbitrary>], iteration_bounds = array<i64: 1, 1, 1>, scalar_prefetch = 0 : i64, scratch_operands = 1 : i64, tpu.core_type = #tpu.core_type<tc>, window_params = [{transform_indices = @transform_0, window_bounds = array<i64: 16, 640>}, {transform_indices = @transform_1, window_bounds = array<i64: 640, 128>}, {transform_indices = @transform_2, window_bounds = array<i64: 1, 128>}, {transform_indices = @transform_3, window_bounds = array<i64: 1, 128>}, {transform_indices = @transform_4, window_bounds = array<i64: 16, 128>}]} {
    %c0_i32 = arith.constant 0 : i32
    %0 = arith.cmpi eq, %arg2, %c0_i32 : i32
    %1 = arith.extui %0 : i1 to i32
    %c0_i32_0 = arith.constant 0 : i32
    %2 = arith.cmpi ne, %1, %c0_i32_0 : i32
    scf.if %2 {
      %cst_10 = arith.constant 0.000000e+00 : f32
      %12 = vector.broadcast %cst_10 : f32 to vector<16x128xf32>
      %c0_11 = arith.constant 0 : index
      %c0_12 = arith.constant 0 : index
      %13 = vector.load %arg8[%c0_11, %c0_12] : memref<16x128xf32, #tpu.memory_space<vmem>>, vector<16x128xf32>
      tpu.vector_store %arg8[%c0_11, %c0_12], %12 {strides = array<i32>} : memref<16x128xf32, #tpu.memory_space<vmem>>, vector<16x128xf32>,
    } else {
    }
    %c0 = arith.constant 0 : index
    %c0_1 = arith.constant 0 : index
    %3 = vector.load %arg8[%c0, %c0_1] : memref<16x128xf32, #tpu.memory_space<vmem>>, vector<16x128xf32>
    %c0_2 = arith.constant 0 : index
    %c0_3 = arith.constant 0 : index
    %4 = vector.load %arg3[%c0_2, %c0_3] : memref<16x640xbf16, #tpu.memory_space<vmem>>, vector<16x640xbf16>
    %c0_4 = arith.constant 0 : index
    %c0_5 = arith.constant 0 : index
    %5 = vector.load %arg4[%c0_4, %c0_5] : memref<640x128xbf16, #tpu.memory_space<vmem>>, vector<640x128xbf16>
    %cst = arith.constant dense<0.000000e+00> : vector<16x128xf32>
    %6 = tpu.matmul %4, %5, %cst {dimension_numbers = #tpu.dot_dimension_numbers<[1], [0], [0], [1], [0, 0, 1, 1], [], []>} : vector<16x640xbf16>, vector<640x128xbf16>, vector<16x128xf32> -> vector<16x128xf32>
    %7 = arith.addf %3, %6 : vector<16x128xf32>
    %c0_6 = arith.constant 0 : index
    %c0_7 = arith.constant 0 : index
    %8 = vector.load %arg8[%c0_6, %c0_7] : memref<16x128xf32, #tpu.memory_space<vmem>>, vector<16x128xf32>
    tpu.vector_store %arg8[%c0_6, %c0_7], %7 {strides = array<i32>} : memref<16x128xf32, #tpu.memory_space<vmem>>, vector<16x128xf32>,
    %c0_i32_8 = arith.constant 0 : i32
    %9 = arith.cmpi eq, %arg2, %c0_i32_8 : i32
    %10 = arith.extui %9 : i1 to i32
    %c0_i32_9 = arith.constant 0 : i32
    %11 = arith.cmpi ne, %10, %c0_i32_9 : i32
    scf.if %11 {
      %c0_10 = arith.constant 0 : index
      %c0_11 = arith.constant 0 : index
      %12 = vector.load %arg8[%c0_10, %c0_11] : memref<16x128xf32, #tpu.memory_space<vmem>>, vector<16x128xf32>
      %c0_12 = arith.constant 0 : index
      %c0_13 = arith.constant 0 : index
      %13 = vector.load %arg5[%c0_12, %c0_13] : memref<1x128xf32, #tpu.memory_space<vmem>>, vector<1x128xf32>
      %14 = vector.broadcast %13 : vector<1x128xf32> to vector<16x128xf32>
      %15 = arith.mulf %12, %14 : vector<16x128xf32>
      %c0_14 = arith.constant 0 : index
      %c0_15 = arith.constant 0 : index
      %16 = vector.load %arg6[%c0_14, %c0_15] : memref<1x128xf32, #tpu.memory_space<vmem>>, vector<1x128xf32>
      %17 = vector.broadcast %16 : vector<1x128xf32> to vector<16x128xf32>
      %18 = arith.addf %15, %17 : vector<16x128xf32>
      %19 = arith.truncf %18 : vector<16x128xf32> to vector<16x128xbf16>
      %c0_16 = arith.constant 0 : index
      %c0_17 = arith.constant 0 : index
      %20 = vector.load %arg7[%c0_16, %c0_17] : memref<16x128xbf16, #tpu.memory_space<vmem>>, vector<16x128xbf16>
      tpu.vector_store %arg7[%c0_16, %c0_17], %19 {strides = array<i32>} : memref<16x128xbf16, #tpu.memory_space<vmem>>, vector<16x128xbf16>,
    } else {
    }
    return
  }
  func.func @transform_0(%arg0: i32, %arg1: i32, %arg2: i32) -> (i32, i32) {
    %c0_i32 = arith.constant 0 : i32
    return %arg0, %arg2 : i32, i32
  }
  func.func @transform_1(%arg0: i32, %arg1: i32, %arg2: i32) -> (i32, i32) {
    %c0_i32 = arith.constant 0 : i32
    return %arg2, %arg1 : i32, i32
  }
  func.func @transform_2(%arg0: i32, %arg1: i32, %arg2: i32) -> (i32, i32) {
    %c0_i32 = arith.constant 0 : i32
    %c0_i32_0 = arith.constant 0 : i32
    return %c0_i32, %arg1 : i32, i32
  }
  func.func @transform_3(%arg0: i32, %arg1: i32, %arg2: i32) -> (i32, i32) {
    %c0_i32 = arith.constant 0 : i32
    %c0_i32_0 = arith.constant 0 : i32
    return %c0_i32, %arg1 : i32, i32
  }
  func.func @transform_4(%arg0: i32, %arg1: i32, %arg2: i32) -> (i32, i32) {
    %c0_i32 = arith.constant 0 : i32
    return %arg0, %arg1 : i32, i32
  }
}

module attributes {stable_mosaic.version = 11 : i64} {
  func.func @_matmul_bn_relu_kernel(%arg0: i32, %arg1: i32, %arg2: i32, %arg3: memref<16x128xbf16, #tpu.memory_space<vmem>>, %arg4: memref<128x128xbf16, #tpu.memory_space<vmem>>, %arg5: memref<1x128xf32, #tpu.memory_space<vmem>>, %arg6: memref<1x128xf32, #tpu.memory_space<vmem>>, %arg7: memref<16x128xbf16, #tpu.memory_space<vmem>>, %arg8: memref<16x128xf32, #tpu.memory_space<vmem>>) attributes {dimension_semantics = [#tpu.dimension_semantics<parallel>, #tpu.dimension_semantics<parallel>, #tpu.dimension_semantics<arbitrary>], iteration_bounds = array<i64: 1, 1, 1>, scalar_prefetch = 0 : i64, scratch_operands = 1 : i64, tpu.core_type = #tpu.core_type<tc>, window_params = [{transform_indices = @transform_0, window_bounds = array<i64: 16, 128>}, {transform_indices = @transform_1, window_bounds = array<i64: 128, 128>}, {transform_indices = @transform_2, window_bounds = array<i64: 1, 128>}, {transform_indices = @transform_3, window_bounds = array<i64: 1, 128>}, {transform_indices = @transform_4, window_bounds = array<i64: 16, 128>}]} {
    %c0_i32 = arith.constant 0 : i32
    %0 = arith.cmpi eq, %arg2, %c0_i32 : i32
    %1 = arith.extui %0 : i1 to i32
    %c0_i32_0 = arith.constant 0 : i32
    %2 = arith.cmpi ne, %1, %c0_i32_0 : i32
    scf.if %2 {
      %cst_10 = arith.constant 0.000000e+00 : f32
      %12 = vector.broadcast %cst_10 : f32 to vector<16x128xf32>
      %c0_11 = arith.constant 0 : index
      %c0_12 = arith.constant 0 : index
      %13 = vector.load %arg8[%c0_11, %c0_12] : memref<16x128xf32, #tpu.memory_space<vmem>>, vector<16x128xf32>
      tpu.vector_store %arg8[%c0_11, %c0_12], %12 {strides = array<i32>} : memref<16x128xf32, #tpu.memory_space<vmem>>, vector<16x128xf32>,
    } else {
    }
    %c0 = arith.constant 0 : index
    %c0_1 = arith.constant 0 : index
    %3 = vector.load %arg8[%c0, %c0_1] : memref<16x128xf32, #tpu.memory_space<vmem>>, vector<16x128xf32>
    %c0_2 = arith.constant 0 : index
    %c0_3 = arith.constant 0 : index
    %4 = vector.load %arg3[%c0_2, %c0_3] : memref<16x128xbf16, #tpu.memory_space<vmem>>, vector<16x128xbf16>
    %c0_4 = arith.constant 0 : index
    %c0_5 = arith.constant 0 : index
    %5 = vector.load %arg4[%c0_4, %c0_5] : memref<128x128xbf16, #tpu.memory_space<vmem>>, vector<128x128xbf16>
    %cst = arith.constant dense<0.000000e+00> : vector<16x128xf32>
    %6 = tpu.matmul %4, %5, %cst {dimension_numbers = #tpu.dot_dimension_numbers<[1], [0], [0], [1], [0, 0, 1, 1], [], []>} : vector<16x128xbf16>, vector<128x128xbf16>, vector<16x128xf32> -> vector<16x128xf32>
    %7 = arith.addf %3, %6 : vector<16x128xf32>
    %c0_6 = arith.constant 0 : index
    %c0_7 = arith.constant 0 : index
    %8 = vector.load %arg8[%c0_6, %c0_7] : memref<16x128xf32, #tpu.memory_space<vmem>>, vector<16x128xf32>
    tpu.vector_store %arg8[%c0_6, %c0_7], %7 {strides = array<i32>} : memref<16x128xf32, #tpu.memory_space<vmem>>, vector<16x128xf32>,
    %c0_i32_8 = arith.constant 0 : i32
    %9 = arith.cmpi eq, %arg2, %c0_i32_8 : i32
    %10 = arith.extui %9 : i1 to i32
    %c0_i32_9 = arith.constant 0 : i32
    %11 = arith.cmpi ne, %10, %c0_i32_9 : i32
    scf.if %11 {
      %c0_10 = arith.constant 0 : index
      %c0_11 = arith.constant 0 : index
      %12 = vector.load %arg8[%c0_10, %c0_11] : memref<16x128xf32, #tpu.memory_space<vmem>>, vector<16x128xf32>
      %c0_12 = arith.constant 0 : index
      %c0_13 = arith.constant 0 : index
      %13 = vector.load %arg5[%c0_12, %c0_13] : memref<1x128xf32, #tpu.memory_space<vmem>>, vector<1x128xf32>
      %14 = vector.broadcast %13 : vector<1x128xf32> to vector<16x128xf32>
      %15 = arith.mulf %12, %14 : vector<16x128xf32>
      %c0_14 = arith.constant 0 : index
      %c0_15 = arith.constant 0 : index
      %16 = vector.load %arg6[%c0_14, %c0_15] : memref<1x128xf32, #tpu.memory_space<vmem>>, vector<1x128xf32>
      %17 = vector.broadcast %16 : vector<1x128xf32> to vector<16x128xf32>
      %18 = arith.addf %15, %17 : vector<16x128xf32>
      %19 = arith.truncf %18 : vector<16x128xf32> to vector<16x128xbf16>
      %c0_16 = arith.constant 0 : index
      %c0_17 = arith.constant 0 : index
      %20 = vector.load %arg7[%c0_16, %c0_17] : memref<16x128xbf16, #tpu.memory_space<vmem>>, vector<16x128xbf16>
      tpu.vector_store %arg7[%c0_16, %c0_17], %19 {strides = array<i32>} : memref<16x128xbf16, #tpu.memory_space<vmem>>, vector<16x128xbf16>,
    } else {
    }
    return
  }
  func.func @transform_0(%arg0: i32, %arg1: i32, %arg2: i32) -> (i32, i32) {
    %c0_i32 = arith.constant 0 : i32
    return %arg0, %arg2 : i32, i32
  }
  func.func @transform_1(%arg0: i32, %arg1: i32, %arg2: i32) -> (i32, i32) {
    %c0_i32 = arith.constant 0 : i32
    return %arg2, %arg1 : i32, i32
  }
  func.func @transform_2(%arg0: i32, %arg1: i32, %arg2: i32) -> (i32, i32) {
    %c0_i32 = arith.constant 0 : i32
    %c0_i32_0 = arith.constant 0 : i32
    return %c0_i32, %arg1 : i32, i32
  }
  func.func @transform_3(%arg0: i32, %arg1: i32, %arg2: i32) -> (i32, i32) {
    %c0_i32 = arith.constant 0 : i32
    %c0_i32_0 = arith.constant 0 : i32
    return %c0_i32, %arg1 : i32, i32
  }
  func.func @transform_4(%arg0: i32, %arg1: i32, %arg2: i32) -> (i32, i32) {
    %c0_i32 = arith.constant 0 : i32
    return %arg0, %arg1 : i32, i32
  }
}

module attributes {stable_mosaic.version = 11 : i64} {
  func.func @_matmul_bn_relu_kernel(%arg0: i32, %arg1: i32, %arg2: i32, %arg3: memref<16x128xbf16, #tpu.memory_space<vmem>>, %arg4: memref<128x512xbf16, #tpu.memory_space<vmem>>, %arg5: memref<1x512xf32, #tpu.memory_space<vmem>>, %arg6: memref<1x512xf32, #tpu.memory_space<vmem>>, %arg7: memref<16x512xf32, #tpu.memory_space<vmem>>, %arg8: memref<16x512xf32, #tpu.memory_space<vmem>>) attributes {dimension_semantics = [#tpu.dimension_semantics<parallel>, #tpu.dimension_semantics<parallel>, #tpu.dimension_semantics<arbitrary>], iteration_bounds = array<i64: 1, 1, 1>, scalar_prefetch = 0 : i64, scratch_operands = 1 : i64, tpu.core_type = #tpu.core_type<tc>, window_params = [{transform_indices = @transform_0, window_bounds = array<i64: 16, 128>}, {transform_indices = @transform_1, window_bounds = array<i64: 128, 512>}, {transform_indices = @transform_2, window_bounds = array<i64: 1, 512>}, {transform_indices = @transform_3, window_bounds = array<i64: 1, 512>}, {transform_indices = @transform_4, window_bounds = array<i64: 16, 512>}]} {
    %c0_i32 = arith.constant 0 : i32
    %0 = arith.cmpi eq, %arg2, %c0_i32 : i32
    %1 = arith.extui %0 : i1 to i32
    %c0_i32_0 = arith.constant 0 : i32
    %2 = arith.cmpi ne, %1, %c0_i32_0 : i32
    scf.if %2 {
      %cst_10 = arith.constant 0.000000e+00 : f32
      %12 = vector.broadcast %cst_10 : f32 to vector<16x512xf32>
      %c0_11 = arith.constant 0 : index
      %c0_12 = arith.constant 0 : index
      %13 = vector.load %arg8[%c0_11, %c0_12] : memref<16x512xf32, #tpu.memory_space<vmem>>, vector<16x512xf32>
      tpu.vector_store %arg8[%c0_11, %c0_12], %12 {strides = array<i32>} : memref<16x512xf32, #tpu.memory_space<vmem>>, vector<16x512xf32>,
    } else {
    }
    %c0 = arith.constant 0 : index
    %c0_1 = arith.constant 0 : index
    %3 = vector.load %arg8[%c0, %c0_1] : memref<16x512xf32, #tpu.memory_space<vmem>>, vector<16x512xf32>
    %c0_2 = arith.constant 0 : index
    %c0_3 = arith.constant 0 : index
    %4 = vector.load %arg3[%c0_2, %c0_3] : memref<16x128xbf16, #tpu.memory_space<vmem>>, vector<16x128xbf16>
    %c0_4 = arith.constant 0 : index
    %c0_5 = arith.constant 0 : index
    %5 = vector.load %arg4[%c0_4, %c0_5] : memref<128x512xbf16, #tpu.memory_space<vmem>>, vector<128x512xbf16>
    %cst = arith.constant dense<0.000000e+00> : vector<16x512xf32>
    %6 = tpu.matmul %4, %5, %cst {dimension_numbers = #tpu.dot_dimension_numbers<[1], [0], [0], [1], [0, 0, 1, 1], [], []>} : vector<16x128xbf16>, vector<128x512xbf16>, vector<16x512xf32> -> vector<16x512xf32>
    %7 = arith.addf %3, %6 : vector<16x512xf32>
    %c0_6 = arith.constant 0 : index
    %c0_7 = arith.constant 0 : index
    %8 = vector.load %arg8[%c0_6, %c0_7] : memref<16x512xf32, #tpu.memory_space<vmem>>, vector<16x512xf32>
    tpu.vector_store %arg8[%c0_6, %c0_7], %7 {strides = array<i32>} : memref<16x512xf32, #tpu.memory_space<vmem>>, vector<16x512xf32>,
    %c0_i32_8 = arith.constant 0 : i32
    %9 = arith.cmpi eq, %arg2, %c0_i32_8 : i32
    %10 = arith.extui %9 : i1 to i32
    %c0_i32_9 = arith.constant 0 : i32
    %11 = arith.cmpi ne, %10, %c0_i32_9 : i32
    scf.if %11 {
      %c0_10 = arith.constant 0 : index
      %c0_11 = arith.constant 0 : index
      %12 = vector.load %arg8[%c0_10, %c0_11] : memref<16x512xf32, #tpu.memory_space<vmem>>, vector<16x512xf32>
      %c0_12 = arith.constant 0 : index
      %c0_13 = arith.constant 0 : index
      %13 = vector.load %arg5[%c0_12, %c0_13] : memref<1x512xf32, #tpu.memory_space<vmem>>, vector<1x512xf32>
      %14 = vector.broadcast %13 : vector<1x512xf32> to vector<16x512xf32>
      %15 = arith.mulf %12, %14 : vector<16x512xf32>
      %c0_14 = arith.constant 0 : index
      %c0_15 = arith.constant 0 : index
      %16 = vector.load %arg6[%c0_14, %c0_15] : memref<1x512xf32, #tpu.memory_space<vmem>>, vector<1x512xf32>
      %17 = vector.broadcast %16 : vector<1x512xf32> to vector<16x512xf32>
      %18 = arith.addf %15, %17 : vector<16x512xf32>
      %c0_16 = arith.constant 0 : index
      %c0_17 = arith.constant 0 : index
      %19 = vector.load %arg7[%c0_16, %c0_17] : memref<16x512xf32, #tpu.memory_space<vmem>>, vector<16x512xf32>
      tpu.vector_store %arg7[%c0_16, %c0_17], %18 {strides = array<i32>} : memref<16x512xf32, #tpu.memory_space<vmem>>, vector<16x512xf32>,
    } else {
    }
    return
  }
  func.func @transform_0(%arg0: i32, %arg1: i32, %arg2: i32) -> (i32, i32) {
    %c0_i32 = arith.constant 0 : i32
    return %arg0, %arg2 : i32, i32
  }
  func.func @transform_1(%arg0: i32, %arg1: i32, %arg2: i32) -> (i32, i32) {
    %c0_i32 = arith.constant 0 : i32
    return %arg2, %arg1 : i32, i32
  }
  func.func @transform_2(%arg0: i32, %arg1: i32, %arg2: i32) -> (i32, i32) {
    %c0_i32 = arith.constant 0 : i32
    %c0_i32_0 = arith.constant 0 : i32
    return %c0_i32, %arg1 : i32, i32
  }
  func.func @transform_3(%arg0: i32, %arg1: i32, %arg2: i32) -> (i32, i32) {
    %c0_i32 = arith.constant 0 : i32
    %c0_i32_0 = arith.constant 0 : i32
    return %c0_i32, %arg1 : i32, i32
  }
  func.func @transform_4(%arg0: i32, %arg1: i32, %arg2: i32) -> (i32, i32) {
    %c0_i32 = arith.constant 0 : i32
    return %arg0, %arg1 : i32, i32
  }
}

module attributes {stable_mosaic.version = 11 : i64} {
  func.func @_pose_head_kernel(%arg0: i32, %arg1: memref<16x128xbf16, #tpu.memory_space<vmem>>, %arg2: memref<128x128xbf16, #tpu.memory_space<vmem>>, %arg3: memref<1x128xf32, #tpu.memory_space<vmem>>, %arg4: memref<128x128xbf16, #tpu.memory_space<vmem>>, %arg5: memref<1x128xf32, #tpu.memory_space<vmem>>, %arg6: memref<16x128xf32, #tpu.memory_space<vmem>>) attributes {dimension_semantics = [#tpu.dimension_semantics<arbitrary>], iteration_bounds = array<i64: 1>, scalar_prefetch = 0 : i64, scratch_operands = 0 : i64, tpu.core_type = #tpu.core_type<tc>, window_params = [{pipeline_mode = #tpu.pipeline_mode<synchronous>, transform_indices = @transform_0, window_bounds = array<i64: 16, 128>}, {pipeline_mode = #tpu.pipeline_mode<synchronous>, transform_indices = @transform_1, window_bounds = array<i64: 128, 128>}, {pipeline_mode = #tpu.pipeline_mode<synchronous>, transform_indices = @transform_2, window_bounds = array<i64: 1, 128>}, {pipeline_mode = #tpu.pipeline_mode<synchronous>, transform_indices = @transform_3, window_bounds = array<i64: 128, 128>}, {pipeline_mode = #tpu.pipeline_mode<synchronous>, transform_indices = @transform_4, window_bounds = array<i64: 1, 128>}, {pipeline_mode = #tpu.pipeline_mode<synchronous>, transform_indices = @transform_5, window_bounds = array<i64: 16, 128>}]} {
    %c0 = arith.constant 0 : index
    %c0_0 = arith.constant 0 : index
    %0 = vector.load %arg1[%c0, %c0_0] : memref<16x128xbf16, #tpu.memory_space<vmem>>, vector<16x128xbf16>
    %c0_1 = arith.constant 0 : index
    %c0_2 = arith.constant 0 : index
    %1 = vector.load %arg2[%c0_1, %c0_2] : memref<128x128xbf16, #tpu.memory_space<vmem>>, vector<128x128xbf16>
    %cst = arith.constant dense<0.000000e+00> : vector<16x128xf32>
    %2 = tpu.matmul %0, %1, %cst {dimension_numbers = #tpu.dot_dimension_numbers<[1], [0], [0], [1], [0, 0, 1, 1], [], []>} : vector<16x128xbf16>, vector<128x128xbf16>, vector<16x128xf32> -> vector<16x128xf32>
    %c0_3 = arith.constant 0 : index
    %c0_4 = arith.constant 0 : index
    %3 = vector.load %arg3[%c0_3, %c0_4] : memref<1x128xf32, #tpu.memory_space<vmem>>, vector<1x128xf32>
    %4 = vector.broadcast %3 : vector<1x128xf32> to vector<16x128xf32>
    %5 = arith.addf %2, %4 : vector<16x128xf32>
    %cst_5 = arith.constant 0.000000e+00 : f32
    %6 = vector.broadcast %cst_5 : f32 to vector<16x128xf32>
    %7 = arith.maximumf %5, %6 : vector<16x128xf32>
    %8 = arith.truncf %7 : vector<16x128xf32> to vector<16x128xbf16>
    %c0_6 = arith.constant 0 : index
    %c0_7 = arith.constant 0 : index
    %9 = vector.load %arg4[%c0_6, %c0_7] : memref<128x128xbf16, #tpu.memory_space<vmem>>, vector<128x128xbf16>
    %cst_8 = arith.constant dense<0.000000e+00> : vector<16x128xf32>
    %10 = tpu.matmul %8, %9, %cst_8 {dimension_numbers = #tpu.dot_dimension_numbers<[1], [0], [0], [1], [0, 0, 1, 1], [], []>} : vector<16x128xbf16>, vector<128x128xbf16>, vector<16x128xf32> -> vector<16x128xf32>
    %c0_9 = arith.constant 0 : index
    %c0_10 = arith.constant 0 : index
    %11 = vector.load %arg5[%c0_9, %c0_10] : memref<1x128xf32, #tpu.memory_space<vmem>>, vector<1x128xf32>
    %12 = vector.broadcast %11 : vector<1x128xf32> to vector<16x128xf32>
    %13 = arith.addf %10, %12 : vector<16x128xf32>
    %c0_11 = arith.constant 0 : index
    %c0_12 = arith.constant 0 : index
    %14 = vector.load %arg6[%c0_11, %c0_12] : memref<16x128xf32, #tpu.memory_space<vmem>>, vector<16x128xf32>
    tpu.vector_store %arg6[%c0_11, %c0_12], %13 {strides = array<i32>} : memref<16x128xf32, #tpu.memory_space<vmem>>, vector<16x128xf32>,
    return
  }
  func.func @transform_0(%arg0: i32) -> (i32, i32) {
    %c0_i32 = arith.constant 0 : i32
    %c0_i32_0 = arith.constant 0 : i32
    %c0_i32_1 = arith.constant 0 : i32
    return %c0_i32, %c0_i32_0 : i32, i32
  }
  func.func @transform_1(%arg0: i32) -> (i32, i32) {
    %c0_i32 = arith.constant 0 : i32
    %c0_i32_0 = arith.constant 0 : i32
    %c0_i32_1 = arith.constant 0 : i32
    return %c0_i32, %c0_i32_0 : i32, i32
  }
  func.func @transform_2(%arg0: i32) -> (i32, i32) {
    %c0_i32 = arith.constant 0 : i32
    %c0_i32_0 = arith.constant 0 : i32
    %c0_i32_1 = arith.constant 0 : i32
    return %c0_i32, %c0_i32_0 : i32, i32
  }
  func.func @transform_3(%arg0: i32) -> (i32, i32) {
    %c0_i32 = arith.constant 0 : i32
    %c0_i32_0 = arith.constant 0 : i32
    %c0_i32_1 = arith.constant 0 : i32
    return %c0_i32, %c0_i32_0 : i32, i32
  }
  func.func @transform_4(%arg0: i32) -> (i32, i32) {
    %c0_i32 = arith.constant 0 : i32
    %c0_i32_0 = arith.constant 0 : i32
    %c0_i32_1 = arith.constant 0 : i32
    return %c0_i32, %c0_i32_0 : i32, i32
  }
  func.func @transform_5(%arg0: i32) -> (i32, i32) {
    %c0_i32 = arith.constant 0 : i32
    %c0_i32_0 = arith.constant 0 : i32
    %c0_i32_1 = arith.constant 0 : i32
    return %c0_i32, %c0_i32_0 : i32, i32
  }
}

module attributes {stable_mosaic.version = 11 : i64} {
  func.func @_lstm_recur_kernel(%arg0: i32, %arg1: memref<1x2x512xf32, #tpu.memory_space<vmem>>, %arg2: memref<128x512xbf16, #tpu.memory_space<vmem>>, %arg3: memref<1x2x128xbf16, #tpu.memory_space<vmem>>, %arg4: memref<2x128xf32, #tpu.memory_space<vmem>>, %arg5: memref<2x128xf32, #tpu.memory_space<vmem>>) attributes {dimension_semantics = [#tpu.dimension_semantics<arbitrary>], iteration_bounds = array<i64: 4>, scalar_prefetch = 0 : i64, scratch_operands = 2 : i64, tpu.core_type = #tpu.core_type<tc>, window_params = [{transform_indices = @transform_0, window_bounds = array<i64: 1, 2, 512>}, {pipeline_mode = #tpu.pipeline_mode<synchronous>, transform_indices = @transform_1, window_bounds = array<i64: 128, 512>}, {transform_indices = @transform_2, window_bounds = array<i64: 1, 2, 128>}]} {
    %c0_i32 = arith.constant 0 : i32
    %0 = arith.cmpi eq, %arg0, %c0_i32 : i32
    %1 = arith.extui %0 : i1 to i32
    %c0_i32_0 = arith.constant 0 : i32
    %2 = arith.cmpi ne, %1, %c0_i32_0 : i32
    scf.if %2 {
      %cst_19 = arith.constant 0.000000e+00 : f32
      %42 = vector.broadcast %cst_19 : f32 to vector<2x128xf32>
      %c0_20 = arith.constant 0 : index
      %c0_21 = arith.constant 0 : index
      %43 = vector.load %arg4[%c0_20, %c0_21] : memref<2x128xf32, #tpu.memory_space<vmem>>, vector<2x128xf32>
      tpu.vector_store %arg4[%c0_20, %c0_21], %42 {strides = array<i32>} : memref<2x128xf32, #tpu.memory_space<vmem>>, vector<2x128xf32>,
      %cst_22 = arith.constant 0.000000e+00 : f32
      %44 = vector.broadcast %cst_22 : f32 to vector<2x128xf32>
      %c0_23 = arith.constant 0 : index
      %c0_24 = arith.constant 0 : index
      %45 = vector.load %arg5[%c0_23, %c0_24] : memref<2x128xf32, #tpu.memory_space<vmem>>, vector<2x128xf32>
      tpu.vector_store %arg5[%c0_23, %c0_24], %44 {strides = array<i32>} : memref<2x128xf32, #tpu.memory_space<vmem>>, vector<2x128xf32>,
    } else {
    }
    %c0 = arith.constant 0 : index
    %c0_1 = arith.constant 0 : index
    %c0_2 = arith.constant 0 : index
    %3 = vector.load %arg1[%c0, %c0_1, %c0_2] : memref<1x2x512xf32, #tpu.memory_space<vmem>>, vector<1x2x512xf32>
    %4 = vector.shape_cast %3 : vector<1x2x512xf32> to vector<2x512xf32>
    %c0_3 = arith.constant 0 : index
    %c0_4 = arith.constant 0 : index
    %5 = vector.load %arg4[%c0_3, %c0_4] : memref<2x128xf32, #tpu.memory_space<vmem>>, vector<2x128xf32>
    %6 = arith.truncf %5 : vector<2x128xf32> to vector<2x128xbf16>
    %c0_5 = arith.constant 0 : index
    %c0_6 = arith.constant 0 : index
    %7 = vector.load %arg2[%c0_5, %c0_6] : memref<128x512xbf16, #tpu.memory_space<vmem>>, vector<128x512xbf16>
    %cst = arith.constant dense<0.000000e+00> : vector<2x512xf32>
    %8 = tpu.matmul %6, %7, %cst {dimension_numbers = #tpu.dot_dimension_numbers<[1], [0], [0], [1], [0, 0, 1, 1], [], []>} : vector<2x128xbf16>, vector<128x512xbf16>, vector<2x512xf32> -> vector<2x512xf32>
    %9 = arith.addf %4, %8 : vector<2x512xf32>
    %10 = vector.extract_strided_slice %9 {offsets = [0, 0], sizes = [2, 128], strides = [1, 1]} : vector<2x512xf32> to vector<2x128xf32>
    %11 = arith.negf %10 : vector<2x128xf32>
    %12 = math.exp %11 : vector<2x128xf32>
    %cst_7 = arith.constant 1.000000e+00 : f32
    %13 = vector.broadcast %cst_7 : f32 to vector<2x128xf32>
    %14 = arith.addf %13, %12 : vector<2x128xf32>
    %15 = arith.divf %13, %14 : vector<2x128xf32>
    %16 = vector.extract_strided_slice %9 {offsets = [0, 128], sizes = [2, 128], strides = [1, 1]} : vector<2x512xf32> to vector<2x128xf32>
    %17 = arith.negf %16 : vector<2x128xf32>
    %18 = math.exp %17 : vector<2x128xf32>
    %cst_8 = arith.constant 1.000000e+00 : f32
    %19 = vector.broadcast %cst_8 : f32 to vector<2x128xf32>
    %20 = arith.addf %19, %18 : vector<2x128xf32>
    %21 = arith.divf %19, %20 : vector<2x128xf32>
    %22 = vector.extract_strided_slice %9 {offsets = [0, 256], sizes = [2, 128], strides = [1, 1]} : vector<2x512xf32> to vector<2x128xf32>
    %23 = math.tanh %22 : vector<2x128xf32>
    %24 = vector.extract_strided_slice %9 {offsets = [0, 384], sizes = [2, 128], strides = [1, 1]} : vector<2x512xf32> to vector<2x128xf32>
    %25 = arith.negf %24 : vector<2x128xf32>
    %26 = math.exp %25 : vector<2x128xf32>
    %cst_9 = arith.constant 1.000000e+00 : f32
    %27 = vector.broadcast %cst_9 : f32 to vector<2x128xf32>
    %28 = arith.addf %27, %26 : vector<2x128xf32>
    %29 = arith.divf %27, %28 : vector<2x128xf32>
    %c0_10 = arith.constant 0 : index
    %c0_11 = arith.constant 0 : index
    %30 = vector.load %arg5[%c0_10, %c0_11] : memref<2x128xf32, #tpu.memory_space<vmem>>, vector<2x128xf32>
    %31 = arith.mulf %21, %30 : vector<2x128xf32>
    %32 = arith.mulf %15, %23 : vector<2x128xf32>
    %33 = arith.addf %31, %32 : vector<2x128xf32>
    %34 = math.tanh %33 : vector<2x128xf32>
    %35 = arith.mulf %29, %34 : vector<2x128xf32>
    %c0_12 = arith.constant 0 : index
    %c0_13 = arith.constant 0 : index
    %36 = vector.load %arg5[%c0_12, %c0_13] : memref<2x128xf32, #tpu.memory_space<vmem>>, vector<2x128xf32>
    tpu.vector_store %arg5[%c0_12, %c0_13], %33 {strides = array<i32>} : memref<2x128xf32, #tpu.memory_space<vmem>>, vector<2x128xf32>,
    %c0_14 = arith.constant 0 : index
    %c0_15 = arith.constant 0 : index
    %37 = vector.load %arg4[%c0_14, %c0_15] : memref<2x128xf32, #tpu.memory_space<vmem>>, vector<2x128xf32>
    tpu.vector_store %arg4[%c0_14, %c0_15], %35 {strides = array<i32>} : memref<2x128xf32, #tpu.memory_space<vmem>>, vector<2x128xf32>,
    %38 = arith.truncf %35 : vector<2x128xf32> to vector<2x128xbf16>
    %c0_16 = arith.constant 0 : index
    %c0_17 = arith.constant 0 : index
    %c0_18 = arith.constant 0 : index
    %39 = vector.load %arg3[%c0_16, %c0_17, %c0_18] : memref<1x2x128xbf16, #tpu.memory_space<vmem>>, vector<1x2x128xbf16>
    %40 = vector.shape_cast %39 : vector<1x2x128xbf16> to vector<2x128xbf16>
    %41 = vector.shape_cast %38 : vector<2x128xbf16> to vector<1x2x128xbf16>
    tpu.vector_store %arg3[%c0_16, %c0_17, %c0_18], %41 {strides = array<i32>} : memref<1x2x128xbf16, #tpu.memory_space<vmem>>, vector<1x2x128xbf16>,
    return
  }
  func.func @transform_0(%arg0: i32) -> (i32, i32, i32) {
    %c0_i32 = arith.constant 0 : i32
    %c0_i32_0 = arith.constant 0 : i32
    %c0_i32_1 = arith.constant 0 : i32
    return %arg0, %c0_i32, %c0_i32_0 : i32, i32, i32
  }
  func.func @transform_1(%arg0: i32) -> (i32, i32) {
    %c0_i32 = arith.constant 0 : i32
    %c0_i32_0 = arith.constant 0 : i32
    %c0_i32_1 = arith.constant 0 : i32
    return %c0_i32, %c0_i32_0 : i32, i32
  }
  func.func @transform_2(%arg0: i32) -> (i32, i32, i32) {
    %c0_i32 = arith.constant 0 : i32
    %c0_i32_0 = arith.constant 0 : i32
    %c0_i32_1 = arith.constant 0 : i32
    return %arg0, %c0_i32, %c0_i32_0 : i32, i32, i32
  }
}

</mosaic_0001>

<llo_original>
// kernel: forward.15
$region0: #{forward.15}
  #allocation0 [shape = 'u32[]', space=smem, size = 0x4, offset = 0x4, fixed_abs, tag = 'smem constant byte address 0x4 - core index']
  #allocation1 [shape = 'u32[144,128]{1,0:T(1,128)}', space=vmem, size = 0x12000, scoped, tag = 'internal scratch']
  #allocation2 [shape = 'f32[256,128]{1,0:T(8,128)}', space=vmem, size = 0x20000, scoped, tag = 'scratch operand']
  %s0 = inlined_call_operand.vmem [shape: bf16[8192,384], index: 0, kind: input, shape index: {}]
  %s1 = inlined_call_operand.vmem [shape: bf16[384,128], index: 1, kind: input, shape index: {}]
  %s2 = inlined_call_operand.vmem [shape: f32[1,128], index: 2, kind: input, shape index: {}]
  %s3 = inlined_call_operand.vmem [shape: f32[1,128], index: 3, kind: input, shape index: {}]
  %s4 = inlined_call_operand.vmem [shape: bf16[8192,128], index: 4, kind: output, shape index: {}]
  %s5 = sld [smem:[#allocation0]]
  $region57: #{forward.15} parent=0
    _
  %s7 = ssub.s32 1, %s5
  %s8 = scalar_select 0, %s7, %s5
  loop: start=0, step=1, limit=34
  $region2: #{forward.15} parent=0 // loop_pre_header
    _
  $region3: #{forward.15} parent=0 // loop_header
    %s10 = sphi 0, %s14
    %p11 = scmp.ge.s32.totalorder %s10, 34
    %s17 = sphi 0, %s36
    %s18 = sphi 0, %s32
    %s19 = sphi 0, %s28
    %s20 = sphi 0, %s17
    %s21 = sphi 0, %s18
    %s22 = sphi 0, %s19
    %s23 = sphi 0, %s20
    %s24 = sphi 0, %s21
    %s25 = sphi 0, %s22
    %s41 = sphi 0, %s43
    %s44 = sphi 0, %s41
    %s45 = sphi 0, %s44
    %s61 = sphi 0, %s45
    %s69 = sphi 0, %s71
    %s72 = sphi 0, %s69
    %s73 = sphi 0, %s72
    %s89 = sphi 0, %s73
    %s95 = sphi 0, %s97
    %s98 = sphi 0, %s95
    %s99 = sphi 0, %s98
    %s115 = sphi 0, %s99
    %s121 = sphi 0, %s123
    %s124 = sphi 0, %s121
    %s125 = sphi 0, %s124
    %s141 = sphi 0, %s125
    %s149 = sphi 0, %s151
    %s152 = sphi 0, %s149
    %s153 = sphi 0, %s152
    %s169 = sphi 0, %s153
  $region4: #{forward.15} parent=0 // loop_header_branch
    %13 = sbr.rel (%p11) target = $region8
  $region5: #{forward.15} parent=0 // loop_body
    %s15 = ssub.s32 %s10, 1
    %s16 = ssub.s32 %s10, 2
    %s26 = sadd.s32 1, %s19
    %p27 = scmp.ge.s32.totalorder %s26, 1
    %s28 = scalar_select %p27, 0, %s26
    %s29 = sadd.s32 1, %s18
    %s30 = scalar_select %p27, %s29, %s18
    %p31 = scmp.ge.s32.totalorder %s30, 1
    %s32 = scalar_select %p31, 0, %s30
    %s33 = sadd.s32 1, %s17
    %s34 = scalar_select %p31, %s33, %s17
    %p35 = scmp.ge.s32.totalorder %s34, 32
    %s36 = scalar_select %p35, 0, %s34
    %s37 = ssub.s32 %s17, %s36
    %s38 = ssub.s32 %s19, %s28
    %s39 = sor.u32 %s37, %s38
    %p40 = scmp.eq.s32.totalorder %s39, 0
    %s42 = sadd.s32 %s41, 1
    %s43 = scalar_select %p40, %s41, %s42
    %p46 = pneg %p40
    %p47 = scmp.eq.s32.totalorder %s10, 31
    %p48 = por %p46, %p47
    %p49 = scmp.ne.s32.totalorder %s41, %s44
    %p50 = scmp.eq.s32.totalorder %s10, 0
    %p51 = por %p49, %p50
    %p52 = scmp.ne.s32.totalorder %s41, %s44
    %p53 = scmp.eq.s32.totalorder %s15, 31
    %p54 = por %p52, %p53
    %p55 = scmp.ne.s32.totalorder %s44, %s45
    %p56 = scmp.eq.s32.totalorder %s15, 0
    %p57 = por %p55, %p56
    %p58 = scmp.ne.s32.totalorder %s44, %s45
    %p59 = scmp.eq.s32.totalorder %s16, 31
    %p60 = por %p58, %p59
    %p62 = scmp.ne.s32.totalorder %s45, %s61
    %p63 = scmp.eq.s32.totalorder %s16, 0
    %p64 = por %p62, %p63
    %s65 = ssub.s32 %s19, %s28
    %s66 = ssub.s32 %s18, %s32
    %s67 = sor.u32 %s65, %s66
    %p68 = scmp.eq.s32.totalorder %s67, 0
    %s70 = sadd.s32 %s69, 1
    %s71 = scalar_select %p68, %s69, %s70
    %p74 = pneg %p68
    %p75 = scmp.eq.s32.totalorder %s10, 31
    %p76 = por %p74, %p75
    %p77 = scmp.ne.s32.totalorder %s69, %s72
    %p78 = scmp.eq.s32.totalorder %s10, 0
    %p79 = por %p77, %p78
    %p80 = scmp.ne.s32.totalorder %s69, %s72
    %p81 = scmp.eq.s32.totalorder %s15, 31
    %p82 = por %p80, %p81
    %p83 = scmp.ne.s32.totalorder %s72, %s73
    %p84 = scmp.eq.s32.totalorder %s15, 0
    %p85 = por %p83, %p84
    %p86 = scmp.ne.s32.totalorder %s72, %s73
    %p87 = scmp.eq.s32.totalorder %s16, 31
    %p88 = por %p86, %p87
    %p90 = scmp.ne.s32.totalorder %s73, %s89
    %p91 = scmp.eq.s32.totalorder %s16, 0
    %p92 = por %p90, %p91
    %s93 = ssub.s32 %s18, %s32
    %p94 = scmp.eq.s32.totalorder %s93, 0
    %s96 = sadd.s32 %s95, 1
    %s97 = scalar_select %p94, %s95, %s96
    %p100 = pneg %p94
    %p101 = scmp.eq.s32.totalorder %s10, 31
    %p102 = por %p100, %p101
    %p103 = scmp.ne.s32.totalorder %s95, %s98
    %p104 = scmp.eq.s32.totalorder %s10, 0
    %p105 = por %p103, %p104
    %p106 = scmp.ne.s32.totalorder %s95, %s98
    %p107 = scmp.eq.s32.totalorder %s15, 31
    %p108 = por %p106, %p107
    %p109 = scmp.ne.s32.totalorder %s98, %s99
    %p110 = scmp.eq.s32.totalorder %s15, 0
    %p111 = por %p109, %p110
    %p112 = scmp.ne.s32.totalorder %s98, %s99
    %p113 = scmp.eq.s32.totalorder %s16, 31
    %p114 = por %p112, %p113
    %p116 = scmp.ne.s32.totalorder %s99, %s115
    %p117 = scmp.eq.s32.totalorder %s16, 0
    %p118 = por %p116, %p117
    %s119 = ssub.s32 %s18, %s32
    %p120 = scmp.eq.s32.totalorder %s119, 0
    %s122 = sadd.s32 %s121, 1
    %s123 = scalar_select %p120, %s121, %s122
    %p126 = pneg %p120
    %p127 = scmp.eq.s32.totalorder %s10, 31
    %p128 = por %p126, %p127
    %p129 = scmp.ne.s32.totalorder %s121, %s124
    %p130 = scmp.eq.s32.totalorder %s10, 0
    %p131 = por %p129, %p130
    %p132 = scmp.ne.s32.totalorder %s121, %s124
    %p133 = scmp.eq.s32.totalorder %s15, 31
    %p134 = por %p132, %p133
    %p135 = scmp.ne.s32.totalorder %s124, %s125
    %p136 = scmp.eq.s32.totalorder %s15, 0
    %p137 = por %p135, %p136
    %p138 = scmp.ne.s32.totalorder %s124, %s125
    %p139 = scmp.eq.s32.totalorder %s16, 31
    %p140 = por %p138, %p139
    %p142 = scmp.ne.s32.totalorder %s125, %s141
    %p143 = scmp.eq.s32.totalorder %s16, 0
    %p144 = por %p142, %p143
    %s145 = ssub.s32 %s17, %s36
    %s146 = ssub.s32 %s18, %s32
    %s147 = sor.u32 %s145, %s146
    %p148 = scmp.eq.s32.totalorder %s147, 0
    %s150 = sadd.s32 %s149, 1
    %s151 = scalar_select %p148, %s149, %s150
    %p154 = pneg %p148
    %p155 = scmp.eq.s32.totalorder %s10, 31
    %p156 = por %p154, %p155
    %p157 = scmp.ne.s32.totalorder %s149, %s152
    %p158 = scmp.eq.s32.totalorder %s10, 0
    %p159 = por %p157, %p158
    %p160 = scmp.ne.s32.totalorder %s149, %s152
    %p161 = scmp.eq.s32.totalorder %s15, 31
    %p162 = por %p160, %p161
    %p163 = scmp.ne.s32.totalorder %s152, %s153
    %p164 = scmp.eq.s32.totalorder %s15, 0
    %p165 = por %p163, %p164
    %p166 = scmp.ne.s32.totalorder %s152, %s153
    %p167 = scmp.eq.s32.totalorder %s16, 31
    %p168 = por %p166, %p167
    %p170 = scmp.ne.s32.totalorder %s153, %s169
    %p171 = scmp.eq.s32.totalorder %s16, 0
    %p172 = por %p170, %p171
    %p173 = scmp.le.s32.totalorder 1, %s10
    %p174 = scmp.lt.s32.totalorder %s10, 33
    %p175 = pnand %p173, %p174
    %p176 = pneg %p175
    // Predicated region
    $region9: #{forward.15} parent=5 // pred_check
      _
    $region10: #{forward.15} parent=5 // pred_check_branch
      %178 = sbr.rel (%p175) target = $region12
    $region11: #{forward.15} parent=5 // pred_region
      %s179 = ssub.s32 %s10, 1
      // Predicated region
      $region13: #{forward.15} parent=11 // pred_check
        %p180 = pneg %p85
      $region14: #{forward.15} parent=11 // pred_check_branch
        %182 = sbr.rel (%p180) target = $region16
      $region15: #{forward.15} parent=11 // pred_region
        %s183 = smul.u32 48, %s22
        %p184 = scmp.lt.s32.totalorder %s183, 47
        %s185 = scalar_select %p184, %s183, 47
        %p186 = scmp.lt.s32.totalorder %s21, 0
        %s187 = scalar_select %p186, %s21, 0
        %s188 = sadd.s32 %s187, %s185
        %s189 = smul.addr %s188, 4
        %s190 = scalar_lea.vmem %s1, %s189
        %s191 = smul.u32 48, %s22
      $region16: #{forward.15} parent=11 // pred_fallthru
        _
      // Predicated region
      $region17: #{forward.15} parent=11 // pred_check
        %p192 = pneg %p111
      $region18: #{forward.15} parent=11 // pred_check_branch
        %194 = sbr.rel (%p192) target = $region20
      $region19: #{forward.15} parent=11 // pred_region
        %p195 = scmp.lt.s32.totalorder %s21, 0
        %s196 = scalar_select %p195, %s21, 0
        %s197 = scalar_lea.vmem %s2, %s196
      $region20: #{forward.15} parent=11 // pred_fallthru
        _
      // Predicated region
      $region21: #{forward.15} parent=11 // pred_check
        %p198 = pneg %p137
      $region22: #{forward.15} parent=11 // pred_check_branch
        %200 = sbr.rel (%p198) target = $region24
      $region23: #{forward.15} parent=11 // pred_region
        %p201 = scmp.lt.s32.totalorder %s21, 0
        %s202 = scalar_select %p201, %s21, 0
        %s203 = scalar_lea.vmem %s3, %s202
      $region24: #{forward.15} parent=11 // pred_fallthru
        _
    $region12: #{forward.15} parent=5 // pred_fallthru
      _
    %p204 = scmp.lt.s32.totalorder %s10, 32
    // Predicated region
    $region25: #{forward.15} parent=5 // pred_check
      %p205 = pneg %p204
    $region26: #{forward.15} parent=5 // pred_check_branch
      %207 = sbr.rel (%p205) target = $region28
    $region27: #{forward.15} parent=5 // pred_region
      // Predicated region
      $region29: #{forward.15} parent=27 // pred_check
        %p208 = pneg %p51
      $region30: #{forward.15} parent=27 // pred_check_branch
        %210 = sbr.rel (%p208) target = $region32
      $region31: #{forward.15} parent=27 // pred_region
        %s211 = smul.u32 32, %s17
        %s212 = smul.u32 3, %s19
        %p213 = scmp.lt.s32.totalorder %s211, 1023
        %s214 = scalar_select %p213, %s211, 1023
        %p215 = scmp.lt.s32.totalorder %s212, 2
        %s216 = scalar_select %p215, %s212, 2
        %s217 = smul.addr %s214, 3
        %s218 = sadd.s32 %s216, %s217
        %s219 = smul.addr %s218, 4
        %s220 = scalar_lea.vmem %s0, %s219
        %s221 = smul.u32 32, %s17
        %s222 = smul.u32 3, %s19
      $region32: #{forward.15} parent=27 // pred_fallthru
        _
    $region28: #{forward.15} parent=5 // pred_fallthru
      _
    %p223 = scmp.le.s32.totalorder 1, %s10
    %p224 = scmp.lt.s32.totalorder %s10, 33
    %p225 = pnand %p223, %p224
    %p226 = pneg %p225
    // Predicated region
    $region33: #{forward.15} parent=5 // pred_check
      _
    $region34: #{forward.15} parent=5 // pred_check_branch
      %228 = sbr.rel (%p225) target = $region36
    $region35: #{forward.15} parent=5 // pred_region
      %s229 = ssub.s32 %s10, 1
      %s230 = smul.u32 32, %s20
      %s231 = smul.u32 3, %s22
      %p232 = scmp.lt.s32.totalorder %s230, 1023
      %s233 = scalar_select %p232, %s230, 1023
      %p234 = scmp.lt.s32.totalorder %s231, 2
      %s235 = scalar_select %p234, %s231, 2
      %s236 = smul.addr %s233, 3
      %s237 = sadd.s32 %s235, %s236
      %s238 = smul.addr %s237, 4
      %s239 = scalar_lea.vmem %s0, %s238
      %p240 = pneg %p57
      %p241 = pneg %p54
      %s242 = smul.u32 48, %s22
      %p243 = scmp.lt.s32.totalorder %s242, 47
      %s244 = scalar_select %p243, %s242, 47
      %p245 = scmp.lt.s32.totalorder %s21, 0
      %s246 = scalar_select %p245, %s21, 0
      %s247 = sadd.s32 %s246, %s244
      %s248 = smul.addr %s247, 4
      %s249 = scalar_lea.vmem %s1, %s248
      %p250 = pneg %p85
      %p251 = pneg %p82
      %p252 = scmp.lt.s32.totalorder %s21, 0
      %s253 = scalar_select %p252, %s21, 0
      %s254 = scalar_lea.vmem %s2, %s253
      %p255 = pneg %p111
      %p256 = pneg %p108
      %p257 = scmp.lt.s32.totalorder %s21, 0
      %s258 = scalar_select %p257, %s21, 0
      %s259 = scalar_lea.vmem %s3, %s258
      %p260 = pneg %p137
      %p261 = pneg %p134
      %p262 = pneg %p165
      %p263 = pneg %p162
      %s264 = smul.u32 32, %s20
      %p265 = scmp.lt.s32.totalorder %s264, 1023
      %s266 = scalar_select %p265, %s264, 1023
      %p267 = scmp.lt.s32.totalorder %s21, 0
      %s268 = scalar_select %p267, %s21, 0
      %s269 = sadd.s32 %s268, %s266
      %s270 = smul.addr %s269, 4
      %s271 = scalar_lea.vmem %s4, %s270
      %s272 = smul.u32 32, %s20
      %s273 = smul.u32 3, %s22
      %p274 = scmp.lt.s32.totalorder %s272, 1023
      %s275 = scalar_select %p274, %s272, 1023
      %p276 = scmp.lt.s32.totalorder %s273, 2
      %s277 = scalar_select %p276, %s273, 2
      %s278 = smul.addr %s275, 3
      %s279 = sadd.s32 %s277, %s278
      %s280 = smul.addr %s279, 4
      %s281 = scalar_lea.vmem %s0, %s280
      %s282 = smul.u32 32, %s20
      %s283 = smul.u32 3, %s22
      %s284 = smul.u32 48, %s22
      %p285 = scmp.lt.s32.totalorder %s284, 47
      %s286 = scalar_select %p285, %s284, 47
      %p287 = scmp.lt.s32.totalorder %s21, 0
      %s288 = scalar_select %p287, %s21, 0
      %s289 = sadd.s32 %s288, %s286
      %s290 = smul.addr %s289, 4
      %s291 = scalar_lea.vmem %s1, %s290
      %s292 = smul.u32 48, %s22
      %p293 = scmp.lt.s32.totalorder %s21, 0
      %s294 = scalar_select %p293, %s21, 0
      %s295 = scalar_lea.vmem %s2, %s294
      %p296 = scmp.lt.s32.totalorder %s21, 0
      %s297 = scalar_select %p296, %s21, 0
      %s298 = scalar_lea.vmem %s3, %s297
      %s299 = smul.u32 32, %s20
      %p300 = scmp.lt.s32.totalorder %s299, 1023
      %s301 = scalar_select %p300, %s299, 1023
      %p302 = scmp.lt.s32.totalorder %s21, 0
      %s303 = scalar_select %p302, %s21, 0
      %s304 = sadd.s32 %s303, %s301
      %s305 = smul.addr %s304, 4
      %s306 = scalar_lea.vmem %s4, %s305
      %s307 = smul.u32 32, %s20
      %p309 = scmp.eq.s32.totalorder %s22, 0
      // Predicated region
      $region37: #{forward.15} parent=35 // pred_check
        %p310 = pneg %p309
      $region38: #{forward.15} parent=35 // pred_check_branch
        %312 = sbr.rel (%p310) target = $region40
      $region39: #{forward.15} parent=35 // pred_region
        %313 = vst [vmem:[#allocation2] sm:$0xff] 0.0
        %314 = vst [vmem:[#allocation2 + $0x8] sm:$0xff] 0.0
        %315 = vst [vmem:[#allocation2 + $0x10] sm:$0xff] 0.0
        %316 = vst [vmem:[#allocation2 + $0x18] sm:$0xff] 0.0
        %317 = vst [vmem:[#allocation2 + $0x20] sm:$0xff] 0.0
        %318 = vst [vmem:[#allocation2 + $0x28] sm:$0xff] 0.0
        %319 = vst [vmem:[#allocation2 + $0x30] sm:$0xff] 0.0
        %320 = vst [vmem:[#allocation2 + $0x38] sm:$0xff] 0.0
        %321 = vst [vmem:[#allocation2 + $0x40] sm:$0xff] 0.0
        %322 = vst [vmem:[#allocation2 + $0x48] sm:$0xff] 0.0
        %323 = vst [vmem:[#allocation2 + $0x50] sm:$0xff] 0.0
        %324 = vst [vmem:[#allocation2 + $0x58] sm:$0xff] 0.0
        %325 = vst [vmem:[#allocation2 + $0x60] sm:$0xff] 0.0
        %326 = vst [vmem:[#allocation2 + $0x68] sm:$0xff] 0.0
        %327 = vst [vmem:[#allocation2 + $0x70] sm:$0xff] 0.0
        %328 = vst [vmem:[#allocation2 + $0x78] sm:$0xff] 0.0
        %329 = vst [vmem:[#allocation2 + $0x80] sm:$0xff] 0.0
        %330 = vst [vmem:[#allocation2 + $0x88] sm:$0xff] 0.0
        %331 = vst [vmem:[#allocation2 + $0x90] sm:$0xff] 0.0
        %332 = vst [vmem:[#allocation2 + $0x98] sm:$0xff] 0.0
        %333 = vst [vmem:[#allocation2 + $0xa0] sm:$0xff] 0.0
        %334 = vst [vmem:[#allocation2 + $0xa8] sm:$0xff] 0.0
        %335 = vst [vmem:[#allocation2 + $0xb0] sm:$0xff] 0.0
        %336 = vst [vmem:[#allocation2 + $0xb8] sm:$0xff] 0.0
        %337 = vst [vmem:[#allocation2 + $0xc0] sm:$0xff] 0.0
        %338 = vst [vmem:[#allocation2 + $0xc8] sm:$0xff] 0.0
        %339 = vst [vmem:[#allocation2 + $0xd0] sm:$0xff] 0.0
        %340 = vst [vmem:[#allocation2 + $0xd8] sm:$0xff] 0.0
        %341 = vst [vmem:[#allocation2 + $0xe0] sm:$0xff] 0.0
        %342 = vst [vmem:[#allocation2 + $0xe8] sm:$0xff] 0.0
        %343 = vst [vmem:[#allocation2 + $0xf0] sm:$0xff] 0.0
        %344 = vst [vmem:[#allocation2 + $0xf8] sm:$0xff] 0.0
      $region40: #{forward.15} parent=35 // pred_fallthru
        _
      %v345 = vld [vmem:[#allocation2] sm:$0xff]
      %v346 = vld [vmem:[#allocation2 + $0x8] sm:$0xff]
      %v347 = vld [vmem:[#allocation2 + $0x10] sm:$0xff]
      %v348 = vld [vmem:[#allocation2 + $0x18] sm:$0xff]
      %v349 = vld [vmem:[#allocation2 + $0x20] sm:$0xff]
      %v350 = vld [vmem:[#allocation2 + $0x28] sm:$0xff]
      %v351 = vld [vmem:[#allocation2 + $0x30] sm:$0xff]
      %v352 = vld [vmem:[#allocation2 + $0x38] sm:$0xff]
      %v353 = vld [vmem:[#allocation2 + $0x40] sm:$0xff]
      %v354 = vld [vmem:[#allocation2 + $0x48] sm:$0xff]
      %v355 = vld [vmem:[#allocation2 + $0x50] sm:$0xff]
      %v356 = vld [vmem:[#allocation2 + $0x58] sm:$0xff]
      %v357 = vld [vmem:[#allocation2 + $0x60] sm:$0xff]
      %v358 = vld [vmem:[#allocation2 + $0x68] sm:$0xff]
      %v359 = vld [vmem:[#allocation2 + $0x70] sm:$0xff]
      %v360 = vld [vmem:[#allocation2 + $0x78] sm:$0xff]
      %v361 = vld [vmem:[#allocation2 + $0x80] sm:$0xff]
      %v362 = vld [vmem:[#allocation2 + $0x88] sm:$0xff]
      %v363 = vld [vmem:[#allocation2 + $0x90] sm:$0xff]
      %v364 = vld [vmem:[#allocation2 + $0x98] sm:$0xff]
      %v365 = vld [vmem:[#allocation2 + $0xa0] sm:$0xff]
      %v366 = vld [vmem:[#allocation2 + $0xa8] sm:$0xff]
      %v367 = vld [vmem:[#allocation2 + $0xb0] sm:$0xff]
      %v368 = vld [vmem:[#allocation2 + $0xb8] sm:$0xff]
      %v369 = vld [vmem:[#allocation2 + $0xc0] sm:$0xff]
      %v370 = vld [vmem:[#allocation2 + $0xc8] sm:$0xff]
      %v371 = vld [vmem:[#allocation2 + $0xd0] sm:$0xff]
      %v372 = vld [vmem:[#allocation2 + $0xd8] sm:$0xff]
      %v373 = vld [vmem:[#allocation2 + $0xe0] sm:$0xff]
      %v374 = vld [vmem:[#allocation2 + $0xe8] sm:$0xff]
      %v375 = vld [vmem:[#allocation2 + $0xf0] sm:$0xff]
      %v376 = vld [vmem:[#allocation2 + $0xf8] sm:$0xff]
      %v377 = vld [vmem:[%s281] sm:$0xff]
      %v378 = vld [vmem:[%s281 + $0x8] sm:$0xf]
      %v379 = vld [vmem:[%s281 + $0xc] sm:$0xff]
      %v380 = vld [vmem:[%s281 + $0x14] sm:$0xf]
      %v381 = vld [vmem:[%s281 + $0x18] sm:$0xff]
      %v382 = vld [vmem:[%s281 + $0x20] sm:$0xf]
      %v383 = vld [vmem:[%s281 + $0x24] sm:$0xff]
      %v384 = vld [vmem:[%s281 + $0x2c] sm:$0xf]
      %v385 = vld [vmem:[%s281 + $0x30] sm:$0xff]
      %v386 = vld [vmem:[%s281 + $0x38] sm:$0xf]
      %v387 = vld [vmem:[%s281 + $0x3c] sm:$0xff]
      %v388 = vld [vmem:[%s281 + $0x44] sm:$0xf]
      %v389 = vld [vmem:[%s281 + $0x48] sm:$0xff]
      %v390 = vld [vmem:[%s281 + $0x50] sm:$0xf]
      %v391 = vld [vmem:[%s281 + $0x54] sm:$0xff]
      %v392 = vld [vmem:[%s281 + $0x5c] sm:$0xf]
      %v393 = vld [vmem:[%s281 + $0x60] sm:$0xff]
      %v394 = vld [vmem:[%s281 + $0x68] sm:$0xf]
      %v395 = vld [vmem:[%s281 + $0x6c] sm:$0xff]
      %v396 = vld [vmem:[%s281 + $0x74] sm:$0xf]
      %v397 = vld [vmem:[%s281 + $0x78] sm:$0xff]
      %v398 = vld [vmem:[%s281 + $0x80] sm:$0xf]
      %v399 = vld [vmem:[%s281 + $0x84] sm:$0xff]
      %v400 = vld [vmem:[%s281 + $0x8c] sm:$0xf]
      %v401 = vld [vmem:[%s281 + $0x90] sm:$0xff]
      %v402 = vld [vmem:[%s281 + $0x98] sm:$0xf]
      %v403 = vld [vmem:[%s281 + $0x9c] sm:$0xff]
      %v404 = vld [vmem:[%s281 + $0xa4] sm:$0xf]
      %v405 = vld [vmem:[%s281 + $0xa8] sm:$0xff]
      %v406 = vld [vmem:[%s281 + $0xb0] sm:$0xf]
      %v407 = vld [vmem:[%s281 + $0xb4] sm:$0xff]
      %v408 = vld [vmem:[%s281 + $0xbc] sm:$0xf]
      %v409 = vld [vmem:[%s281 + $0xc0] sm:$0xff]
      %v410 = vld [vmem:[%s281 + $0xc8] sm:$0xf]
      %v411 = vld [vmem:[%s281 + $0xcc] sm:$0xff]
      %v412 = vld [vmem:[%s281 + $0xd4] sm:$0xf]
      %v413 = vld [vmem:[%s281 + $0xd8] sm:$0xff]
      %v414 = vld [vmem:[%s281 + $0xe0] sm:$0xf]
      %v415 = vld [vmem:[%s281 + $0xe4] sm:$0xff]
      %v416 = vld [vmem:[%s281 + $0xec] sm:$0xf]
      %v417 = vld [vmem:[%s281 + $0xf0] sm:$0xff]
      %v418 = vld [vmem:[%s281 + $0xf8] sm:$0xf]
      %v419 = vld [vmem:[%s281 + $0xfc] sm:$0xff]
      %v420 = vld [vmem:[%s281 + $0x104] sm:$0xf]
      %v421 = vld [vmem:[%s281 + $0x108] sm:$0xff]
      %v422 = vld [vmem:[%s281 + $0x110] sm:$0xf]
      %v423 = vld [vmem:[%s281 + $0x114] sm:$0xff]
      %v424 = vld [vmem:[%s281 + $0x11c] sm:$0xf]
      %v425 = vld [vmem:[%s281 + $0x120] sm:$0xff]
      %v426 = vld [vmem:[%s281 + $0x128] sm:$0xf]
      %v427 = vld [vmem:[%s281 + $0x12c] sm:$0xff]
      %v428 = vld [vmem:[%s281 + $0x134] sm:$0xf]
      %v429 = vld [vmem:[%s281 + $0x138] sm:$0xff]
      %v430 = vld [vmem:[%s281 + $0x140] sm:$0xf]
      %v431 = vld [vmem:[%s281 + $0x144] sm:$0xff]
      %v432 = vld [vmem:[%s281 + $0x14c] sm:$0xf]
      %v433 = vld [vmem:[%s281 + $0x150] sm:$0xff]
      %v434 = vld [vmem:[%s281 + $0x158] sm:$0xf]
      %v435 = vld [vmem:[%s281 + $0x15c] sm:$0xff]
      %v436 = vld [vmem:[%s281 + $0x164] sm:$0xf]
      %v437 = vld [vmem:[%s281 + $0x168] sm:$0xff]
      %v438 = vld [vmem:[%s281 + $0x170] sm:$0xf]
      %v439 = vld [vmem:[%s281 + $0x174] sm:$0xff]
      %v440 = vld [vmem:[%s281 + $0x17c] sm:$0xf]
      %v441 = vld [vmem:[%s291] sm:$0xf]
      %v442 = vld [vmem:[%s291 + $0x4] sm:$0xf]
      %v443 = vld [vmem:[%s291 + $0x8] sm:$0xf]
      %v444 = vld [vmem:[%s291 + $0xc] sm:$0xf]
      %v445 = vld [vmem:[%s291 + $0x10] sm:$0xf]
      %v446 = vld [vmem:[%s291 + $0x14] sm:$0xf]
      %v447 = vld [vmem:[%s291 + $0x18] sm:$0xf]
      %v448 = vld [vmem:[%s291 + $0x1c] sm:$0xf]
      %v449 = vld [vmem:[%s291 + $0x20] sm:$0xf]
      %v450 = vld [vmem:[%s291 + $0x24] sm:$0xf]
      %v451 = vld [vmem:[%s291 + $0x28] sm:$0xf]
      %v452 = vld [vmem:[%s291 + $0x2c] sm:$0xf]
      %v453 = vld [vmem:[%s291 + $0x30] sm:$0xf]
      %v454 = vld [vmem:[%s291 + $0x34] sm:$0xf]
      %v455 = vld [vmem:[%s291 + $0x38] sm:$0xf]
      %v456 = vld [vmem:[%s291 + $0x3c] sm:$0xf]
      %v457 = vld [vmem:[%s291 + $0x40] sm:$0xf]
      %v458 = vld [vmem:[%s291 + $0x44] sm:$0xf]
      %v459 = vld [vmem:[%s291 + $0x48] sm:$0xf]
      %v460 = vld [vmem:[%s291 + $0x4c] sm:$0xf]
      %v461 = vld [vmem:[%s291 + $0x50] sm:$0xf]
      %v462 = vld [vmem:[%s291 + $0x54] sm:$0xf]
      %v463 = vld [vmem:[%s291 + $0x58] sm:$0xf]
      %v464 = vld [vmem:[%s291 + $0x5c] sm:$0xf]
      %v465 = vld [vmem:[%s291 + $0x60] sm:$0xf]
      %v466 = vld [vmem:[%s291 + $0x64] sm:$0xf]
      %v467 = vld [vmem:[%s291 + $0x68] sm:$0xf]
      %v468 = vld [vmem:[%s291 + $0x6c] sm:$0xf]
      %v469 = vld [vmem:[%s291 + $0x70] sm:$0xf]
      %v470 = vld [vmem:[%s291 + $0x74] sm:$0xf]
      %v471 = vld [vmem:[%s291 + $0x78] sm:$0xf]
      %v472 = vld [vmem:[%s291 + $0x7c] sm:$0xf]
      %v473 = vld [vmem:[%s291 + $0x80] sm:$0xf]
      %v474 = vld [vmem:[%s291 + $0x84] sm:$0xf]
      %v475 = vld [vmem:[%s291 + $0x88] sm:$0xf]
      %v476 = vld [vmem:[%s291 + $0x8c] sm:$0xf]
      %v477 = vld [vmem:[%s291 + $0x90] sm:$0xf]
      %v478 = vld [vmem:[%s291 + $0x94] sm:$0xf]
      %v479 = vld [vmem:[%s291 + $0x98] sm:$0xf]
      %v480 = vld [vmem:[%s291 + $0x9c] sm:$0xf]
      %v481 = vld [vmem:[%s291 + $0xa0] sm:$0xf]
      %v482 = vld [vmem:[%s291 + $0xa4] sm:$0xf]
      %v483 = vld [vmem:[%s291 + $0xa8] sm:$0xf]
      %v484 = vld [vmem:[%s291 + $0xac] sm:$0xf]
      %v485 = vld [vmem:[%s291 + $0xb0] sm:$0xf]
      %v486 = vld [vmem:[%s291 + $0xb4] sm:$0xf]
      %v487 = vld [vmem:[%s291 + $0xb8] sm:$0xf]
      %v488 = vld [vmem:[%s291 + $0xbc] sm:$0xf]
      %v553 = vunpack.c.l.b16 %v377
      %v554 = vunpack.c.h.b16 %v377
      %v555 = vunpack.c.l.b16 %v378
      %v556 = vunpack.c.l.b16 %v379
      %v557 = vunpack.c.h.b16 %v379
      %v558 = vunpack.c.l.b16 %v380
      %v559 = vunpack.c.l.b16 %v381
      %v560 = vunpack.c.h.b16 %v381
      %v561 = vunpack.c.l.b16 %v382
      %v562 = vunpack.c.l.b16 %v383
      %v563 = vunpack.c.h.b16 %v383
      %v564 = vunpack.c.l.b16 %v384
      %v565 = vunpack.c.l.b16 %v385
      %v566 = vunpack.c.h.b16 %v385
      %v567 = vunpack.c.l.b16 %v386
      %v568 = vunpack.c.l.b16 %v387
      %v569 = vunpack.c.h.b16 %v387
      %v570 = vunpack.c.l.b16 %v388
      %v571 = vunpack.c.l.b16 %v389
      %v572 = vunpack.c.h.b16 %v389
      %v573 = vunpack.c.l.b16 %v390
      %v574 = vunpack.c.l.b16 %v391
      %v575 = vunpack.c.h.b16 %v391
      %v576 = vunpack.c.l.b16 %v392
      %v577 = vunpack.c.l.b16 %v393
      %v578 = vunpack.c.h.b16 %v393
      %v579 = vunpack.c.l.b16 %v394
      %v580 = vunpack.c.l.b16 %v395
      %v581 = vunpack.c.h.b16 %v395
      %v582 = vunpack.c.l.b16 %v396
      %v583 = vunpack.c.l.b16 %v397
      %v584 = vunpack.c.h.b16 %v397
      %v585 = vunpack.c.l.b16 %v398
      %v586 = vunpack.c.l.b16 %v399
      %v587 = vunpack.c.h.b16 %v399
      %v588 = vunpack.c.l.b16 %v400
      %v589 = vunpack.c.l.b16 %v401
      %v590 = vunpack.c.h.b16 %v401
      %v591 = vunpack.c.l.b16 %v402
      %v592 = vunpack.c.l.b16 %v403
      %v593 = vunpack.c.h.b16 %v403
      %v594 = vunpack.c.l.b16 %v404
      %v595 = vunpack.c.l.b16 %v405
      %v596 = vunpack.c.h.b16 %v405
      %v597 = vunpack.c.l.b16 %v406
      %v598 = vunpack.c.l.b16 %v407
      %v599 = vunpack.c.h.b16 %v407
      %v600 = vunpack.c.l.b16 %v408
      %v601 = vunpack.c.l.b16 %v409
      %v602 = vunpack.c.h.b16 %v409
      %v603 = vunpack.c.l.b16 %v410
      %v604 = vunpack.c.l.b16 %v411
      %v605 = vunpack.c.h.b16 %v411
      %v606 = vunpack.c.l.b16 %v412
      %v607 = vunpack.c.l.b16 %v413
      %v608 = vunpack.c.h.b16 %v413
      %v609 = vunpack.c.l.b16 %v414
      %v610 = vunpack.c.l.b16 %v415
      %v611 = vunpack.c.h.b16 %v415
      %v612 = vunpack.c.l.b16 %v416
      %v613 = vunpack.c.l.b16 %v417
      %v614 = vunpack.c.h.b16 %v417
      %v615 = vunpack.c.l.b16 %v418
      %v616 = vunpack.c.l.b16 %v419
      %v617 = vunpack.c.h.b16 %v419
      %v618 = vunpack.c.l.b16 %v420
      %v619 = vunpack.c.l.b16 %v421
      %v620 = vunpack.c.h.b16 %v421
      %v621 = vunpack.c.l.b16 %v422
      %v622 = vunpack.c.l.b16 %v423
      %v623 = vunpack.c.h.b16 %v423
      %v624 = vunpack.c.l.b16 %v424
      %v625 = vunpack.c.l.b16 %v425
      %v626 = vunpack.c.h.b16 %v425
      %v627 = vunpack.c.l.b16 %v426
      %v628 = vunpack.c.l.b16 %v427
      %v629 = vunpack.c.h.b16 %v427
      %v630 = vunpack.c.l.b16 %v428
      %v631 = vunpack.c.l.b16 %v429
      %v632 = vunpack.c.h.b16 %v429
      %v633 = vunpack.c.l.b16 %v430
      %v634 = vunpack.c.l.b16 %v431
      %v635 = vunpack.c.h.b16 %v431
      %v636 = vunpack.c.l.b16 %v432
      %v637 = vunpack.c.l.b16 %v433
      %v638 = vunpack.c.h.b16 %v433
      %v639 = vunpack.c.l.b16 %v434
      %v640 = vunpack.c.l.b16 %v435
      %v641 = vunpack.c.h.b16 %v435
      %v642 = vunpack.c.l.b16 %v436
      %v643 = vunpack.c.l.b16 %v437
      %v644 = vunpack.c.h.b16 %v437
      %v645 = vunpack.c.l.b16 %v438
      %v646 = vunpack.c.l.b16 %v439
      %v647 = vunpack.c.h.b16 %v439
      %v648 = vunpack.c.l.b16 %v440
      %v649 = vpack.c.b16 %v556, %v553
      %v650 = vpack.c.b16 %v557, %v554
      %v651 = vpack.c.b16 %v558, %v555
      %v652 = vpack.c.b16 %v562, %v559
      %v653 = vpack.c.b16 %v563, %v560
      %v654 = vpack.c.b16 %v564, %v561
      %v655 = vpack.c.b16 %v568, %v565
      %v656 = vpack.c.b16 %v569, %v566
      %v657 = vpack.c.b16 %v570, %v567
      %v658 = vpack.c.b16 %v574, %v571
      %v659 = vpack.c.b16 %v575, %v572
      %v660 = vpack.c.b16 %v576, %v573
      %v661 = vpack.c.b16 %v580, %v577
      %v662 = vpack.c.b16 %v581, %v578
      %v663 = vpack.c.b16 %v582, %v579
      %v664 = vpack.c.b16 %v586, %v583
      %v665 = vpack.c.b16 %v587, %v584
      %v666 = vpack.c.b16 %v588, %v585
      %v667 = vpack.c.b16 %v592, %v589
      %v668 = vpack.c.b16 %v593, %v590
      %v669 = vpack.c.b16 %v594, %v591
      %v670 = vpack.c.b16 %v598, %v595
      %v671 = vpack.c.b16 %v599, %v596
      %v672 = vpack.c.b16 %v600, %v597
      %v673 = vpack.c.b16 %v604, %v601
      %v674 = vpack.c.b16 %v605, %v602
      %v675 = vpack.c.b16 %v606, %v603
      %v676 = vpack.c.b16 %v610, %v607
      %v677 = vpack.c.b16 %v611, %v608
      %v678 = vpack.c.b16 %v612, %v609
      %v679 = vpack.c.b16 %v616, %v613
      %v680 = vpack.c.b16 %v617, %v614
      %v681 = vpack.c.b16 %v618, %v615
      %v682 = vpack.c.b16 %v622, %v619
      %v683 = vpack.c.b16 %v623, %v620
      %v684 = vpack.c.b16 %v624, %v621
      %v685 = vpack.c.b16 %v628, %v625
      %v686 = vpack.c.b16 %v629, %v626
      %v687 = vpack.c.b16 %v630, %v627
      %v688 = vpack.c.b16 %v634, %v631
      %v689 = vpack.c.b16 %v635, %v632
      %v690 = vpack.c.b16 %v636, %v633
      %v691 = vpack.c.b16 %v640, %v637
      %v692 = vpack.c.b16 %v641, %v638
      %v693 = vpack.c.b16 %v642, %v639
      %v694 = vpack.c.b16 %v646, %v643
      %v695 = vpack.c.b16 %v647, %v644
      %v696 = vpack.c.b16 %v648, %v645
      %v793 = vunpack.c.l.b16 %v441
      %v794 = vunpack.c.l.b16 %v442
      %v795 = vunpack.c.l.b16 %v443
      %v796 = vunpack.c.l.b16 %v444
      %v797 = vunpack.c.l.b16 %v445
      %v798 = vunpack.c.l.b16 %v446
      %v799 = vunpack.c.l.b16 %v447
      %v800 = vunpack.c.l.b16 %v448
      %v801 = vunpack.c.l.b16 %v449
      %v802 = vunpack.c.l.b16 %v450
      %v803 = vunpack.c.l.b16 %v451
      %v804 = vunpack.c.l.b16 %v452
      %v805 = vunpack.c.l.b16 %v453
      %v806 = vunpack.c.l.b16 %v454
      %v807 = vunpack.c.l.b16 %v455
      %v808 = vunpack.c.l.b16 %v456
      %v809 = vunpack.c.l.b16 %v457
      %v810 = vunpack.c.l.b16 %v458
      %v811 = vunpack.c.l.b16 %v459
      %v812 = vunpack.c.l.b16 %v460
      %v813 = vunpack.c.l.b16 %v461
      %v814 = vunpack.c.l.b16 %v462
      %v815 = vunpack.c.l.b16 %v463
      %v816 = vunpack.c.l.b16 %v464
      %v817 = vunpack.c.l.b16 %v465
      %v818 = vunpack.c.l.b16 %v466
      %v819 = vunpack.c.l.b16 %v467
      %v820 = vunpack.c.l.b16 %v468
      %v821 = vunpack.c.l.b16 %v469
      %v822 = vunpack.c.l.b16 %v470
      %v823 = vunpack.c.l.b16 %v471
      %v824 = vunpack.c.l.b16 %v472
      %v825 = vunpack.c.l.b16 %v473
      %v826 = vunpack.c.l.b16 %v474
      %v827 = vunpack.c.l.b16 %v475
      %v828 = vunpack.c.l.b16 %v476
      %v829 = vunpack.c.l.b16 %v477
      %v830 = vunpack.c.l.b16 %v478
      %v831 = vunpack.c.l.b16 %v479
      %v832 = vunpack.c.l.b16 %v480
      %v833 = vunpack.c.l.b16 %v481
      %v834 = vunpack.c.l.b16 %v482
      %v835 = vunpack.c.l.b16 %v483
      %v836 = vunpack.c.l.b16 %v484
      %v837 = vunpack.c.l.b16 %v485
      %v838 = vunpack.c.l.b16 %v486
      %v839 = vunpack.c.l.b16 %v487
      %v840 = vunpack.c.l.b16 %v488
      %v841 = vpack.c.b16 %v794, %v793
      %v842 = vpack.c.b16 %v796, %v795
      %v843 = vpack.c.b16 %v798, %v797
      %v844 = vpack.c.b16 %v800, %v799
      %v845 = vpack.c.b16 %v802, %v801
      %v846 = vpack.c.b16 %v804, %v803
      %v847 = vpack.c.b16 %v806, %v805
      %v848 = vpack.c.b16 %v808, %v807
      %v849 = vpack.c.b16 %v810, %v809
      %v850 = vpack.c.b16 %v812, %v811
      %v851 = vpack.c.b16 %v814, %v813
      %v852 = vpack.c.b16 %v816, %v815
      %v853 = vpack.c.b16 %v818, %v817
      %v854 = vpack.c.b16 %v820, %v819
      %v855 = vpack.c.b16 %v822, %v821
      %v856 = vpack.c.b16 %v824, %v823
      %v857 = vpack.c.b16 %v826, %v825
      %v858 = vpack.c.b16 %v828, %v827
      %v859 = vpack.c.b16 %v830, %v829
      %v860 = vpack.c.b16 %v832, %v831
      %v861 = vpack.c.b16 %v834, %v833
      %v862 = vpack.c.b16 %v836, %v835
      %v863 = vpack.c.b16 %v838, %v837
      %v864 = vpack.c.b16 %v840, %v839
      %889 = vmatprep.subr.bf16.mxu0 0
      %890 = vmatpush1.bf16.msra.mxu0 %v841
      %891 = vmatprep.subr.bf16.mxu0 0
      %892 = vmatpush1.bf16.msra.mxu0 %v842
      %893 = vmatprep.subr.bf16.mxu0 0
      %894 = vmatpush1.bf16.msra.mxu0 %v843
      %895 = vmatprep.subr.bf16.mxu0 0
      %896 = vmatpush1.bf16.msra.mxu0 %v844
      %897 = vmatprep.subr.bf16.mxu0 0
      %898 = vmatpush1.bf16.msra.mxu0 %v845
      %899 = vmatprep.subr.bf16.mxu0 0
      %900 = vmatpush1.bf16.msra.mxu0 %v846
      %901 = vmatprep.subr.bf16.mxu0 0
      %902 = vmatpush1.bf16.msra.mxu0 %v847
      %903 = vmatprep.subr.bf16.mxu0 0
      %904 = vmatpush1.bf16.msra.mxu0 %v848
      %905 = vmatprep.subr.bf16.mxu0 0
      %906 = vmatpush1.bf16.msra.mxu0 %v849
      %907 = vmatprep.subr.bf16.mxu0 0
      %908 = vmatpush1.bf16.msra.mxu0 %v850
      %909 = vmatprep.subr.bf16.mxu0 0
      %910 = vmatpush1.bf16.msra.mxu0 %v851
      %911 = vmatprep.subr.bf16.mxu0 0
      %912 = vmatpush1.bf16.msra.mxu0 %v852
      %913 = vmatprep.subr.bf16.mxu0 0
      %914 = vmatpush1.bf16.msra.mxu0 %v853
      %915 = vmatprep.subr.bf16.mxu0 0
      %916 = vmatpush1.bf16.msra.mxu0 %v854
      %917 = vmatprep.subr.bf16.mxu0 0
      %918 = vmatpush1.bf16.msra.mxu0 %v855
      %919 = vmatprep.subr.bf16.mxu0 0
      %920 = vmatpush1.bf16.msra.mxu0 %v856
      %921 = vmatprep.mubr.bf16.mxu0 %v650
      %922 = vmatmul.mubr.bf16.gmra.mrb[0].mxu0 %v649
      %v923 = vpop.f32.mrb[0].mxu0
      %v924 = vadd.f32 0.0, %v923
      %v925 = vpop.f32.mrb[0].mxu0
      %v926 = vpop.f32.mrb[0].mxu0
      %v927 = vadd.f32 0.0, %v926
      %v928 = vpop.f32.mrb[0].mxu0
      %929 = vmatprep.mubr.bf16.mxu0 %v653
      %930 = vmatmul.mubr.bf16.gmra.mrb[0].mxu0 %v652
      %v931 = vpop.f32.mrb[0].mxu0
      %v932 = vadd.f32 0.0, %v931
      %v933 = vpop.f32.mrb[0].mxu0
      %v934 = vpop.f32.mrb[0].mxu0
      %v935 = vadd.f32 0.0, %v934
      %v936 = vpop.f32.mrb[0].mxu0
      %937 = vmatprep.mubr.bf16.mxu0 %v656
      %938 = vmatmul.mubr.bf16.gmra.mrb[0].mxu0 %v655
      %v939 = vpop.f32.mrb[0].mxu0
      %v940 = vadd.f32 0.0, %v939
      %v941 = vpop.f32.mrb[0].mxu0
      %v942 = vpop.f32.mrb[0].mxu0
      %v943 = vadd.f32 0.0, %v942
      %v944 = vpop.f32.mrb[0].mxu0
      %945 = vmatprep.mubr.bf16.mxu0 %v659
      %946 = vmatmul.mubr.bf16.gmra.mrb[0].mxu0 %v658
      %v947 = vpop.f32.mrb[0].mxu0
      %v948 = vadd.f32 0.0, %v947
      %v949 = vpop.f32.mrb[0].mxu0
      %v950 = vpop.f32.mrb[0].mxu0
      %v951 = vadd.f32 0.0, %v950
      %v952 = vpop.f32.mrb[0].mxu0
      %953 = vmatprep.mubr.bf16.mxu0 %v662
      %954 = vmatmul.mubr.bf16.gmra.mrb[0].mxu0 %v661
      %v955 = vpop.f32.mrb[0].mxu0
      %v956 = vadd.f32 0.0, %v955
      %v957 = vpop.f32.mrb[0].mxu0
      %v958 = vpop.f32.mrb[0].mxu0
      %v959 = vadd.f32 0.0, %v958
      %v960 = vpop.f32.mrb[0].mxu0
      %961 = vmatprep.mubr.bf16.mxu0 %v665
      %962 = vmatmul.mubr.bf16.gmra.mrb[0].mxu0 %v664
      %v963 = vpop.f32.mrb[0].mxu0
      %v964 = vadd.f32 0.0, %v963
      %v965 = vpop.f32.mrb[0].mxu0
      %v966 = vpop.f32.mrb[0].mxu0
      %v967 = vadd.f32 0.0, %v966
      %v968 = vpop.f32.mrb[0].mxu0
      %969 = vmatprep.mubr.bf16.mxu0 %v668
      %970 = vmatmul.mubr.bf16.gmra.mrb[0].mxu0 %v667
      %v971 = vpop.f32.mrb[0].mxu0
      %v972 = vadd.f32 0.0, %v971
      %v973 = vpop.f32.mrb[0].mxu0
      %v974 = vpop.f32.mrb[0].mxu0
      %v975 = vadd.f32 0.0, %v974
      %v976 = vpop.f32.mrb[0].mxu0
      %977 = vmatprep.mubr.bf16.mxu0 %v671
      %978 = vmatmul.mubr.bf16.gmra.mrb[0].mxu0 %v670
      %v979 = vpop.f32.mrb[0].mxu0
      %v980 = vadd.f32 0.0, %v979
      %v981 = vpop.f32.mrb[0].mxu0
      %v982 = vpop.f32.mrb[0].mxu0
      %v983 = vadd.f32 0.0, %v982
      %v984 = vpop.f32.mrb[0].mxu0
      %985 = vmatprep.mubr.bf16.mxu0 %v674
      %986 = vmatmul.mubr.bf16.gmra.mrb[0].mxu0 %v673
      %v987 = vpop.f32.mrb[0].mxu0
      %v988 = vadd.f32 0.0, %v987
      %v989 = vpop.f32.mrb[0].mxu0
      %v990 = vpop.f32.mrb[0].mxu0
      %v991 = vadd.f32 0.0, %v990
      %v992 = vpop.f32.mrb[0].mxu0
      %993 = vmatprep.mubr.bf16.mxu0 %v677
      %994 = vmatmul.mubr.bf16.gmra.mrb[0].mxu0 %v676
      %v995 = vpop.f32.mrb[0].mxu0
      %v996 = vadd.f32 0.0, %v995
      %v997 = vpop.f32.mrb[0].mxu0
      %v998 = vpop.f32.mrb[0].mxu0
      %v999 = vadd.f32 0.0, %v998
      %v1000 = vpop.f32.mrb[0].mxu0
      %1001 = vmatprep.mubr.bf16.mxu0 %v680
      %1002 = vmatmul.mubr.bf16.gmra.mrb[0].mxu0 %v679
      %v1003 = vpop.f32.mrb[0].mxu0
      %v1004 = vadd.f32 0.0, %v1003
      %v1005 = vpop.f32.mrb[0].mxu0
      %v1006 = vpop.f32.mrb[0].mxu0
      %v1007 = vadd.f32 0.0, %v1006
      %v1008 = vpop.f32.mrb[0].mxu0
      %1009 = vmatprep.mubr.bf16.mxu0 %v683
      %1010 = vmatmul.mubr.bf16.gmra.mrb[0].mxu0 %v682
      %v1011 = vpop.f32.mrb[0].mxu0
      %v1012 = vadd.f32 0.0, %v1011
      %v1013 = vpop.f32.mrb[0].mxu0
      %v1014 = vpop.f32.mrb[0].mxu0
      %v1015 = vadd.f32 0.0, %v1014
      %v1016 = vpop.f32.mrb[0].mxu0
      %1017 = vmatprep.mubr.bf16.mxu0 %v686
      %1018 = vmatmul.mubr.bf16.gmra.mrb[0].mxu0 %v685
      %v1019 = vpop.f32.mrb[0].mxu0
      %v1020 = vadd.f32 0.0, %v1019
      %v1021 = vpop.f32.mrb[0].mxu0
      %v1022 = vpop.f32.mrb[0].mxu0
      %v1023 = vadd.f32 0.0, %v1022
      %v1024 = vpop.f32.mrb[0].mxu0
      %1025 = vmatprep.mubr.bf16.mxu0 %v689
      %1026 = vmatmul.mubr.bf16.gmra.mrb[0].mxu0 %v688
      %v1027 = vpop.f32.mrb[0].mxu0
      %v1028 = vadd.f32 0.0, %v1027
      %v1029 = vpop.f32.mrb[0].mxu0
      %v1030 = vpop.f32.mrb[0].mxu0
      %v1031 = vadd.f32 0.0, %v1030
      %v1032 = vpop.f32.mrb[0].mxu0
      %1033 = vmatprep.mubr.bf16.mxu0 %v692
      %1034 = vmatmul.mubr.bf16.gmra.mrb[0].mxu0 %v691
      %v1035 = vpop.f32.mrb[0].mxu0
      %v1036 = vadd.f32 0.0, %v1035
      %v1037 = vpop.f32.mrb[0].mxu0
      %v1038 = vpop.f32.mrb[0].mxu0
      %v1039 = vadd.f32 0.0, %v1038
      %v1040 = vpop.f32.mrb[0].mxu0
      %1041 = vmatprep.mubr.bf16.mxu0 %v695
      %1042 = vmatmul.mubr.bf16.gmra.mrb[0].mxu0 %v694
      %v1043 = vpop.f32.mrb[0].mxu0
      %v1044 = vadd.f32 0.0, %v1043
      %v1045 = vpop.f32.mrb[0].mxu0
      %v1046 = vpop.f32.mrb[0].mxu0
      %v1047 = vadd.f32 0.0, %v1046
      %v1048 = vpop.f32.mrb[0].mxu0
      %1049 = vdwg.mxu0
      %1050 = vmatprep.subr.bf16.mxu0 0
      %1051 = vmatpush1.bf16.msra.mxu0 %v857
      %1052 = vmatprep.subr.bf16.mxu0 0
      %1053 = vmatpush1.bf16.msra.mxu0 %v858
      %1054 = vmatprep.subr.bf16.mxu0 0
      %1055 = vmatpush1.bf16.msra.mxu0 %v859
      %1056 = vmatprep.subr.bf16.mxu0 0
      %1057 = vmatpush1.bf16.msra.mxu0 %v860
      %1058 = vmatprep.subr.bf16.mxu0 0
      %1059 = vmatpush1.bf16.msra.mxu0 %v861
      %1060 = vmatprep.subr.bf16.mxu0 0
      %1061 = vmatpush1.bf16.msra.mxu0 %v862
      %1062 = vmatprep.subr.bf16.mxu0 0
      %1063 = vmatpush1.bf16.msra.mxu0 %v863
      %1064 = vmatprep.subr.bf16.mxu0 0
      %1065 = vmatpush1.bf16.msra.mxu0 %v864
      %1066 = vmatprep.subr.bf16.mxu0 0
      %1067 = vmatpush1.bf16.msra.mxu0 0
      %1068 = vmatprep.subr.bf16.mxu0 0
      %1069 = vmatpush1.bf16.msra.mxu0 0
      %1070 = vmatprep.subr.bf16.mxu0 0
      %1071 = vmatpush1.bf16.msra.mxu0 0
      %1072 = vmatprep.subr.bf16.mxu0 0
      %1073 = vmatpush1.bf16.msra.mxu0 0
      %1074 = vmatprep.subr.bf16.mxu0 0
      %1075 = vmatpush1.bf16.msra.mxu0 0
      %1076 = vmatprep.subr.bf16.mxu0 0
      %1077 = vmatpush1.bf16.msra.mxu0 0
      %1078 = vmatprep.subr.bf16.mxu0 0
      %1079 = vmatpush1.bf16.msra.mxu0 0
      %1080 = vmatprep.subr.bf16.mxu0 0
      %1081 = vmatpush1.bf16.msra.mxu0 0
      %1082 = vmatprep.mubr.bf16.mxu0 0
      %1083 = vmatmul.mubr.bf16.gmra.mrb[0].mxu0 %v651
      %v1084 = vpop.f32.mrb[0].mxu0
      %v1085 = vadd.f32 %v924, %v1084
      %v1086 = vpop.f32.mrb[0].mxu0
      %v1087 = vpop.f32.mrb[0].mxu0
      %v1088 = vadd.f32 %v927, %v1087
      %v1089 = vpop.f32.mrb[0].mxu0
      %1090 = vmatprep.mubr.bf16.mxu0 0
      %1091 = vmatmul.mubr.bf16.gmra.mrb[0].mxu0 %v654
      %v1092 = vpop.f32.mrb[0].mxu0
      %v1093 = vadd.f32 %v932, %v1092
      %v1094 = vpop.f32.mrb[0].mxu0
      %v1095 = vpop.f32.mrb[0].mxu0
      %v1096 = vadd.f32 %v935, %v1095
      %v1097 = vpop.f32.mrb[0].mxu0
      %1098 = vmatprep.mubr.bf16.mxu0 0
      %1099 = vmatmul.mubr.bf16.gmra.mrb[0].mxu0 %v657
      %v1100 = vpop.f32.mrb[0].mxu0
      %v1101 = vadd.f32 %v940, %v1100
      %v1102 = vpop.f32.mrb[0].mxu0
      %v1103 = vpop.f32.mrb[0].mxu0
      %v1104 = vadd.f32 %v943, %v1103
      %v1105 = vpop.f32.mrb[0].mxu0
      %1106 = vmatprep.mubr.bf16.mxu0 0
      %1107 = vmatmul.mubr.bf16.gmra.mrb[0].mxu0 %v660
      %v1108 = vpop.f32.mrb[0].mxu0
      %v1109 = vadd.f32 %v948, %v1108
      %v1110 = vpop.f32.mrb[0].mxu0
      %v1111 = vpop.f32.mrb[0].mxu0
      %v1112 = vadd.f32 %v951, %v1111
      %v1113 = vpop.f32.mrb[0].mxu0
      %1114 = vmatprep.mubr.bf16.mxu0 0
      %1115 = vmatmul.mubr.bf16.gmra.mrb[0].mxu0 %v663
      %v1116 = vpop.f32.mrb[0].mxu0
      %v1117 = vadd.f32 %v956, %v1116
      %v1118 = vpop.f32.mrb[0].mxu0
      %v1119 = vpop.f32.mrb[0].mxu0
      %v1120 = vadd.f32 %v959, %v1119
      %v1121 = vpop.f32.mrb[0].mxu0
      %1122 = vmatprep.mubr.bf16.mxu0 0
      %1123 = vmatmul.mubr.bf16.gmra.mrb[0].mxu0 %v666
      %v1124 = vpop.f32.mrb[0].mxu0
      %v1125 = vadd.f32 %v964, %v1124
      %v1126 = vpop.f32.mrb[0].mxu0
      %v1127 = vpop.f32.mrb[0].mxu0
      %v1128 = vadd.f32 %v967, %v1127
      %v1129 = vpop.f32.mrb[0].mxu0
      %1130 = vmatprep.mubr.bf16.mxu0 0
      %1131 = vmatmul.mubr.bf16.gmra.mrb[0].mxu0 %v669
      %v1132 = vpop.f32.mrb[0].mxu0
      %v1133 = vadd.f32 %v972, %v1132
      %v1134 = vpop.f32.mrb[0].mxu0
      %v1135 = vpop.f32.mrb[0].mxu0
      %v1136 = vadd.f32 %v975, %v1135
      %v1137 = vpop.f32.mrb[0].mxu0
      %1138 = vmatprep.mubr.bf16.mxu0 0
      %1139 = vmatmul.mubr.bf16.gmra.mrb[0].mxu0 %v672
      %v1140 = vpop.f32.mrb[0].mxu0
      %v1141 = vadd.f32 %v980, %v1140
      %v1142 = vpop.f32.mrb[0].mxu0
      %v1143 = vpop.f32.mrb[0].mxu0
      %v1144 = vadd.f32 %v983, %v1143
      %v1145 = vpop.f32.mrb[0].mxu0
      %1146 = vmatprep.mubr.bf16.mxu0 0
      %1147 = vmatmul.mubr.bf16.gmra.mrb[0].mxu0 %v675
      %v1148 = vpop.f32.mrb[0].mxu0
      %v1149 = vadd.f32 %v988, %v1148
      %v1150 = vpop.f32.mrb[0].mxu0
      %v1151 = vpop.f32.mrb[0].mxu0
      %v1152 = vadd.f32 %v991, %v1151
      %v1153 = vpop.f32.mrb[0].mxu0
      %1154 = vmatprep.mubr.bf16.mxu0 0
      %1155 = vmatmul.mubr.bf16.gmra.mrb[0].mxu0 %v678
      %v1156 = vpop.f32.mrb[0].mxu0
      %v1157 = vadd.f32 %v996, %v1156
      %v1158 = vpop.f32.mrb[0].mxu0
      %v1159 = vpop.f32.mrb[0].mxu0
      %v1160 = vadd.f32 %v999, %v1159
      %v1161 = vpop.f32.mrb[0].mxu0
      %1162 = vmatprep.mubr.bf16.mxu0 0
      %1163 = vmatmul.mubr.bf16.gmra.mrb[0].mxu0 %v681
      %v1164 = vpop.f32.mrb[0].mxu0
      %v1165 = vadd.f32 %v1004, %v1164
      %v1166 = vpop.f32.mrb[0].mxu0
      %v1167 = vpop.f32.mrb[0].mxu0
      %v1168 = vadd.f32 %v1007, %v1167
      %v1169 = vpop.f32.mrb[0].mxu0
      %1170 = vmatprep.mubr.bf16.mxu0 0
      %1171 = vmatmul.mubr.bf16.gmra.mrb[0].mxu0 %v684
      %v1172 = vpop.f32.mrb[0].mxu0
      %v1173 = vadd.f32 %v1012, %v1172
      %v1174 = vpop.f32.mrb[0].mxu0
      %v1175 = vpop.f32.mrb[0].mxu0
      %v1176 = vadd.f32 %v1015, %v1175
      %v1177 = vpop.f32.mrb[0].mxu0
      %1178 = vmatprep.mubr.bf16.mxu0 0
      %1179 = vmatmul.mubr.bf16.gmra.mrb[0].mxu0 %v687
      %v1180 = vpop.f32.mrb[0].mxu0
      %v1181 = vadd.f32 %v1020, %v1180
      %v1182 = vpop.f32.mrb[0].mxu0
      %v1183 = vpop.f32.mrb[0].mxu0
      %v1184 = vadd.f32 %v1023, %v1183
      %v1185 = vpop.f32.mrb[0].mxu0
      %1186 = vmatprep.mubr.bf16.mxu0 0
      %1187 = vmatmul.mubr.bf16.gmra.mrb[0].mxu0 %v690
      %v1188 = vpop.f32.mrb[0].mxu0
      %v1189 = vadd.f32 %v1028, %v1188
      %v1190 = vpop.f32.mrb[0].mxu0
      %v1191 = vpop.f32.mrb[0].mxu0
      %v1192 = vadd.f32 %v1031, %v1191
      %v1193 = vpop.f32.mrb[0].mxu0
      %1194 = vmatprep.mubr.bf16.mxu0 0
      %1195 = vmatmul.mubr.bf16.gmra.mrb[0].mxu0 %v693
      %v1196 = vpop.f32.mrb[0].mxu0
      %v1197 = vadd.f32 %v1036, %v1196
      %v1198 = vpop.f32.mrb[0].mxu0
      %v1199 = vpop.f32.mrb[0].mxu0
      %v1200 = vadd.f32 %v1039, %v1199
      %v1201 = vpop.f32.mrb[0].mxu0
      %1202 = vmatprep.mubr.bf16.mxu0 0
      %1203 = vmatmul.mubr.bf16.gmra.mrb[0].mxu0 %v696
      %v1204 = vpop.f32.mrb[0].mxu0
      %v1205 = vadd.f32 %v1044, %v1204
      %v1206 = vpop.f32.mrb[0].mxu0
      %v1207 = vpop.f32.mrb[0].mxu0
      %v1208 = vadd.f32 %v1047, %v1207
      %v1209 = vpop.f32.mrb[0].mxu0
      %1210 = vdwg.mxu0
      %v1211 = vadd.f32 %v345, %v1085
      %v1212 = vadd.f32 %v346, %v1088
      %v1213 = vadd.f32 %v347, %v1093
      %v1214 = vadd.f32 %v348, %v1096
      %v1215 = vadd.f32 %v349, %v1101
      %v1216 = vadd.f32 %v350, %v1104
      %v1217 = vadd.f32 %v351, %v1109
      %v1218 = vadd.f32 %v352, %v1112
      %v1219 = vadd.f32 %v353, %v1117
      %v1220 = vadd.f32 %v354, %v1120
      %v1221 = vadd.f32 %v355, %v1125
      %v1222 = vadd.f32 %v356, %v1128
      %v1223 = vadd.f32 %v357, %v1133
      %v1224 = vadd.f32 %v358, %v1136
      %v1225 = vadd.f32 %v359, %v1141
      %v1226 = vadd.f32 %v360, %v1144
      %v1227 = vadd.f32 %v361, %v1149
      %v1228 = vadd.f32 %v362, %v1152
      %v1229 = vadd.f32 %v363, %v1157
      %v1230 = vadd.f32 %v364, %v1160
      %v1231 = vadd.f32 %v365, %v1165
      %v1232 = vadd.f32 %v366, %v1168
      %v1233 = vadd.f32 %v367, %v1173
      %v1234 = vadd.f32 %v368, %v1176
      %v1235 = vadd.f32 %v369, %v1181
      %v1236 = vadd.f32 %v370, %v1184
      %v1237 = vadd.f32 %v371, %v1189
      %v1238 = vadd.f32 %v372, %v1192
      %v1239 = vadd.f32 %v373, %v1197
      %v1240 = vadd.f32 %v374, %v1200
      %v1241 = vadd.f32 %v375, %v1205
      %v1242 = vadd.f32 %v376, %v1208
      %1243 = vst [vmem:[#allocation2] sm:$0xff] %v1211
      %1244 = vst [vmem:[#allocation2 + $0x8] sm:$0xff] %v1212
      %1245 = vst [vmem:[#allocation2 + $0x10] sm:$0xff] %v1213
      %1246 = vst [vmem:[#allocation2 + $0x18] sm:$0xff] %v1214
      %1247 = vst [vmem:[#allocation2 + $0x20] sm:$0xff] %v1215
      %1248 = vst [vmem:[#allocation2 + $0x28] sm:$0xff] %v1216
      %1249 = vst [vmem:[#allocation2 + $0x30] sm:$0xff] %v1217
      %1250 = vst [vmem:[#allocation2 + $0x38] sm:$0xff] %v1218
      %1251 = vst [vmem:[#allocation2 + $0x40] sm:$0xff] %v1219
      %1252 = vst [vmem:[#allocation2 + $0x48] sm:$0xff] %v1220
      %1253 = vst [vmem:[#allocation2 + $0x50] sm:$0xff] %v1221
      %1254 = vst [vmem:[#allocation2 + $0x58] sm:$0xff] %v1222
      %1255 = vst [vmem:[#allocation2 + $0x60] sm:$0xff] %v1223
      %1256 = vst [vmem:[#allocation2 + $0x68] sm:$0xff] %v1224
      %1257 = vst [vmem:[#allocation2 + $0x70] sm:$0xff] %v1225
      %1258 = vst [vmem:[#allocation2 + $0x78] sm:$0xff] %v1226
      %1259 = vst [vmem:[#allocation2 + $0x80] sm:$0xff] %v1227
      %1260 = vst [vmem:[#allocation2 + $0x88] sm:$0xff] %v1228
      %1261 = vst [vmem:[#allocation2 + $0x90] sm:$0xff] %v1229
      %1262 = vst [vmem:[#allocation2 + $0x98] sm:$0xff] %v1230
      %1263 = vst [vmem:[#allocation2 + $0xa0] sm:$0xff] %v1231
      %1264 = vst [vmem:[#allocation2 + $0xa8] sm:$0xff] %v1232
      %1265 = vst [vmem:[#allocation2 + $0xb0] sm:$0xff] %v1233
      %1266 = vst [vmem:[#allocation2 + $0xb8] sm:$0xff] %v1234
      %1267 = vst [vmem:[#allocation2 + $0xc0] sm:$0xff] %v1235
      %1268 = vst [vmem:[#allocation2 + $0xc8] sm:$0xff] %v1236
      %1269 = vst [vmem:[#allocation2 + $0xd0] sm:$0xff] %v1237
      %1270 = vst [vmem:[#allocation2 + $0xd8] sm:$0xff] %v1238
      %1271 = vst [vmem:[#allocation2 + $0xe0] sm:$0xff] %v1239
      %1272 = vst [vmem:[#allocation2 + $0xe8] sm:$0xff] %v1240
      %1273 = vst [vmem:[#allocation2 + $0xf0] sm:$0xff] %v1241
      %1274 = vst [vmem:[#allocation2 + $0xf8] sm:$0xff] %v1242
      // Predicated region
      $region41: #{forward.15} parent=35 // pred_check
        %p1275 = pneg %p309
      $region42: #{forward.15} parent=35 // pred_check_branch
        %1277 = sbr.rel (%p1275) target = $region44
      $region43: #{forward.15} parent=35 // pred_region
        %v1278 = vld [vmem:[#allocation2] sm:$0xff]
        %v1279 = vld [vmem:[#allocation2 + $0x8] sm:$0xff]
        %v1280 = vld [vmem:[#allocation2 + $0x10] sm:$0xff]
        %v1281 = vld [vmem:[#allocation2 + $0x18] sm:$0xff]
        %v1282 = vld [vmem:[#allocation2 + $0x20] sm:$0xff]
        %v1283 = vld [vmem:[#allocation2 + $0x28] sm:$0xff]
        %v1284 = vld [vmem:[#allocation2 + $0x30] sm:$0xff]
        %v1285 = vld [vmem:[#allocation2 + $0x38] sm:$0xff]
        %v1286 = vld [vmem:[#allocation2 + $0x40] sm:$0xff]
        %v1287 = vld [vmem:[#allocation2 + $0x48] sm:$0xff]
        %v1288 = vld [vmem:[#allocation2 + $0x50] sm:$0xff]
        %v1289 = vld [vmem:[#allocation2 + $0x58] sm:$0xff]
        %v1290 = vld [vmem:[#allocation2 + $0x60] sm:$0xff]
        %v1291 = vld [vmem:[#allocation2 + $0x68] sm:$0xff]
        %v1292 = vld [vmem:[#allocation2 + $0x70] sm:$0xff]
        %v1293 = vld [vmem:[#allocation2 + $0x78] sm:$0xff]
        %v1294 = vld [vmem:[#allocation2 + $0x80] sm:$0xff]
        %v1295 = vld [vmem:[#allocation2 + $0x88] sm:$0xff]
        %v1296 = vld [vmem:[#allocation2 + $0x90] sm:$0xff]
        %v1297 = vld [vmem:[#allocation2 + $0x98] sm:$0xff]
        %v1298 = vld [vmem:[#allocation2 + $0xa0] sm:$0xff]
        %v1299 = vld [vmem:[#allocation2 + $0xa8] sm:$0xff]
        %v1300 = vld [vmem:[#allocation2 + $0xb0] sm:$0xff]
        %v1301 = vld [vmem:[#allocation2 + $0xb8] sm:$0xff]
        %v1302 = vld [vmem:[#allocation2 + $0xc0] sm:$0xff]
        %v1303 = vld [vmem:[#allocation2 + $0xc8] sm:$0xff]
        %v1304 = vld [vmem:[#allocation2 + $0xd0] sm:$0xff]
        %v1305 = vld [vmem:[#allocation2 + $0xd8] sm:$0xff]
        %v1306 = vld [vmem:[#allocation2 + $0xe0] sm:$0xff]
        %v1307 = vld [vmem:[#allocation2 + $0xe8] sm:$0xff]
        %v1308 = vld [vmem:[#allocation2 + $0xf0] sm:$0xff]
        %v1309 = vld [vmem:[#allocation2 + $0xf8] sm:$0xff]
        %v1310 = vld [vmem:[%s295] sm:$0x1]
        %v1312 = vlaneseq
        %v1313 = vshrl.u32 %v1312, 7
        %v1314 = vsub.s32 0, %v1313
        %v1315 = vrot.slane %v1310, %v1314
        %v1317 = vmul.f32 %v1278, %v1315
        %v1318 = vmul.f32 %v1279, %v1315
        %v1319 = vmul.f32 %v1280, %v1315
        %v1320 = vmul.f32 %v1281, %v1315
        %v1321 = vmul.f32 %v1282, %v1315
        %v1322 = vmul.f32 %v1283, %v1315
        %v1323 = vmul.f32 %v1284, %v1315
        %v1324 = vmul.f32 %v1285, %v1315
        %v1325 = vmul.f32 %v1286, %v1315
        %v1326 = vmul.f32 %v1287, %v1315
        %v1327 = vmul.f32 %v1288, %v1315
        %v1328 = vmul.f32 %v1289, %v1315
        %v1329 = vmul.f32 %v1290, %v1315
        %v1330 = vmul.f32 %v1291, %v1315
        %v1331 = vmul.f32 %v1292, %v1315
        %v1332 = vmul.f32 %v1293, %v1315
        %v1333 = vmul.f32 %v1294, %v1315
        %v1334 = vmul.f32 %v1295, %v1315
        %v1335 = vmul.f32 %v1296, %v1315
        %v1336 = vmul.f32 %v1297, %v1315
        %v1337 = vmul.f32 %v1298, %v1315
        %v1338 = vmul.f32 %v1299, %v1315
        %v1339 = vmul.f32 %v1300, %v1315
        %v1340 = vmul.f32 %v1301, %v1315
        %v1341 = vmul.f32 %v1302, %v1315
        %v1342 = vmul.f32 %v1303, %v1315
        %v1343 = vmul.f32 %v1304, %v1315
        %v1344 = vmul.f32 %v1305, %v1315
        %v1345 = vmul.f32 %v1306, %v1315
        %v1346 = vmul.f32 %v1307, %v1315
        %v1347 = vmul.f32 %v1308, %v1315
        %v1348 = vmul.f32 %v1309, %v1315
        %v1349 = vld [vmem:[%s298] sm:$0x1]
        %v1351 = vlaneseq
        %v1352 = vshrl.u32 %v1351, 7
        %v1353 = vsub.s32 0, %v1352
        %v1354 = vrot.slane %v1349, %v1353
        %v1356 = vadd.f32 %v1317, %v1354
        %v1357 = vadd.f32 %v1318, %v1354
        %v1358 = vadd.f32 %v1319, %v1354
        %v1359 = vadd.f32 %v1320, %v1354
        %v1360 = vadd.f32 %v1321, %v1354
        %v1361 = vadd.f32 %v1322, %v1354
        %v1362 = vadd.f32 %v1323, %v1354
        %v1363 = vadd.f32 %v1324, %v1354
        %v1364 = vadd.f32 %v1325, %v1354
        %v1365 = vadd.f32 %v1326, %v1354
        %v1366 = vadd.f32 %v1327, %v1354
        %v1367 = vadd.f32 %v1328, %v1354
        %v1368 = vadd.f32 %v1329, %v1354
        %v1369 = vadd.f32 %v1330, %v1354
        %v1370 = vadd.f32 %v1331, %v1354
        %v1371 = vadd.f32 %v1332, %v1354
        %v1372 = vadd.f32 %v1333, %v1354
        %v1373 = vadd.f32 %v1334, %v1354
        %v1374 = vadd.f32 %v1335, %v1354
        %v1375 = vadd.f32 %v1336, %v1354
        %v1376 = vadd.f32 %v1337, %v1354
        %v1377 = vadd.f32 %v1338, %v1354
        %v1378 = vadd.f32 %v1339, %v1354
        %v1379 = vadd.f32 %v1340, %v1354
        %v1380 = vadd.f32 %v1341, %v1354
        %v1381 = vadd.f32 %v1342, %v1354
        %v1382 = vadd.f32 %v1343, %v1354
        %v1383 = vadd.f32 %v1344, %v1354
        %v1384 = vadd.f32 %v1345, %v1354
        %v1385 = vadd.f32 %v1346, %v1354
        %v1386 = vadd.f32 %v1347, %v1354
        %v1387 = vadd.f32 %v1348, %v1354
        %v1388 = vmax.f32 %v1356, 0.0
        %v1389 = vmax.f32 %v1357, 0.0
        %v1390 = vmax.f32 %v1358, 0.0
        %v1391 = vmax.f32 %v1359, 0.0
        %v1392 = vmax.f32 %v1360, 0.0
        %v1393 = vmax.f32 %v1361, 0.0
        %v1394 = vmax.f32 %v1362, 0.0
        %v1395 = vmax.f32 %v1363, 0.0
        %v1396 = vmax.f32 %v1364, 0.0
        %v1397 = vmax.f32 %v1365, 0.0
        %v1398 = vmax.f32 %v1366, 0.0
        %v1399 = vmax.f32 %v1367, 0.0
        %v1400 = vmax.f32 %v1368, 0.0
        %v1401 = vmax.f32 %v1369, 0.0
        %v1402 = vmax.f32 %v1370, 0.0
        %v1403 = vmax.f32 %v1371, 0.0
        %v1404 = vmax.f32 %v1372, 0.0
        %v1405 = vmax.f32 %v1373, 0.0
        %v1406 = vmax.f32 %v1374, 0.0
        %v1407 = vmax.f32 %v1375, 0.0
        %v1408 = vmax.f32 %v1376, 0.0
        %v1409 = vmax.f32 %v1377, 0.0
        %v1410 = vmax.f32 %v1378, 0.0
        %v1411 = vmax.f32 %v1379, 0.0
        %v1412 = vmax.f32 %v1380, 0.0
        %v1413 = vmax.f32 %v1381, 0.0
        %v1414 = vmax.f32 %v1382, 0.0
        %v1415 = vmax.f32 %v1383, 0.0
        %v1416 = vmax.f32 %v1384, 0.0
        %v1417 = vmax.f32 %v1385, 0.0
        %v1418 = vmax.f32 %v1386, 0.0
        %v1419 = vmax.f32 %v1387, 0.0
        %v1420 = vpack.c.bf16 %v1389, %v1388
        %v1421 = vpack.c.bf16 %v1391, %v1390
        %v1422 = vpack.c.bf16 %v1393, %v1392
        %v1423 = vpack.c.bf16 %v1395, %v1394
        %v1424 = vpack.c.bf16 %v1397, %v1396
        %v1425 = vpack.c.bf16 %v1399, %v1398
        %v1426 = vpack.c.bf16 %v1401, %v1400
        %v1427 = vpack.c.bf16 %v1403, %v1402
        %v1428 = vpack.c.bf16 %v1405, %v1404
        %v1429 = vpack.c.bf16 %v1407, %v1406
        %v1430 = vpack.c.bf16 %v1409, %v1408
        %v1431 = vpack.c.bf16 %v1411, %v1410
        %v1432 = vpack.c.bf16 %v1413, %v1412
        %v1433 = vpack.c.bf16 %v1415, %v1414
        %v1434 = vpack.c.bf16 %v1417, %v1416
        %v1435 = vpack.c.bf16 %v1419, %v1418
        %v1452 = vunpack.c.l.b16 %v1420
        %v1453 = vunpack.c.h.b16 %v1420
        %v1454 = vunpack.c.l.b16 %v1421
        %v1455 = vunpack.c.h.b16 %v1421
        %v1456 = vunpack.c.l.b16 %v1422
        %v1457 = vunpack.c.h.b16 %v1422
        %v1458 = vunpack.c.l.b16 %v1423
        %v1459 = vunpack.c.h.b16 %v1423
        %v1460 = vunpack.c.l.b16 %v1424
        %v1461 = vunpack.c.h.b16 %v1424
        %v1462 = vunpack.c.l.b16 %v1425
        %v1463 = vunpack.c.h.b16 %v1425
        %v1464 = vunpack.c.l.b16 %v1426
        %v1465 = vunpack.c.h.b16 %v1426
        %v1466 = vunpack.c.l.b16 %v1427
        %v1467 = vunpack.c.h.b16 %v1427
        %v1468 = vunpack.c.l.b16 %v1428
        %v1469 = vunpack.c.h.b16 %v1428
        %v1470 = vunpack.c.l.b16 %v1429
        %v1471 = vunpack.c.h.b16 %v1429
        %v1472 = vunpack.c.l.b16 %v1430
        %v1473 = vunpack.c.h.b16 %v1430
        %v1474 = vunpack.c.l.b16 %v1431
        %v1475 = vunpack.c.h.b16 %v1431
        %v1476 = vunpack.c.l.b16 %v1432
        %v1477 = vunpack.c.h.b16 %v1432
        %v1478 = vunpack.c.l.b16 %v1433
        %v1479 = vunpack.c.h.b16 %v1433
        %v1480 = vunpack.c.l.b16 %v1434
        %v1481 = vunpack.c.h.b16 %v1434
        %v1482 = vunpack.c.l.b16 %v1435
        %v1483 = vunpack.c.h.b16 %v1435
        %v1484 = vpack.c.b16 %v1452, %v1452
        %v1485 = vpack.c.b16 %v1453, %v1453
        %v1486 = vpack.c.b16 %v1454, %v1454
        %v1487 = vpack.c.b16 %v1455, %v1455
        %v1488 = vpack.c.b16 %v1456, %v1456
        %v1489 = vpack.c.b16 %v1457, %v1457
        %v1490 = vpack.c.b16 %v1458, %v1458
        %v1491 = vpack.c.b16 %v1459, %v1459
        %v1492 = vpack.c.b16 %v1460, %v1460
        %v1493 = vpack.c.b16 %v1461, %v1461
        %v1494 = vpack.c.b16 %v1462, %v1462
        %v1495 = vpack.c.b16 %v1463, %v1463
        %v1496 = vpack.c.b16 %v1464, %v1464
        %v1497 = vpack.c.b16 %v1465, %v1465
        %v1498 = vpack.c.b16 %v1466, %v1466
        %v1499 = vpack.c.b16 %v1467, %v1467
        %v1500 = vpack.c.b16 %v1468, %v1468
        %v1501 = vpack.c.b16 %v1469, %v1469
        %v1502 = vpack.c.b16 %v1470, %v1470
        %v1503 = vpack.c.b16 %v1471, %v1471
        %v1504 = vpack.c.b16 %v1472, %v1472
        %v1505 = vpack.c.b16 %v1473, %v1473
        %v1506 = vpack.c.b16 %v1474, %v1474
        %v1507 = vpack.c.b16 %v1475, %v1475
        %v1508 = vpack.c.b16 %v1476, %v1476
        %v1509 = vpack.c.b16 %v1477, %v1477
        %v1510 = vpack.c.b16 %v1478, %v1478
        %v1511 = vpack.c.b16 %v1479, %v1479
        %v1512 = vpack.c.b16 %v1480, %v1480
        %v1513 = vpack.c.b16 %v1481, %v1481
        %v1514 = vpack.c.b16 %v1482, %v1482
        %v1515 = vpack.c.b16 %v1483, %v1483
        %1548 = vst [vmem:[%s306] sm:$0xf] %v1484
        %1549 = vst [vmem:[%s306 + $0x4] sm:$0xf] %v1485
        %1550 = vst [vmem:[%s306 + $0x8] sm:$0xf] %v1486
        %1551 = vst [vmem:[%s306 + $0xc] sm:$0xf] %v1487
        %1552 = vst [vmem:[%s306 + $0x10] sm:$0xf] %v1488
        %1553 = vst [vmem:[%s306 + $0x14] sm:$0xf] %v1489
        %1554 = vst [vmem:[%s306 + $0x18] sm:$0xf] %v1490
        %1555 = vst [vmem:[%s306 + $0x1c] sm:$0xf] %v1491
        %1556 = vst [vmem:[%s306 + $0x20] sm:$0xf] %v1492
        %1557 = vst [vmem:[%s306 + $0x24] sm:$0xf] %v1493
        %1558 = vst [vmem:[%s306 + $0x28] sm:$0xf] %v1494
        %1559 = vst [vmem:[%s306 + $0x2c] sm:$0xf] %v1495
        %1560 = vst [vmem:[%s306 + $0x30] sm:$0xf] %v1496
        %1561 = vst [vmem:[%s306 + $0x34] sm:$0xf] %v1497
        %1562 = vst [vmem:[%s306 + $0x38] sm:$0xf] %v1498
        %1563 = vst [vmem:[%s306 + $0x3c] sm:$0xf] %v1499
        %1564 = vst [vmem:[%s306 + $0x40] sm:$0xf] %v1500
        %1565 = vst [vmem:[%s306 + $0x44] sm:$0xf] %v1501
        %1566 = vst [vmem:[%s306 + $0x48] sm:$0xf] %v1502
        %1567 = vst [vmem:[%s306 + $0x4c] sm:$0xf] %v1503
        %1568 = vst [vmem:[%s306 + $0x50] sm:$0xf] %v1504
        %1569 = vst [vmem:[%s306 + $0x54] sm:$0xf] %v1505
        %1570 = vst [vmem:[%s306 + $0x58] sm:$0xf] %v1506
        %1571 = vst [vmem:[%s306 + $0x5c] sm:$0xf] %v1507
        %1572 = vst [vmem:[%s306 + $0x60] sm:$0xf] %v1508
        %1573 = vst [vmem:[%s306 + $0x64] sm:$0xf] %v1509
        %1574 = vst [vmem:[%s306 + $0x68] sm:$0xf] %v1510
        %1575 = vst [vmem:[%s306 + $0x6c] sm:$0xf] %v1511
        %1576 = vst [vmem:[%s306 + $0x70] sm:$0xf] %v1512
        %1577 = vst [vmem:[%s306 + $0x74] sm:$0xf] %v1513
        %1578 = vst [vmem:[%s306 + $0x78] sm:$0xf] %v1514
        %1579 = vst [vmem:[%s306 + $0x7c] sm:$0xf] %v1515
      $region44: #{forward.15} parent=35 // pred_fallthru
        _
      %s1580 = smul.u32 32, %s20
      %p1581 = scmp.lt.s32.totalorder %s1580, 1023
      %s1582 = scalar_select %p1581, %s1580, 1023
      %p1583 = scmp.lt.s32.totalorder %s21, 0
      %s1584 = scalar_select %p1583, %s21, 0
      %s1585 = sadd.s32 %s1584, %s1582
      %s1586 = smul.addr %s1585, 4
      %s1587 = scalar_lea.vmem %s4, %s1586
      // Predicated region
      $region45: #{forward.15} parent=35 // pred_check
        %p1588 = pneg %p162
      $region46: #{forward.15} parent=35 // pred_check_branch
        %1590 = sbr.rel (%p1588) target = $region48
      $region47: #{forward.15} parent=35 // pred_region
        %s1591 = smul.u32 32, %s20
      $region48: #{forward.15} parent=35 // pred_fallthru
        _
    $region36: #{forward.15} parent=5 // pred_fallthru
      _
    %p1592 = scmp.le.s32.totalorder 2, %s10
    // Predicated region
    $region49: #{forward.15} parent=5 // pred_check
      %p1593 = pneg %p1592
    $region50: #{forward.15} parent=5 // pred_check_branch
      %1595 = sbr.rel (%p1593) target = $region52
    $region51: #{forward.15} parent=5 // pred_region
      %s1596 = ssub.s32 %s10, 2
      // Predicated region
      $region53: #{forward.15} parent=51 // pred_check
        %p1597 = pneg %p168
      $region54: #{forward.15} parent=51 // pred_check_branch
        %1599 = sbr.rel (%p1597) target = $region56
      $region55: #{forward.15} parent=51 // pred_region
        %s1600 = smul.u32 32, %s23
        %p1601 = scmp.lt.s32.totalorder %s1600, 1023
        %s1602 = scalar_select %p1601, %s1600, 1023
        %p1603 = scmp.lt.s32.totalorder %s24, 0
        %s1604 = scalar_select %p1603, %s24, 0
        %s1605 = sadd.s32 %s1604, %s1602
        %s1606 = smul.addr %s1605, 4
        %s1607 = scalar_lea.vmem %s4, %s1606
      $region56: #{forward.15} parent=51 // pred_fallthru
        _
    $region52: #{forward.15} parent=5 // pred_fallthru
      _
  $region6: #{forward.15} parent=0 // loop_footer
    %s14 = sadd.s32 1, %s10
  $region7: #{forward.15} parent=0 // loop_footer_branch
    %9 = sbr.rel target = $region3
  $region8: #{forward.15} parent=0 // loop_exit
    _

// kernel: forward.16
$region0: #{forward.16}
  #allocation0 [shape = 'u32[]', space=smem, size = 0x4, offset = 0x4, fixed_abs, tag = 'smem constant byte address 0x4 - core index']
  #allocation1 [shape = 'u32[144,128]{1,0:T(1,128)}', space=vmem, size = 0x12000, scoped, tag = 'internal scratch']
  #allocation2 [shape = 'f32[256,128]{1,0:T(8,128)}', space=vmem, size = 0x20000, scoped, tag = 'scratch operand']
  %s0 = inlined_call_operand.vmem [shape: bf16[2048,256], index: 0, kind: input, shape index: {}]
  %s1 = inlined_call_operand.vmem [shape: bf16[256,128], index: 1, kind: input, shape index: {}]
  %s2 = inlined_call_operand.vmem [shape: f32[1,128], index: 2, kind: input, shape index: {}]
  %s3 = inlined_call_operand.vmem [shape: f32[1,128], index: 3, kind: input, shape index: {}]
  %s4 = inlined_call_operand.vmem [shape: bf16[2048,128], index: 4, kind: output, shape index: {}]
  %s5 = sld [smem:[#allocation0]]
  $region57: #{forward.16} parent=0
    _
  %s7 = ssub.s32 1, %s5
  %s8 = scalar_select 0, %s7, %s5
  loop: start=0, step=1, limit=10
  $region2: #{forward.16} parent=0 // loop_pre_header
    _
  $region3: #{forward.16} parent=0 // loop_header
    %s10 = sphi 0, %s14
    %p11 = scmp.ge.s32.totalorder %s10, 10
    %s17 = sphi 0, %s36
    %s18 = sphi 0, %s32
    %s19 = sphi 0, %s28
    %s20 = sphi 0, %s17
    %s21 = sphi 0, %s18
    %s22 = sphi 0, %s19
    %s23 = sphi 0, %s20
    %s24 = sphi 0, %s21
    %s25 = sphi 0, %s22
    %s41 = sphi 0, %s43
    %s44 = sphi 0, %s41
    %s45 = sphi 0, %s44
    %s61 = sphi 0, %s45
    %s69 = sphi 0, %s71
    %s72 = sphi 0, %s69
    %s73 = sphi 0, %s72
    %s89 = sphi 0, %s73
    %s95 = sphi 0, %s97
    %s98 = sphi 0, %s95
    %s99 = sphi 0, %s98
    %s115 = sphi 0, %s99
    %s121 = sphi 0, %s123
    %s124 = sphi 0, %s121
    %s125 = sphi 0, %s124
    %s141 = sphi 0, %s125
    %s149 = sphi 0, %s151
    %s152 = sphi 0, %s149
    %s153 = sphi 0, %s152
    %s169 = sphi 0, %s153
  $region4: #{forward.16} parent=0 // loop_header_branch
    %13 = sbr.rel (%p11) target = $region8
  $region5: #{forward.16} parent=0 // loop_body
    %s15 = ssub.s32 %s10, 1
    %s16 = ssub.s32 %s10, 2
    %s26 = sadd.s32 1, %s19
    %p27 = scmp.ge.s32.totalorder %s26, 1
    %s28 = scalar_select %p27, 0, %s26
    %s29 = sadd.s32 1, %s18
    %s30 = scalar_select %p27, %s29, %s18
    %p31 = scmp.ge.s32.totalorder %s30, 1
    %s32 = scalar_select %p31, 0, %s30
    %s33 = sadd.s32 1, %s17
    %s34 = scalar_select %p31, %s33, %s17
    %p35 = scmp.ge.s32.totalorder %s34, 8
    %s36 = scalar_select %p35, 0, %s34
    %s37 = ssub.s32 %s17, %s36
    %s38 = ssub.s32 %s19, %s28
    %s39 = sor.u32 %s37, %s38
    %p40 = scmp.eq.s32.totalorder %s39, 0
    %s42 = sadd.s32 %s41, 1
    %s43 = scalar_select %p40, %s41, %s42
    %p46 = pneg %p40
    %p47 = scmp.eq.s32.totalorder %s10, 7
    %p48 = por %p46, %p47
    %p49 = scmp.ne.s32.totalorder %s41, %s44
    %p50 = scmp.eq.s32.totalorder %s10, 0
    %p51 = por %p49, %p50
    %p52 = scmp.ne.s32.totalorder %s41, %s44
    %p53 = scmp.eq.s32.totalorder %s15, 7
    %p54 = por %p52, %p53
    %p55 = scmp.ne.s32.totalorder %s44, %s45
    %p56 = scmp.eq.s32.totalorder %s15, 0
    %p57 = por %p55, %p56
    %p58 = scmp.ne.s32.totalorder %s44, %s45
    %p59 = scmp.eq.s32.totalorder %s16, 7
    %p60 = por %p58, %p59
    %p62 = scmp.ne.s32.totalorder %s45, %s61
    %p63 = scmp.eq.s32.totalorder %s16, 0
    %p64 = por %p62, %p63
    %s65 = ssub.s32 %s19, %s28
    %s66 = ssub.s32 %s18, %s32
    %s67 = sor.u32 %s65, %s66
    %p68 = scmp.eq.s32.totalorder %s67, 0
    %s70 = sadd.s32 %s69, 1
    %s71 = scalar_select %p68, %s69, %s70
    %p74 = pneg %p68
    %p75 = scmp.eq.s32.totalorder %s10, 7
    %p76 = por %p74, %p75
    %p77 = scmp.ne.s32.totalorder %s69, %s72
    %p78 = scmp.eq.s32.totalorder %s10, 0
    %p79 = por %p77, %p78
    %p80 = scmp.ne.s32.totalorder %s69, %s72
    %p81 = scmp.eq.s32.totalorder %s15, 7
    %p82 = por %p80, %p81
    %p83 = scmp.ne.s32.totalorder %s72, %s73
    %p84 = scmp.eq.s32.totalorder %s15, 0
    %p85 = por %p83, %p84
    %p86 = scmp.ne.s32.totalorder %s72, %s73
    %p87 = scmp.eq.s32.totalorder %s16, 7
    %p88 = por %p86, %p87
    %p90 = scmp.ne.s32.totalorder %s73, %s89
    %p91 = scmp.eq.s32.totalorder %s16, 0
    %p92 = por %p90, %p91
    %s93 = ssub.s32 %s18, %s32
    %p94 = scmp.eq.s32.totalorder %s93, 0
    %s96 = sadd.s32 %s95, 1
    %s97 = scalar_select %p94, %s95, %s96
    %p100 = pneg %p94
    %p101 = scmp.eq.s32.totalorder %s10, 7
    %p102 = por %p100, %p101
    %p103 = scmp.ne.s32.totalorder %s95, %s98
    %p104 = scmp.eq.s32.totalorder %s10, 0
    %p105 = por %p103, %p104
    %p106 = scmp.ne.s32.totalorder %s95, %s98
    %p107 = scmp.eq.s32.totalorder %s15, 7
    %p108 = por %p106, %p107
    %p109 = scmp.ne.s32.totalorder %s98, %s99
    %p110 = scmp.eq.s32.totalorder %s15, 0
    %p111 = por %p109, %p110
    %p112 = scmp.ne.s32.totalorder %s98, %s99
    %p113 = scmp.eq.s32.totalorder %s16, 7
    %p114 = por %p112, %p113
    %p116 = scmp.ne.s32.totalorder %s99, %s115
    %p117 = scmp.eq.s32.totalorder %s16, 0
    %p118 = por %p116, %p117
    %s119 = ssub.s32 %s18, %s32
    %p120 = scmp.eq.s32.totalorder %s119, 0
    %s122 = sadd.s32 %s121, 1
    %s123 = scalar_select %p120, %s121, %s122
    %p126 = pneg %p120
    %p127 = scmp.eq.s32.totalorder %s10, 7
    %p128 = por %p126, %p127
    %p129 = scmp.ne.s32.totalorder %s121, %s124
    %p130 = scmp.eq.s32.totalorder %s10, 0
    %p131 = por %p129, %p130
    %p132 = scmp.ne.s32.totalorder %s121, %s124
    %p133 = scmp.eq.s32.totalorder %s15, 7
    %p134 = por %p132, %p133
    %p135 = scmp.ne.s32.totalorder %s124, %s125
    %p136 = scmp.eq.s32.totalorder %s15, 0
    %p137 = por %p135, %p136
    %p138 = scmp.ne.s32.totalorder %s124, %s125
    %p139 = scmp.eq.s32.totalorder %s16, 7
    %p140 = por %p138, %p139
    %p142 = scmp.ne.s32.totalorder %s125, %s141
    %p143 = scmp.eq.s32.totalorder %s16, 0
    %p144 = por %p142, %p143
    %s145 = ssub.s32 %s17, %s36
    %s146 = ssub.s32 %s18, %s32
    %s147 = sor.u32 %s145, %s146
    %p148 = scmp.eq.s32.totalorder %s147, 0
    %s150 = sadd.s32 %s149, 1
    %s151 = scalar_select %p148, %s149, %s150
    %p154 = pneg %p148
    %p155 = scmp.eq.s32.totalorder %s10, 7
    %p156 = por %p154, %p155
    %p157 = scmp.ne.s32.totalorder %s149, %s152
    %p158 = scmp.eq.s32.totalorder %s10, 0
    %p159 = por %p157, %p158
    %p160 = scmp.ne.s32.totalorder %s149, %s152
    %p161 = scmp.eq.s32.totalorder %s15, 7
    %p162 = por %p160, %p161
    %p163 = scmp.ne.s32.totalorder %s152, %s153
    %p164 = scmp.eq.s32.totalorder %s15, 0
    %p165 = por %p163, %p164
    %p166 = scmp.ne.s32.totalorder %s152, %s153
    %p167 = scmp.eq.s32.totalorder %s16, 7
    %p168 = por %p166, %p167
    %p170 = scmp.ne.s32.totalorder %s153, %s169
    %p171 = scmp.eq.s32.totalorder %s16, 0
    %p172 = por %p170, %p171
    %p173 = scmp.le.s32.totalorder 1, %s10
    %p174 = scmp.lt.s32.totalorder %s10, 9
    %p175 = pnand %p173, %p174
    %p176 = pneg %p175
    // Predicated region
    $region9: #{forward.16} parent=5 // pred_check
      _
    $region10: #{forward.16} parent=5 // pred_check_branch
      %178 = sbr.rel (%p175) target = $region12
    $region11: #{forward.16} parent=5 // pred_region
      %s179 = ssub.s32 %s10, 1
      // Predicated region
      $region13: #{forward.16} parent=11 // pred_check
        %p180 = pneg %p85
      $region14: #{forward.16} parent=11 // pred_check_branch
        %182 = sbr.rel (%p180) target = $region16
      $region15: #{forward.16} parent=11 // pred_region
        %s183 = smul.u32 32, %s22
        %p184 = scmp.lt.s32.totalorder %s183, 31
        %s185 = scalar_select %p184, %s183, 31
        %p186 = scmp.lt.s32.totalorder %s21, 0
        %s187 = scalar_select %p186, %s21, 0
        %s188 = sadd.s32 %s187, %s185
        %s189 = smul.addr %s188, 4
        %s190 = scalar_lea.vmem %s1, %s189
        %s191 = smul.u32 32, %s22
      $region16: #{forward.16} parent=11 // pred_fallthru
        _
      // Predicated region
      $region17: #{forward.16} parent=11 // pred_check
        %p192 = pneg %p111
      $region18: #{forward.16} parent=11 // pred_check_branch
        %194 = sbr.rel (%p192) target = $region20
      $region19: #{forward.16} parent=11 // pred_region
        %p195 = scmp.lt.s32.totalorder %s21, 0
        %s196 = scalar_select %p195, %s21, 0
        %s197 = scalar_lea.vmem %s2, %s196
      $region20: #{forward.16} parent=11 // pred_fallthru
        _
      // Predicated region
      $region21: #{forward.16} parent=11 // pred_check
        %p198 = pneg %p137
      $region22: #{forward.16} parent=11 // pred_check_branch
        %200 = sbr.rel (%p198) target = $region24
      $region23: #{forward.16} parent=11 // pred_region
        %p201 = scmp.lt.s32.totalorder %s21, 0
        %s202 = scalar_select %p201, %s21, 0
        %s203 = scalar_lea.vmem %s3, %s202
      $region24: #{forward.16} parent=11 // pred_fallthru
        _
    $region12: #{forward.16} parent=5 // pred_fallthru
      _
    %p204 = scmp.lt.s32.totalorder %s10, 8
    // Predicated region
    $region25: #{forward.16} parent=5 // pred_check
      %p205 = pneg %p204
    $region26: #{forward.16} parent=5 // pred_check_branch
      %207 = sbr.rel (%p205) target = $region28
    $region27: #{forward.16} parent=5 // pred_region
      // Predicated region
      $region29: #{forward.16} parent=27 // pred_check
        %p208 = pneg %p51
      $region30: #{forward.16} parent=27 // pred_check_branch
        %210 = sbr.rel (%p208) target = $region32
      $region31: #{forward.16} parent=27 // pred_region
        %s211 = smul.u32 32, %s17
        %s212 = smul.u32 2, %s19
        %p213 = scmp.lt.s32.totalorder %s211, 255
        %s214 = scalar_select %p213, %s211, 255
        %p215 = scmp.lt.s32.totalorder %s212, 1
        %s216 = scalar_select %p215, %s212, 1
        %s217 = smul.addr %s214, 2
        %s218 = sadd.s32 %s216, %s217
        %s219 = smul.addr %s218, 4
        %s220 = scalar_lea.vmem %s0, %s219
        %s221 = smul.u32 32, %s17
        %s222 = smul.u32 2, %s19
      $region32: #{forward.16} parent=27 // pred_fallthru
        _
    $region28: #{forward.16} parent=5 // pred_fallthru
      _
    %p223 = scmp.le.s32.totalorder 1, %s10
    %p224 = scmp.lt.s32.totalorder %s10, 9
    %p225 = pnand %p223, %p224
    %p226 = pneg %p225
    // Predicated region
    $region33: #{forward.16} parent=5 // pred_check
      _
    $region34: #{forward.16} parent=5 // pred_check_branch
      %228 = sbr.rel (%p225) target = $region36
    $region35: #{forward.16} parent=5 // pred_region
      %s229 = ssub.s32 %s10, 1
      %s230 = smul.u32 32, %s20
      %s231 = smul.u32 2, %s22
      %p232 = scmp.lt.s32.totalorder %s230, 255
      %s233 = scalar_select %p232, %s230, 255
      %p234 = scmp.lt.s32.totalorder %s231, 1
      %s235 = scalar_select %p234, %s231, 1
      %s236 = smul.addr %s233, 2
      %s237 = sadd.s32 %s235, %s236
      %s238 = smul.addr %s237, 4
      %s239 = scalar_lea.vmem %s0, %s238
      %p240 = pneg %p57
      %p241 = pneg %p54
      %s242 = smul.u32 32, %s22
      %p243 = scmp.lt.s32.totalorder %s242, 31
      %s244 = scalar_select %p243, %s242, 31
      %p245 = scmp.lt.s32.totalorder %s21, 0
      %s246 = scalar_select %p245, %s21, 0
      %s247 = sadd.s32 %s246, %s244
      %s248 = smul.addr %s247, 4
      %s249 = scalar_lea.vmem %s1, %s248
      %p250 = pneg %p85
      %p251 = pneg %p82
      %p252 = scmp.lt.s32.totalorder %s21, 0
      %s253 = scalar_select %p252, %s21, 0
      %s254 = scalar_lea.vmem %s2, %s253
      %p255 = pneg %p111
      %p256 = pneg %p108
      %p257 = scmp.lt.s32.totalorder %s21, 0
      %s258 = scalar_select %p257, %s21, 0
      %s259 = scalar_lea.vmem %s3, %s258
      %p260 = pneg %p137
      %p261 = pneg %p134
      %p262 = pneg %p165
      %p263 = pneg %p162
      %s264 = smul.u32 32, %s20
      %p265 = scmp.lt.s32.totalorder %s264, 255
      %s266 = scalar_select %p265, %s264, 255
      %p267 = scmp.lt.s32.totalorder %s21, 0
      %s268 = scalar_select %p267, %s21, 0
      %s269 = sadd.s32 %s268, %s266
      %s270 = smul.addr %s269, 4
      %s271 = scalar_lea.vmem %s4, %s270
      %s272 = smul.u32 32, %s20
      %s273 = smul.u32 2, %s22
      %p274 = scmp.lt.s32.totalorder %s272, 255
      %s275 = scalar_select %p274, %s272, 255
      %p276 = scmp.lt.s32.totalorder %s273, 1
      %s277 = scalar_select %p276, %s273, 1
      %s278 = smul.addr %s275, 2
      %s279 = sadd.s32 %s277, %s278
      %s280 = smul.addr %s279, 4
      %s281 = scalar_lea.vmem %s0, %s280
      %s282 = smul.u32 32, %s20
      %s283 = smul.u32 2, %s22
      %s284 = smul.u32 32, %s22
      %p285 = scmp.lt.s32.totalorder %s284, 31
      %s286 = scalar_select %p285, %s284, 31
      %p287 = scmp.lt.s32.totalorder %s21, 0
      %s288 = scalar_select %p287, %s21, 0
      %s289 = sadd.s32 %s288, %s286
      %s290 = smul.addr %s289, 4
      %s291 = scalar_lea.vmem %s1, %s290
      %s292 = smul.u32 32, %s22
      %p293 = scmp.lt.s32.totalorder %s21, 0
      %s294 = scalar_select %p293, %s21, 0
      %s295 = scalar_lea.vmem %s2, %s294
      %p296 = scmp.lt.s32.totalorder %s21, 0
      %s297 = scalar_select %p296, %s21, 0
      %s298 = scalar_lea.vmem %s3, %s297
      %s299 = smul.u32 32, %s20
      %p300 = scmp.lt.s32.totalorder %s299, 255
      %s301 = scalar_select %p300, %s299, 255
      %p302 = scmp.lt.s32.totalorder %s21, 0
      %s303 = scalar_select %p302, %s21, 0
      %s304 = sadd.s32 %s303, %s301
      %s305 = smul.addr %s304, 4
      %s306 = scalar_lea.vmem %s4, %s305
      %s307 = smul.u32 32, %s20
      %p309 = scmp.eq.s32.totalorder %s22, 0
      // Predicated region
      $region37: #{forward.16} parent=35 // pred_check
        %p310 = pneg %p309
      $region38: #{forward.16} parent=35 // pred_check_branch
        %312 = sbr.rel (%p310) target = $region40
      $region39: #{forward.16} parent=35 // pred_region
        %313 = vst [vmem:[#allocation2] sm:$0xff] 0.0
        %314 = vst [vmem:[#allocation2 + $0x8] sm:$0xff] 0.0
        %315 = vst [vmem:[#allocation2 + $0x10] sm:$0xff] 0.0
        %316 = vst [vmem:[#allocation2 + $0x18] sm:$0xff] 0.0
        %317 = vst [vmem:[#allocation2 + $0x20] sm:$0xff] 0.0
        %318 = vst [vmem:[#allocation2 + $0x28] sm:$0xff] 0.0
        %319 = vst [vmem:[#allocation2 + $0x30] sm:$0xff] 0.0
        %320 = vst [vmem:[#allocation2 + $0x38] sm:$0xff] 0.0
        %321 = vst [vmem:[#allocation2 + $0x40] sm:$0xff] 0.0
        %322 = vst [vmem:[#allocation2 + $0x48] sm:$0xff] 0.0
        %323 = vst [vmem:[#allocation2 + $0x50] sm:$0xff] 0.0
        %324 = vst [vmem:[#allocation2 + $0x58] sm:$0xff] 0.0
        %325 = vst [vmem:[#allocation2 + $0x60] sm:$0xff] 0.0
        %326 = vst [vmem:[#allocation2 + $0x68] sm:$0xff] 0.0
        %327 = vst [vmem:[#allocation2 + $0x70] sm:$0xff] 0.0
        %328 = vst [vmem:[#allocation2 + $0x78] sm:$0xff] 0.0
        %329 = vst [vmem:[#allocation2 + $0x80] sm:$0xff] 0.0
        %330 = vst [vmem:[#allocation2 + $0x88] sm:$0xff] 0.0
        %331 = vst [vmem:[#allocation2 + $0x90] sm:$0xff] 0.0
        %332 = vst [vmem:[#allocation2 + $0x98] sm:$0xff] 0.0
        %333 = vst [vmem:[#allocation2 + $0xa0] sm:$0xff] 0.0
        %334 = vst [vmem:[#allocation2 + $0xa8] sm:$0xff] 0.0
        %335 = vst [vmem:[#allocation2 + $0xb0] sm:$0xff] 0.0
        %336 = vst [vmem:[#allocation2 + $0xb8] sm:$0xff] 0.0
        %337 = vst [vmem:[#allocation2 + $0xc0] sm:$0xff] 0.0
        %338 = vst [vmem:[#allocation2 + $0xc8] sm:$0xff] 0.0
        %339 = vst [vmem:[#allocation2 + $0xd0] sm:$0xff] 0.0
        %340 = vst [vmem:[#allocation2 + $0xd8] sm:$0xff] 0.0
        %341 = vst [vmem:[#allocation2 + $0xe0] sm:$0xff] 0.0
        %342 = vst [vmem:[#allocation2 + $0xe8] sm:$0xff] 0.0
        %343 = vst [vmem:[#allocation2 + $0xf0] sm:$0xff] 0.0
        %344 = vst [vmem:[#allocation2 + $0xf8] sm:$0xff] 0.0
      $region40: #{forward.16} parent=35 // pred_fallthru
        _
      %v345 = vld [vmem:[#allocation2] sm:$0xff]
      %v346 = vld [vmem:[#allocation2 + $0x8] sm:$0xff]
      %v347 = vld [vmem:[#allocation2 + $0x10] sm:$0xff]
      %v348 = vld [vmem:[#allocation2 + $0x18] sm:$0xff]
      %v349 = vld [vmem:[#allocation2 + $0x20] sm:$0xff]
      %v350 = vld [vmem:[#allocation2 + $0x28] sm:$0xff]
      %v351 = vld [vmem:[#allocation2 + $0x30] sm:$0xff]
      %v352 = vld [vmem:[#allocation2 + $0x38] sm:$0xff]
      %v353 = vld [vmem:[#allocation2 + $0x40] sm:$0xff]
      %v354 = vld [vmem:[#allocation2 + $0x48] sm:$0xff]
      %v355 = vld [vmem:[#allocation2 + $0x50] sm:$0xff]
      %v356 = vld [vmem:[#allocation2 + $0x58] sm:$0xff]
      %v357 = vld [vmem:[#allocation2 + $0x60] sm:$0xff]
      %v358 = vld [vmem:[#allocation2 + $0x68] sm:$0xff]
      %v359 = vld [vmem:[#allocation2 + $0x70] sm:$0xff]
      %v360 = vld [vmem:[#allocation2 + $0x78] sm:$0xff]
      %v361 = vld [vmem:[#allocation2 + $0x80] sm:$0xff]
      %v362 = vld [vmem:[#allocation2 + $0x88] sm:$0xff]
      %v363 = vld [vmem:[#allocation2 + $0x90] sm:$0xff]
      %v364 = vld [vmem:[#allocation2 + $0x98] sm:$0xff]
      %v365 = vld [vmem:[#allocation2 + $0xa0] sm:$0xff]
      %v366 = vld [vmem:[#allocation2 + $0xa8] sm:$0xff]
      %v367 = vld [vmem:[#allocation2 + $0xb0] sm:$0xff]
      %v368 = vld [vmem:[#allocation2 + $0xb8] sm:$0xff]
      %v369 = vld [vmem:[#allocation2 + $0xc0] sm:$0xff]
      %v370 = vld [vmem:[#allocation2 + $0xc8] sm:$0xff]
      %v371 = vld [vmem:[#allocation2 + $0xd0] sm:$0xff]
      %v372 = vld [vmem:[#allocation2 + $0xd8] sm:$0xff]
      %v373 = vld [vmem:[#allocation2 + $0xe0] sm:$0xff]
      %v374 = vld [vmem:[#allocation2 + $0xe8] sm:$0xff]
      %v375 = vld [vmem:[#allocation2 + $0xf0] sm:$0xff]
      %v376 = vld [vmem:[#allocation2 + $0xf8] sm:$0xff]
      %v377 = vld [vmem:[%s281] sm:$0xff]
      %v378 = vld [vmem:[%s281 + $0x8] sm:$0xff]
      %v379 = vld [vmem:[%s281 + $0x10] sm:$0xff]
      %v380 = vld [vmem:[%s281 + $0x18] sm:$0xff]
      %v381 = vld [vmem:[%s281 + $0x20] sm:$0xff]
      %v382 = vld [vmem:[%s281 + $0x28] sm:$0xff]
      %v383 = vld [vmem:[%s281 + $0x30] sm:$0xff]
      %v384 = vld [vmem:[%s281 + $0x38] sm:$0xff]
      %v385 = vld [vmem:[%s281 + $0x40] sm:$0xff]
      %v386 = vld [vmem:[%s281 + $0x48] sm:$0xff]
      %v387 = vld [vmem:[%s281 + $0x50] sm:$0xff]
      %v388 = vld [vmem:[%s281 + $0x58] sm:$0xff]
      %v389 = vld [vmem:[%s281 + $0x60] sm:$0xff]
      %v390 = vld [vmem:[%s281 + $0x68] sm:$0xff]
      %v391 = vld [vmem:[%s281 + $0x70] sm:$0xff]
      %v392 = vld [vmem:[%s281 + $0x78] sm:$0xff]
      %v393 = vld [vmem:[%s281 + $0x80] sm:$0xff]
      %v394 = vld [vmem:[%s281 + $0x88] sm:$0xff]
      %v395 = vld [vmem:[%s281 + $0x90] sm:$0xff]
      %v396 = vld [vmem:[%s281 + $0x98] sm:$0xff]
      %v397 = vld [vmem:[%s281 + $0xa0] sm:$0xff]
      %v398 = vld [vmem:[%s281 + $0xa8] sm:$0xff]
      %v399 = vld [vmem:[%s281 + $0xb0] sm:$0xff]
      %v400 = vld [vmem:[%s281 + $0xb8] sm:$0xff]
      %v401 = vld [vmem:[%s281 + $0xc0] sm:$0xff]
      %v402 = vld [vmem:[%s281 + $0xc8] sm:$0xff]
      %v403 = vld [vmem:[%s281 + $0xd0] sm:$0xff]
      %v404 = vld [vmem:[%s281 + $0xd8] sm:$0xff]
      %v405 = vld [vmem:[%s281 + $0xe0] sm:$0xff]
      %v406 = vld [vmem:[%s281 + $0xe8] sm:$0xff]
      %v407 = vld [vmem:[%s281 + $0xf0] sm:$0xff]
      %v408 = vld [vmem:[%s281 + $0xf8] sm:$0xff]
      %v409 = vld [vmem:[%s291] sm:$0xf]
      %v410 = vld [vmem:[%s291 + $0x4] sm:$0xf]
      %v411 = vld [vmem:[%s291 + $0x8] sm:$0xf]
      %v412 = vld [vmem:[%s291 + $0xc] sm:$0xf]
      %v413 = vld [vmem:[%s291 + $0x10] sm:$0xf]
      %v414 = vld [vmem:[%s291 + $0x14] sm:$0xf]
      %v415 = vld [vmem:[%s291 + $0x18] sm:$0xf]
      %v416 = vld [vmem:[%s291 + $0x1c] sm:$0xf]
      %v417 = vld [vmem:[%s291 + $0x20] sm:$0xf]
      %v418 = vld [vmem:[%s291 + $0x24] sm:$0xf]
      %v419 = vld [vmem:[%s291 + $0x28] sm:$0xf]
      %v420 = vld [vmem:[%s291 + $0x2c] sm:$0xf]
      %v421 = vld [vmem:[%s291 + $0x30] sm:$0xf]
      %v422 = vld [vmem:[%s291 + $0x34] sm:$0xf]
      %v423 = vld [vmem:[%s291 + $0x38] sm:$0xf]
      %v424 = vld [vmem:[%s291 + $0x3c] sm:$0xf]
      %v425 = vld [vmem:[%s291 + $0x40] sm:$0xf]
      %v426 = vld [vmem:[%s291 + $0x44] sm:$0xf]
      %v427 = vld [vmem:[%s291 + $0x48] sm:$0xf]
      %v428 = vld [vmem:[%s291 + $0x4c] sm:$0xf]
      %v429 = vld [vmem:[%s291 + $0x50] sm:$0xf]
      %v430 = vld [vmem:[%s291 + $0x54] sm:$0xf]
      %v431 = vld [vmem:[%s291 + $0x58] sm:$0xf]
      %v432 = vld [vmem:[%s291 + $0x5c] sm:$0xf]
      %v433 = vld [vmem:[%s291 + $0x60] sm:$0xf]
      %v434 = vld [vmem:[%s291 + $0x64] sm:$0xf]
      %v435 = vld [vmem:[%s291 + $0x68] sm:$0xf]
      %v436 = vld [vmem:[%s291 + $0x6c] sm:$0xf]
      %v437 = vld [vmem:[%s291 + $0x70] sm:$0xf]
      %v438 = vld [vmem:[%s291 + $0x74] sm:$0xf]
      %v439 = vld [vmem:[%s291 + $0x78] sm:$0xf]
      %v440 = vld [vmem:[%s291 + $0x7c] sm:$0xf]
      %v473 = vunpack.c.l.b16 %v377
      %v474 = vunpack.c.h.b16 %v377
      %v475 = vunpack.c.l.b16 %v378
      %v476 = vunpack.c.h.b16 %v378
      %v477 = vunpack.c.l.b16 %v379
      %v478 = vunpack.c.h.b16 %v379
      %v479 = vunpack.c.l.b16 %v380
      %v480 = vunpack.c.h.b16 %v380
      %v481 = vunpack.c.l.b16 %v381
      %v482 = vunpack.c.h.b16 %v381
      %v483 = vunpack.c.l.b16 %v382
      %v484 = vunpack.c.h.b16 %v382
      %v485 = vunpack.c.l.b16 %v383
      %v486 = vunpack.c.h.b16 %v383
      %v487 = vunpack.c.l.b16 %v384
      %v488 = vunpack.c.h.b16 %v384
      %v489 = vunpack.c.l.b16 %v385
      %v490 = vunpack.c.h.b16 %v385
      %v491 = vunpack.c.l.b16 %v386
      %v492 = vunpack.c.h.b16 %v386
      %v493 = vunpack.c.l.b16 %v387
      %v494 = vunpack.c.h.b16 %v387
      %v495 = vunpack.c.l.b16 %v388
      %v496 = vunpack.c.h.b16 %v388
      %v497 = vunpack.c.l.b16 %v389
      %v498 = vunpack.c.h.b16 %v389
      %v499 = vunpack.c.l.b16 %v390
      %v500 = vunpack.c.h.b16 %v390
      %v501 = vunpack.c.l.b16 %v391
      %v502 = vunpack.c.h.b16 %v391
      %v503 = vunpack.c.l.b16 %v392
      %v504 = vunpack.c.h.b16 %v392
      %v505 = vunpack.c.l.b16 %v393
      %v506 = vunpack.c.h.b16 %v393
      %v507 = vunpack.c.l.b16 %v394
      %v508 = vunpack.c.h.b16 %v394
      %v509 = vunpack.c.l.b16 %v395
      %v510 = vunpack.c.h.b16 %v395
      %v511 = vunpack.c.l.b16 %v396
      %v512 = vunpack.c.h.b16 %v396
      %v513 = vunpack.c.l.b16 %v397
      %v514 = vunpack.c.h.b16 %v397
      %v515 = vunpack.c.l.b16 %v398
      %v516 = vunpack.c.h.b16 %v398
      %v517 = vunpack.c.l.b16 %v399
      %v518 = vunpack.c.h.b16 %v399
      %v519 = vunpack.c.l.b16 %v400
      %v520 = vunpack.c.h.b16 %v400
      %v521 = vunpack.c.l.b16 %v401
      %v522 = vunpack.c.h.b16 %v401
      %v523 = vunpack.c.l.b16 %v402
      %v524 = vunpack.c.h.b16 %v402
      %v525 = vunpack.c.l.b16 %v403
      %v526 = vunpack.c.h.b16 %v403
      %v527 = vunpack.c.l.b16 %v404
      %v528 = vunpack.c.h.b16 %v404
      %v529 = vunpack.c.l.b16 %v405
      %v530 = vunpack.c.h.b16 %v405
      %v531 = vunpack.c.l.b16 %v406
      %v532 = vunpack.c.h.b16 %v406
      %v533 = vunpack.c.l.b16 %v407
      %v534 = vunpack.c.h.b16 %v407
      %v535 = vunpack.c.l.b16 %v408
      %v536 = vunpack.c.h.b16 %v408
      %v537 = vpack.c.b16 %v475, %v473
      %v538 = vpack.c.b16 %v476, %v474
      %v539 = vpack.c.b16 %v479, %v477
      %v540 = vpack.c.b16 %v480, %v478
      %v541 = vpack.c.b16 %v483, %v481
      %v542 = vpack.c.b16 %v484, %v482
      %v543 = vpack.c.b16 %v487, %v485
      %v544 = vpack.c.b16 %v488, %v486
      %v545 = vpack.c.b16 %v491, %v489
      %v546 = vpack.c.b16 %v492, %v490
      %v547 = vpack.c.b16 %v495, %v493
      %v548 = vpack.c.b16 %v496, %v494
      %v549 = vpack.c.b16 %v499, %v497
      %v550 = vpack.c.b16 %v500, %v498
      %v551 = vpack.c.b16 %v503, %v501
      %v552 = vpack.c.b16 %v504, %v502
      %v553 = vpack.c.b16 %v507, %v505
      %v554 = vpack.c.b16 %v508, %v506
      %v555 = vpack.c.b16 %v511, %v509
      %v556 = vpack.c.b16 %v512, %v510
      %v557 = vpack.c.b16 %v515, %v513
      %v558 = vpack.c.b16 %v516, %v514
      %v559 = vpack.c.b16 %v519, %v517
      %v560 = vpack.c.b16 %v520, %v518
      %v561 = vpack.c.b16 %v523, %v521
      %v562 = vpack.c.b16 %v524, %v522
      %v563 = vpack.c.b16 %v527, %v525
      %v564 = vpack.c.b16 %v528, %v526
      %v565 = vpack.c.b16 %v531, %v529
      %v566 = vpack.c.b16 %v532, %v530
      %v567 = vpack.c.b16 %v535, %v533
      %v568 = vpack.c.b16 %v536, %v534
      %v633 = vunpack.c.l.b16 %v409
      %v634 = vunpack.c.l.b16 %v410
      %v635 = vunpack.c.l.b16 %v411
      %v636 = vunpack.c.l.b16 %v412
      %v637 = vunpack.c.l.b16 %v413
      %v638 = vunpack.c.l.b16 %v414
      %v639 = vunpack.c.l.b16 %v415
      %v640 = vunpack.c.l.b16 %v416
      %v641 = vunpack.c.l.b16 %v417
      %v642 = vunpack.c.l.b16 %v418
      %v643 = vunpack.c.l.b16 %v419
      %v644 = vunpack.c.l.b16 %v420
      %v645 = vunpack.c.l.b16 %v421
      %v646 = vunpack.c.l.b16 %v422
      %v647 = vunpack.c.l.b16 %v423
      %v648 = vunpack.c.l.b16 %v424
      %v649 = vunpack.c.l.b16 %v425
      %v650 = vunpack.c.l.b16 %v426
      %v651 = vunpack.c.l.b16 %v427
      %v652 = vunpack.c.l.b16 %v428
      %v653 = vunpack.c.l.b16 %v429
      %v654 = vunpack.c.l.b16 %v430
      %v655 = vunpack.c.l.b16 %v431
      %v656 = vunpack.c.l.b16 %v432
      %v657 = vunpack.c.l.b16 %v433
      %v658 = vunpack.c.l.b16 %v434
      %v659 = vunpack.c.l.b16 %v435
      %v660 = vunpack.c.l.b16 %v436
      %v661 = vunpack.c.l.b16 %v437
      %v662 = vunpack.c.l.b16 %v438
      %v663 = vunpack.c.l.b16 %v439
      %v664 = vunpack.c.l.b16 %v440
      %v665 = vpack.c.b16 %v634, %v633
      %v666 = vpack.c.b16 %v636, %v635
      %v667 = vpack.c.b16 %v638, %v637
      %v668 = vpack.c.b16 %v640, %v639
      %v669 = vpack.c.b16 %v642, %v641
      %v670 = vpack.c.b16 %v644, %v643
      %v671 = vpack.c.b16 %v646, %v645
      %v672 = vpack.c.b16 %v648, %v647
      %v673 = vpack.c.b16 %v650, %v649
      %v674 = vpack.c.b16 %v652, %v651
      %v675 = vpack.c.b16 %v654, %v653
      %v676 = vpack.c.b16 %v656, %v655
      %v677 = vpack.c.b16 %v658, %v657
      %v678 = vpack.c.b16 %v660, %v659
      %v679 = vpack.c.b16 %v662, %v661
      %v680 = vpack.c.b16 %v664, %v663
      %697 = vmatprep.subr.bf16.mxu0 0
      %698 = vmatpush1.bf16.msra.mxu0 %v665
      %699 = vmatprep.subr.bf16.mxu0 0
      %700 = vmatpush1.bf16.msra.mxu0 %v666
      %701 = vmatprep.subr.bf16.mxu0 0
      %702 = vmatpush1.bf16.msra.mxu0 %v667
      %703 = vmatprep.subr.bf16.mxu0 0
      %704 = vmatpush1.bf16.msra.mxu0 %v668
      %705 = vmatprep.subr.bf16.mxu0 0
      %706 = vmatpush1.bf16.msra.mxu0 %v669
      %707 = vmatprep.subr.bf16.mxu0 0
      %708 = vmatpush1.bf16.msra.mxu0 %v670
      %709 = vmatprep.subr.bf16.mxu0 0
      %710 = vmatpush1.bf16.msra.mxu0 %v671
      %711 = vmatprep.subr.bf16.mxu0 0
      %712 = vmatpush1.bf16.msra.mxu0 %v672
      %713 = vmatprep.subr.bf16.mxu0 0
      %714 = vmatpush1.bf16.msra.mxu0 %v673
      %715 = vmatprep.subr.bf16.mxu0 0
      %716 = vmatpush1.bf16.msra.mxu0 %v674
      %717 = vmatprep.subr.bf16.mxu0 0
      %718 = vmatpush1.bf16.msra.mxu0 %v675
      %719 = vmatprep.subr.bf16.mxu0 0
      %720 = vmatpush1.bf16.msra.mxu0 %v676
      %721 = vmatprep.subr.bf16.mxu0 0
      %722 = vmatpush1.bf16.msra.mxu0 %v677
      %723 = vmatprep.subr.bf16.mxu0 0
      %724 = vmatpush1.bf16.msra.mxu0 %v678
      %725 = vmatprep.subr.bf16.mxu0 0
      %726 = vmatpush1.bf16.msra.mxu0 %v679
      %727 = vmatprep.subr.bf16.mxu0 0
      %728 = vmatpush1.bf16.msra.mxu0 %v680
      %729 = vmatprep.mubr.bf16.mxu0 %v538
      %730 = vmatmul.mubr.bf16.gmra.mrb[0].mxu0 %v537
      %v731 = vpop.f32.mrb[0].mxu0
      %v732 = vadd.f32 0.0, %v731
      %v733 = vpop.f32.mrb[0].mxu0
      %v734 = vpop.f32.mrb[0].mxu0
      %v735 = vadd.f32 0.0, %v734
      %v736 = vpop.f32.mrb[0].mxu0
      %737 = vmatprep.mubr.bf16.mxu0 %v540
      %738 = vmatmul.mubr.bf16.gmra.mrb[0].mxu0 %v539
      %v739 = vpop.f32.mrb[0].mxu0
      %v740 = vadd.f32 0.0, %v739
      %v741 = vpop.f32.mrb[0].mxu0
      %v742 = vpop.f32.mrb[0].mxu0
      %v743 = vadd.f32 0.0, %v742
      %v744 = vpop.f32.mrb[0].mxu0
      %745 = vmatprep.mubr.bf16.mxu0 %v542
      %746 = vmatmul.mubr.bf16.gmra.mrb[0].mxu0 %v541
      %v747 = vpop.f32.mrb[0].mxu0
      %v748 = vadd.f32 0.0, %v747
      %v749 = vpop.f32.mrb[0].mxu0
      %v750 = vpop.f32.mrb[0].mxu0
      %v751 = vadd.f32 0.0, %v750
      %v752 = vpop.f32.mrb[0].mxu0
      %753 = vmatprep.mubr.bf16.mxu0 %v544
      %754 = vmatmul.mubr.bf16.gmra.mrb[0].mxu0 %v543
      %v755 = vpop.f32.mrb[0].mxu0
      %v756 = vadd.f32 0.0, %v755
      %v757 = vpop.f32.mrb[0].mxu0
      %v758 = vpop.f32.mrb[0].mxu0
      %v759 = vadd.f32 0.0, %v758
      %v760 = vpop.f32.mrb[0].mxu0
      %761 = vmatprep.mubr.bf16.mxu0 %v546
      %762 = vmatmul.mubr.bf16.gmra.mrb[0].mxu0 %v545
      %v763 = vpop.f32.mrb[0].mxu0
      %v764 = vadd.f32 0.0, %v763
      %v765 = vpop.f32.mrb[0].mxu0
      %v766 = vpop.f32.mrb[0].mxu0
      %v767 = vadd.f32 0.0, %v766
      %v768 = vpop.f32.mrb[0].mxu0
      %769 = vmatprep.mubr.bf16.mxu0 %v548
      %770 = vmatmul.mubr.bf16.gmra.mrb[0].mxu0 %v547
      %v771 = vpop.f32.mrb[0].mxu0
      %v772 = vadd.f32 0.0, %v771
      %v773 = vpop.f32.mrb[0].mxu0
      %v774 = vpop.f32.mrb[0].mxu0
      %v775 = vadd.f32 0.0, %v774
      %v776 = vpop.f32.mrb[0].mxu0
      %777 = vmatprep.mubr.bf16.mxu0 %v550
      %778 = vmatmul.mubr.bf16.gmra.mrb[0].mxu0 %v549
      %v779 = vpop.f32.mrb[0].mxu0
      %v780 = vadd.f32 0.0, %v779
      %v781 = vpop.f32.mrb[0].mxu0
      %v782 = vpop.f32.mrb[0].mxu0
      %v783 = vadd.f32 0.0, %v782
      %v784 = vpop.f32.mrb[0].mxu0
      %785 = vmatprep.mubr.bf16.mxu0 %v552
      %786 = vmatmul.mubr.bf16.gmra.mrb[0].mxu0 %v551
      %v787 = vpop.f32.mrb[0].mxu0
      %v788 = vadd.f32 0.0, %v787
      %v789 = vpop.f32.mrb[0].mxu0
      %v790 = vpop.f32.mrb[0].mxu0
      %v791 = vadd.f32 0.0, %v790
      %v792 = vpop.f32.mrb[0].mxu0
      %793 = vmatprep.mubr.bf16.mxu0 %v554
      %794 = vmatmul.mubr.bf16.gmra.mrb[0].mxu0 %v553
      %v795 = vpop.f32.mrb[0].mxu0
      %v796 = vadd.f32 0.0, %v795
      %v797 = vpop.f32.mrb[0].mxu0
      %v798 = vpop.f32.mrb[0].mxu0
      %v799 = vadd.f32 0.0, %v798
      %v800 = vpop.f32.mrb[0].mxu0
      %801 = vmatprep.mubr.bf16.mxu0 %v556
      %802 = vmatmul.mubr.bf16.gmra.mrb[0].mxu0 %v555
      %v803 = vpop.f32.mrb[0].mxu0
      %v804 = vadd.f32 0.0, %v803
      %v805 = vpop.f32.mrb[0].mxu0
      %v806 = vpop.f32.mrb[0].mxu0
      %v807 = vadd.f32 0.0, %v806
      %v808 = vpop.f32.mrb[0].mxu0
      %809 = vmatprep.mubr.bf16.mxu0 %v558
      %810 = vmatmul.mubr.bf16.gmra.mrb[0].mxu0 %v557
      %v811 = vpop.f32.mrb[0].mxu0
      %v812 = vadd.f32 0.0, %v811
      %v813 = vpop.f32.mrb[0].mxu0
      %v814 = vpop.f32.mrb[0].mxu0
      %v815 = vadd.f32 0.0, %v814
      %v816 = vpop.f32.mrb[0].mxu0
      %817 = vmatprep.mubr.bf16.mxu0 %v560
      %818 = vmatmul.mubr.bf16.gmra.mrb[0].mxu0 %v559
      %v819 = vpop.f32.mrb[0].mxu0
      %v820 = vadd.f32 0.0, %v819
      %v821 = vpop.f32.mrb[0].mxu0
      %v822 = vpop.f32.mrb[0].mxu0
      %v823 = vadd.f32 0.0, %v822
      %v824 = vpop.f32.mrb[0].mxu0
      %825 = vmatprep.mubr.bf16.mxu0 %v562
      %826 = vmatmul.mubr.bf16.gmra.mrb[0].mxu0 %v561
      %v827 = vpop.f32.mrb[0].mxu0
      %v828 = vadd.f32 0.0, %v827
      %v829 = vpop.f32.mrb[0].mxu0
      %v830 = vpop.f32.mrb[0].mxu0
      %v831 = vadd.f32 0.0, %v830
      %v832 = vpop.f32.mrb[0].mxu0
      %833 = vmatprep.mubr.bf16.mxu0 %v564
      %834 = vmatmul.mubr.bf16.gmra.mrb[0].mxu0 %v563
      %v835 = vpop.f32.mrb[0].mxu0
      %v836 = vadd.f32 0.0, %v835
      %v837 = vpop.f32.mrb[0].mxu0
      %v838 = vpop.f32.mrb[0].mxu0
      %v839 = vadd.f32 0.0, %v838
      %v840 = vpop.f32.mrb[0].mxu0
      %841 = vmatprep.mubr.bf16.mxu0 %v566
      %842 = vmatmul.mubr.bf16.gmra.mrb[0].mxu0 %v565
      %v843 = vpop.f32.mrb[0].mxu0
      %v844 = vadd.f32 0.0, %v843
      %v845 = vpop.f32.mrb[0].mxu0
      %v846 = vpop.f32.mrb[0].mxu0
      %v847 = vadd.f32 0.0, %v846
      %v848 = vpop.f32.mrb[0].mxu0
      %849 = vmatprep.mubr.bf16.mxu0 %v568
      %850 = vmatmul.mubr.bf16.gmra.mrb[0].mxu0 %v567
      %v851 = vpop.f32.mrb[0].mxu0
      %v852 = vadd.f32 0.0, %v851
      %v853 = vpop.f32.mrb[0].mxu0
      %v854 = vpop.f32.mrb[0].mxu0
      %v855 = vadd.f32 0.0, %v854
      %v856 = vpop.f32.mrb[0].mxu0
      %857 = vdwg.mxu0
      %v858 = vadd.f32 %v345, %v732
      %v859 = vadd.f32 %v346, %v735
      %v860 = vadd.f32 %v347, %v740
      %v861 = vadd.f32 %v348, %v743
      %v862 = vadd.f32 %v349, %v748
      %v863 = vadd.f32 %v350, %v751
      %v864 = vadd.f32 %v351, %v756
      %v865 = vadd.f32 %v352, %v759
      %v866 = vadd.f32 %v353, %v764
      %v867 = vadd.f32 %v354, %v767
      %v868 = vadd.f32 %v355, %v772
      %v869 = vadd.f32 %v356, %v775
      %v870 = vadd.f32 %v357, %v780
      %v871 = vadd.f32 %v358, %v783
      %v872 = vadd.f32 %v359, %v788
      %v873 = vadd.f32 %v360, %v791
      %v874 = vadd.f32 %v361, %v796
      %v875 = vadd.f32 %v362, %v799
      %v876 = vadd.f32 %v363, %v804
      %v877 = vadd.f32 %v364, %v807
      %v878 = vadd.f32 %v365, %v812
      %v879 = vadd.f32 %v366, %v815
      %v880 = vadd.f32 %v367, %v820
      %v881 = vadd.f32 %v368, %v823
      %v882 = vadd.f32 %v369, %v828
      %v883 = vadd.f32 %v370, %v831
      %v884 = vadd.f32 %v371, %v836
      %v885 = vadd.f32 %v372, %v839
      %v886 = vadd.f32 %v373, %v844
      %v887 = vadd.f32 %v374, %v847
      %v888 = vadd.f32 %v375, %v852
      %v889 = vadd.f32 %v376, %v855
      %890 = vst [vmem:[#allocation2] sm:$0xff] %v858
      %891 = vst [vmem:[#allocation2 + $0x8] sm:$0xff] %v859
      %892 = vst [vmem:[#allocation2 + $0x10] sm:$0xff] %v860
      %893 = vst [vmem:[#allocation2 + $0x18] sm:$0xff] %v861
      %894 = vst [vmem:[#allocation2 + $0x20] sm:$0xff] %v862
      %895 = vst [vmem:[#allocation2 + $0x28] sm:$0xff] %v863
      %896 = vst [vmem:[#allocation2 + $0x30] sm:$0xff] %v864
      %897 = vst [vmem:[#allocation2 + $0x38] sm:$0xff] %v865
      %898 = vst [vmem:[#allocation2 + $0x40] sm:$0xff] %v866
      %899 = vst [vmem:[#allocation2 + $0x48] sm:$0xff] %v867
      %900 = vst [vmem:[#allocation2 + $0x50] sm:$0xff] %v868
      %901 = vst [vmem:[#allocation2 + $0x58] sm:$0xff] %v869
      %902 = vst [vmem:[#allocation2 + $0x60] sm:$0xff] %v870
      %903 = vst [vmem:[#allocation2 + $0x68] sm:$0xff] %v871
      %904 = vst [vmem:[#allocation2 + $0x70] sm:$0xff] %v872
      %905 = vst [vmem:[#allocation2 + $0x78] sm:$0xff] %v873
      %906 = vst [vmem:[#allocation2 + $0x80] sm:$0xff] %v874
      %907 = vst [vmem:[#allocation2 + $0x88] sm:$0xff] %v875
      %908 = vst [vmem:[#allocation2 + $0x90] sm:$0xff] %v876
      %909 = vst [vmem:[#allocation2 + $0x98] sm:$0xff] %v877
      %910 = vst [vmem:[#allocation2 + $0xa0] sm:$0xff] %v878
      %911 = vst [vmem:[#allocation2 + $0xa8] sm:$0xff] %v879
      %912 = vst [vmem:[#allocation2 + $0xb0] sm:$0xff] %v880
      %913 = vst [vmem:[#allocation2 + $0xb8] sm:$0xff] %v881
      %914 = vst [vmem:[#allocation2 + $0xc0] sm:$0xff] %v882
      %915 = vst [vmem:[#allocation2 + $0xc8] sm:$0xff] %v883
      %916 = vst [vmem:[#allocation2 + $0xd0] sm:$0xff] %v884
      %917 = vst [vmem:[#allocation2 + $0xd8] sm:$0xff] %v885
      %918 = vst [vmem:[#allocation2 + $0xe0] sm:$0xff] %v886
      %919 = vst [vmem:[#allocation2 + $0xe8] sm:$0xff] %v887
      %920 = vst [vmem:[#allocation2 + $0xf0] sm:$0xff] %v888
      %921 = vst [vmem:[#allocation2 + $0xf8] sm:$0xff] %v889
      // Predicated region
      $region41: #{forward.16} parent=35 // pred_check
        %p922 = pneg %p309
      $region42: #{forward.16} parent=35 // pred_check_branch
        %924 = sbr.rel (%p922) target = $region44
      $region43: #{forward.16} parent=35 // pred_region
        %v925 = vld [vmem:[#allocation2] sm:$0xff]
        %v926 = vld [vmem:[#allocation2 + $0x8] sm:$0xff]
        %v927 = vld [vmem:[#allocation2 + $0x10] sm:$0xff]
        %v928 = vld [vmem:[#allocation2 + $0x18] sm:$0xff]
        %v929 = vld [vmem:[#allocation2 + $0x20] sm:$0xff]
        %v930 = vld [vmem:[#allocation2 + $0x28] sm:$0xff]
        %v931 = vld [vmem:[#allocation2 + $0x30] sm:$0xff]
        %v932 = vld [vmem:[#allocation2 + $0x38] sm:$0xff]
        %v933 = vld [vmem:[#allocation2 + $0x40] sm:$0xff]
        %v934 = vld [vmem:[#allocation2 + $0x48] sm:$0xff]
        %v935 = vld [vmem:[#allocation2 + $0x50] sm:$0xff]
        %v936 = vld [vmem:[#allocation2 + $0x58] sm:$0xff]
        %v937 = vld [vmem:[#allocation2 + $0x60] sm:$0xff]
        %v938 = vld [vmem:[#allocation2 + $0x68] sm:$0xff]
        %v939 = vld [vmem:[#allocation2 + $0x70] sm:$0xff]
        %v940 = vld [vmem:[#allocation2 + $0x78] sm:$0xff]
        %v941 = vld [vmem:[#allocation2 + $0x80] sm:$0xff]
        %v942 = vld [vmem:[#allocation2 + $0x88] sm:$0xff]
        %v943 = vld [vmem:[#allocation2 + $0x90] sm:$0xff]
        %v944 = vld [vmem:[#allocation2 + $0x98] sm:$0xff]
        %v945 = vld [vmem:[#allocation2 + $0xa0] sm:$0xff]
        %v946 = vld [vmem:[#allocation2 + $0xa8] sm:$0xff]
        %v947 = vld [vmem:[#allocation2 + $0xb0] sm:$0xff]
        %v948 = vld [vmem:[#allocation2 + $0xb8] sm:$0xff]
        %v949 = vld [vmem:[#allocation2 + $0xc0] sm:$0xff]
        %v950 = vld [vmem:[#allocation2 + $0xc8] sm:$0xff]
        %v951 = vld [vmem:[#allocation2 + $0xd0] sm:$0xff]
        %v952 = vld [vmem:[#allocation2 + $0xd8] sm:$0xff]
        %v953 = vld [vmem:[#allocation2 + $0xe0] sm:$0xff]
        %v954 = vld [vmem:[#allocation2 + $0xe8] sm:$0xff]
        %v955 = vld [vmem:[#allocation2 + $0xf0] sm:$0xff]
        %v956 = vld [vmem:[#allocation2 + $0xf8] sm:$0xff]
        %v957 = vld [vmem:[%s295] sm:$0x1]
        %v959 = vlaneseq
        %v960 = vshrl.u32 %v959, 7
        %v961 = vsub.s32 0, %v960
        %v962 = vrot.slane %v957, %v961
        %v964 = vmul.f32 %v925, %v962
        %v965 = vmul.f32 %v926, %v962
        %v966 = vmul.f32 %v927, %v962
        %v967 = vmul.f32 %v928, %v962
        %v968 = vmul.f32 %v929, %v962
        %v969 = vmul.f32 %v930, %v962
        %v970 = vmul.f32 %v931, %v962
        %v971 = vmul.f32 %v932, %v962
        %v972 = vmul.f32 %v933, %v962
        %v973 = vmul.f32 %v934, %v962
        %v974 = vmul.f32 %v935, %v962
        %v975 = vmul.f32 %v936, %v962
        %v976 = vmul.f32 %v937, %v962
        %v977 = vmul.f32 %v938, %v962
        %v978 = vmul.f32 %v939, %v962
        %v979 = vmul.f32 %v940, %v962
        %v980 = vmul.f32 %v941, %v962
        %v981 = vmul.f32 %v942, %v962
        %v982 = vmul.f32 %v943, %v962
        %v983 = vmul.f32 %v944, %v962
        %v984 = vmul.f32 %v945, %v962
        %v985 = vmul.f32 %v946, %v962
        %v986 = vmul.f32 %v947, %v962
        %v987 = vmul.f32 %v948, %v962
        %v988 = vmul.f32 %v949, %v962
        %v989 = vmul.f32 %v950, %v962
        %v990 = vmul.f32 %v951, %v962
        %v991 = vmul.f32 %v952, %v962
        %v992 = vmul.f32 %v953, %v962
        %v993 = vmul.f32 %v954, %v962
        %v994 = vmul.f32 %v955, %v962
        %v995 = vmul.f32 %v956, %v962
        %v996 = vld [vmem:[%s298] sm:$0x1]
        %v998 = vlaneseq
        %v999 = vshrl.u32 %v998, 7
        %v1000 = vsub.s32 0, %v999
        %v1001 = vrot.slane %v996, %v1000
        %v1003 = vadd.f32 %v964, %v1001
        %v1004 = vadd.f32 %v965, %v1001
        %v1005 = vadd.f32 %v966, %v1001
        %v1006 = vadd.f32 %v967, %v1001
        %v1007 = vadd.f32 %v968, %v1001
        %v1008 = vadd.f32 %v969, %v1001
        %v1009 = vadd.f32 %v970, %v1001
        %v1010 = vadd.f32 %v971, %v1001
        %v1011 = vadd.f32 %v972, %v1001
        %v1012 = vadd.f32 %v973, %v1001
        %v1013 = vadd.f32 %v974, %v1001
        %v1014 = vadd.f32 %v975, %v1001
        %v1015 = vadd.f32 %v976, %v1001
        %v1016 = vadd.f32 %v977, %v1001
        %v1017 = vadd.f32 %v978, %v1001
        %v1018 = vadd.f32 %v979, %v1001
        %v1019 = vadd.f32 %v980, %v1001
        %v1020 = vadd.f32 %v981, %v1001
        %v1021 = vadd.f32 %v982, %v1001
        %v1022 = vadd.f32 %v983, %v1001
        %v1023 = vadd.f32 %v984, %v1001
        %v1024 = vadd.f32 %v985, %v1001
        %v1025 = vadd.f32 %v986, %v1001
        %v1026 = vadd.f32 %v987, %v1001
        %v1027 = vadd.f32 %v988, %v1001
        %v1028 = vadd.f32 %v989, %v1001
        %v1029 = vadd.f32 %v990, %v1001
        %v1030 = vadd.f32 %v991, %v1001
        %v1031 = vadd.f32 %v992, %v1001
        %v1032 = vadd.f32 %v993, %v1001
        %v1033 = vadd.f32 %v994, %v1001
        %v1034 = vadd.f32 %v995, %v1001
        %v1035 = vmax.f32 %v1003, 0.0
        %v1036 = vmax.f32 %v1004, 0.0
        %v1037 = vmax.f32 %v1005, 0.0
        %v1038 = vmax.f32 %v1006, 0.0
        %v1039 = vmax.f32 %v1007, 0.0
        %v1040 = vmax.f32 %v1008, 0.0
        %v1041 = vmax.f32 %v1009, 0.0
        %v1042 = vmax.f32 %v1010, 0.0
        %v1043 = vmax.f32 %v1011, 0.0
        %v1044 = vmax.f32 %v1012, 0.0
        %v1045 = vmax.f32 %v1013, 0.0
        %v1046 = vmax.f32 %v1014, 0.0
        %v1047 = vmax.f32 %v1015, 0.0
        %v1048 = vmax.f32 %v1016, 0.0
        %v1049 = vmax.f32 %v1017, 0.0
        %v1050 = vmax.f32 %v1018, 0.0
        %v1051 = vmax.f32 %v1019, 0.0
        %v1052 = vmax.f32 %v1020, 0.0
        %v1053 = vmax.f32 %v1021, 0.0
        %v1054 = vmax.f32 %v1022, 0.0
        %v1055 = vmax.f32 %v1023, 0.0
        %v1056 = vmax.f32 %v1024, 0.0
        %v1057 = vmax.f32 %v1025, 0.0
        %v1058 = vmax.f32 %v1026, 0.0
        %v1059 = vmax.f32 %v1027, 0.0
        %v1060 = vmax.f32 %v1028, 0.0
        %v1061 = vmax.f32 %v1029, 0.0
        %v1062 = vmax.f32 %v1030, 0.0
        %v1063 = vmax.f32 %v1031, 0.0
        %v1064 = vmax.f32 %v1032, 0.0
        %v1065 = vmax.f32 %v1033, 0.0
        %v1066 = vmax.f32 %v1034, 0.0
        %v1067 = vpack.c.bf16 %v1036, %v1035
        %v1068 = vpack.c.bf16 %v1038, %v1037
        %v1069 = vpack.c.bf16 %v1040, %v1039
        %v1070 = vpack.c.bf16 %v1042, %v1041
        %v1071 = vpack.c.bf16 %v1044, %v1043
        %v1072 = vpack.c.bf16 %v1046, %v1045
        %v1073 = vpack.c.bf16 %v1048, %v1047
        %v1074 = vpack.c.bf16 %v1050, %v1049
        %v1075 = vpack.c.bf16 %v1052, %v1051
        %v1076 = vpack.c.bf16 %v1054, %v1053
        %v1077 = vpack.c.bf16 %v1056, %v1055
        %v1078 = vpack.c.bf16 %v1058, %v1057
        %v1079 = vpack.c.bf16 %v1060, %v1059
        %v1080 = vpack.c.bf16 %v1062, %v1061
        %v1081 = vpack.c.bf16 %v1064, %v1063
        %v1082 = vpack.c.bf16 %v1066, %v1065
        %v1099 = vunpack.c.l.b16 %v1067
        %v1100 = vunpack.c.h.b16 %v1067
        %v1101 = vunpack.c.l.b16 %v1068
        %v1102 = vunpack.c.h.b16 %v1068
        %v1103 = vunpack.c.l.b16 %v1069
        %v1104 = vunpack.c.h.b16 %v1069
        %v1105 = vunpack.c.l.b16 %v1070
        %v1106 = vunpack.c.h.b16 %v1070
        %v1107 = vunpack.c.l.b16 %v1071
        %v1108 = vunpack.c.h.b16 %v1071
        %v1109 = vunpack.c.l.b16 %v1072
        %v1110 = vunpack.c.h.b16 %v1072
        %v1111 = vunpack.c.l.b16 %v1073
        %v1112 = vunpack.c.h.b16 %v1073
        %v1113 = vunpack.c.l.b16 %v1074
        %v1114 = vunpack.c.h.b16 %v1074
        %v1115 = vunpack.c.l.b16 %v1075
        %v1116 = vunpack.c.h.b16 %v1075
        %v1117 = vunpack.c.l.b16 %v1076
        %v1118 = vunpack.c.h.b16 %v1076
        %v1119 = vunpack.c.l.b16 %v1077
        %v1120 = vunpack.c.h.b16 %v1077
        %v1121 = vunpack.c.l.b16 %v1078
        %v1122 = vunpack.c.h.b16 %v1078
        %v1123 = vunpack.c.l.b16 %v1079
        %v1124 = vunpack.c.h.b16 %v1079
        %v1125 = vunpack.c.l.b16 %v1080
        %v1126 = vunpack.c.h.b16 %v1080
        %v1127 = vunpack.c.l.b16 %v1081
        %v1128 = vunpack.c.h.b16 %v1081
        %v1129 = vunpack.c.l.b16 %v1082
        %v1130 = vunpack.c.h.b16 %v1082
        %v1131 = vpack.c.b16 %v1099, %v1099
        %v1132 = vpack.c.b16 %v1100, %v1100
        %v1133 = vpack.c.b16 %v1101, %v1101
        %v1134 = vpack.c.b16 %v1102, %v1102
        %v1135 = vpack.c.b16 %v1103, %v1103
        %v1136 = vpack.c.b16 %v1104, %v1104
        %v1137 = vpack.c.b16 %v1105, %v1105
        %v1138 = vpack.c.b16 %v1106, %v1106
        %v1139 = vpack.c.b16 %v1107, %v1107
        %v1140 = vpack.c.b16 %v1108, %v1108
        %v1141 = vpack.c.b16 %v1109, %v1109
        %v1142 = vpack.c.b16 %v1110, %v1110
        %v1143 = vpack.c.b16 %v1111, %v1111
        %v1144 = vpack.c.b16 %v1112, %v1112
        %v1145 = vpack.c.b16 %v1113, %v1113
        %v1146 = vpack.c.b16 %v1114, %v1114
        %v1147 = vpack.c.b16 %v1115, %v1115
        %v1148 = vpack.c.b16 %v1116, %v1116
        %v1149 = vpack.c.b16 %v1117, %v1117
        %v1150 = vpack.c.b16 %v1118, %v1118
        %v1151 = vpack.c.b16 %v1119, %v1119
        %v1152 = vpack.c.b16 %v1120, %v1120
        %v1153 = vpack.c.b16 %v1121, %v1121
        %v1154 = vpack.c.b16 %v1122, %v1122
        %v1155 = vpack.c.b16 %v1123, %v1123
        %v1156 = vpack.c.b16 %v1124, %v1124
        %v1157 = vpack.c.b16 %v1125, %v1125
        %v1158 = vpack.c.b16 %v1126, %v1126
        %v1159 = vpack.c.b16 %v1127, %v1127
        %v1160 = vpack.c.b16 %v1128, %v1128
        %v1161 = vpack.c.b16 %v1129, %v1129
        %v1162 = vpack.c.b16 %v1130, %v1130
        %1195 = vst [vmem:[%s306] sm:$0xf] %v1131
        %1196 = vst [vmem:[%s306 + $0x4] sm:$0xf] %v1132
        %1197 = vst [vmem:[%s306 + $0x8] sm:$0xf] %v1133
        %1198 = vst [vmem:[%s306 + $0xc] sm:$0xf] %v1134
        %1199 = vst [vmem:[%s306 + $0x10] sm:$0xf] %v1135
        %1200 = vst [vmem:[%s306 + $0x14] sm:$0xf] %v1136
        %1201 = vst [vmem:[%s306 + $0x18] sm:$0xf] %v1137
        %1202 = vst [vmem:[%s306 + $0x1c] sm:$0xf] %v1138
        %1203 = vst [vmem:[%s306 + $0x20] sm:$0xf] %v1139
        %1204 = vst [vmem:[%s306 + $0x24] sm:$0xf] %v1140
        %1205 = vst [vmem:[%s306 + $0x28] sm:$0xf] %v1141
        %1206 = vst [vmem:[%s306 + $0x2c] sm:$0xf] %v1142
        %1207 = vst [vmem:[%s306 + $0x30] sm:$0xf] %v1143
        %1208 = vst [vmem:[%s306 + $0x34] sm:$0xf] %v1144
        %1209 = vst [vmem:[%s306 + $0x38] sm:$0xf] %v1145
        %1210 = vst [vmem:[%s306 + $0x3c] sm:$0xf] %v1146
        %1211 = vst [vmem:[%s306 + $0x40] sm:$0xf] %v1147
        %1212 = vst [vmem:[%s306 + $0x44] sm:$0xf] %v1148
        %1213 = vst [vmem:[%s306 + $0x48] sm:$0xf] %v1149
        %1214 = vst [vmem:[%s306 + $0x4c] sm:$0xf] %v1150
        %1215 = vst [vmem:[%s306 + $0x50] sm:$0xf] %v1151
        %1216 = vst [vmem:[%s306 + $0x54] sm:$0xf] %v1152
        %1217 = vst [vmem:[%s306 + $0x58] sm:$0xf] %v1153
        %1218 = vst [vmem:[%s306 + $0x5c] sm:$0xf] %v1154
        %1219 = vst [vmem:[%s306 + $0x60] sm:$0xf] %v1155
        %1220 = vst [vmem:[%s306 + $0x64] sm:$0xf] %v1156
        %1221 = vst [vmem:[%s306 + $0x68] sm:$0xf] %v1157
        %1222 = vst [vmem:[%s306 + $0x6c] sm:$0xf] %v1158
        %1223 = vst [vmem:[%s306 + $0x70] sm:$0xf] %v1159
        %1224 = vst [vmem:[%s306 + $0x74] sm:$0xf] %v1160
        %1225 = vst [vmem:[%s306 + $0x78] sm:$0xf] %v1161
        %1226 = vst [vmem:[%s306 + $0x7c] sm:$0xf] %v1162
      $region44: #{forward.16} parent=35 // pred_fallthru
        _
      %s1227 = smul.u32 32, %s20
      %p1228 = scmp.lt.s32.totalorder %s1227, 255
      %s1229 = scalar_select %p1228, %s1227, 255
      %p1230 = scmp.lt.s32.totalorder %s21, 0
      %s1231 = scalar_select %p1230, %s21, 0
      %s1232 = sadd.s32 %s1231, %s1229
      %s1233 = smul.addr %s1232, 4
      %s1234 = scalar_lea.vmem %s4, %s1233
      // Predicated region
      $region45: #{forward.16} parent=35 // pred_check
        %p1235 = pneg %p162
      $region46: #{forward.16} parent=35 // pred_check_branch
        %1237 = sbr.rel (%p1235) target = $region48
      $region47: #{forward.16} parent=35 // pred_region
        %s1238 = smul.u32 32, %s20
      $region48: #{forward.16} parent=35 // pred_fallthru
        _
    $region36: #{forward.16} parent=5 // pred_fallthru
      _
    %p1239 = scmp.le.s32.totalorder 2, %s10
    // Predicated region
    $region49: #{forward.16} parent=5 // pred_check
      %p1240 = pneg %p1239
    $region50: #{forward.16} parent=5 // pred_check_branch
      %1242 = sbr.rel (%p1240) target = $region52
    $region51: #{forward.16} parent=5 // pred_region
      %s1243 = ssub.s32 %s10, 2
      // Predicated region
      $region53: #{forward.16} parent=51 // pred_check
        %p1244 = pneg %p168
      $region54: #{forward.16} parent=51 // pred_check_branch
        %1246 = sbr.rel (%p1244) target = $region56
      $region55: #{forward.16} parent=51 // pred_region
        %s1247 = smul.u32 32, %s23
        %p1248 = scmp.lt.s32.totalorder %s1247, 255
        %s1249 = scalar_select %p1248, %s1247, 255
        %p1250 = scmp.lt.s32.totalorder %s24, 0
        %s1251 = scalar_select %p1250, %s24, 0
        %s1252 = sadd.s32 %s1251, %s1249
        %s1253 = smul.addr %s1252, 4
        %s1254 = scalar_lea.vmem %s4, %s1253
      $region56: #{forward.16} parent=51 // pred_fallthru
        _
    $region52: #{forward.16} parent=5 // pred_fallthru
      _
  $region6: #{forward.16} parent=0 // loop_footer
    %s14 = sadd.s32 1, %s10
  $region7: #{forward.16} parent=0 // loop_footer_branch
    %9 = sbr.rel target = $region3
  $region8: #{forward.16} parent=0 // loop_exit
    _

// kernel: forward.17
$region0: #{forward.17}
  #allocation0 [shape = 'u32[]', space=smem, size = 0x4, offset = 0x4, fixed_abs, tag = 'smem constant byte address 0x4 - core index']
  #allocation1 [shape = 'u32[144,128]{1,0:T(1,128)}', space=vmem, size = 0x12000, scoped, tag = 'internal scratch']
  #allocation2 [shape = 'f32[256,128]{1,0:T(8,128)}', space=vmem, size = 0x20000, scoped, tag = 'scratch operand']
  %s0 = inlined_call_operand.vmem [shape: bf16[512,512], index: 0, kind: input, shape index: {}]
  %s1 = inlined_call_operand.vmem [shape: bf16[512,128], index: 1, kind: input, shape index: {}]
  %s2 = inlined_call_operand.vmem [shape: f32[1,128], index: 2, kind: input, shape index: {}]
  %s3 = inlined_call_operand.vmem [shape: f32[1,128], index: 3, kind: input, shape index: {}]
  %s4 = inlined_call_operand.vmem [shape: bf16[512,128], index: 4, kind: output, shape index: {}]
  %s5 = sld [smem:[#allocation0]]
  $region57: #{forward.17} parent=0
    _
  %s7 = ssub.s32 1, %s5
  %s8 = scalar_select 0, %s7, %s5
  loop: start=0, step=1, limit=4
  $region2: #{forward.17} parent=0 // loop_pre_header
    _
  $region3: #{forward.17} parent=0 // loop_header
    %s10 = sphi 0, %s14
    %p11 = scmp.ge.s32.totalorder %s10, 4
    %s17 = sphi 0, %s36
    %s18 = sphi 0, %s32
    %s19 = sphi 0, %s28
    %s20 = sphi 0, %s17
    %s21 = sphi 0, %s18
    %s22 = sphi 0, %s19
    %s23 = sphi 0, %s20
    %s24 = sphi 0, %s21
    %s25 = sphi 0, %s22
    %s41 = sphi 0, %s43
    %s44 = sphi 0, %s41
    %s45 = sphi 0, %s44
    %s61 = sphi 0, %s45
    %s69 = sphi 0, %s71
    %s72 = sphi 0, %s69
    %s73 = sphi 0, %s72
    %s89 = sphi 0, %s73
    %s95 = sphi 0, %s97
    %s98 = sphi 0, %s95
    %s99 = sphi 0, %s98
    %s115 = sphi 0, %s99
    %s121 = sphi 0, %s123
    %s124 = sphi 0, %s121
    %s125 = sphi 0, %s124
    %s141 = sphi 0, %s125
    %s149 = sphi 0, %s151
    %s152 = sphi 0, %s149
    %s153 = sphi 0, %s152
    %s169 = sphi 0, %s153
  $region4: #{forward.17} parent=0 // loop_header_branch
    %13 = sbr.rel (%p11) target = $region8
  $region5: #{forward.17} parent=0 // loop_body
    %s15 = ssub.s32 %s10, 1
    %s16 = ssub.s32 %s10, 2
    %s26 = sadd.s32 1, %s19
    %p27 = scmp.ge.s32.totalorder %s26, 1
    %s28 = scalar_select %p27, 0, %s26
    %s29 = sadd.s32 1, %s18
    %s30 = scalar_select %p27, %s29, %s18
    %p31 = scmp.ge.s32.totalorder %s30, 1
    %s32 = scalar_select %p31, 0, %s30
    %s33 = sadd.s32 1, %s17
    %s34 = scalar_select %p31, %s33, %s17
    %p35 = scmp.ge.s32.totalorder %s34, 2
    %s36 = scalar_select %p35, 0, %s34
    %s37 = ssub.s32 %s17, %s36
    %s38 = ssub.s32 %s19, %s28
    %s39 = sor.u32 %s37, %s38
    %p40 = scmp.eq.s32.totalorder %s39, 0
    %s42 = sadd.s32 %s41, 1
    %s43 = scalar_select %p40, %s41, %s42
    %p46 = pneg %p40
    %p47 = scmp.eq.s32.totalorder %s10, 1
    %p48 = por %p46, %p47
    %p49 = scmp.ne.s32.totalorder %s41, %s44
    %p50 = scmp.eq.s32.totalorder %s10, 0
    %p51 = por %p49, %p50
    %p52 = scmp.ne.s32.totalorder %s41, %s44
    %p53 = scmp.eq.s32.totalorder %s15, 1
    %p54 = por %p52, %p53
    %p55 = scmp.ne.s32.totalorder %s44, %s45
    %p56 = scmp.eq.s32.totalorder %s15, 0
    %p57 = por %p55, %p56
    %p58 = scmp.ne.s32.totalorder %s44, %s45
    %p59 = scmp.eq.s32.totalorder %s16, 1
    %p60 = por %p58, %p59
    %p62 = scmp.ne.s32.totalorder %s45, %s61
    %p63 = scmp.eq.s32.totalorder %s16, 0
    %p64 = por %p62, %p63
    %s65 = ssub.s32 %s19, %s28
    %s66 = ssub.s32 %s18, %s32
    %s67 = sor.u32 %s65, %s66
    %p68 = scmp.eq.s32.totalorder %s67, 0
    %s70 = sadd.s32 %s69, 1
    %s71 = scalar_select %p68, %s69, %s70
    %p74 = pneg %p68
    %p75 = scmp.eq.s32.totalorder %s10, 1
    %p76 = por %p74, %p75
    %p77 = scmp.ne.s32.totalorder %s69, %s72
    %p78 = scmp.eq.s32.totalorder %s10, 0
    %p79 = por %p77, %p78
    %p80 = scmp.ne.s32.totalorder %s69, %s72
    %p81 = scmp.eq.s32.totalorder %s15, 1
    %p82 = por %p80, %p81
    %p83 = scmp.ne.s32.totalorder %s72, %s73
    %p84 = scmp.eq.s32.totalorder %s15, 0
    %p85 = por %p83, %p84
    %p86 = scmp.ne.s32.totalorder %s72, %s73
    %p87 = scmp.eq.s32.totalorder %s16, 1
    %p88 = por %p86, %p87
    %p90 = scmp.ne.s32.totalorder %s73, %s89
    %p91 = scmp.eq.s32.totalorder %s16, 0
    %p92 = por %p90, %p91
    %s93 = ssub.s32 %s18, %s32
    %p94 = scmp.eq.s32.totalorder %s93, 0
    %s96 = sadd.s32 %s95, 1
    %s97 = scalar_select %p94, %s95, %s96
    %p100 = pneg %p94
    %p101 = scmp.eq.s32.totalorder %s10, 1
    %p102 = por %p100, %p101
    %p103 = scmp.ne.s32.totalorder %s95, %s98
    %p104 = scmp.eq.s32.totalorder %s10, 0
    %p105 = por %p103, %p104
    %p106 = scmp.ne.s32.totalorder %s95, %s98
    %p107 = scmp.eq.s32.totalorder %s15, 1
    %p108 = por %p106, %p107
    %p109 = scmp.ne.s32.totalorder %s98, %s99
    %p110 = scmp.eq.s32.totalorder %s15, 0
    %p111 = por %p109, %p110
    %p112 = scmp.ne.s32.totalorder %s98, %s99
    %p113 = scmp.eq.s32.totalorder %s16, 1
    %p114 = por %p112, %p113
    %p116 = scmp.ne.s32.totalorder %s99, %s115
    %p117 = scmp.eq.s32.totalorder %s16, 0
    %p118 = por %p116, %p117
    %s119 = ssub.s32 %s18, %s32
    %p120 = scmp.eq.s32.totalorder %s119, 0
    %s122 = sadd.s32 %s121, 1
    %s123 = scalar_select %p120, %s121, %s122
    %p126 = pneg %p120
    %p127 = scmp.eq.s32.totalorder %s10, 1
    %p128 = por %p126, %p127
    %p129 = scmp.ne.s32.totalorder %s121, %s124
    %p130 = scmp.eq.s32.totalorder %s10, 0
    %p131 = por %p129, %p130
    %p132 = scmp.ne.s32.totalorder %s121, %s124
    %p133 = scmp.eq.s32.totalorder %s15, 1
    %p134 = por %p132, %p133
    %p135 = scmp.ne.s32.totalorder %s124, %s125
    %p136 = scmp.eq.s32.totalorder %s15, 0
    %p137 = por %p135, %p136
    %p138 = scmp.ne.s32.totalorder %s124, %s125
    %p139 = scmp.eq.s32.totalorder %s16, 1
    %p140 = por %p138, %p139
    %p142 = scmp.ne.s32.totalorder %s125, %s141
    %p143 = scmp.eq.s32.totalorder %s16, 0
    %p144 = por %p142, %p143
    %s145 = ssub.s32 %s17, %s36
    %s146 = ssub.s32 %s18, %s32
    %s147 = sor.u32 %s145, %s146
    %p148 = scmp.eq.s32.totalorder %s147, 0
    %s150 = sadd.s32 %s149, 1
    %s151 = scalar_select %p148, %s149, %s150
    %p154 = pneg %p148
    %p155 = scmp.eq.s32.totalorder %s10, 1
    %p156 = por %p154, %p155
    %p157 = scmp.ne.s32.totalorder %s149, %s152
    %p158 = scmp.eq.s32.totalorder %s10, 0
    %p159 = por %p157, %p158
    %p160 = scmp.ne.s32.totalorder %s149, %s152
    %p161 = scmp.eq.s32.totalorder %s15, 1
    %p162 = por %p160, %p161
    %p163 = scmp.ne.s32.totalorder %s152, %s153
    %p164 = scmp.eq.s32.totalorder %s15, 0
    %p165 = por %p163, %p164
    %p166 = scmp.ne.s32.totalorder %s152, %s153
    %p167 = scmp.eq.s32.totalorder %s16, 1
    %p168 = por %p166, %p167
    %p170 = scmp.ne.s32.totalorder %s153, %s169
    %p171 = scmp.eq.s32.totalorder %s16, 0
    %p172 = por %p170, %p171
    %p173 = scmp.le.s32.totalorder 1, %s10
    %p174 = scmp.lt.s32.totalorder %s10, 3
    %p175 = pnand %p173, %p174
    %p176 = pneg %p175
    // Predicated region
    $region9: #{forward.17} parent=5 // pred_check
      _
    $region10: #{forward.17} parent=5 // pred_check_branch
      %178 = sbr.rel (%p175) target = $region12
    $region11: #{forward.17} parent=5 // pred_region
      %s179 = ssub.s32 %s10, 1
      // Predicated region
      $region13: #{forward.17} parent=11 // pred_check
        %p180 = pneg %p85
      $region14: #{forward.17} parent=11 // pred_check_branch
        %182 = sbr.rel (%p180) target = $region16
      $region15: #{forward.17} parent=11 // pred_region
        %s183 = smul.u32 64, %s22
        %p184 = scmp.lt.s32.totalorder %s183, 63
        %s185 = scalar_select %p184, %s183, 63
        %p186 = scmp.lt.s32.totalorder %s21, 0
        %s187 = scalar_select %p186, %s21, 0
        %s188 = sadd.s32 %s187, %s185
        %s189 = smul.addr %s188, 4
        %s190 = scalar_lea.vmem %s1, %s189
        %s191 = smul.u32 64, %s22
      $region16: #{forward.17} parent=11 // pred_fallthru
        _
      // Predicated region
      $region17: #{forward.17} parent=11 // pred_check
        %p192 = pneg %p111
      $region18: #{forward.17} parent=11 // pred_check_branch
        %194 = sbr.rel (%p192) target = $region20
      $region19: #{forward.17} parent=11 // pred_region
        %p195 = scmp.lt.s32.totalorder %s21, 0
        %s196 = scalar_select %p195, %s21, 0
        %s197 = scalar_lea.vmem %s2, %s196
      $region20: #{forward.17} parent=11 // pred_fallthru
        _
      // Predicated region
      $region21: #{forward.17} parent=11 // pred_check
        %p198 = pneg %p137
      $region22: #{forward.17} parent=11 // pred_check_branch
        %200 = sbr.rel (%p198) target = $region24
      $region23: #{forward.17} parent=11 // pred_region
        %p201 = scmp.lt.s32.totalorder %s21, 0
        %s202 = scalar_select %p201, %s21, 0
        %s203 = scalar_lea.vmem %s3, %s202
      $region24: #{forward.17} parent=11 // pred_fallthru
        _
    $region12: #{forward.17} parent=5 // pred_fallthru
      _
    %p204 = scmp.lt.s32.totalorder %s10, 2
    // Predicated region
    $region25: #{forward.17} parent=5 // pred_check
      %p205 = pneg %p204
    $region26: #{forward.17} parent=5 // pred_check_branch
      %207 = sbr.rel (%p205) target = $region28
    $region27: #{forward.17} parent=5 // pred_region
      // Predicated region
      $region29: #{forward.17} parent=27 // pred_check
        %p208 = pneg %p51
      $region30: #{forward.17} parent=27 // pred_check_branch
        %210 = sbr.rel (%p208) target = $region32
      $region31: #{forward.17} parent=27 // pred_region
        %s211 = smul.u32 32, %s17
        %s212 = smul.u32 4, %s19
        %p213 = scmp.lt.s32.totalorder %s211, 63
        %s214 = scalar_select %p213, %s211, 63
        %p215 = scmp.lt.s32.totalorder %s212, 3
        %s216 = scalar_select %p215, %s212, 3
        %s217 = smul.addr %s214, 4
        %s218 = sadd.s32 %s216, %s217
        %s219 = smul.addr %s218, 4
        %s220 = scalar_lea.vmem %s0, %s219
        %s221 = smul.u32 32, %s17
        %s222 = smul.u32 4, %s19
      $region32: #{forward.17} parent=27 // pred_fallthru
        _
    $region28: #{forward.17} parent=5 // pred_fallthru
      _
    %p223 = scmp.le.s32.totalorder 1, %s10
    %p224 = scmp.lt.s32.totalorder %s10, 3
    %p225 = pnand %p223, %p224
    %p226 = pneg %p225
    // Predicated region
    $region33: #{forward.17} parent=5 // pred_check
      _
    $region34: #{forward.17} parent=5 // pred_check_branch
      %228 = sbr.rel (%p225) target = $region36
    $region35: #{forward.17} parent=5 // pred_region
      %s229 = ssub.s32 %s10, 1
      %s230 = smul.u32 32, %s20
      %s231 = smul.u32 4, %s22
      %p232 = scmp.lt.s32.totalorder %s230, 63
      %s233 = scalar_select %p232, %s230, 63
      %p234 = scmp.lt.s32.totalorder %s231, 3
      %s235 = scalar_select %p234, %s231, 3
      %s236 = smul.addr %s233, 4
      %s237 = sadd.s32 %s235, %s236
      %s238 = smul.addr %s237, 4
      %s239 = scalar_lea.vmem %s0, %s238
      %p240 = pneg %p57
      %p241 = pneg %p54
      %s242 = smul.u32 64, %s22
      %p243 = scmp.lt.s32.totalorder %s242, 63
      %s244 = scalar_select %p243, %s242, 63
      %p245 = scmp.lt.s32.totalorder %s21, 0
      %s246 = scalar_select %p245, %s21, 0
      %s247 = sadd.s32 %s246, %s244
      %s248 = smul.addr %s247, 4
      %s249 = scalar_lea.vmem %s1, %s248
      %p250 = pneg %p85
      %p251 = pneg %p82
      %p252 = scmp.lt.s32.totalorder %s21, 0
      %s253 = scalar_select %p252, %s21, 0
      %s254 = scalar_lea.vmem %s2, %s253
      %p255 = pneg %p111
      %p256 = pneg %p108
      %p257 = scmp.lt.s32.totalorder %s21, 0
      %s258 = scalar_select %p257, %s21, 0
      %s259 = scalar_lea.vmem %s3, %s258
      %p260 = pneg %p137
      %p261 = pneg %p134
      %p262 = pneg %p165
      %p263 = pneg %p162
      %s264 = smul.u32 32, %s20
      %p265 = scmp.lt.s32.totalorder %s264, 63
      %s266 = scalar_select %p265, %s264, 63
      %p267 = scmp.lt.s32.totalorder %s21, 0
      %s268 = scalar_select %p267, %s21, 0
      %s269 = sadd.s32 %s268, %s266
      %s270 = smul.addr %s269, 4
      %s271 = scalar_lea.vmem %s4, %s270
      %s272 = smul.u32 32, %s20
      %s273 = smul.u32 4, %s22
      %p274 = scmp.lt.s32.totalorder %s272, 63
      %s275 = scalar_select %p274, %s272, 63
      %p276 = scmp.lt.s32.totalorder %s273, 3
      %s277 = scalar_select %p276, %s273, 3
      %s278 = smul.addr %s275, 4
      %s279 = sadd.s32 %s277, %s278
      %s280 = smul.addr %s279, 4
      %s281 = scalar_lea.vmem %s0, %s280
      %s282 = smul.u32 32, %s20
      %s283 = smul.u32 4, %s22
      %s284 = smul.u32 64, %s22
      %p285 = scmp.lt.s32.totalorder %s284, 63
      %s286 = scalar_select %p285, %s284, 63
      %p287 = scmp.lt.s32.totalorder %s21, 0
      %s288 = scalar_select %p287, %s21, 0
      %s289 = sadd.s32 %s288, %s286
      %s290 = smul.addr %s289, 4
      %s291 = scalar_lea.vmem %s1, %s290
      %s292 = smul.u32 64, %s22
      %p293 = scmp.lt.s32.totalorder %s21, 0
      %s294 = scalar_select %p293, %s21, 0
      %s295 = scalar_lea.vmem %s2, %s294
      %p296 = scmp.lt.s32.totalorder %s21, 0
      %s297 = scalar_select %p296, %s21, 0
      %s298 = scalar_lea.vmem %s3, %s297
      %s299 = smul.u32 32, %s20
      %p300 = scmp.lt.s32.totalorder %s299, 63
      %s301 = scalar_select %p300, %s299, 63
      %p302 = scmp.lt.s32.totalorder %s21, 0
      %s303 = scalar_select %p302, %s21, 0
      %s304 = sadd.s32 %s303, %s301
      %s305 = smul.addr %s304, 4
      %s306 = scalar_lea.vmem %s4, %s305
      %s307 = smul.u32 32, %s20
      %p309 = scmp.eq.s32.totalorder %s22, 0
      // Predicated region
      $region37: #{forward.17} parent=35 // pred_check
        %p310 = pneg %p309
      $region38: #{forward.17} parent=35 // pred_check_branch
        %312 = sbr.rel (%p310) target = $region40
      $region39: #{forward.17} parent=35 // pred_region
        %313 = vst [vmem:[#allocation2] sm:$0xff] 0.0
        %314 = vst [vmem:[#allocation2 + $0x8] sm:$0xff] 0.0
        %315 = vst [vmem:[#allocation2 + $0x10] sm:$0xff] 0.0
        %316 = vst [vmem:[#allocation2 + $0x18] sm:$0xff] 0.0
        %317 = vst [vmem:[#allocation2 + $0x20] sm:$0xff] 0.0
        %318 = vst [vmem:[#allocation2 + $0x28] sm:$0xff] 0.0
        %319 = vst [vmem:[#allocation2 + $0x30] sm:$0xff] 0.0
        %320 = vst [vmem:[#allocation2 + $0x38] sm:$0xff] 0.0
        %321 = vst [vmem:[#allocation2 + $0x40] sm:$0xff] 0.0
        %322 = vst [vmem:[#allocation2 + $0x48] sm:$0xff] 0.0
        %323 = vst [vmem:[#allocation2 + $0x50] sm:$0xff] 0.0
        %324 = vst [vmem:[#allocation2 + $0x58] sm:$0xff] 0.0
        %325 = vst [vmem:[#allocation2 + $0x60] sm:$0xff] 0.0
        %326 = vst [vmem:[#allocation2 + $0x68] sm:$0xff] 0.0
        %327 = vst [vmem:[#allocation2 + $0x70] sm:$0xff] 0.0
        %328 = vst [vmem:[#allocation2 + $0x78] sm:$0xff] 0.0
        %329 = vst [vmem:[#allocation2 + $0x80] sm:$0xff] 0.0
        %330 = vst [vmem:[#allocation2 + $0x88] sm:$0xff] 0.0
        %331 = vst [vmem:[#allocation2 + $0x90] sm:$0xff] 0.0
        %332 = vst [vmem:[#allocation2 + $0x98] sm:$0xff] 0.0
        %333 = vst [vmem:[#allocation2 + $0xa0] sm:$0xff] 0.0
        %334 = vst [vmem:[#allocation2 + $0xa8] sm:$0xff] 0.0
        %335 = vst [vmem:[#allocation2 + $0xb0] sm:$0xff] 0.0
        %336 = vst [vmem:[#allocation2 + $0xb8] sm:$0xff] 0.0
        %337 = vst [vmem:[#allocation2 + $0xc0] sm:$0xff] 0.0
        %338 = vst [vmem:[#allocation2 + $0xc8] sm:$0xff] 0.0
        %339 = vst [vmem:[#allocation2 + $0xd0] sm:$0xff] 0.0
        %340 = vst [vmem:[#allocation2 + $0xd8] sm:$0xff] 0.0
        %341 = vst [vmem:[#allocation2 + $0xe0] sm:$0xff] 0.0
        %342 = vst [vmem:[#allocation2 + $0xe8] sm:$0xff] 0.0
        %343 = vst [vmem:[#allocation2 + $0xf0] sm:$0xff] 0.0
        %344 = vst [vmem:[#allocation2 + $0xf8] sm:$0xff] 0.0
      $region40: #{forward.17} parent=35 // pred_fallthru
        _
      %v345 = vld [vmem:[#allocation2] sm:$0xff]
      %v346 = vld [vmem:[#allocation2 + $0x8] sm:$0xff]
      %v347 = vld [vmem:[#allocation2 + $0x10] sm:$0xff]
      %v348 = vld [vmem:[#allocation2 + $0x18] sm:$0xff]
      %v349 = vld [vmem:[#allocation2 + $0x20] sm:$0xff]
      %v350 = vld [vmem:[#allocation2 + $0x28] sm:$0xff]
      %v351 = vld [vmem:[#allocation2 + $0x30] sm:$0xff]
      %v352 = vld [vmem:[#allocation2 + $0x38] sm:$0xff]
      %v353 = vld [vmem:[#allocation2 + $0x40] sm:$0xff]
      %v354 = vld [vmem:[#allocation2 + $0x48] sm:$0xff]
      %v355 = vld [vmem:[#allocation2 + $0x50] sm:$0xff]
      %v356 = vld [vmem:[#allocation2 + $0x58] sm:$0xff]
      %v357 = vld [vmem:[#allocation2 + $0x60] sm:$0xff]
      %v358 = vld [vmem:[#allocation2 + $0x68] sm:$0xff]
      %v359 = vld [vmem:[#allocation2 + $0x70] sm:$0xff]
      %v360 = vld [vmem:[#allocation2 + $0x78] sm:$0xff]
      %v361 = vld [vmem:[#allocation2 + $0x80] sm:$0xff]
      %v362 = vld [vmem:[#allocation2 + $0x88] sm:$0xff]
      %v363 = vld [vmem:[#allocation2 + $0x90] sm:$0xff]
      %v364 = vld [vmem:[#allocation2 + $0x98] sm:$0xff]
      %v365 = vld [vmem:[#allocation2 + $0xa0] sm:$0xff]
      %v366 = vld [vmem:[#allocation2 + $0xa8] sm:$0xff]
      %v367 = vld [vmem:[#allocation2 + $0xb0] sm:$0xff]
      %v368 = vld [vmem:[#allocation2 + $0xb8] sm:$0xff]
      %v369 = vld [vmem:[#allocation2 + $0xc0] sm:$0xff]
      %v370 = vld [vmem:[#allocation2 + $0xc8] sm:$0xff]
      %v371 = vld [vmem:[#allocation2 + $0xd0] sm:$0xff]
      %v372 = vld [vmem:[#allocation2 + $0xd8] sm:$0xff]
      %v373 = vld [vmem:[#allocation2 + $0xe0] sm:$0xff]
      %v374 = vld [vmem:[#allocation2 + $0xe8] sm:$0xff]
      %v375 = vld [vmem:[#allocation2 + $0xf0] sm:$0xff]
      %v376 = vld [vmem:[#allocation2 + $0xf8] sm:$0xff]
      %v377 = vld [vmem:[%s281] sm:$0xff]
      %v378 = vld [vmem:[%s281 + $0x8] sm:$0xff]
      %v379 = vld [vmem:[%s281 + $0x10] sm:$0xff]
      %v380 = vld [vmem:[%s281 + $0x18] sm:$0xff]
      %v381 = vld [vmem:[%s281 + $0x20] sm:$0xff]
      %v382 = vld [vmem:[%s281 + $0x28] sm:$0xff]
      %v383 = vld [vmem:[%s281 + $0x30] sm:$0xff]
      %v384 = vld [vmem:[%s281 + $0x38] sm:$0xff]
      %v385 = vld [vmem:[%s281 + $0x40] sm:$0xff]
      %v386 = vld [vmem:[%s281 + $0x48] sm:$0xff]
      %v387 = vld [vmem:[%s281 + $0x50] sm:$0xff]
      %v388 = vld [vmem:[%s281 + $0x58] sm:$0xff]
      %v389 = vld [vmem:[%s281 + $0x60] sm:$0xff]
      %v390 = vld [vmem:[%s281 + $0x68] sm:$0xff]
      %v391 = vld [vmem:[%s281 + $0x70] sm:$0xff]
      %v392 = vld [vmem:[%s281 + $0x78] sm:$0xff]
      %v393 = vld [vmem:[%s281 + $0x80] sm:$0xff]
      %v394 = vld [vmem:[%s281 + $0x88] sm:$0xff]
      %v395 = vld [vmem:[%s281 + $0x90] sm:$0xff]
      %v396 = vld [vmem:[%s281 + $0x98] sm:$0xff]
      %v397 = vld [vmem:[%s281 + $0xa0] sm:$0xff]
      %v398 = vld [vmem:[%s281 + $0xa8] sm:$0xff]
      %v399 = vld [vmem:[%s281 + $0xb0] sm:$0xff]
      %v400 = vld [vmem:[%s281 + $0xb8] sm:$0xff]
      %v401 = vld [vmem:[%s281 + $0xc0] sm:$0xff]
      %v402 = vld [vmem:[%s281 + $0xc8] sm:$0xff]
      %v403 = vld [vmem:[%s281 + $0xd0] sm:$0xff]
      %v404 = vld [vmem:[%s281 + $0xd8] sm:$0xff]
      %v405 = vld [vmem:[%s281 + $0xe0] sm:$0xff]
      %v406 = vld [vmem:[%s281 + $0xe8] sm:$0xff]
      %v407 = vld [vmem:[%s281 + $0xf0] sm:$0xff]
      %v408 = vld [vmem:[%s281 + $0xf8] sm:$0xff]
      %v409 = vld [vmem:[%s281 + $0x100] sm:$0xff]
      %v410 = vld [vmem:[%s281 + $0x108] sm:$0xff]
      %v411 = vld [vmem:[%s281 + $0x110] sm:$0xff]
      %v412 = vld [vmem:[%s281 + $0x118] sm:$0xff]
      %v413 = vld [vmem:[%s281 + $0x120] sm:$0xff]
      %v414 = vld [vmem:[%s281 + $0x128] sm:$0xff]
      %v415 = vld [vmem:[%s281 + $0x130] sm:$0xff]
      %v416 = vld [vmem:[%s281 + $0x138] sm:$0xff]
      %v417 = vld [vmem:[%s281 + $0x140] sm:$0xff]
      %v418 = vld [vmem:[%s281 + $0x148] sm:$0xff]
      %v419 = vld [vmem:[%s281 + $0x150] sm:$0xff]
      %v420 = vld [vmem:[%s281 + $0x158] sm:$0xff]
      %v421 = vld [vmem:[%s281 + $0x160] sm:$0xff]
      %v422 = vld [vmem:[%s281 + $0x168] sm:$0xff]
      %v423 = vld [vmem:[%s281 + $0x170] sm:$0xff]
      %v424 = vld [vmem:[%s281 + $0x178] sm:$0xff]
      %v425 = vld [vmem:[%s281 + $0x180] sm:$0xff]
      %v426 = vld [vmem:[%s281 + $0x188] sm:$0xff]
      %v427 = vld [vmem:[%s281 + $0x190] sm:$0xff]
      %v428 = vld [vmem:[%s281 + $0x198] sm:$0xff]
      %v429 = vld [vmem:[%s281 + $0x1a0] sm:$0xff]
      %v430 = vld [vmem:[%s281 + $0x1a8] sm:$0xff]
      %v431 = vld [vmem:[%s281 + $0x1b0] sm:$0xff]
      %v432 = vld [vmem:[%s281 + $0x1b8] sm:$0xff]
      %v433 = vld [vmem:[%s281 + $0x1c0] sm:$0xff]
      %v434 = vld [vmem:[%s281 + $0x1c8] sm:$0xff]
      %v435 = vld [vmem:[%s281 + $0x1d0] sm:$0xff]
      %v436 = vld [vmem:[%s281 + $0x1d8] sm:$0xff]
      %v437 = vld [vmem:[%s281 + $0x1e0] sm:$0xff]
      %v438 = vld [vmem:[%s281 + $0x1e8] sm:$0xff]
      %v439 = vld [vmem:[%s281 + $0x1f0] sm:$0xff]
      %v440 = vld [vmem:[%s281 + $0x1f8] sm:$0xff]
      %v441 = vld [vmem:[%s291] sm:$0xf]
      %v442 = vld [vmem:[%s291 + $0x4] sm:$0xf]
      %v443 = vld [vmem:[%s291 + $0x8] sm:$0xf]
      %v444 = vld [vmem:[%s291 + $0xc] sm:$0xf]
      %v445 = vld [vmem:[%s291 + $0x10] sm:$0xf]
      %v446 = vld [vmem:[%s291 + $0x14] sm:$0xf]
      %v447 = vld [vmem:[%s291 + $0x18] sm:$0xf]
      %v448 = vld [vmem:[%s291 + $0x1c] sm:$0xf]
      %v449 = vld [vmem:[%s291 + $0x20] sm:$0xf]
      %v450 = vld [vmem:[%s291 + $0x24] sm:$0xf]
      %v451 = vld [vmem:[%s291 + $0x28] sm:$0xf]
      %v452 = vld [vmem:[%s291 + $0x2c] sm:$0xf]
      %v453 = vld [vmem:[%s291 + $0x30] sm:$0xf]
      %v454 = vld [vmem:[%s291 + $0x34] sm:$0xf]
      %v455 = vld [vmem:[%s291 + $0x38] sm:$0xf]
      %v456 = vld [vmem:[%s291 + $0x3c] sm:$0xf]
      %v457 = vld [vmem:[%s291 + $0x40] sm:$0xf]
      %v458 = vld [vmem:[%s291 + $0x44] sm:$0xf]
      %v459 = vld [vmem:[%s291 + $0x48] sm:$0xf]
      %v460 = vld [vmem:[%s291 + $0x4c] sm:$0xf]
      %v461 = vld [vmem:[%s291 + $0x50] sm:$0xf]
      %v462 = vld [vmem:[%s291 + $0x54] sm:$0xf]
      %v463 = vld [vmem:[%s291 + $0x58] sm:$0xf]
      %v464 = vld [vmem:[%s291 + $0x5c] sm:$0xf]
      %v465 = vld [vmem:[%s291 + $0x60] sm:$0xf]
      %v466 = vld [vmem:[%s291 + $0x64] sm:$0xf]
      %v467 = vld [vmem:[%s291 + $0x68] sm:$0xf]
      %v468 = vld [vmem:[%s291 + $0x6c] sm:$0xf]
      %v469 = vld [vmem:[%s291 + $0x70] sm:$0xf]
      %v470 = vld [vmem:[%s291 + $0x74] sm:$0xf]
      %v471 = vld [vmem:[%s291 + $0x78] sm:$0xf]
      %v472 = vld [vmem:[%s291 + $0x7c] sm:$0xf]
      %v473 = vld [vmem:[%s291 + $0x80] sm:$0xf]
      %v474 = vld [vmem:[%s291 + $0x84] sm:$0xf]
      %v475 = vld [vmem:[%s291 + $0x88] sm:$0xf]
      %v476 = vld [vmem:[%s291 + $0x8c] sm:$0xf]
      %v477 = vld [vmem:[%s291 + $0x90] sm:$0xf]
      %v478 = vld [vmem:[%s291 + $0x94] sm:$0xf]
      %v479 = vld [vmem:[%s291 + $0x98] sm:$0xf]
      %v480 = vld [vmem:[%s291 + $0x9c] sm:$0xf]
      %v481 = vld [vmem:[%s291 + $0xa0] sm:$0xf]
      %v482 = vld [vmem:[%s291 + $0xa4] sm:$0xf]
      %v483 = vld [vmem:[%s291 + $0xa8] sm:$0xf]
      %v484 = vld [vmem:[%s291 + $0xac] sm:$0xf]
      %v485 = vld [vmem:[%s291 + $0xb0] sm:$0xf]
      %v486 = vld [vmem:[%s291 + $0xb4] sm:$0xf]
      %v487 = vld [vmem:[%s291 + $0xb8] sm:$0xf]
      %v488 = vld [vmem:[%s291 + $0xbc] sm:$0xf]
      %v489 = vld [vmem:[%s291 + $0xc0] sm:$0xf]
      %v490 = vld [vmem:[%s291 + $0xc4] sm:$0xf]
      %v491 = vld [vmem:[%s291 + $0xc8] sm:$0xf]
      %v492 = vld [vmem:[%s291 + $0xcc] sm:$0xf]
      %v493 = vld [vmem:[%s291 + $0xd0] sm:$0xf]
      %v494 = vld [vmem:[%s291 + $0xd4] sm:$0xf]
      %v495 = vld [vmem:[%s291 + $0xd8] sm:$0xf]
      %v496 = vld [vmem:[%s291 + $0xdc] sm:$0xf]
      %v497 = vld [vmem:[%s291 + $0xe0] sm:$0xf]
      %v498 = vld [vmem:[%s291 + $0xe4] sm:$0xf]
      %v499 = vld [vmem:[%s291 + $0xe8] sm:$0xf]
      %v500 = vld [vmem:[%s291 + $0xec] sm:$0xf]
      %v501 = vld [vmem:[%s291 + $0xf0] sm:$0xf]
      %v502 = vld [vmem:[%s291 + $0xf4] sm:$0xf]
      %v503 = vld [vmem:[%s291 + $0xf8] sm:$0xf]
      %v504 = vld [vmem:[%s291 + $0xfc] sm:$0xf]
      %v569 = vunpack.c.l.b16 %v377
      %v570 = vunpack.c.h.b16 %v377
      %v571 = vunpack.c.l.b16 %v378
      %v572 = vunpack.c.h.b16 %v378
      %v573 = vunpack.c.l.b16 %v379
      %v574 = vunpack.c.h.b16 %v379
      %v575 = vunpack.c.l.b16 %v380
      %v576 = vunpack.c.h.b16 %v380
      %v577 = vunpack.c.l.b16 %v381
      %v578 = vunpack.c.h.b16 %v381
      %v579 = vunpack.c.l.b16 %v382
      %v580 = vunpack.c.h.b16 %v382
      %v581 = vunpack.c.l.b16 %v383
      %v582 = vunpack.c.h.b16 %v383
      %v583 = vunpack.c.l.b16 %v384
      %v584 = vunpack.c.h.b16 %v384
      %v585 = vunpack.c.l.b16 %v385
      %v586 = vunpack.c.h.b16 %v385
      %v587 = vunpack.c.l.b16 %v386
      %v588 = vunpack.c.h.b16 %v386
      %v589 = vunpack.c.l.b16 %v387
      %v590 = vunpack.c.h.b16 %v387
      %v591 = vunpack.c.l.b16 %v388
      %v592 = vunpack.c.h.b16 %v388
      %v593 = vunpack.c.l.b16 %v389
      %v594 = vunpack.c.h.b16 %v389
      %v595 = vunpack.c.l.b16 %v390
      %v596 = vunpack.c.h.b16 %v390
      %v597 = vunpack.c.l.b16 %v391
      %v598 = vunpack.c.h.b16 %v391
      %v599 = vunpack.c.l.b16 %v392
      %v600 = vunpack.c.h.b16 %v392
      %v601 = vunpack.c.l.b16 %v393
      %v602 = vunpack.c.h.b16 %v393
      %v603 = vunpack.c.l.b16 %v394
      %v604 = vunpack.c.h.b16 %v394
      %v605 = vunpack.c.l.b16 %v395
      %v606 = vunpack.c.h.b16 %v395
      %v607 = vunpack.c.l.b16 %v396
      %v608 = vunpack.c.h.b16 %v396
      %v609 = vunpack.c.l.b16 %v397
      %v610 = vunpack.c.h.b16 %v397
      %v611 = vunpack.c.l.b16 %v398
      %v612 = vunpack.c.h.b16 %v398
      %v613 = vunpack.c.l.b16 %v399
      %v614 = vunpack.c.h.b16 %v399
      %v615 = vunpack.c.l.b16 %v400
      %v616 = vunpack.c.h.b16 %v400
      %v617 = vunpack.c.l.b16 %v401
      %v618 = vunpack.c.h.b16 %v401
      %v619 = vunpack.c.l.b16 %v402
      %v620 = vunpack.c.h.b16 %v402
      %v621 = vunpack.c.l.b16 %v403
      %v622 = vunpack.c.h.b16 %v403
      %v623 = vunpack.c.l.b16 %v404
      %v624 = vunpack.c.h.b16 %v404
      %v625 = vunpack.c.l.b16 %v405
      %v626 = vunpack.c.h.b16 %v405
      %v627 = vunpack.c.l.b16 %v406
      %v628 = vunpack.c.h.b16 %v406
      %v629 = vunpack.c.l.b16 %v407
      %v630 = vunpack.c.h.b16 %v407
      %v631 = vunpack.c.l.b16 %v408
      %v632 = vunpack.c.h.b16 %v408
      %v633 = vunpack.c.l.b16 %v409
      %v634 = vunpack.c.h.b16 %v409
      %v635 = vunpack.c.l.b16 %v410
      %v636 = vunpack.c.h.b16 %v410
      %v637 = vunpack.c.l.b16 %v411
      %v638 = vunpack.c.h.b16 %v411
      %v639 = vunpack.c.l.b16 %v412
      %v640 = vunpack.c.h.b16 %v412
      %v641 = vunpack.c.l.b16 %v413
      %v642 = vunpack.c.h.b16 %v413
      %v643 = vunpack.c.l.b16 %v414
      %v644 = vunpack.c.h.b16 %v414
      %v645 = vunpack.c.l.b16 %v415
      %v646 = vunpack.c.h.b16 %v415
      %v647 = vunpack.c.l.b16 %v416
      %v648 = vunpack.c.h.b16 %v416
      %v649 = vunpack.c.l.b16 %v417
      %v650 = vunpack.c.h.b16 %v417
      %v651 = vunpack.c.l.b16 %v418
      %v652 = vunpack.c.h.b16 %v418
      %v653 = vunpack.c.l.b16 %v419
      %v654 = vunpack.c.h.b16 %v419
      %v655 = vunpack.c.l.b16 %v420
      %v656 = vunpack.c.h.b16 %v420
      %v657 = vunpack.c.l.b16 %v421
      %v658 = vunpack.c.h.b16 %v421
      %v659 = vunpack.c.l.b16 %v422
      %v660 = vunpack.c.h.b16 %v422
      %v661 = vunpack.c.l.b16 %v423
      %v662 = vunpack.c.h.b16 %v423
      %v663 = vunpack.c.l.b16 %v424
      %v664 = vunpack.c.h.b16 %v424
      %v665 = vunpack.c.l.b16 %v425
      %v666 = vunpack.c.h.b16 %v425
      %v667 = vunpack.c.l.b16 %v426
      %v668 = vunpack.c.h.b16 %v426
      %v669 = vunpack.c.l.b16 %v427
      %v670 = vunpack.c.h.b16 %v427
      %v671 = vunpack.c.l.b16 %v428
      %v672 = vunpack.c.h.b16 %v428
      %v673 = vunpack.c.l.b16 %v429
      %v674 = vunpack.c.h.b16 %v429
      %v675 = vunpack.c.l.b16 %v430
      %v676 = vunpack.c.h.b16 %v430
      %v677 = vunpack.c.l.b16 %v431
      %v678 = vunpack.c.h.b16 %v431
      %v679 = vunpack.c.l.b16 %v432
      %v680 = vunpack.c.h.b16 %v432
      %v681 = vunpack.c.l.b16 %v433
      %v682 = vunpack.c.h.b16 %v433
      %v683 = vunpack.c.l.b16 %v434
      %v684 = vunpack.c.h.b16 %v434
      %v685 = vunpack.c.l.b16 %v435
      %v686 = vunpack.c.h.b16 %v435
      %v687 = vunpack.c.l.b16 %v436
      %v688 = vunpack.c.h.b16 %v436
      %v689 = vunpack.c.l.b16 %v437
      %v690 = vunpack.c.h.b16 %v437
      %v691 = vunpack.c.l.b16 %v438
      %v692 = vunpack.c.h.b16 %v438
      %v693 = vunpack.c.l.b16 %v439
      %v694 = vunpack.c.h.b16 %v439
      %v695 = vunpack.c.l.b16 %v440
      %v696 = vunpack.c.h.b16 %v440
      %v697 = vpack.c.b16 %v573, %v569
      %v698 = vpack.c.b16 %v574, %v570
      %v699 = vpack.c.b16 %v575, %v571
      %v700 = vpack.c.b16 %v576, %v572
      %v701 = vpack.c.b16 %v581, %v577
      %v702 = vpack.c.b16 %v582, %v578
      %v703 = vpack.c.b16 %v583, %v579
      %v704 = vpack.c.b16 %v584, %v580
      %v705 = vpack.c.b16 %v589, %v585
      %v706 = vpack.c.b16 %v590, %v586
      %v707 = vpack.c.b16 %v591, %v587
      %v708 = vpack.c.b16 %v592, %v588
      %v709 = vpack.c.b16 %v597, %v593
      %v710 = vpack.c.b16 %v598, %v594
      %v711 = vpack.c.b16 %v599, %v595
      %v712 = vpack.c.b16 %v600, %v596
      %v713 = vpack.c.b16 %v605, %v601
      %v714 = vpack.c.b16 %v606, %v602
      %v715 = vpack.c.b16 %v607, %v603
      %v716 = vpack.c.b16 %v608, %v604
      %v717 = vpack.c.b16 %v613, %v609
      %v718 = vpack.c.b16 %v614, %v610
      %v719 = vpack.c.b16 %v615, %v611
      %v720 = vpack.c.b16 %v616, %v612
      %v721 = vpack.c.b16 %v621, %v617
      %v722 = vpack.c.b16 %v622, %v618
      %v723 = vpack.c.b16 %v623, %v619
      %v724 = vpack.c.b16 %v624, %v620
      %v725 = vpack.c.b16 %v629, %v625
      %v726 = vpack.c.b16 %v630, %v626
      %v727 = vpack.c.b16 %v631, %v627
      %v728 = vpack.c.b16 %v632, %v628
      %v729 = vpack.c.b16 %v637, %v633
      %v730 = vpack.c.b16 %v638, %v634
      %v731 = vpack.c.b16 %v639, %v635
      %v732 = vpack.c.b16 %v640, %v636
      %v733 = vpack.c.b16 %v645, %v641
      %v734 = vpack.c.b16 %v646, %v642
      %v735 = vpack.c.b16 %v647, %v643
      %v736 = vpack.c.b16 %v648, %v644
      %v737 = vpack.c.b16 %v653, %v649
      %v738 = vpack.c.b16 %v654, %v650
      %v739 = vpack.c.b16 %v655, %v651
      %v740 = vpack.c.b16 %v656, %v652
      %v741 = vpack.c.b16 %v661, %v657
      %v742 = vpack.c.b16 %v662, %v658
      %v743 = vpack.c.b16 %v663, %v659
      %v744 = vpack.c.b16 %v664, %v660
      %v745 = vpack.c.b16 %v669, %v665
      %v746 = vpack.c.b16 %v670, %v666
      %v747 = vpack.c.b16 %v671, %v667
      %v748 = vpack.c.b16 %v672, %v668
      %v749 = vpack.c.b16 %v677, %v673
      %v750 = vpack.c.b16 %v678, %v674
      %v751 = vpack.c.b16 %v679, %v675
      %v752 = vpack.c.b16 %v680, %v676
      %v753 = vpack.c.b16 %v685, %v681
      %v754 = vpack.c.b16 %v686, %v682
      %v755 = vpack.c.b16 %v687, %v683
      %v756 = vpack.c.b16 %v688, %v684
      %v757 = vpack.c.b16 %v693, %v689
      %v758 = vpack.c.b16 %v694, %v690
      %v759 = vpack.c.b16 %v695, %v691
      %v760 = vpack.c.b16 %v696, %v692
      %v889 = vunpack.c.l.b16 %v441
      %v890 = vunpack.c.l.b16 %v442
      %v891 = vunpack.c.l.b16 %v443
      %v892 = vunpack.c.l.b16 %v444
      %v893 = vunpack.c.l.b16 %v445
      %v894 = vunpack.c.l.b16 %v446
      %v895 = vunpack.c.l.b16 %v447
      %v896 = vunpack.c.l.b16 %v448
      %v897 = vunpack.c.l.b16 %v449
      %v898 = vunpack.c.l.b16 %v450
      %v899 = vunpack.c.l.b16 %v451
      %v900 = vunpack.c.l.b16 %v452
      %v901 = vunpack.c.l.b16 %v453
      %v902 = vunpack.c.l.b16 %v454
      %v903 = vunpack.c.l.b16 %v455
      %v904 = vunpack.c.l.b16 %v456
      %v905 = vunpack.c.l.b16 %v457
      %v906 = vunpack.c.l.b16 %v458
      %v907 = vunpack.c.l.b16 %v459
      %v908 = vunpack.c.l.b16 %v460
      %v909 = vunpack.c.l.b16 %v461
      %v910 = vunpack.c.l.b16 %v462
      %v911 = vunpack.c.l.b16 %v463
      %v912 = vunpack.c.l.b16 %v464
      %v913 = vunpack.c.l.b16 %v465
      %v914 = vunpack.c.l.b16 %v466
      %v915 = vunpack.c.l.b16 %v467
      %v916 = vunpack.c.l.b16 %v468
      %v917 = vunpack.c.l.b16 %v469
      %v918 = vunpack.c.l.b16 %v470
      %v919 = vunpack.c.l.b16 %v471
      %v920 = vunpack.c.l.b16 %v472
      %v921 = vunpack.c.l.b16 %v473
      %v922 = vunpack.c.l.b16 %v474
      %v923 = vunpack.c.l.b16 %v475
      %v924 = vunpack.c.l.b16 %v476
      %v925 = vunpack.c.l.b16 %v477
      %v926 = vunpack.c.l.b16 %v478
      %v927 = vunpack.c.l.b16 %v479
      %v928 = vunpack.c.l.b16 %v480
      %v929 = vunpack.c.l.b16 %v481
      %v930 = vunpack.c.l.b16 %v482
      %v931 = vunpack.c.l.b16 %v483
      %v932 = vunpack.c.l.b16 %v484
      %v933 = vunpack.c.l.b16 %v485
      %v934 = vunpack.c.l.b16 %v486
      %v935 = vunpack.c.l.b16 %v487
      %v936 = vunpack.c.l.b16 %v488
      %v937 = vunpack.c.l.b16 %v489
      %v938 = vunpack.c.l.b16 %v490
      %v939 = vunpack.c.l.b16 %v491
      %v940 = vunpack.c.l.b16 %v492
      %v941 = vunpack.c.l.b16 %v493
      %v942 = vunpack.c.l.b16 %v494
      %v943 = vunpack.c.l.b16 %v495
      %v944 = vunpack.c.l.b16 %v496
      %v945 = vunpack.c.l.b16 %v497
      %v946 = vunpack.c.l.b16 %v498
      %v947 = vunpack.c.l.b16 %v499
      %v948 = vunpack.c.l.b16 %v500
      %v949 = vunpack.c.l.b16 %v501
      %v950 = vunpack.c.l.b16 %v502
      %v951 = vunpack.c.l.b16 %v503
      %v952 = vunpack.c.l.b16 %v504
      %v953 = vpack.c.b16 %v890, %v889
      %v954 = vpack.c.b16 %v892, %v891
      %v955 = vpack.c.b16 %v894, %v893
      %v956 = vpack.c.b16 %v896, %v895
      %v957 = vpack.c.b16 %v898, %v897
      %v958 = vpack.c.b16 %v900, %v899
      %v959 = vpack.c.b16 %v902, %v901
      %v960 = vpack.c.b16 %v904, %v903
      %v961 = vpack.c.b16 %v906, %v905
      %v962 = vpack.c.b16 %v908, %v907
      %v963 = vpack.c.b16 %v910, %v909
      %v964 = vpack.c.b16 %v912, %v911
      %v965 = vpack.c.b16 %v914, %v913
      %v966 = vpack.c.b16 %v916, %v915
      %v967 = vpack.c.b16 %v918, %v917
      %v968 = vpack.c.b16 %v920, %v919
      %v969 = vpack.c.b16 %v922, %v921
      %v970 = vpack.c.b16 %v924, %v923
      %v971 = vpack.c.b16 %v926, %v925
      %v972 = vpack.c.b16 %v928, %v927
      %v973 = vpack.c.b16 %v930, %v929
      %v974 = vpack.c.b16 %v932, %v931
      %v975 = vpack.c.b16 %v934, %v933
      %v976 = vpack.c.b16 %v936, %v935
      %v977 = vpack.c.b16 %v938, %v937
      %v978 = vpack.c.b16 %v940, %v939
      %v979 = vpack.c.b16 %v942, %v941
      %v980 = vpack.c.b16 %v944, %v943
      %v981 = vpack.c.b16 %v946, %v945
      %v982 = vpack.c.b16 %v948, %v947
      %v983 = vpack.c.b16 %v950, %v949
      %v984 = vpack.c.b16 %v952, %v951
      %1017 = vmatprep.subr.bf16.mxu0 0
      %1018 = vmatpush1.bf16.msra.mxu0 %v953
      %1019 = vmatprep.subr.bf16.mxu0 0
      %1020 = vmatpush1.bf16.msra.mxu0 %v954
      %1021 = vmatprep.subr.bf16.mxu0 0
      %1022 = vmatpush1.bf16.msra.mxu0 %v955
      %1023 = vmatprep.subr.bf16.mxu0 0
      %1024 = vmatpush1.bf16.msra.mxu0 %v956
      %1025 = vmatprep.subr.bf16.mxu0 0
      %1026 = vmatpush1.bf16.msra.mxu0 %v957
      %1027 = vmatprep.subr.bf16.mxu0 0
      %1028 = vmatpush1.bf16.msra.mxu0 %v958
      %1029 = vmatprep.subr.bf16.mxu0 0
      %1030 = vmatpush1.bf16.msra.mxu0 %v959
      %1031 = vmatprep.subr.bf16.mxu0 0
      %1032 = vmatpush1.bf16.msra.mxu0 %v960
      %1033 = vmatprep.subr.bf16.mxu0 0
      %1034 = vmatpush1.bf16.msra.mxu0 %v961
      %1035 = vmatprep.subr.bf16.mxu0 0
      %1036 = vmatpush1.bf16.msra.mxu0 %v962
      %1037 = vmatprep.subr.bf16.mxu0 0
      %1038 = vmatpush1.bf16.msra.mxu0 %v963
      %1039 = vmatprep.subr.bf16.mxu0 0
      %1040 = vmatpush1.bf16.msra.mxu0 %v964
      %1041 = vmatprep.subr.bf16.mxu0 0
      %1042 = vmatpush1.bf16.msra.mxu0 %v965
      %1043 = vmatprep.subr.bf16.mxu0 0
      %1044 = vmatpush1.bf16.msra.mxu0 %v966
      %1045 = vmatprep.subr.bf16.mxu0 0
      %1046 = vmatpush1.bf16.msra.mxu0 %v967
      %1047 = vmatprep.subr.bf16.mxu0 0
      %1048 = vmatpush1.bf16.msra.mxu0 %v968
      %1049 = vmatprep.mubr.bf16.mxu0 %v698
      %1050 = vmatmul.mubr.bf16.gmra.mrb[0].mxu0 %v697
      %v1051 = vpop.f32.mrb[0].mxu0
      %v1052 = vadd.f32 0.0, %v1051
      %v1053 = vpop.f32.mrb[0].mxu0
      %v1054 = vpop.f32.mrb[0].mxu0
      %v1055 = vadd.f32 0.0, %v1054
      %v1056 = vpop.f32.mrb[0].mxu0
      %1057 = vmatprep.mubr.bf16.mxu0 %v702
      %1058 = vmatmul.mubr.bf16.gmra.mrb[0].mxu0 %v701
      %v1059 = vpop.f32.mrb[0].mxu0
      %v1060 = vadd.f32 0.0, %v1059
      %v1061 = vpop.f32.mrb[0].mxu0
      %v1062 = vpop.f32.mrb[0].mxu0
      %v1063 = vadd.f32 0.0, %v1062
      %v1064 = vpop.f32.mrb[0].mxu0
      %1065 = vmatprep.mubr.bf16.mxu0 %v706
      %1066 = vmatmul.mubr.bf16.gmra.mrb[0].mxu0 %v705
      %v1067 = vpop.f32.mrb[0].mxu0
      %v1068 = vadd.f32 0.0, %v1067
      %v1069 = vpop.f32.mrb[0].mxu0
      %v1070 = vpop.f32.mrb[0].mxu0
      %v1071 = vadd.f32 0.0, %v1070
      %v1072 = vpop.f32.mrb[0].mxu0
      %1073 = vmatprep.mubr.bf16.mxu0 %v710
      %1074 = vmatmul.mubr.bf16.gmra.mrb[0].mxu0 %v709
      %v1075 = vpop.f32.mrb[0].mxu0
      %v1076 = vadd.f32 0.0, %v1075
      %v1077 = vpop.f32.mrb[0].mxu0
      %v1078 = vpop.f32.mrb[0].mxu0
      %v1079 = vadd.f32 0.0, %v1078
      %v1080 = vpop.f32.mrb[0].mxu0
      %1081 = vmatprep.mubr.bf16.mxu0 %v714
      %1082 = vmatmul.mubr.bf16.gmra.mrb[0].mxu0 %v713
      %v1083 = vpop.f32.mrb[0].mxu0
      %v1084 = vadd.f32 0.0, %v1083
      %v1085 = vpop.f32.mrb[0].mxu0
      %v1086 = vpop.f32.mrb[0].mxu0
      %v1087 = vadd.f32 0.0, %v1086
      %v1088 = vpop.f32.mrb[0].mxu0
      %1089 = vmatprep.mubr.bf16.mxu0 %v718
      %1090 = vmatmul.mubr.bf16.gmra.mrb[0].mxu0 %v717
      %v1091 = vpop.f32.mrb[0].mxu0
      %v1092 = vadd.f32 0.0, %v1091
      %v1093 = vpop.f32.mrb[0].mxu0
      %v1094 = vpop.f32.mrb[0].mxu0
      %v1095 = vadd.f32 0.0, %v1094
      %v1096 = vpop.f32.mrb[0].mxu0
      %1097 = vmatprep.mubr.bf16.mxu0 %v722
      %1098 = vmatmul.mubr.bf16.gmra.mrb[0].mxu0 %v721
      %v1099 = vpop.f32.mrb[0].mxu0
      %v1100 = vadd.f32 0.0, %v1099
      %v1101 = vpop.f32.mrb[0].mxu0
      %v1102 = vpop.f32.mrb[0].mxu0
      %v1103 = vadd.f32 0.0, %v1102
      %v1104 = vpop.f32.mrb[0].mxu0
      %1105 = vmatprep.mubr.bf16.mxu0 %v726
      %1106 = vmatmul.mubr.bf16.gmra.mrb[0].mxu0 %v725
      %v1107 = vpop.f32.mrb[0].mxu0
      %v1108 = vadd.f32 0.0, %v1107
      %v1109 = vpop.f32.mrb[0].mxu0
      %v1110 = vpop.f32.mrb[0].mxu0
      %v1111 = vadd.f32 0.0, %v1110
      %v1112 = vpop.f32.mrb[0].mxu0
      %1113 = vmatprep.mubr.bf16.mxu0 %v730
      %1114 = vmatmul.mubr.bf16.gmra.mrb[0].mxu0 %v729
      %v1115 = vpop.f32.mrb[0].mxu0
      %v1116 = vadd.f32 0.0, %v1115
      %v1117 = vpop.f32.mrb[0].mxu0
      %v1118 = vpop.f32.mrb[0].mxu0
      %v1119 = vadd.f32 0.0, %v1118
      %v1120 = vpop.f32.mrb[0].mxu0
      %1121 = vmatprep.mubr.bf16.mxu0 %v734
      %1122 = vmatmul.mubr.bf16.gmra.mrb[0].mxu0 %v733
      %v1123 = vpop.f32.mrb[0].mxu0
      %v1124 = vadd.f32 0.0, %v1123
      %v1125 = vpop.f32.mrb[0].mxu0
      %v1126 = vpop.f32.mrb[0].mxu0
      %v1127 = vadd.f32 0.0, %v1126
      %v1128 = vpop.f32.mrb[0].mxu0
      %1129 = vmatprep.mubr.bf16.mxu0 %v738
      %1130 = vmatmul.mubr.bf16.gmra.mrb[0].mxu0 %v737
      %v1131 = vpop.f32.mrb[0].mxu0
      %v1132 = vadd.f32 0.0, %v1131
      %v1133 = vpop.f32.mrb[0].mxu0
      %v1134 = vpop.f32.mrb[0].mxu0
      %v1135 = vadd.f32 0.0, %v1134
      %v1136 = vpop.f32.mrb[0].mxu0
      %1137 = vmatprep.mubr.bf16.mxu0 %v742
      %1138 = vmatmul.mubr.bf16.gmra.mrb[0].mxu0 %v741
      %v1139 = vpop.f32.mrb[0].mxu0
      %v1140 = vadd.f32 0.0, %v1139
      %v1141 = vpop.f32.mrb[0].mxu0
      %v1142 = vpop.f32.mrb[0].mxu0
      %v1143 = vadd.f32 0.0, %v1142
      %v1144 = vpop.f32.mrb[0].mxu0
      %1145 = vmatprep.mubr.bf16.mxu0 %v746
      %1146 = vmatmul.mubr.bf16.gmra.mrb[0].mxu0 %v745
      %v1147 = vpop.f32.mrb[0].mxu0
      %v1148 = vadd.f32 0.0, %v1147
      %v1149 = vpop.f32.mrb[0].mxu0
      %v1150 = vpop.f32.mrb[0].mxu0
      %v1151 = vadd.f32 0.0, %v1150
      %v1152 = vpop.f32.mrb[0].mxu0
      %1153 = vmatprep.mubr.bf16.mxu0 %v750
      %1154 = vmatmul.mubr.bf16.gmra.mrb[0].mxu0 %v749
      %v1155 = vpop.f32.mrb[0].mxu0
      %v1156 = vadd.f32 0.0, %v1155
      %v1157 = vpop.f32.mrb[0].mxu0
      %v1158 = vpop.f32.mrb[0].mxu0
      %v1159 = vadd.f32 0.0, %v1158
      %v1160 = vpop.f32.mrb[0].mxu0
      %1161 = vmatprep.mubr.bf16.mxu0 %v754
      %1162 = vmatmul.mubr.bf16.gmra.mrb[0].mxu0 %v753
      %v1163 = vpop.f32.mrb[0].mxu0
      %v1164 = vadd.f32 0.0, %v1163
      %v1165 = vpop.f32.mrb[0].mxu0
      %v1166 = vpop.f32.mrb[0].mxu0
      %v1167 = vadd.f32 0.0, %v1166
      %v1168 = vpop.f32.mrb[0].mxu0
      %1169 = vmatprep.mubr.bf16.mxu0 %v758
      %1170 = vmatmul.mubr.bf16.gmra.mrb[0].mxu0 %v757
      %v1171 = vpop.f32.mrb[0].mxu0
      %v1172 = vadd.f32 0.0, %v1171
      %v1173 = vpop.f32.mrb[0].mxu0
      %v1174 = vpop.f32.mrb[0].mxu0
      %v1175 = vadd.f32 0.0, %v1174
      %v1176 = vpop.f32.mrb[0].mxu0
      %1177 = vdwg.mxu0
      %1178 = vmatprep.subr.bf16.mxu0 0
      %1179 = vmatpush1.bf16.msra.mxu0 %v969
      %1180 = vmatprep.subr.bf16.mxu0 0
      %1181 = vmatpush1.bf16.msra.mxu0 %v970
      %1182 = vmatprep.subr.bf16.mxu0 0
      %1183 = vmatpush1.bf16.msra.mxu0 %v971
      %1184 = vmatprep.subr.bf16.mxu0 0
      %1185 = vmatpush1.bf16.msra.mxu0 %v972
      %1186 = vmatprep.subr.bf16.mxu0 0
      %1187 = vmatpush1.bf16.msra.mxu0 %v973
      %1188 = vmatprep.subr.bf16.mxu0 0
      %1189 = vmatpush1.bf16.msra.mxu0 %v974
      %1190 = vmatprep.subr.bf16.mxu0 0
      %1191 = vmatpush1.bf16.msra.mxu0 %v975
      %1192 = vmatprep.subr.bf16.mxu0 0
      %1193 = vmatpush1.bf16.msra.mxu0 %v976
      %1194 = vmatprep.subr.bf16.mxu0 0
      %1195 = vmatpush1.bf16.msra.mxu0 %v977
      %1196 = vmatprep.subr.bf16.mxu0 0
      %1197 = vmatpush1.bf16.msra.mxu0 %v978
      %1198 = vmatprep.subr.bf16.mxu0 0
      %1199 = vmatpush1.bf16.msra.mxu0 %v979
      %1200 = vmatprep.subr.bf16.mxu0 0
      %1201 = vmatpush1.bf16.msra.mxu0 %v980
      %1202 = vmatprep.subr.bf16.mxu0 0
      %1203 = vmatpush1.bf16.msra.mxu0 %v981
      %1204 = vmatprep.subr.bf16.mxu0 0
      %1205 = vmatpush1.bf16.msra.mxu0 %v982
      %1206 = vmatprep.subr.bf16.mxu0 0
      %1207 = vmatpush1.bf16.msra.mxu0 %v983
      %1208 = vmatprep.subr.bf16.mxu0 0
      %1209 = vmatpush1.bf16.msra.mxu0 %v984
      %1210 = vmatprep.mubr.bf16.mxu0 %v700
      %1211 = vmatmul.mubr.bf16.gmra.mrb[0].mxu0 %v699
      %v1212 = vpop.f32.mrb[0].mxu0
      %v1213 = vadd.f32 %v1052, %v1212
      %v1214 = vpop.f32.mrb[0].mxu0
      %v1215 = vpop.f32.mrb[0].mxu0
      %v1216 = vadd.f32 %v1055, %v1215
      %v1217 = vpop.f32.mrb[0].mxu0
      %1218 = vmatprep.mubr.bf16.mxu0 %v704
      %1219 = vmatmul.mubr.bf16.gmra.mrb[0].mxu0 %v703
      %v1220 = vpop.f32.mrb[0].mxu0
      %v1221 = vadd.f32 %v1060, %v1220
      %v1222 = vpop.f32.mrb[0].mxu0
      %v1223 = vpop.f32.mrb[0].mxu0
      %v1224 = vadd.f32 %v1063, %v1223
      %v1225 = vpop.f32.mrb[0].mxu0
      %1226 = vmatprep.mubr.bf16.mxu0 %v708
      %1227 = vmatmul.mubr.bf16.gmra.mrb[0].mxu0 %v707
      %v1228 = vpop.f32.mrb[0].mxu0
      %v1229 = vadd.f32 %v1068, %v1228
      %v1230 = vpop.f32.mrb[0].mxu0
      %v1231 = vpop.f32.mrb[0].mxu0
      %v1232 = vadd.f32 %v1071, %v1231
      %v1233 = vpop.f32.mrb[0].mxu0
      %1234 = vmatprep.mubr.bf16.mxu0 %v712
      %1235 = vmatmul.mubr.bf16.gmra.mrb[0].mxu0 %v711
      %v1236 = vpop.f32.mrb[0].mxu0
      %v1237 = vadd.f32 %v1076, %v1236
      %v1238 = vpop.f32.mrb[0].mxu0
      %v1239 = vpop.f32.mrb[0].mxu0
      %v1240 = vadd.f32 %v1079, %v1239
      %v1241 = vpop.f32.mrb[0].mxu0
      %1242 = vmatprep.mubr.bf16.mxu0 %v716
      %1243 = vmatmul.mubr.bf16.gmra.mrb[0].mxu0 %v715
      %v1244 = vpop.f32.mrb[0].mxu0
      %v1245 = vadd.f32 %v1084, %v1244
      %v1246 = vpop.f32.mrb[0].mxu0
      %v1247 = vpop.f32.mrb[0].mxu0
      %v1248 = vadd.f32 %v1087, %v1247
      %v1249 = vpop.f32.mrb[0].mxu0
      %1250 = vmatprep.mubr.bf16.mxu0 %v720
      %1251 = vmatmul.mubr.bf16.gmra.mrb[0].mxu0 %v719
      %v1252 = vpop.f32.mrb[0].mxu0
      %v1253 = vadd.f32 %v1092, %v1252
      %v1254 = vpop.f32.mrb[0].mxu0
      %v1255 = vpop.f32.mrb[0].mxu0
      %v1256 = vadd.f32 %v1095, %v1255
      %v1257 = vpop.f32.mrb[0].mxu0
      %1258 = vmatprep.mubr.bf16.mxu0 %v724
      %1259 = vmatmul.mubr.bf16.gmra.mrb[0].mxu0 %v723
      %v1260 = vpop.f32.mrb[0].mxu0
      %v1261 = vadd.f32 %v1100, %v1260
      %v1262 = vpop.f32.mrb[0].mxu0
      %v1263 = vpop.f32.mrb[0].mxu0
      %v1264 = vadd.f32 %v1103, %v1263
      %v1265 = vpop.f32.mrb[0].mxu0
      %1266 = vmatprep.mubr.bf16.mxu0 %v728
      %1267 = vmatmul.mubr.bf16.gmra.mrb[0].mxu0 %v727
      %v1268 = vpop.f32.mrb[0].mxu0
      %v1269 = vadd.f32 %v1108, %v1268
      %v1270 = vpop.f32.mrb[0].mxu0
      %v1271 = vpop.f32.mrb[0].mxu0
      %v1272 = vadd.f32 %v1111, %v1271
      %v1273 = vpop.f32.mrb[0].mxu0
      %1274 = vmatprep.mubr.bf16.mxu0 %v732
      %1275 = vmatmul.mubr.bf16.gmra.mrb[0].mxu0 %v731
      %v1276 = vpop.f32.mrb[0].mxu0
      %v1277 = vadd.f32 %v1116, %v1276
      %v1278 = vpop.f32.mrb[0].mxu0
      %v1279 = vpop.f32.mrb[0].mxu0
      %v1280 = vadd.f32 %v1119, %v1279
      %v1281 = vpop.f32.mrb[0].mxu0
      %1282 = vmatprep.mubr.bf16.mxu0 %v736
      %1283 = vmatmul.mubr.bf16.gmra.mrb[0].mxu0 %v735
      %v1284 = vpop.f32.mrb[0].mxu0
      %v1285 = vadd.f32 %v1124, %v1284
      %v1286 = vpop.f32.mrb[0].mxu0
      %v1287 = vpop.f32.mrb[0].mxu0
      %v1288 = vadd.f32 %v1127, %v1287
      %v1289 = vpop.f32.mrb[0].mxu0
      %1290 = vmatprep.mubr.bf16.mxu0 %v740
      %1291 = vmatmul.mubr.bf16.gmra.mrb[0].mxu0 %v739
      %v1292 = vpop.f32.mrb[0].mxu0
      %v1293 = vadd.f32 %v1132, %v1292
      %v1294 = vpop.f32.mrb[0].mxu0
      %v1295 = vpop.f32.mrb[0].mxu0
      %v1296 = vadd.f32 %v1135, %v1295
      %v1297 = vpop.f32.mrb[0].mxu0
      %1298 = vmatprep.mubr.bf16.mxu0 %v744
      %1299 = vmatmul.mubr.bf16.gmra.mrb[0].mxu0 %v743
      %v1300 = vpop.f32.mrb[0].mxu0
      %v1301 = vadd.f32 %v1140, %v1300
      %v1302 = vpop.f32.mrb[0].mxu0
      %v1303 = vpop.f32.mrb[0].mxu0
      %v1304 = vadd.f32 %v1143, %v1303
      %v1305 = vpop.f32.mrb[0].mxu0
      %1306 = vmatprep.mubr.bf16.mxu0 %v748
      %1307 = vmatmul.mubr.bf16.gmra.mrb[0].mxu0 %v747
      %v1308 = vpop.f32.mrb[0].mxu0
      %v1309 = vadd.f32 %v1148, %v1308
      %v1310 = vpop.f32.mrb[0].mxu0
      %v1311 = vpop.f32.mrb[0].mxu0
      %v1312 = vadd.f32 %v1151, %v1311
      %v1313 = vpop.f32.mrb[0].mxu0
      %1314 = vmatprep.mubr.bf16.mxu0 %v752
      %1315 = vmatmul.mubr.bf16.gmra.mrb[0].mxu0 %v751
      %v1316 = vpop.f32.mrb[0].mxu0
      %v1317 = vadd.f32 %v1156, %v1316
      %v1318 = vpop.f32.mrb[0].mxu0
      %v1319 = vpop.f32.mrb[0].mxu0
      %v1320 = vadd.f32 %v1159, %v1319
      %v1321 = vpop.f32.mrb[0].mxu0
      %1322 = vmatprep.mubr.bf16.mxu0 %v756
      %1323 = vmatmul.mubr.bf16.gmra.mrb[0].mxu0 %v755
      %v1324 = vpop.f32.mrb[0].mxu0
      %v1325 = vadd.f32 %v1164, %v1324
      %v1326 = vpop.f32.mrb[0].mxu0
      %v1327 = vpop.f32.mrb[0].mxu0
      %v1328 = vadd.f32 %v1167, %v1327
      %v1329 = vpop.f32.mrb[0].mxu0
      %1330 = vmatprep.mubr.bf16.mxu0 %v760
      %1331 = vmatmul.mubr.bf16.gmra.mrb[0].mxu0 %v759
      %v1332 = vpop.f32.mrb[0].mxu0
      %v1333 = vadd.f32 %v1172, %v1332
      %v1334 = vpop.f32.mrb[0].mxu0
      %v1335 = vpop.f32.mrb[0].mxu0
      %v1336 = vadd.f32 %v1175, %v1335
      %v1337 = vpop.f32.mrb[0].mxu0
      %1338 = vdwg.mxu0
      %v1339 = vadd.f32 %v345, %v1213
      %v1340 = vadd.f32 %v346, %v1216
      %v1341 = vadd.f32 %v347, %v1221
      %v1342 = vadd.f32 %v348, %v1224
      %v1343 = vadd.f32 %v349, %v1229
      %v1344 = vadd.f32 %v350, %v1232
      %v1345 = vadd.f32 %v351, %v1237
      %v1346 = vadd.f32 %v352, %v1240
      %v1347 = vadd.f32 %v353, %v1245
      %v1348 = vadd.f32 %v354, %v1248
      %v1349 = vadd.f32 %v355, %v1253
      %v1350 = vadd.f32 %v356, %v1256
      %v1351 = vadd.f32 %v357, %v1261
      %v1352 = vadd.f32 %v358, %v1264
      %v1353 = vadd.f32 %v359, %v1269
      %v1354 = vadd.f32 %v360, %v1272
      %v1355 = vadd.f32 %v361, %v1277
      %v1356 = vadd.f32 %v362, %v1280
      %v1357 = vadd.f32 %v363, %v1285
      %v1358 = vadd.f32 %v364, %v1288
      %v1359 = vadd.f32 %v365, %v1293
      %v1360 = vadd.f32 %v366, %v1296
      %v1361 = vadd.f32 %v367, %v1301
      %v1362 = vadd.f32 %v368, %v1304
      %v1363 = vadd.f32 %v369, %v1309
      %v1364 = vadd.f32 %v370, %v1312
      %v1365 = vadd.f32 %v371, %v1317
      %v1366 = vadd.f32 %v372, %v1320
      %v1367 = vadd.f32 %v373, %v1325
      %v1368 = vadd.f32 %v374, %v1328
      %v1369 = vadd.f32 %v375, %v1333
      %v1370 = vadd.f32 %v376, %v1336
      %1371 = vst [vmem:[#allocation2] sm:$0xff] %v1339
      %1372 = vst [vmem:[#allocation2 + $0x8] sm:$0xff] %v1340
      %1373 = vst [vmem:[#allocation2 + $0x10] sm:$0xff] %v1341
      %1374 = vst [vmem:[#allocation2 + $0x18] sm:$0xff] %v1342
      %1375 = vst [vmem:[#allocation2 + $0x20] sm:$0xff] %v1343
      %1376 = vst [vmem:[#allocation2 + $0x28] sm:$0xff] %v1344
      %1377 = vst [vmem:[#allocation2 + $0x30] sm:$0xff] %v1345
      %1378 = vst [vmem:[#allocation2 + $0x38] sm:$0xff] %v1346
      %1379 = vst [vmem:[#allocation2 + $0x40] sm:$0xff] %v1347
      %1380 = vst [vmem:[#allocation2 + $0x48] sm:$0xff] %v1348
      %1381 = vst [vmem:[#allocation2 + $0x50] sm:$0xff] %v1349
      %1382 = vst [vmem:[#allocation2 + $0x58] sm:$0xff] %v1350
      %1383 = vst [vmem:[#allocation2 + $0x60] sm:$0xff] %v1351
      %1384 = vst [vmem:[#allocation2 + $0x68] sm:$0xff] %v1352
      %1385 = vst [vmem:[#allocation2 + $0x70] sm:$0xff] %v1353
      %1386 = vst [vmem:[#allocation2 + $0x78] sm:$0xff] %v1354
      %1387 = vst [vmem:[#allocation2 + $0x80] sm:$0xff] %v1355
      %1388 = vst [vmem:[#allocation2 + $0x88] sm:$0xff] %v1356
      %1389 = vst [vmem:[#allocation2 + $0x90] sm:$0xff] %v1357
      %1390 = vst [vmem:[#allocation2 + $0x98] sm:$0xff] %v1358
      %1391 = vst [vmem:[#allocation2 + $0xa0] sm:$0xff] %v1359
      %1392 = vst [vmem:[#allocation2 + $0xa8] sm:$0xff] %v1360
      %1393 = vst [vmem:[#allocation2 + $0xb0] sm:$0xff] %v1361
      %1394 = vst [vmem:[#allocation2 + $0xb8] sm:$0xff] %v1362
      %1395 = vst [vmem:[#allocation2 + $0xc0] sm:$0xff] %v1363
      %1396 = vst [vmem:[#allocation2 + $0xc8] sm:$0xff] %v1364
      %1397 = vst [vmem:[#allocation2 + $0xd0] sm:$0xff] %v1365
      %1398 = vst [vmem:[#allocation2 + $0xd8] sm:$0xff] %v1366
      %1399 = vst [vmem:[#allocation2 + $0xe0] sm:$0xff] %v1367
      %1400 = vst [vmem:[#allocation2 + $0xe8] sm:$0xff] %v1368
      %1401 = vst [vmem:[#allocation2 + $0xf0] sm:$0xff] %v1369
      %1402 = vst [vmem:[#allocation2 + $0xf8] sm:$0xff] %v1370
      // Predicated region
      $region41: #{forward.17} parent=35 // pred_check
        %p1403 = pneg %p309
      $region42: #{forward.17} parent=35 // pred_check_branch
        %1405 = sbr.rel (%p1403) target = $region44
      $region43: #{forward.17} parent=35 // pred_region
        %v1406 = vld [vmem:[#allocation2] sm:$0xff]
        %v1407 = vld [vmem:[#allocation2 + $0x8] sm:$0xff]
        %v1408 = vld [vmem:[#allocation2 + $0x10] sm:$0xff]
        %v1409 = vld [vmem:[#allocation2 + $0x18] sm:$0xff]
        %v1410 = vld [vmem:[#allocation2 + $0x20] sm:$0xff]
        %v1411 = vld [vmem:[#allocation2 + $0x28] sm:$0xff]
        %v1412 = vld [vmem:[#allocation2 + $0x30] sm:$0xff]
        %v1413 = vld [vmem:[#allocation2 + $0x38] sm:$0xff]
        %v1414 = vld [vmem:[#allocation2 + $0x40] sm:$0xff]
        %v1415 = vld [vmem:[#allocation2 + $0x48] sm:$0xff]
        %v1416 = vld [vmem:[#allocation2 + $0x50] sm:$0xff]
        %v1417 = vld [vmem:[#allocation2 + $0x58] sm:$0xff]
        %v1418 = vld [vmem:[#allocation2 + $0x60] sm:$0xff]
        %v1419 = vld [vmem:[#allocation2 + $0x68] sm:$0xff]
        %v1420 = vld [vmem:[#allocation2 + $0x70] sm:$0xff]
        %v1421 = vld [vmem:[#allocation2 + $0x78] sm:$0xff]
        %v1422 = vld [vmem:[#allocation2 + $0x80] sm:$0xff]
        %v1423 = vld [vmem:[#allocation2 + $0x88] sm:$0xff]
        %v1424 = vld [vmem:[#allocation2 + $0x90] sm:$0xff]
        %v1425 = vld [vmem:[#allocation2 + $0x98] sm:$0xff]
        %v1426 = vld [vmem:[#allocation2 + $0xa0] sm:$0xff]
        %v1427 = vld [vmem:[#allocation2 + $0xa8] sm:$0xff]
        %v1428 = vld [vmem:[#allocation2 + $0xb0] sm:$0xff]
        %v1429 = vld [vmem:[#allocation2 + $0xb8] sm:$0xff]
        %v1430 = vld [vmem:[#allocation2 + $0xc0] sm:$0xff]
        %v1431 = vld [vmem:[#allocation2 + $0xc8] sm:$0xff]
        %v1432 = vld [vmem:[#allocation2 + $0xd0] sm:$0xff]
        %v1433 = vld [vmem:[#allocation2 + $0xd8] sm:$0xff]
        %v1434 = vld [vmem:[#allocation2 + $0xe0] sm:$0xff]
        %v1435 = vld [vmem:[#allocation2 + $0xe8] sm:$0xff]
        %v1436 = vld [vmem:[#allocation2 + $0xf0] sm:$0xff]
        %v1437 = vld [vmem:[#allocation2 + $0xf8] sm:$0xff]
        %v1438 = vld [vmem:[%s295] sm:$0x1]
        %v1440 = vlaneseq
        %v1441 = vshrl.u32 %v1440, 7
        %v1442 = vsub.s32 0, %v1441
        %v1443 = vrot.slane %v1438, %v1442
        %v1445 = vmul.f32 %v1406, %v1443
        %v1446 = vmul.f32 %v1407, %v1443
        %v1447 = vmul.f32 %v1408, %v1443
        %v1448 = vmul.f32 %v1409, %v1443
        %v1449 = vmul.f32 %v1410, %v1443
        %v1450 = vmul.f32 %v1411, %v1443
        %v1451 = vmul.f32 %v1412, %v1443
        %v1452 = vmul.f32 %v1413, %v1443
        %v1453 = vmul.f32 %v1414, %v1443
        %v1454 = vmul.f32 %v1415, %v1443
        %v1455 = vmul.f32 %v1416, %v1443
        %v1456 = vmul.f32 %v1417, %v1443
        %v1457 = vmul.f32 %v1418, %v1443
        %v1458 = vmul.f32 %v1419, %v1443
        %v1459 = vmul.f32 %v1420, %v1443
        %v1460 = vmul.f32 %v1421, %v1443
        %v1461 = vmul.f32 %v1422, %v1443
        %v1462 = vmul.f32 %v1423, %v1443
        %v1463 = vmul.f32 %v1424, %v1443
        %v1464 = vmul.f32 %v1425, %v1443
        %v1465 = vmul.f32 %v1426, %v1443
        %v1466 = vmul.f32 %v1427, %v1443
        %v1467 = vmul.f32 %v1428, %v1443
        %v1468 = vmul.f32 %v1429, %v1443
        %v1469 = vmul.f32 %v1430, %v1443
        %v1470 = vmul.f32 %v1431, %v1443
        %v1471 = vmul.f32 %v1432, %v1443
        %v1472 = vmul.f32 %v1433, %v1443
        %v1473 = vmul.f32 %v1434, %v1443
        %v1474 = vmul.f32 %v1435, %v1443
        %v1475 = vmul.f32 %v1436, %v1443
        %v1476 = vmul.f32 %v1437, %v1443
        %v1477 = vld [vmem:[%s298] sm:$0x1]
        %v1479 = vlaneseq
        %v1480 = vshrl.u32 %v1479, 7
        %v1481 = vsub.s32 0, %v1480
        %v1482 = vrot.slane %v1477, %v1481
        %v1484 = vadd.f32 %v1445, %v1482
        %v1485 = vadd.f32 %v1446, %v1482
        %v1486 = vadd.f32 %v1447, %v1482
        %v1487 = vadd.f32 %v1448, %v1482
        %v1488 = vadd.f32 %v1449, %v1482
        %v1489 = vadd.f32 %v1450, %v1482
        %v1490 = vadd.f32 %v1451, %v1482
        %v1491 = vadd.f32 %v1452, %v1482
        %v1492 = vadd.f32 %v1453, %v1482
        %v1493 = vadd.f32 %v1454, %v1482
        %v1494 = vadd.f32 %v1455, %v1482
        %v1495 = vadd.f32 %v1456, %v1482
        %v1496 = vadd.f32 %v1457, %v1482
        %v1497 = vadd.f32 %v1458, %v1482
        %v1498 = vadd.f32 %v1459, %v1482
        %v1499 = vadd.f32 %v1460, %v1482
        %v1500 = vadd.f32 %v1461, %v1482
        %v1501 = vadd.f32 %v1462, %v1482
        %v1502 = vadd.f32 %v1463, %v1482
        %v1503 = vadd.f32 %v1464, %v1482
        %v1504 = vadd.f32 %v1465, %v1482
        %v1505 = vadd.f32 %v1466, %v1482
        %v1506 = vadd.f32 %v1467, %v1482
        %v1507 = vadd.f32 %v1468, %v1482
        %v1508 = vadd.f32 %v1469, %v1482
        %v1509 = vadd.f32 %v1470, %v1482
        %v1510 = vadd.f32 %v1471, %v1482
        %v1511 = vadd.f32 %v1472, %v1482
        %v1512 = vadd.f32 %v1473, %v1482
        %v1513 = vadd.f32 %v1474, %v1482
        %v1514 = vadd.f32 %v1475, %v1482
        %v1515 = vadd.f32 %v1476, %v1482
        %v1516 = vmax.f32 %v1484, 0.0
        %v1517 = vmax.f32 %v1485, 0.0
        %v1518 = vmax.f32 %v1486, 0.0
        %v1519 = vmax.f32 %v1487, 0.0
        %v1520 = vmax.f32 %v1488, 0.0
        %v1521 = vmax.f32 %v1489, 0.0
        %v1522 = vmax.f32 %v1490, 0.0
        %v1523 = vmax.f32 %v1491, 0.0
        %v1524 = vmax.f32 %v1492, 0.0
        %v1525 = vmax.f32 %v1493, 0.0
        %v1526 = vmax.f32 %v1494, 0.0
        %v1527 = vmax.f32 %v1495, 0.0
        %v1528 = vmax.f32 %v1496, 0.0
        %v1529 = vmax.f32 %v1497, 0.0
        %v1530 = vmax.f32 %v1498, 0.0
        %v1531 = vmax.f32 %v1499, 0.0
        %v1532 = vmax.f32 %v1500, 0.0
        %v1533 = vmax.f32 %v1501, 0.0
        %v1534 = vmax.f32 %v1502, 0.0
        %v1535 = vmax.f32 %v1503, 0.0
        %v1536 = vmax.f32 %v1504, 0.0
        %v1537 = vmax.f32 %v1505, 0.0
        %v1538 = vmax.f32 %v1506, 0.0
        %v1539 = vmax.f32 %v1507, 0.0
        %v1540 = vmax.f32 %v1508, 0.0
        %v1541 = vmax.f32 %v1509, 0.0
        %v1542 = vmax.f32 %v1510, 0.0
        %v1543 = vmax.f32 %v1511, 0.0
        %v1544 = vmax.f32 %v1512, 0.0
        %v1545 = vmax.f32 %v1513, 0.0
        %v1546 = vmax.f32 %v1514, 0.0
        %v1547 = vmax.f32 %v1515, 0.0
        %v1548 = vpack.c.bf16 %v1517, %v1516
        %v1549 = vpack.c.bf16 %v1519, %v1518
        %v1550 = vpack.c.bf16 %v1521, %v1520
        %v1551 = vpack.c.bf16 %v1523, %v1522
        %v1552 = vpack.c.bf16 %v1525, %v1524
        %v1553 = vpack.c.bf16 %v1527, %v1526
        %v1554 = vpack.c.bf16 %v1529, %v1528
        %v1555 = vpack.c.bf16 %v1531, %v1530
        %v1556 = vpack.c.bf16 %v1533, %v1532
        %v1557 = vpack.c.bf16 %v1535, %v1534
        %v1558 = vpack.c.bf16 %v1537, %v1536
        %v1559 = vpack.c.bf16 %v1539, %v1538
        %v1560 = vpack.c.bf16 %v1541, %v1540
        %v1561 = vpack.c.bf16 %v1543, %v1542
        %v1562 = vpack.c.bf16 %v1545, %v1544
        %v1563 = vpack.c.bf16 %v1547, %v1546
        %v1580 = vunpack.c.l.b16 %v1548
        %v1581 = vunpack.c.h.b16 %v1548
        %v1582 = vunpack.c.l.b16 %v1549
        %v1583 = vunpack.c.h.b16 %v1549
        %v1584 = vunpack.c.l.b16 %v1550
        %v1585 = vunpack.c.h.b16 %v1550
        %v1586 = vunpack.c.l.b16 %v1551
        %v1587 = vunpack.c.h.b16 %v1551
        %v1588 = vunpack.c.l.b16 %v1552
        %v1589 = vunpack.c.h.b16 %v1552
        %v1590 = vunpack.c.l.b16 %v1553
        %v1591 = vunpack.c.h.b16 %v1553
        %v1592 = vunpack.c.l.b16 %v1554
        %v1593 = vunpack.c.h.b16 %v1554
        %v1594 = vunpack.c.l.b16 %v1555
        %v1595 = vunpack.c.h.b16 %v1555
        %v1596 = vunpack.c.l.b16 %v1556
        %v1597 = vunpack.c.h.b16 %v1556
        %v1598 = vunpack.c.l.b16 %v1557
        %v1599 = vunpack.c.h.b16 %v1557
        %v1600 = vunpack.c.l.b16 %v1558
        %v1601 = vunpack.c.h.b16 %v1558
        %v1602 = vunpack.c.l.b16 %v1559
        %v1603 = vunpack.c.h.b16 %v1559
        %v1604 = vunpack.c.l.b16 %v1560
        %v1605 = vunpack.c.h.b16 %v1560
        %v1606 = vunpack.c.l.b16 %v1561
        %v1607 = vunpack.c.h.b16 %v1561
        %v1608 = vunpack.c.l.b16 %v1562
        %v1609 = vunpack.c.h.b16 %v1562
        %v1610 = vunpack.c.l.b16 %v1563
        %v1611 = vunpack.c.h.b16 %v1563
        %v1612 = vpack.c.b16 %v1580, %v1580
        %v1613 = vpack.c.b16 %v1581, %v1581
        %v1614 = vpack.c.b16 %v1582, %v1582
        %v1615 = vpack.c.b16 %v1583, %v1583
        %v1616 = vpack.c.b16 %v1584, %v1584
        %v1617 = vpack.c.b16 %v1585, %v1585
        %v1618 = vpack.c.b16 %v1586, %v1586
        %v1619 = vpack.c.b16 %v1587, %v1587
        %v1620 = vpack.c.b16 %v1588, %v1588
        %v1621 = vpack.c.b16 %v1589, %v1589
        %v1622 = vpack.c.b16 %v1590, %v1590
        %v1623 = vpack.c.b16 %v1591, %v1591
        %v1624 = vpack.c.b16 %v1592, %v1592
        %v1625 = vpack.c.b16 %v1593, %v1593
        %v1626 = vpack.c.b16 %v1594, %v1594
        %v1627 = vpack.c.b16 %v1595, %v1595
        %v1628 = vpack.c.b16 %v1596, %v1596
        %v1629 = vpack.c.b16 %v1597, %v1597
        %v1630 = vpack.c.b16 %v1598, %v1598
        %v1631 = vpack.c.b16 %v1599, %v1599
        %v1632 = vpack.c.b16 %v1600, %v1600
        %v1633 = vpack.c.b16 %v1601, %v1601
        %v1634 = vpack.c.b16 %v1602, %v1602
        %v1635 = vpack.c.b16 %v1603, %v1603
        %v1636 = vpack.c.b16 %v1604, %v1604
        %v1637 = vpack.c.b16 %v1605, %v1605
        %v1638 = vpack.c.b16 %v1606, %v1606
        %v1639 = vpack.c.b16 %v1607, %v1607
        %v1640 = vpack.c.b16 %v1608, %v1608
        %v1641 = vpack.c.b16 %v1609, %v1609
        %v1642 = vpack.c.b16 %v1610, %v1610
        %v1643 = vpack.c.b16 %v1611, %v1611
        %1676 = vst [vmem:[%s306] sm:$0xf] %v1612
        %1677 = vst [vmem:[%s306 + $0x4] sm:$0xf] %v1613
        %1678 = vst [vmem:[%s306 + $0x8] sm:$0xf] %v1614
        %1679 = vst [vmem:[%s306 + $0xc] sm:$0xf] %v1615
        %1680 = vst [vmem:[%s306 + $0x10] sm:$0xf] %v1616
        %1681 = vst [vmem:[%s306 + $0x14] sm:$0xf] %v1617
        %1682 = vst [vmem:[%s306 + $0x18] sm:$0xf] %v1618
        %1683 = vst [vmem:[%s306 + $0x1c] sm:$0xf] %v1619
        %1684 = vst [vmem:[%s306 + $0x20] sm:$0xf] %v1620
        %1685 = vst [vmem:[%s306 + $0x24] sm:$0xf] %v1621
        %1686 = vst [vmem:[%s306 + $0x28] sm:$0xf] %v1622
        %1687 = vst [vmem:[%s306 + $0x2c] sm:$0xf] %v1623
        %1688 = vst [vmem:[%s306 + $0x30] sm:$0xf] %v1624
        %1689 = vst [vmem:[%s306 + $0x34] sm:$0xf] %v1625
        %1690 = vst [vmem:[%s306 + $0x38] sm:$0xf] %v1626
        %1691 = vst [vmem:[%s306 + $0x3c] sm:$0xf] %v1627
        %1692 = vst [vmem:[%s306 + $0x40] sm:$0xf] %v1628
        %1693 = vst [vmem:[%s306 + $0x44] sm:$0xf] %v1629
        %1694 = vst [vmem:[%s306 + $0x48] sm:$0xf] %v1630
        %1695 = vst [vmem:[%s306 + $0x4c] sm:$0xf] %v1631
        %1696 = vst [vmem:[%s306 + $0x50] sm:$0xf] %v1632
        %1697 = vst [vmem:[%s306 + $0x54] sm:$0xf] %v1633
        %1698 = vst [vmem:[%s306 + $0x58] sm:$0xf] %v1634
        %1699 = vst [vmem:[%s306 + $0x5c] sm:$0xf] %v1635
        %1700 = vst [vmem:[%s306 + $0x60] sm:$0xf] %v1636
        %1701 = vst [vmem:[%s306 + $0x64] sm:$0xf] %v1637
        %1702 = vst [vmem:[%s306 + $0x68] sm:$0xf] %v1638
        %1703 = vst [vmem:[%s306 + $0x6c] sm:$0xf] %v1639
        %1704 = vst [vmem:[%s306 + $0x70] sm:$0xf] %v1640
        %1705 = vst [vmem:[%s306 + $0x74] sm:$0xf] %v1641
        %1706 = vst [vmem:[%s306 + $0x78] sm:$0xf] %v1642
        %1707 = vst [vmem:[%s306 + $0x7c] sm:$0xf] %v1643
      $region44: #{forward.17} parent=35 // pred_fallthru
        _
      %s1708 = smul.u32 32, %s20
      %p1709 = scmp.lt.s32.totalorder %s1708, 63
      %s1710 = scalar_select %p1709, %s1708, 63
      %p1711 = scmp.lt.s32.totalorder %s21, 0
      %s1712 = scalar_select %p1711, %s21, 0
      %s1713 = sadd.s32 %s1712, %s1710
      %s1714 = smul.addr %s1713, 4
      %s1715 = scalar_lea.vmem %s4, %s1714
      // Predicated region
      $region45: #{forward.17} parent=35 // pred_check
        %p1716 = pneg %p162
      $region46: #{forward.17} parent=35 // pred_check_branch
        %1718 = sbr.rel (%p1716) target = $region48
      $region47: #{forward.17} parent=35 // pred_region
        %s1719 = smul.u32 32, %s20
      $region48: #{forward.17} parent=35 // pred_fallthru
        _
    $region36: #{forward.17} parent=5 // pred_fallthru
      _
    %p1720 = scmp.le.s32.totalorder 2, %s10
    // Predicated region
    $region49: #{forward.17} parent=5 // pred_check
      %p1721 = pneg %p1720
    $region50: #{forward.17} parent=5 // pred_check_branch
      %1723 = sbr.rel (%p1721) target = $region52
    $region51: #{forward.17} parent=5 // pred_region
      %s1724 = ssub.s32 %s10, 2
      // Predicated region
      $region53: #{forward.17} parent=51 // pred_check
        %p1725 = pneg %p168
      $region54: #{forward.17} parent=51 // pred_check_branch
        %1727 = sbr.rel (%p1725) target = $region56
      $region55: #{forward.17} parent=51 // pred_region
        %s1728 = smul.u32 32, %s23
        %p1729 = scmp.lt.s32.totalorder %s1728, 63
        %s1730 = scalar_select %p1729, %s1728, 63
        %p1731 = scmp.lt.s32.totalorder %s24, 0
        %s1732 = scalar_select %p1731, %s24, 0
        %s1733 = sadd.s32 %s1732, %s1730
        %s1734 = smul.addr %s1733, 4
        %s1735 = scalar_lea.vmem %s4, %s1734
      $region56: #{forward.17} parent=51 // pred_fallthru
        _
    $region52: #{forward.17} parent=5 // pred_fallthru
      _
  $region6: #{forward.17} parent=0 // loop_footer
    %s14 = sadd.s32 1, %s10
  $region7: #{forward.17} parent=0 // loop_footer_branch
    %9 = sbr.rel target = $region3
  $region8: #{forward.17} parent=0 // loop_exit
    _

// kernel: forward.18
$region0: #{forward.18}
  #allocation0 [shape = 'u32[]', space=smem, size = 0x4, offset = 0x4, fixed_abs, tag = 'smem constant byte address 0x4 - core index']
  #allocation1 [shape = 'u32[144,128]{1,0:T(1,128)}', space=vmem, size = 0x12000, scoped, tag = 'internal scratch']
  #allocation2 [shape = 'f32[256,128]{1,0:T(8,128)}', space=vmem, size = 0x20000, scoped, tag = 'scratch operand']
  %s0 = inlined_call_operand.vmem [shape: bf16[512,384], index: 0, kind: input, shape index: {}]
  %s1 = inlined_call_operand.vmem [shape: bf16[384,128], index: 1, kind: input, shape index: {}]
  %s2 = inlined_call_operand.vmem [shape: f32[1,128], index: 2, kind: input, shape index: {}]
  %s3 = inlined_call_operand.vmem [shape: f32[1,128], index: 3, kind: input, shape index: {}]
  %s4 = inlined_call_operand.vmem [shape: bf16[512,128], index: 4, kind: output, shape index: {}]
  %s5 = sld [smem:[#allocation0]]
  $region57: #{forward.18} parent=0
    _
  %s7 = ssub.s32 1, %s5
  %s8 = scalar_select 0, %s7, %s5
  loop: start=0, step=1, limit=4
  $region2: #{forward.18} parent=0 // loop_pre_header
    _
  $region3: #{forward.18} parent=0 // loop_header
    %s10 = sphi 0, %s14
    %p11 = scmp.ge.s32.totalorder %s10, 4
    %s17 = sphi 0, %s36
    %s18 = sphi 0, %s32
    %s19 = sphi 0, %s28
    %s20 = sphi 0, %s17
    %s21 = sphi 0, %s18
    %s22 = sphi 0, %s19
    %s23 = sphi 0, %s20
    %s24 = sphi 0, %s21
    %s25 = sphi 0, %s22
    %s41 = sphi 0, %s43
    %s44 = sphi 0, %s41
    %s45 = sphi 0, %s44
    %s61 = sphi 0, %s45
    %s69 = sphi 0, %s71
    %s72 = sphi 0, %s69
    %s73 = sphi 0, %s72
    %s89 = sphi 0, %s73
    %s95 = sphi 0, %s97
    %s98 = sphi 0, %s95
    %s99 = sphi 0, %s98
    %s115 = sphi 0, %s99
    %s121 = sphi 0, %s123
    %s124 = sphi 0, %s121
    %s125 = sphi 0, %s124
    %s141 = sphi 0, %s125
    %s149 = sphi 0, %s151
    %s152 = sphi 0, %s149
    %s153 = sphi 0, %s152
    %s169 = sphi 0, %s153
  $region4: #{forward.18} parent=0 // loop_header_branch
    %13 = sbr.rel (%p11) target = $region8
  $region5: #{forward.18} parent=0 // loop_body
    %s15 = ssub.s32 %s10, 1
    %s16 = ssub.s32 %s10, 2
    %s26 = sadd.s32 1, %s19
    %p27 = scmp.ge.s32.totalorder %s26, 1
    %s28 = scalar_select %p27, 0, %s26
    %s29 = sadd.s32 1, %s18
    %s30 = scalar_select %p27, %s29, %s18
    %p31 = scmp.ge.s32.totalorder %s30, 1
    %s32 = scalar_select %p31, 0, %s30
    %s33 = sadd.s32 1, %s17
    %s34 = scalar_select %p31, %s33, %s17
    %p35 = scmp.ge.s32.totalorder %s34, 2
    %s36 = scalar_select %p35, 0, %s34
    %s37 = ssub.s32 %s17, %s36
    %s38 = ssub.s32 %s19, %s28
    %s39 = sor.u32 %s37, %s38
    %p40 = scmp.eq.s32.totalorder %s39, 0
    %s42 = sadd.s32 %s41, 1
    %s43 = scalar_select %p40, %s41, %s42
    %p46 = pneg %p40
    %p47 = scmp.eq.s32.totalorder %s10, 1
    %p48 = por %p46, %p47
    %p49 = scmp.ne.s32.totalorder %s41, %s44
    %p50 = scmp.eq.s32.totalorder %s10, 0
    %p51 = por %p49, %p50
    %p52 = scmp.ne.s32.totalorder %s41, %s44
    %p53 = scmp.eq.s32.totalorder %s15, 1
    %p54 = por %p52, %p53
    %p55 = scmp.ne.s32.totalorder %s44, %s45
    %p56 = scmp.eq.s32.totalorder %s15, 0
    %p57 = por %p55, %p56
    %p58 = scmp.ne.s32.totalorder %s44, %s45
    %p59 = scmp.eq.s32.totalorder %s16, 1
    %p60 = por %p58, %p59
    %p62 = scmp.ne.s32.totalorder %s45, %s61
    %p63 = scmp.eq.s32.totalorder %s16, 0
    %p64 = por %p62, %p63
    %s65 = ssub.s32 %s19, %s28
    %s66 = ssub.s32 %s18, %s32
    %s67 = sor.u32 %s65, %s66
    %p68 = scmp.eq.s32.totalorder %s67, 0
    %s70 = sadd.s32 %s69, 1
    %s71 = scalar_select %p68, %s69, %s70
    %p74 = pneg %p68
    %p75 = scmp.eq.s32.totalorder %s10, 1
    %p76 = por %p74, %p75
    %p77 = scmp.ne.s32.totalorder %s69, %s72
    %p78 = scmp.eq.s32.totalorder %s10, 0
    %p79 = por %p77, %p78
    %p80 = scmp.ne.s32.totalorder %s69, %s72
    %p81 = scmp.eq.s32.totalorder %s15, 1
    %p82 = por %p80, %p81
    %p83 = scmp.ne.s32.totalorder %s72, %s73
    %p84 = scmp.eq.s32.totalorder %s15, 0
    %p85 = por %p83, %p84
    %p86 = scmp.ne.s32.totalorder %s72, %s73
    %p87 = scmp.eq.s32.totalorder %s16, 1
    %p88 = por %p86, %p87
    %p90 = scmp.ne.s32.totalorder %s73, %s89
    %p91 = scmp.eq.s32.totalorder %s16, 0
    %p92 = por %p90, %p91
    %s93 = ssub.s32 %s18, %s32
    %p94 = scmp.eq.s32.totalorder %s93, 0
    %s96 = sadd.s32 %s95, 1
    %s97 = scalar_select %p94, %s95, %s96
    %p100 = pneg %p94
    %p101 = scmp.eq.s32.totalorder %s10, 1
    %p102 = por %p100, %p101
    %p103 = scmp.ne.s32.totalorder %s95, %s98
    %p104 = scmp.eq.s32.totalorder %s10, 0
    %p105 = por %p103, %p104
    %p106 = scmp.ne.s32.totalorder %s95, %s98
    %p107 = scmp.eq.s32.totalorder %s15, 1
    %p108 = por %p106, %p107
    %p109 = scmp.ne.s32.totalorder %s98, %s99
    %p110 = scmp.eq.s32.totalorder %s15, 0
    %p111 = por %p109, %p110
    %p112 = scmp.ne.s32.totalorder %s98, %s99
    %p113 = scmp.eq.s32.totalorder %s16, 1
    %p114 = por %p112, %p113
    %p116 = scmp.ne.s32.totalorder %s99, %s115
    %p117 = scmp.eq.s32.totalorder %s16, 0
    %p118 = por %p116, %p117
    %s119 = ssub.s32 %s18, %s32
    %p120 = scmp.eq.s32.totalorder %s119, 0
    %s122 = sadd.s32 %s121, 1
    %s123 = scalar_select %p120, %s121, %s122
    %p126 = pneg %p120
    %p127 = scmp.eq.s32.totalorder %s10, 1
    %p128 = por %p126, %p127
    %p129 = scmp.ne.s32.totalorder %s121, %s124
    %p130 = scmp.eq.s32.totalorder %s10, 0
    %p131 = por %p129, %p130
    %p132 = scmp.ne.s32.totalorder %s121, %s124
    %p133 = scmp.eq.s32.totalorder %s15, 1
    %p134 = por %p132, %p133
    %p135 = scmp.ne.s32.totalorder %s124, %s125
    %p136 = scmp.eq.s32.totalorder %s15, 0
    %p137 = por %p135, %p136
    %p138 = scmp.ne.s32.totalorder %s124, %s125
    %p139 = scmp.eq.s32.totalorder %s16, 1
    %p140 = por %p138, %p139
    %p142 = scmp.ne.s32.totalorder %s125, %s141
    %p143 = scmp.eq.s32.totalorder %s16, 0
    %p144 = por %p142, %p143
    %s145 = ssub.s32 %s17, %s36
    %s146 = ssub.s32 %s18, %s32
    %s147 = sor.u32 %s145, %s146
    %p148 = scmp.eq.s32.totalorder %s147, 0
    %s150 = sadd.s32 %s149, 1
    %s151 = scalar_select %p148, %s149, %s150
    %p154 = pneg %p148
    %p155 = scmp.eq.s32.totalorder %s10, 1
    %p156 = por %p154, %p155
    %p157 = scmp.ne.s32.totalorder %s149, %s152
    %p158 = scmp.eq.s32.totalorder %s10, 0
    %p159 = por %p157, %p158
    %p160 = scmp.ne.s32.totalorder %s149, %s152
    %p161 = scmp.eq.s32.totalorder %s15, 1
    %p162 = por %p160, %p161
    %p163 = scmp.ne.s32.totalorder %s152, %s153
    %p164 = scmp.eq.s32.totalorder %s15, 0
    %p165 = por %p163, %p164
    %p166 = scmp.ne.s32.totalorder %s152, %s153
    %p167 = scmp.eq.s32.totalorder %s16, 1
    %p168 = por %p166, %p167
    %p170 = scmp.ne.s32.totalorder %s153, %s169
    %p171 = scmp.eq.s32.totalorder %s16, 0
    %p172 = por %p170, %p171
    %p173 = scmp.le.s32.totalorder 1, %s10
    %p174 = scmp.lt.s32.totalorder %s10, 3
    %p175 = pnand %p173, %p174
    %p176 = pneg %p175
    // Predicated region
    $region9: #{forward.18} parent=5 // pred_check
      _
    $region10: #{forward.18} parent=5 // pred_check_branch
      %178 = sbr.rel (%p175) target = $region12
    $region11: #{forward.18} parent=5 // pred_region
      %s179 = ssub.s32 %s10, 1
      // Predicated region
      $region13: #{forward.18} parent=11 // pred_check
        %p180 = pneg %p85
      $region14: #{forward.18} parent=11 // pred_check_branch
        %182 = sbr.rel (%p180) target = $region16
      $region15: #{forward.18} parent=11 // pred_region
        %s183 = smul.u32 48, %s22
        %p184 = scmp.lt.s32.totalorder %s183, 47
        %s185 = scalar_select %p184, %s183, 47
        %p186 = scmp.lt.s32.totalorder %s21, 0
        %s187 = scalar_select %p186, %s21, 0
        %s188 = sadd.s32 %s187, %s185
        %s189 = smul.addr %s188, 4
        %s190 = scalar_lea.vmem %s1, %s189
        %s191 = smul.u32 48, %s22
      $region16: #{forward.18} parent=11 // pred_fallthru
        _
      // Predicated region
      $region17: #{forward.18} parent=11 // pred_check
        %p192 = pneg %p111
      $region18: #{forward.18} parent=11 // pred_check_branch
        %194 = sbr.rel (%p192) target = $region20
      $region19: #{forward.18} parent=11 // pred_region
        %p195 = scmp.lt.s32.totalorder %s21, 0
        %s196 = scalar_select %p195, %s21, 0
        %s197 = scalar_lea.vmem %s2, %s196
      $region20: #{forward.18} parent=11 // pred_fallthru
        _
      // Predicated region
      $region21: #{forward.18} parent=11 // pred_check
        %p198 = pneg %p137
      $region22: #{forward.18} parent=11 // pred_check_branch
        %200 = sbr.rel (%p198) target = $region24
      $region23: #{forward.18} parent=11 // pred_region
        %p201 = scmp.lt.s32.totalorder %s21, 0
        %s202 = scalar_select %p201, %s21, 0
        %s203 = scalar_lea.vmem %s3, %s202
      $region24: #{forward.18} parent=11 // pred_fallthru
        _
    $region12: #{forward.18} parent=5 // pred_fallthru
      _
    %p204 = scmp.lt.s32.totalorder %s10, 2
    // Predicated region
    $region25: #{forward.18} parent=5 // pred_check
      %p205 = pneg %p204
    $region26: #{forward.18} parent=5 // pred_check_branch
      %207 = sbr.rel (%p205) target = $region28
    $region27: #{forward.18} parent=5 // pred_region
      // Predicated region
      $region29: #{forward.18} parent=27 // pred_check
        %p208 = pneg %p51
      $region30: #{forward.18} parent=27 // pred_check_branch
        %210 = sbr.rel (%p208) target = $region32
      $region31: #{forward.18} parent=27 // pred_region
        %s211 = smul.u32 32, %s17
        %s212 = smul.u32 3, %s19
        %p213 = scmp.lt.s32.totalorder %s211, 63
        %s214 = scalar_select %p213, %s211, 63
        %p215 = scmp.lt.s32.totalorder %s212, 2
        %s216 = scalar_select %p215, %s212, 2
        %s217 = smul.addr %s214, 3
        %s218 = sadd.s32 %s216, %s217
        %s219 = smul.addr %s218, 4
        %s220 = scalar_lea.vmem %s0, %s219
        %s221 = smul.u32 32, %s17
        %s222 = smul.u32 3, %s19
      $region32: #{forward.18} parent=27 // pred_fallthru
        _
    $region28: #{forward.18} parent=5 // pred_fallthru
      _
    %p223 = scmp.le.s32.totalorder 1, %s10
    %p224 = scmp.lt.s32.totalorder %s10, 3
    %p225 = pnand %p223, %p224
    %p226 = pneg %p225
    // Predicated region
    $region33: #{forward.18} parent=5 // pred_check
      _
    $region34: #{forward.18} parent=5 // pred_check_branch
      %228 = sbr.rel (%p225) target = $region36
    $region35: #{forward.18} parent=5 // pred_region
      %s229 = ssub.s32 %s10, 1
      %s230 = smul.u32 32, %s20
      %s231 = smul.u32 3, %s22
      %p232 = scmp.lt.s32.totalorder %s230, 63
      %s233 = scalar_select %p232, %s230, 63
      %p234 = scmp.lt.s32.totalorder %s231, 2
      %s235 = scalar_select %p234, %s231, 2
      %s236 = smul.addr %s233, 3
      %s237 = sadd.s32 %s235, %s236
      %s238 = smul.addr %s237, 4
      %s239 = scalar_lea.vmem %s0, %s238
      %p240 = pneg %p57
      %p241 = pneg %p54
      %s242 = smul.u32 48, %s22
      %p243 = scmp.lt.s32.totalorder %s242, 47
      %s244 = scalar_select %p243, %s242, 47
      %p245 = scmp.lt.s32.totalorder %s21, 0
      %s246 = scalar_select %p245, %s21, 0
      %s247 = sadd.s32 %s246, %s244
      %s248 = smul.addr %s247, 4
      %s249 = scalar_lea.vmem %s1, %s248
      %p250 = pneg %p85
      %p251 = pneg %p82
      %p252 = scmp.lt.s32.totalorder %s21, 0
      %s253 = scalar_select %p252, %s21, 0
      %s254 = scalar_lea.vmem %s2, %s253
      %p255 = pneg %p111
      %p256 = pneg %p108
      %p257 = scmp.lt.s32.totalorder %s21, 0
      %s258 = scalar_select %p257, %s21, 0
      %s259 = scalar_lea.vmem %s3, %s258
      %p260 = pneg %p137
      %p261 = pneg %p134
      %p262 = pneg %p165
      %p263 = pneg %p162
      %s264 = smul.u32 32, %s20
      %p265 = scmp.lt.s32.totalorder %s264, 63
      %s266 = scalar_select %p265, %s264, 63
      %p267 = scmp.lt.s32.totalorder %s21, 0
      %s268 = scalar_select %p267, %s21, 0
      %s269 = sadd.s32 %s268, %s266
      %s270 = smul.addr %s269, 4
      %s271 = scalar_lea.vmem %s4, %s270
      %s272 = smul.u32 32, %s20
      %s273 = smul.u32 3, %s22
      %p274 = scmp.lt.s32.totalorder %s272, 63
      %s275 = scalar_select %p274, %s272, 63
      %p276 = scmp.lt.s32.totalorder %s273, 2
      %s277 = scalar_select %p276, %s273, 2
      %s278 = smul.addr %s275, 3
      %s279 = sadd.s32 %s277, %s278
      %s280 = smul.addr %s279, 4
      %s281 = scalar_lea.vmem %s0, %s280
      %s282 = smul.u32 32, %s20
      %s283 = smul.u32 3, %s22
      %s284 = smul.u32 48, %s22
      %p285 = scmp.lt.s32.totalorder %s284, 47
      %s286 = scalar_select %p285, %s284, 47
      %p287 = scmp.lt.s32.totalorder %s21, 0
      %s288 = scalar_select %p287, %s21, 0
      %s289 = sadd.s32 %s288, %s286
      %s290 = smul.addr %s289, 4
      %s291 = scalar_lea.vmem %s1, %s290
      %s292 = smul.u32 48, %s22
      %p293 = scmp.lt.s32.totalorder %s21, 0
      %s294 = scalar_select %p293, %s21, 0
      %s295 = scalar_lea.vmem %s2, %s294
      %p296 = scmp.lt.s32.totalorder %s21, 0
      %s297 = scalar_select %p296, %s21, 0
      %s298 = scalar_lea.vmem %s3, %s297
      %s299 = smul.u32 32, %s20
      %p300 = scmp.lt.s32.totalorder %s299, 63
      %s301 = scalar_select %p300, %s299, 63
      %p302 = scmp.lt.s32.totalorder %s21, 0
      %s303 = scalar_select %p302, %s21, 0
      %s304 = sadd.s32 %s303, %s301
      %s305 = smul.addr %s304, 4
      %s306 = scalar_lea.vmem %s4, %s305
      %s307 = smul.u32 32, %s20
      %p309 = scmp.eq.s32.totalorder %s22, 0
      // Predicated region
      $region37: #{forward.18} parent=35 // pred_check
        %p310 = pneg %p309
      $region38: #{forward.18} parent=35 // pred_check_branch
        %312 = sbr.rel (%p310) target = $region40
      $region39: #{forward.18} parent=35 // pred_region
        %313 = vst [vmem:[#allocation2] sm:$0xff] 0.0
        %314 = vst [vmem:[#allocation2 + $0x8] sm:$0xff] 0.0
        %315 = vst [vmem:[#allocation2 + $0x10] sm:$0xff] 0.0
        %316 = vst [vmem:[#allocation2 + $0x18] sm:$0xff] 0.0
        %317 = vst [vmem:[#allocation2 + $0x20] sm:$0xff] 0.0
        %318 = vst [vmem:[#allocation2 + $0x28] sm:$0xff] 0.0
        %319 = vst [vmem:[#allocation2 + $0x30] sm:$0xff] 0.0
        %320 = vst [vmem:[#allocation2 + $0x38] sm:$0xff] 0.0
        %321 = vst [vmem:[#allocation2 + $0x40] sm:$0xff] 0.0
        %322 = vst [vmem:[#allocation2 + $0x48] sm:$0xff] 0.0
        %323 = vst [vmem:[#allocation2 + $0x50] sm:$0xff] 0.0
        %324 = vst [vmem:[#allocation2 + $0x58] sm:$0xff] 0.0
        %325 = vst [vmem:[#allocation2 + $0x60] sm:$0xff] 0.0
        %326 = vst [vmem:[#allocation2 + $0x68] sm:$0xff] 0.0
        %327 = vst [vmem:[#allocation2 + $0x70] sm:$0xff] 0.0
        %328 = vst [vmem:[#allocation2 + $0x78] sm:$0xff] 0.0
        %329 = vst [vmem:[#allocation2 + $0x80] sm:$0xff] 0.0
        %330 = vst [vmem:[#allocation2 + $0x88] sm:$0xff] 0.0
        %331 = vst [vmem:[#allocation2 + $0x90] sm:$0xff] 0.0
        %332 = vst [vmem:[#allocation2 + $0x98] sm:$0xff] 0.0
        %333 = vst [vmem:[#allocation2 + $0xa0] sm:$0xff] 0.0
        %334 = vst [vmem:[#allocation2 + $0xa8] sm:$0xff] 0.0
        %335 = vst [vmem:[#allocation2 + $0xb0] sm:$0xff] 0.0
        %336 = vst [vmem:[#allocation2 + $0xb8] sm:$0xff] 0.0
        %337 = vst [vmem:[#allocation2 + $0xc0] sm:$0xff] 0.0
        %338 = vst [vmem:[#allocation2 + $0xc8] sm:$0xff] 0.0
        %339 = vst [vmem:[#allocation2 + $0xd0] sm:$0xff] 0.0
        %340 = vst [vmem:[#allocation2 + $0xd8] sm:$0xff] 0.0
        %341 = vst [vmem:[#allocation2 + $0xe0] sm:$0xff] 0.0
        %342 = vst [vmem:[#allocation2 + $0xe8] sm:$0xff] 0.0
        %343 = vst [vmem:[#allocation2 + $0xf0] sm:$0xff] 0.0
        %344 = vst [vmem:[#allocation2 + $0xf8] sm:$0xff] 0.0
      $region40: #{forward.18} parent=35 // pred_fallthru
        _
      %v345 = vld [vmem:[#allocation2] sm:$0xff]
      %v346 = vld [vmem:[#allocation2 + $0x8] sm:$0xff]
      %v347 = vld [vmem:[#allocation2 + $0x10] sm:$0xff]
      %v348 = vld [vmem:[#allocation2 + $0x18] sm:$0xff]
      %v349 = vld [vmem:[#allocation2 + $0x20] sm:$0xff]
      %v350 = vld [vmem:[#allocation2 + $0x28] sm:$0xff]
      %v351 = vld [vmem:[#allocation2 + $0x30] sm:$0xff]
      %v352 = vld [vmem:[#allocation2 + $0x38] sm:$0xff]
      %v353 = vld [vmem:[#allocation2 + $0x40] sm:$0xff]
      %v354 = vld [vmem:[#allocation2 + $0x48] sm:$0xff]
      %v355 = vld [vmem:[#allocation2 + $0x50] sm:$0xff]
      %v356 = vld [vmem:[#allocation2 + $0x58] sm:$0xff]
      %v357 = vld [vmem:[#allocation2 + $0x60] sm:$0xff]
      %v358 = vld [vmem:[#allocation2 + $0x68] sm:$0xff]
      %v359 = vld [vmem:[#allocation2 + $0x70] sm:$0xff]
      %v360 = vld [vmem:[#allocation2 + $0x78] sm:$0xff]
      %v361 = vld [vmem:[#allocation2 + $0x80] sm:$0xff]
      %v362 = vld [vmem:[#allocation2 + $0x88] sm:$0xff]
      %v363 = vld [vmem:[#allocation2 + $0x90] sm:$0xff]
      %v364 = vld [vmem:[#allocation2 + $0x98] sm:$0xff]
      %v365 = vld [vmem:[#allocation2 + $0xa0] sm:$0xff]
      %v366 = vld [vmem:[#allocation2 + $0xa8] sm:$0xff]
      %v367 = vld [vmem:[#allocation2 + $0xb0] sm:$0xff]
      %v368 = vld [vmem:[#allocation2 + $0xb8] sm:$0xff]
      %v369 = vld [vmem:[#allocation2 + $0xc0] sm:$0xff]
      %v370 = vld [vmem:[#allocation2 + $0xc8] sm:$0xff]
      %v371 = vld [vmem:[#allocation2 + $0xd0] sm:$0xff]
      %v372 = vld [vmem:[#allocation2 + $0xd8] sm:$0xff]
      %v373 = vld [vmem:[#allocation2 + $0xe0] sm:$0xff]
      %v374 = vld [vmem:[#allocation2 + $0xe8] sm:$0xff]
      %v375 = vld [vmem:[#allocation2 + $0xf0] sm:$0xff]
      %v376 = vld [vmem:[#allocation2 + $0xf8] sm:$0xff]
      %v377 = vld [vmem:[%s281] sm:$0xff]
      %v378 = vld [vmem:[%s281 + $0x8] sm:$0xf]
      %v379 = vld [vmem:[%s281 + $0xc] sm:$0xff]
      %v380 = vld [vmem:[%s281 + $0x14] sm:$0xf]
      %v381 = vld [vmem:[%s281 + $0x18] sm:$0xff]
      %v382 = vld [vmem:[%s281 + $0x20] sm:$0xf]
      %v383 = vld [vmem:[%s281 + $0x24] sm:$0xff]
      %v384 = vld [vmem:[%s281 + $0x2c] sm:$0xf]
      %v385 = vld [vmem:[%s281 + $0x30] sm:$0xff]
      %v386 = vld [vmem:[%s281 + $0x38] sm:$0xf]
      %v387 = vld [vmem:[%s281 + $0x3c] sm:$0xff]
      %v388 = vld [vmem:[%s281 + $0x44] sm:$0xf]
      %v389 = vld [vmem:[%s281 + $0x48] sm:$0xff]
      %v390 = vld [vmem:[%s281 + $0x50] sm:$0xf]
      %v391 = vld [vmem:[%s281 + $0x54] sm:$0xff]
      %v392 = vld [vmem:[%s281 + $0x5c] sm:$0xf]
      %v393 = vld [vmem:[%s281 + $0x60] sm:$0xff]
      %v394 = vld [vmem:[%s281 + $0x68] sm:$0xf]
      %v395 = vld [vmem:[%s281 + $0x6c] sm:$0xff]
      %v396 = vld [vmem:[%s281 + $0x74] sm:$0xf]
      %v397 = vld [vmem:[%s281 + $0x78] sm:$0xff]
      %v398 = vld [vmem:[%s281 + $0x80] sm:$0xf]
      %v399 = vld [vmem:[%s281 + $0x84] sm:$0xff]
      %v400 = vld [vmem:[%s281 + $0x8c] sm:$0xf]
      %v401 = vld [vmem:[%s281 + $0x90] sm:$0xff]
      %v402 = vld [vmem:[%s281 + $0x98] sm:$0xf]
      %v403 = vld [vmem:[%s281 + $0x9c] sm:$0xff]
      %v404 = vld [vmem:[%s281 + $0xa4] sm:$0xf]
      %v405 = vld [vmem:[%s281 + $0xa8] sm:$0xff]
      %v406 = vld [vmem:[%s281 + $0xb0] sm:$0xf]
      %v407 = vld [vmem:[%s281 + $0xb4] sm:$0xff]
      %v408 = vld [vmem:[%s281 + $0xbc] sm:$0xf]
      %v409 = vld [vmem:[%s281 + $0xc0] sm:$0xff]
      %v410 = vld [vmem:[%s281 + $0xc8] sm:$0xf]
      %v411 = vld [vmem:[%s281 + $0xcc] sm:$0xff]
      %v412 = vld [vmem:[%s281 + $0xd4] sm:$0xf]
      %v413 = vld [vmem:[%s281 + $0xd8] sm:$0xff]
      %v414 = vld [vmem:[%s281 + $0xe0] sm:$0xf]
      %v415 = vld [vmem:[%s281 + $0xe4] sm:$0xff]
      %v416 = vld [vmem:[%s281 + $0xec] sm:$0xf]
      %v417 = vld [vmem:[%s281 + $0xf0] sm:$0xff]
      %v418 = vld [vmem:[%s281 + $0xf8] sm:$0xf]
      %v419 = vld [vmem:[%s281 + $0xfc] sm:$0xff]
      %v420 = vld [vmem:[%s281 + $0x104] sm:$0xf]
      %v421 = vld [vmem:[%s281 + $0x108] sm:$0xff]
      %v422 = vld [vmem:[%s281 + $0x110] sm:$0xf]
      %v423 = vld [vmem:[%s281 + $0x114] sm:$0xff]
      %v424 = vld [vmem:[%s281 + $0x11c] sm:$0xf]
      %v425 = vld [vmem:[%s281 + $0x120] sm:$0xff]
      %v426 = vld [vmem:[%s281 + $0x128] sm:$0xf]
      %v427 = vld [vmem:[%s281 + $0x12c] sm:$0xff]
      %v428 = vld [vmem:[%s281 + $0x134] sm:$0xf]
      %v429 = vld [vmem:[%s281 + $0x138] sm:$0xff]
      %v430 = vld [vmem:[%s281 + $0x140] sm:$0xf]
      %v431 = vld [vmem:[%s281 + $0x144] sm:$0xff]
      %v432 = vld [vmem:[%s281 + $0x14c] sm:$0xf]
      %v433 = vld [vmem:[%s281 + $0x150] sm:$0xff]
      %v434 = vld [vmem:[%s281 + $0x158] sm:$0xf]
      %v435 = vld [vmem:[%s281 + $0x15c] sm:$0xff]
      %v436 = vld [vmem:[%s281 + $0x164] sm:$0xf]
      %v437 = vld [vmem:[%s281 + $0x168] sm:$0xff]
      %v438 = vld [vmem:[%s281 + $0x170] sm:$0xf]
      %v439 = vld [vmem:[%s281 + $0x174] sm:$0xff]
      %v440 = vld [vmem:[%s281 + $0x17c] sm:$0xf]
      %v441 = vld [vmem:[%s291] sm:$0xf]
      %v442 = vld [vmem:[%s291 + $0x4] sm:$0xf]
      %v443 = vld [vmem:[%s291 + $0x8] sm:$0xf]
      %v444 = vld [vmem:[%s291 + $0xc] sm:$0xf]
      %v445 = vld [vmem:[%s291 + $0x10] sm:$0xf]
      %v446 = vld [vmem:[%s291 + $0x14] sm:$0xf]
      %v447 = vld [vmem:[%s291 + $0x18] sm:$0xf]
      %v448 = vld [vmem:[%s291 + $0x1c] sm:$0xf]
      %v449 = vld [vmem:[%s291 + $0x20] sm:$0xf]
      %v450 = vld [vmem:[%s291 + $0x24] sm:$0xf]
      %v451 = vld [vmem:[%s291 + $0x28] sm:$0xf]
      %v452 = vld [vmem:[%s291 + $0x2c] sm:$0xf]
      %v453 = vld [vmem:[%s291 + $0x30] sm:$0xf]
      %v454 = vld [vmem:[%s291 + $0x34] sm:$0xf]
      %v455 = vld [vmem:[%s291 + $0x38] sm:$0xf]
      %v456 = vld [vmem:[%s291 + $0x3c] sm:$0xf]
      %v457 = vld [vmem:[%s291 + $0x40] sm:$0xf]
      %v458 = vld [vmem:[%s291 + $0x44] sm:$0xf]
      %v459 = vld [vmem:[%s291 + $0x48] sm:$0xf]
      %v460 = vld [vmem:[%s291 + $0x4c] sm:$0xf]
      %v461 = vld [vmem:[%s291 + $0x50] sm:$0xf]
      %v462 = vld [vmem:[%s291 + $0x54] sm:$0xf]
      %v463 = vld [vmem:[%s291 + $0x58] sm:$0xf]
      %v464 = vld [vmem:[%s291 + $0x5c] sm:$0xf]
      %v465 = vld [vmem:[%s291 + $0x60] sm:$0xf]
      %v466 = vld [vmem:[%s291 + $0x64] sm:$0xf]
      %v467 = vld [vmem:[%s291 + $0x68] sm:$0xf]
      %v468 = vld [vmem:[%s291 + $0x6c] sm:$0xf]
      %v469 = vld [vmem:[%s291 + $0x70] sm:$0xf]
      %v470 = vld [vmem:[%s291 + $0x74] sm:$0xf]
      %v471 = vld [vmem:[%s291 + $0x78] sm:$0xf]
      %v472 = vld [vmem:[%s291 + $0x7c] sm:$0xf]
      %v473 = vld [vmem:[%s291 + $0x80] sm:$0xf]
      %v474 = vld [vmem:[%s291 + $0x84] sm:$0xf]
      %v475 = vld [vmem:[%s291 + $0x88] sm:$0xf]
      %v476 = vld [vmem:[%s291 + $0x8c] sm:$0xf]
      %v477 = vld [vmem:[%s291 + $0x90] sm:$0xf]
      %v478 = vld [vmem:[%s291 + $0x94] sm:$0xf]
      %v479 = vld [vmem:[%s291 + $0x98] sm:$0xf]
      %v480 = vld [vmem:[%s291 + $0x9c] sm:$0xf]
      %v481 = vld [vmem:[%s291 + $0xa0] sm:$0xf]
      %v482 = vld [vmem:[%s291 + $0xa4] sm:$0xf]
      %v483 = vld [vmem:[%s291 + $0xa8] sm:$0xf]
      %v484 = vld [vmem:[%s291 + $0xac] sm:$0xf]
      %v485 = vld [vmem:[%s291 + $0xb0] sm:$0xf]
      %v486 = vld [vmem:[%s291 + $0xb4] sm:$0xf]
      %v487 = vld [vmem:[%s291 + $0xb8] sm:$0xf]
      %v488 = vld [vmem:[%s291 + $0xbc] sm:$0xf]
      %v553 = vunpack.c.l.b16 %v377
      %v554 = vunpack.c.h.b16 %v377
      %v555 = vunpack.c.l.b16 %v378
      %v556 = vunpack.c.l.b16 %v379
      %v557 = vunpack.c.h.b16 %v379
      %v558 = vunpack.c.l.b16 %v380
      %v559 = vunpack.c.l.b16 %v381
      %v560 = vunpack.c.h.b16 %v381
      %v561 = vunpack.c.l.b16 %v382
      %v562 = vunpack.c.l.b16 %v383
      %v563 = vunpack.c.h.b16 %v383
      %v564 = vunpack.c.l.b16 %v384
      %v565 = vunpack.c.l.b16 %v385
      %v566 = vunpack.c.h.b16 %v385
      %v567 = vunpack.c.l.b16 %v386
      %v568 = vunpack.c.l.b16 %v387
      %v569 = vunpack.c.h.b16 %v387
      %v570 = vunpack.c.l.b16 %v388
      %v571 = vunpack.c.l.b16 %v389
      %v572 = vunpack.c.h.b16 %v389
      %v573 = vunpack.c.l.b16 %v390
      %v574 = vunpack.c.l.b16 %v391
      %v575 = vunpack.c.h.b16 %v391
      %v576 = vunpack.c.l.b16 %v392
      %v577 = vunpack.c.l.b16 %v393
      %v578 = vunpack.c.h.b16 %v393
      %v579 = vunpack.c.l.b16 %v394
      %v580 = vunpack.c.l.b16 %v395
      %v581 = vunpack.c.h.b16 %v395
      %v582 = vunpack.c.l.b16 %v396
      %v583 = vunpack.c.l.b16 %v397
      %v584 = vunpack.c.h.b16 %v397
      %v585 = vunpack.c.l.b16 %v398
      %v586 = vunpack.c.l.b16 %v399
      %v587 = vunpack.c.h.b16 %v399
      %v588 = vunpack.c.l.b16 %v400
      %v589 = vunpack.c.l.b16 %v401
      %v590 = vunpack.c.h.b16 %v401
      %v591 = vunpack.c.l.b16 %v402
      %v592 = vunpack.c.l.b16 %v403
      %v593 = vunpack.c.h.b16 %v403
      %v594 = vunpack.c.l.b16 %v404
      %v595 = vunpack.c.l.b16 %v405
      %v596 = vunpack.c.h.b16 %v405
      %v597 = vunpack.c.l.b16 %v406
      %v598 = vunpack.c.l.b16 %v407
      %v599 = vunpack.c.h.b16 %v407
      %v600 = vunpack.c.l.b16 %v408
      %v601 = vunpack.c.l.b16 %v409
      %v602 = vunpack.c.h.b16 %v409
      %v603 = vunpack.c.l.b16 %v410
      %v604 = vunpack.c.l.b16 %v411
      %v605 = vunpack.c.h.b16 %v411
      %v606 = vunpack.c.l.b16 %v412
      %v607 = vunpack.c.l.b16 %v413
      %v608 = vunpack.c.h.b16 %v413
      %v609 = vunpack.c.l.b16 %v414
      %v610 = vunpack.c.l.b16 %v415
      %v611 = vunpack.c.h.b16 %v415
      %v612 = vunpack.c.l.b16 %v416
      %v613 = vunpack.c.l.b16 %v417
      %v614 = vunpack.c.h.b16 %v417
      %v615 = vunpack.c.l.b16 %v418
      %v616 = vunpack.c.l.b16 %v419
      %v617 = vunpack.c.h.b16 %v419
      %v618 = vunpack.c.l.b16 %v420
      %v619 = vunpack.c.l.b16 %v421
      %v620 = vunpack.c.h.b16 %v421
      %v621 = vunpack.c.l.b16 %v422
      %v622 = vunpack.c.l.b16 %v423
      %v623 = vunpack.c.h.b16 %v423
      %v624 = vunpack.c.l.b16 %v424
      %v625 = vunpack.c.l.b16 %v425
      %v626 = vunpack.c.h.b16 %v425
      %v627 = vunpack.c.l.b16 %v426
      %v628 = vunpack.c.l.b16 %v427
      %v629 = vunpack.c.h.b16 %v427
      %v630 = vunpack.c.l.b16 %v428
      %v631 = vunpack.c.l.b16 %v429
      %v632 = vunpack.c.h.b16 %v429
      %v633 = vunpack.c.l.b16 %v430
      %v634 = vunpack.c.l.b16 %v431
      %v635 = vunpack.c.h.b16 %v431
      %v636 = vunpack.c.l.b16 %v432
      %v637 = vunpack.c.l.b16 %v433
      %v638 = vunpack.c.h.b16 %v433
      %v639 = vunpack.c.l.b16 %v434
      %v640 = vunpack.c.l.b16 %v435
      %v641 = vunpack.c.h.b16 %v435
      %v642 = vunpack.c.l.b16 %v436
      %v643 = vunpack.c.l.b16 %v437
      %v644 = vunpack.c.h.b16 %v437
      %v645 = vunpack.c.l.b16 %v438
      %v646 = vunpack.c.l.b16 %v439
      %v647 = vunpack.c.h.b16 %v439
      %v648 = vunpack.c.l.b16 %v440
      %v649 = vpack.c.b16 %v556, %v553
      %v650 = vpack.c.b16 %v557, %v554
      %v651 = vpack.c.b16 %v558, %v555
      %v652 = vpack.c.b16 %v562, %v559
      %v653 = vpack.c.b16 %v563, %v560
      %v654 = vpack.c.b16 %v564, %v561
      %v655 = vpack.c.b16 %v568, %v565
      %v656 = vpack.c.b16 %v569, %v566
      %v657 = vpack.c.b16 %v570, %v567
      %v658 = vpack.c.b16 %v574, %v571
      %v659 = vpack.c.b16 %v575, %v572
      %v660 = vpack.c.b16 %v576, %v573
      %v661 = vpack.c.b16 %v580, %v577
      %v662 = vpack.c.b16 %v581, %v578
      %v663 = vpack.c.b16 %v582, %v579
      %v664 = vpack.c.b16 %v586, %v583
      %v665 = vpack.c.b16 %v587, %v584
      %v666 = vpack.c.b16 %v588, %v585
      %v667 = vpack.c.b16 %v592, %v589
      %v668 = vpack.c.b16 %v593, %v590
      %v669 = vpack.c.b16 %v594, %v591
      %v670 = vpack.c.b16 %v598, %v595
      %v671 = vpack.c.b16 %v599, %v596
      %v672 = vpack.c.b16 %v600, %v597
      %v673 = vpack.c.b16 %v604, %v601
      %v674 = vpack.c.b16 %v605, %v602
      %v675 = vpack.c.b16 %v606, %v603
      %v676 = vpack.c.b16 %v610, %v607
      %v677 = vpack.c.b16 %v611, %v608
      %v678 = vpack.c.b16 %v612, %v609
      %v679 = vpack.c.b16 %v616, %v613
      %v680 = vpack.c.b16 %v617, %v614
      %v681 = vpack.c.b16 %v618, %v615
      %v682 = vpack.c.b16 %v622, %v619
      %v683 = vpack.c.b16 %v623, %v620
      %v684 = vpack.c.b16 %v624, %v621
      %v685 = vpack.c.b16 %v628, %v625
      %v686 = vpack.c.b16 %v629, %v626
      %v687 = vpack.c.b16 %v630, %v627
      %v688 = vpack.c.b16 %v634, %v631
      %v689 = vpack.c.b16 %v635, %v632
      %v690 = vpack.c.b16 %v636, %v633
      %v691 = vpack.c.b16 %v640, %v637
      %v692 = vpack.c.b16 %v641, %v638
      %v693 = vpack.c.b16 %v642, %v639
      %v694 = vpack.c.b16 %v646, %v643
      %v695 = vpack.c.b16 %v647, %v644
      %v696 = vpack.c.b16 %v648, %v645
      %v793 = vunpack.c.l.b16 %v441
      %v794 = vunpack.c.l.b16 %v442
      %v795 = vunpack.c.l.b16 %v443
      %v796 = vunpack.c.l.b16 %v444
      %v797 = vunpack.c.l.b16 %v445
      %v798 = vunpack.c.l.b16 %v446
      %v799 = vunpack.c.l.b16 %v447
      %v800 = vunpack.c.l.b16 %v448
      %v801 = vunpack.c.l.b16 %v449
      %v802 = vunpack.c.l.b16 %v450
      %v803 = vunpack.c.l.b16 %v451
      %v804 = vunpack.c.l.b16 %v452
      %v805 = vunpack.c.l.b16 %v453
      %v806 = vunpack.c.l.b16 %v454
      %v807 = vunpack.c.l.b16 %v455
      %v808 = vunpack.c.l.b16 %v456
      %v809 = vunpack.c.l.b16 %v457
      %v810 = vunpack.c.l.b16 %v458
      %v811 = vunpack.c.l.b16 %v459
      %v812 = vunpack.c.l.b16 %v460
      %v813 = vunpack.c.l.b16 %v461
      %v814 = vunpack.c.l.b16 %v462
      %v815 = vunpack.c.l.b16 %v463
      %v816 = vunpack.c.l.b16 %v464
      %v817 = vunpack.c.l.b16 %v465
      %v818 = vunpack.c.l.b16 %v466
      %v819 = vunpack.c.l.b16 %v467
      %v820 = vunpack.c.l.b16 %v468
      %v821 = vunpack.c.l.b16 %v469
      %v822 = vunpack.c.l.b16 %v470
      %v823 = vunpack.c.l.b16 %v471
      %v824 = vunpack.c.l.b16 %v472
      %v825 = vunpack.c.l.b16 %v473
      %v826 = vunpack.c.l.b16 %v474
      %v827 = vunpack.c.l.b16 %v475
      %v828 = vunpack.c.l.b16 %v476
      %v829 = vunpack.c.l.b16 %v477
      %v830 = vunpack.c.l.b16 %v478
      %v831 = vunpack.c.l.b16 %v479
      %v832 = vunpack.c.l.b16 %v480
      %v833 = vunpack.c.l.b16 %v481
      %v834 = vunpack.c.l.b16 %v482
      %v835 = vunpack.c.l.b16 %v483
      %v836 = vunpack.c.l.b16 %v484
      %v837 = vunpack.c.l.b16 %v485
      %v838 = vunpack.c.l.b16 %v486
      %v839 = vunpack.c.l.b16 %v487
      %v840 = vunpack.c.l.b16 %v488
      %v841 = vpack.c.b16 %v794, %v793
      %v842 = vpack.c.b16 %v796, %v795
      %v843 = vpack.c.b16 %v798, %v797
      %v844 = vpack.c.b16 %v800, %v799
      %v845 = vpack.c.b16 %v802, %v801
      %v846 = vpack.c.b16 %v804, %v803
      %v847 = vpack.c.b16 %v806, %v805
      %v848 = vpack.c.b16 %v808, %v807
      %v849 = vpack.c.b16 %v810, %v809
      %v850 = vpack.c.b16 %v812, %v811
      %v851 = vpack.c.b16 %v814, %v813
      %v852 = vpack.c.b16 %v816, %v815
      %v853 = vpack.c.b16 %v818, %v817
      %v854 = vpack.c.b16 %v820, %v819
      %v855 = vpack.c.b16 %v822, %v821
      %v856 = vpack.c.b16 %v824, %v823
      %v857 = vpack.c.b16 %v826, %v825
      %v858 = vpack.c.b16 %v828, %v827
      %v859 = vpack.c.b16 %v830, %v829
      %v860 = vpack.c.b16 %v832, %v831
      %v861 = vpack.c.b16 %v834, %v833
      %v862 = vpack.c.b16 %v836, %v835
      %v863 = vpack.c.b16 %v838, %v837
      %v864 = vpack.c.b16 %v840, %v839
      %889 = vmatprep.subr.bf16.mxu0 0
      %890 = vmatpush1.bf16.msra.mxu0 %v841
      %891 = vmatprep.subr.bf16.mxu0 0
      %892 = vmatpush1.bf16.msra.mxu0 %v842
      %893 = vmatprep.subr.bf16.mxu0 0
      %894 = vmatpush1.bf16.msra.mxu0 %v843
      %895 = vmatprep.subr.bf16.mxu0 0
      %896 = vmatpush1.bf16.msra.mxu0 %v844
      %897 = vmatprep.subr.bf16.mxu0 0
      %898 = vmatpush1.bf16.msra.mxu0 %v845
      %899 = vmatprep.subr.bf16.mxu0 0
      %900 = vmatpush1.bf16.msra.mxu0 %v846
      %901 = vmatprep.subr.bf16.mxu0 0
      %902 = vmatpush1.bf16.msra.mxu0 %v847
      %903 = vmatprep.subr.bf16.mxu0 0
      %904 = vmatpush1.bf16.msra.mxu0 %v848
      %905 = vmatprep.subr.bf16.mxu0 0
      %906 = vmatpush1.bf16.msra.mxu0 %v849
      %907 = vmatprep.subr.bf16.mxu0 0
      %908 = vmatpush1.bf16.msra.mxu0 %v850
      %909 = vmatprep.subr.bf16.mxu0 0
      %910 = vmatpush1.bf16.msra.mxu0 %v851
      %911 = vmatprep.subr.bf16.mxu0 0
      %912 = vmatpush1.bf16.msra.mxu0 %v852
      %913 = vmatprep.subr.bf16.mxu0 0
      %914 = vmatpush1.bf16.msra.mxu0 %v853
      %915 = vmatprep.subr.bf16.mxu0 0
      %916 = vmatpush1.bf16.msra.mxu0 %v854
      %917 = vmatprep.subr.bf16.mxu0 0
      %918 = vmatpush1.bf16.msra.mxu0 %v855
      %919 = vmatprep.subr.bf16.mxu0 0
      %920 = vmatpush1.bf16.msra.mxu0 %v856
      %921 = vmatprep.mubr.bf16.mxu0 %v650
      %922 = vmatmul.mubr.bf16.gmra.mrb[0].mxu0 %v649
      %v923 = vpop.f32.mrb[0].mxu0
      %v924 = vadd.f32 0.0, %v923
      %v925 = vpop.f32.mrb[0].mxu0
      %v926 = vpop.f32.mrb[0].mxu0
      %v927 = vadd.f32 0.0, %v926
      %v928 = vpop.f32.mrb[0].mxu0
      %929 = vmatprep.mubr.bf16.mxu0 %v653
      %930 = vmatmul.mubr.bf16.gmra.mrb[0].mxu0 %v652
      %v931 = vpop.f32.mrb[0].mxu0
      %v932 = vadd.f32 0.0, %v931
      %v933 = vpop.f32.mrb[0].mxu0
      %v934 = vpop.f32.mrb[0].mxu0
      %v935 = vadd.f32 0.0, %v934
      %v936 = vpop.f32.mrb[0].mxu0
      %937 = vmatprep.mubr.bf16.mxu0 %v656
      %938 = vmatmul.mubr.bf16.gmra.mrb[0].mxu0 %v655
      %v939 = vpop.f32.mrb[0].mxu0
      %v940 = vadd.f32 0.0, %v939
      %v941 = vpop.f32.mrb[0].mxu0
      %v942 = vpop.f32.mrb[0].mxu0
      %v943 = vadd.f32 0.0, %v942
      %v944 = vpop.f32.mrb[0].mxu0
      %945 = vmatprep.mubr.bf16.mxu0 %v659
      %946 = vmatmul.mubr.bf16.gmra.mrb[0].mxu0 %v658
      %v947 = vpop.f32.mrb[0].mxu0
      %v948 = vadd.f32 0.0, %v947
      %v949 = vpop.f32.mrb[0].mxu0
      %v950 = vpop.f32.mrb[0].mxu0
      %v951 = vadd.f32 0.0, %v950
      %v952 = vpop.f32.mrb[0].mxu0
      %953 = vmatprep.mubr.bf16.mxu0 %v662
      %954 = vmatmul.mubr.bf16.gmra.mrb[0].mxu0 %v661
      %v955 = vpop.f32.mrb[0].mxu0
      %v956 = vadd.f32 0.0, %v955
      %v957 = vpop.f32.mrb[0].mxu0
      %v958 = vpop.f32.mrb[0].mxu0
      %v959 = vadd.f32 0.0, %v958
      %v960 = vpop.f32.mrb[0].mxu0
      %961 = vmatprep.mubr.bf16.mxu0 %v665
      %962 = vmatmul.mubr.bf16.gmra.mrb[0].mxu0 %v664
      %v963 = vpop.f32.mrb[0].mxu0
      %v964 = vadd.f32 0.0, %v963
      %v965 = vpop.f32.mrb[0].mxu0
      %v966 = vpop.f32.mrb[0].mxu0
      %v967 = vadd.f32 0.0, %v966
      %v968 = vpop.f32.mrb[0].mxu0
      %969 = vmatprep.mubr.bf16.mxu0 %v668
      %970 = vmatmul.mubr.bf16.gmra.mrb[0].mxu0 %v667
      %v971 = vpop.f32.mrb[0].mxu0
      %v972 = vadd.f32 0.0, %v971
      %v973 = vpop.f32.mrb[0].mxu0
      %v974 = vpop.f32.mrb[0].mxu0
      %v975 = vadd.f32 0.0, %v974
      %v976 = vpop.f32.mrb[0].mxu0
      %977 = vmatprep.mubr.bf16.mxu0 %v671
      %978 = vmatmul.mubr.bf16.gmra.mrb[0].mxu0 %v670
      %v979 = vpop.f32.mrb[0].mxu0
      %v980 = vadd.f32 0.0, %v979
      %v981 = vpop.f32.mrb[0].mxu0
      %v982 = vpop.f32.mrb[0].mxu0
      %v983 = vadd.f32 0.0, %v982
      %v984 = vpop.f32.mrb[0].mxu0
      %985 = vmatprep.mubr.bf16.mxu0 %v674
      %986 = vmatmul.mubr.bf16.gmra.mrb[0].mxu0 %v673
      %v987 = vpop.f32.mrb[0].mxu0
      %v988 = vadd.f32 0.0, %v987
      %v989 = vpop.f32.mrb[0].mxu0
      %v990 = vpop.f32.mrb[0].mxu0
      %v991 = vadd.f32 0.0, %v990
      %v992 = vpop.f32.mrb[0].mxu0
      %993 = vmatprep.mubr.bf16.mxu0 %v677
      %994 = vmatmul.mubr.bf16.gmra.mrb[0].mxu0 %v676
      %v995 = vpop.f32.mrb[0].mxu0
      %v996 = vadd.f32 0.0, %v995
      %v997 = vpop.f32.mrb[0].mxu0
      %v998 = vpop.f32.mrb[0].mxu0
      %v999 = vadd.f32 0.0, %v998
      %v1000 = vpop.f32.mrb[0].mxu0
      %1001 = vmatprep.mubr.bf16.mxu0 %v680
      %1002 = vmatmul.mubr.bf16.gmra.mrb[0].mxu0 %v679
      %v1003 = vpop.f32.mrb[0].mxu0
      %v1004 = vadd.f32 0.0, %v1003
      %v1005 = vpop.f32.mrb[0].mxu0
      %v1006 = vpop.f32.mrb[0].mxu0
      %v1007 = vadd.f32 0.0, %v1006
      %v1008 = vpop.f32.mrb[0].mxu0
      %1009 = vmatprep.mubr.bf16.mxu0 %v683
      %1010 = vmatmul.mubr.bf16.gmra.mrb[0].mxu0 %v682
      %v1011 = vpop.f32.mrb[0].mxu0
      %v1012 = vadd.f32 0.0, %v1011
      %v1013 = vpop.f32.mrb[0].mxu0
      %v1014 = vpop.f32.mrb[0].mxu0
      %v1015 = vadd.f32 0.0, %v1014
      %v1016 = vpop.f32.mrb[0].mxu0
      %1017 = vmatprep.mubr.bf16.mxu0 %v686
      %1018 = vmatmul.mubr.bf16.gmra.mrb[0].mxu0 %v685
      %v1019 = vpop.f32.mrb[0].mxu0
      %v1020 = vadd.f32 0.0, %v1019
      %v1021 = vpop.f32.mrb[0].mxu0
      %v1022 = vpop.f32.mrb[0].mxu0
      %v1023 = vadd.f32 0.0, %v1022
      %v1024 = vpop.f32.mrb[0].mxu0
      %1025 = vmatprep.mubr.bf16.mxu0 %v689
      %1026 = vmatmul.mubr.bf16.gmra.mrb[0].mxu0 %v688
      %v1027 = vpop.f32.mrb[0].mxu0
      %v1028 = vadd.f32 0.0, %v1027
      %v1029 = vpop.f32.mrb[0].mxu0
      %v1030 = vpop.f32.mrb[0].mxu0
      %v1031 = vadd.f32 0.0, %v1030
      %v1032 = vpop.f32.mrb[0].mxu0
      %1033 = vmatprep.mubr.bf16.mxu0 %v692
      %1034 = vmatmul.mubr.bf16.gmra.mrb[0].mxu0 %v691
      %v1035 = vpop.f32.mrb[0].mxu0
      %v1036 = vadd.f32 0.0, %v1035
      %v1037 = vpop.f32.mrb[0].mxu0
      %v1038 = vpop.f32.mrb[0].mxu0
      %v1039 = vadd.f32 0.0, %v1038
      %v1040 = vpop.f32.mrb[0].mxu0
      %1041 = vmatprep.mubr.bf16.mxu0 %v695
      %1042 = vmatmul.mubr.bf16.gmra.mrb[0].mxu0 %v694
      %v1043 = vpop.f32.mrb[0].mxu0
      %v1044 = vadd.f32 0.0, %v1043
      %v1045 = vpop.f32.mrb[0].mxu0
      %v1046 = vpop.f32.mrb[0].mxu0
      %v1047 = vadd.f32 0.0, %v1046
      %v1048 = vpop.f32.mrb[0].mxu0
      %1049 = vdwg.mxu0
      %1050 = vmatprep.subr.bf16.mxu0 0
      %1051 = vmatpush1.bf16.msra.mxu0 %v857
      %1052 = vmatprep.subr.bf16.mxu0 0
      %1053 = vmatpush1.bf16.msra.mxu0 %v858
      %1054 = vmatprep.subr.bf16.mxu0 0
      %1055 = vmatpush1.bf16.msra.mxu0 %v859
      %1056 = vmatprep.subr.bf16.mxu0 0
      %1057 = vmatpush1.bf16.msra.mxu0 %v860
      %1058 = vmatprep.subr.bf16.mxu0 0
      %1059 = vmatpush1.bf16.msra.mxu0 %v861
      %1060 = vmatprep.subr.bf16.mxu0 0
      %1061 = vmatpush1.bf16.msra.mxu0 %v862
      %1062 = vmatprep.subr.bf16.mxu0 0
      %1063 = vmatpush1.bf16.msra.mxu0 %v863
      %1064 = vmatprep.subr.bf16.mxu0 0
      %1065 = vmatpush1.bf16.msra.mxu0 %v864
      %1066 = vmatprep.subr.bf16.mxu0 0
      %1067 = vmatpush1.bf16.msra.mxu0 0
      %1068 = vmatprep.subr.bf16.mxu0 0
      %1069 = vmatpush1.bf16.msra.mxu0 0
      %1070 = vmatprep.subr.bf16.mxu0 0
      %1071 = vmatpush1.bf16.msra.mxu0 0
      %1072 = vmatprep.subr.bf16.mxu0 0
      %1073 = vmatpush1.bf16.msra.mxu0 0
      %1074 = vmatprep.subr.bf16.mxu0 0
      %1075 = vmatpush1.bf16.msra.mxu0 0
      %1076 = vmatprep.subr.bf16.mxu0 0
      %1077 = vmatpush1.bf16.msra.mxu0 0
      %1078 = vmatprep.subr.bf16.mxu0 0
      %1079 = vmatpush1.bf16.msra.mxu0 0
      %1080 = vmatprep.subr.bf16.mxu0 0
      %1081 = vmatpush1.bf16.msra.mxu0 0
      %1082 = vmatprep.mubr.bf16.mxu0 0
      %1083 = vmatmul.mubr.bf16.gmra.mrb[0].mxu0 %v651
      %v1084 = vpop.f32.mrb[0].mxu0
      %v1085 = vadd.f32 %v924, %v1084
      %v1086 = vpop.f32.mrb[0].mxu0
      %v1087 = vpop.f32.mrb[0].mxu0
      %v1088 = vadd.f32 %v927, %v1087
      %v1089 = vpop.f32.mrb[0].mxu0
      %1090 = vmatprep.mubr.bf16.mxu0 0
      %1091 = vmatmul.mubr.bf16.gmra.mrb[0].mxu0 %v654
      %v1092 = vpop.f32.mrb[0].mxu0
      %v1093 = vadd.f32 %v932, %v1092
      %v1094 = vpop.f32.mrb[0].mxu0
      %v1095 = vpop.f32.mrb[0].mxu0
      %v1096 = vadd.f32 %v935, %v1095
      %v1097 = vpop.f32.mrb[0].mxu0
      %1098 = vmatprep.mubr.bf16.mxu0 0
      %1099 = vmatmul.mubr.bf16.gmra.mrb[0].mxu0 %v657
      %v1100 = vpop.f32.mrb[0].mxu0
      %v1101 = vadd.f32 %v940, %v1100
      %v1102 = vpop.f32.mrb[0].mxu0
      %v1103 = vpop.f32.mrb[0].mxu0
      %v1104 = vadd.f32 %v943, %v1103
      %v1105 = vpop.f32.mrb[0].mxu0
      %1106 = vmatprep.mubr.bf16.mxu0 0
      %1107 = vmatmul.mubr.bf16.gmra.mrb[0].mxu0 %v660
      %v1108 = vpop.f32.mrb[0].mxu0
      %v1109 = vadd.f32 %v948, %v1108
      %v1110 = vpop.f32.mrb[0].mxu0
      %v1111 = vpop.f32.mrb[0].mxu0
      %v1112 = vadd.f32 %v951, %v1111
      %v1113 = vpop.f32.mrb[0].mxu0
      %1114 = vmatprep.mubr.bf16.mxu0 0
      %1115 = vmatmul.mubr.bf16.gmra.mrb[0].mxu0 %v663
      %v1116 = vpop.f32.mrb[0].mxu0
      %v1117 = vadd.f32 %v956, %v1116
      %v1118 = vpop.f32.mrb[0].mxu0
      %v1119 = vpop.f32.mrb[0].mxu0
      %v1120 = vadd.f32 %v959, %v1119
      %v1121 = vpop.f32.mrb[0].mxu0
      %1122 = vmatprep.mubr.bf16.mxu0 0
      %1123 = vmatmul.mubr.bf16.gmra.mrb[0].mxu0 %v666
      %v1124 = vpop.f32.mrb[0].mxu0
      %v1125 = vadd.f32 %v964, %v1124
      %v1126 = vpop.f32.mrb[0].mxu0
      %v1127 = vpop.f32.mrb[0].mxu0
      %v1128 = vadd.f32 %v967, %v1127
      %v1129 = vpop.f32.mrb[0].mxu0
      %1130 = vmatprep.mubr.bf16.mxu0 0
      %1131 = vmatmul.mubr.bf16.gmra.mrb[0].mxu0 %v669
      %v1132 = vpop.f32.mrb[0].mxu0
      %v1133 = vadd.f32 %v972, %v1132
      %v1134 = vpop.f32.mrb[0].mxu0
      %v1135 = vpop.f32.mrb[0].mxu0
      %v1136 = vadd.f32 %v975, %v1135
      %v1137 = vpop.f32.mrb[0].mxu0
      %1138 = vmatprep.mubr.bf16.mxu0 0
      %1139 = vmatmul.mubr.bf16.gmra.mrb[0].mxu0 %v672
      %v1140 = vpop.f32.mrb[0].mxu0
      %v1141 = vadd.f32 %v980, %v1140
      %v1142 = vpop.f32.mrb[0].mxu0
      %v1143 = vpop.f32.mrb[0].mxu0
      %v1144 = vadd.f32 %v983, %v1143
      %v1145 = vpop.f32.mrb[0].mxu0
      %1146 = vmatprep.mubr.bf16.mxu0 0
      %1147 = vmatmul.mubr.bf16.gmra.mrb[0].mxu0 %v675
      %v1148 = vpop.f32.mrb[0].mxu0
      %v1149 = vadd.f32 %v988, %v1148
      %v1150 = vpop.f32.mrb[0].mxu0
      %v1151 = vpop.f32.mrb[0].mxu0
      %v1152 = vadd.f32 %v991, %v1151
      %v1153 = vpop.f32.mrb[0].mxu0
      %1154 = vmatprep.mubr.bf16.mxu0 0
      %1155 = vmatmul.mubr.bf16.gmra.mrb[0].mxu0 %v678
      %v1156 = vpop.f32.mrb[0].mxu0
      %v1157 = vadd.f32 %v996, %v1156
      %v1158 = vpop.f32.mrb[0].mxu0
      %v1159 = vpop.f32.mrb[0].mxu0
      %v1160 = vadd.f32 %v999, %v1159
      %v1161 = vpop.f32.mrb[0].mxu0
      %1162 = vmatprep.mubr.bf16.mxu0 0
      %1163 = vmatmul.mubr.bf16.gmra.mrb[0].mxu0 %v681
      %v1164 = vpop.f32.mrb[0].mxu0
      %v1165 = vadd.f32 %v1004, %v1164
      %v1166 = vpop.f32.mrb[0].mxu0
      %v1167 = vpop.f32.mrb[0].mxu0
      %v1168 = vadd.f32 %v1007, %v1167
      %v1169 = vpop.f32.mrb[0].mxu0
      %1170 = vmatprep.mubr.bf16.mxu0 0
      %1171 = vmatmul.mubr.bf16.gmra.mrb[0].mxu0 %v684
      %v1172 = vpop.f32.mrb[0].mxu0
      %v1173 = vadd.f32 %v1012, %v1172
      %v1174 = vpop.f32.mrb[0].mxu0
      %v1175 = vpop.f32.mrb[0].mxu0
      %v1176 = vadd.f32 %v1015, %v1175
      %v1177 = vpop.f32.mrb[0].mxu0
      %1178 = vmatprep.mubr.bf16.mxu0 0
      %1179 = vmatmul.mubr.bf16.gmra.mrb[0].mxu0 %v687
      %v1180 = vpop.f32.mrb[0].mxu0
      %v1181 = vadd.f32 %v1020, %v1180
      %v1182 = vpop.f32.mrb[0].mxu0
      %v1183 = vpop.f32.mrb[0].mxu0
      %v1184 = vadd.f32 %v1023, %v1183
      %v1185 = vpop.f32.mrb[0].mxu0
      %1186 = vmatprep.mubr.bf16.mxu0 0
      %1187 = vmatmul.mubr.bf16.gmra.mrb[0].mxu0 %v690
      %v1188 = vpop.f32.mrb[0].mxu0
      %v1189 = vadd.f32 %v1028, %v1188
      %v1190 = vpop.f32.mrb[0].mxu0
      %v1191 = vpop.f32.mrb[0].mxu0
      %v1192 = vadd.f32 %v1031, %v1191
      %v1193 = vpop.f32.mrb[0].mxu0
      %1194 = vmatprep.mubr.bf16.mxu0 0
      %1195 = vmatmul.mubr.bf16.gmra.mrb[0].mxu0 %v693
      %v1196 = vpop.f32.mrb[0].mxu0
      %v1197 = vadd.f32 %v1036, %v1196
      %v1198 = vpop.f32.mrb[0].mxu0
      %v1199 = vpop.f32.mrb[0].mxu0
      %v1200 = vadd.f32 %v1039, %v1199
      %v1201 = vpop.f32.mrb[0].mxu0
      %1202 = vmatprep.mubr.bf16.mxu0 0
      %1203 = vmatmul.mubr.bf16.gmra.mrb[0].mxu0 %v696
      %v1204 = vpop.f32.mrb[0].mxu0
      %v1205 = vadd.f32 %v1044, %v1204
      %v1206 = vpop.f32.mrb[0].mxu0
      %v1207 = vpop.f32.mrb[0].mxu0
      %v1208 = vadd.f32 %v1047, %v1207
      %v1209 = vpop.f32.mrb[0].mxu0
      %1210 = vdwg.mxu0
      %v1211 = vadd.f32 %v345, %v1085
      %v1212 = vadd.f32 %v346, %v1088
      %v1213 = vadd.f32 %v347, %v1093
      %v1214 = vadd.f32 %v348, %v1096
      %v1215 = vadd.f32 %v349, %v1101
      %v1216 = vadd.f32 %v350, %v1104
      %v1217 = vadd.f32 %v351, %v1109
      %v1218 = vadd.f32 %v352, %v1112
      %v1219 = vadd.f32 %v353, %v1117
      %v1220 = vadd.f32 %v354, %v1120
      %v1221 = vadd.f32 %v355, %v1125
      %v1222 = vadd.f32 %v356, %v1128
      %v1223 = vadd.f32 %v357, %v1133
      %v1224 = vadd.f32 %v358, %v1136
      %v1225 = vadd.f32 %v359, %v1141
      %v1226 = vadd.f32 %v360, %v1144
      %v1227 = vadd.f32 %v361, %v1149
      %v1228 = vadd.f32 %v362, %v1152
      %v1229 = vadd.f32 %v363, %v1157
      %v1230 = vadd.f32 %v364, %v1160
      %v1231 = vadd.f32 %v365, %v1165
      %v1232 = vadd.f32 %v366, %v1168
      %v1233 = vadd.f32 %v367, %v1173
      %v1234 = vadd.f32 %v368, %v1176
      %v1235 = vadd.f32 %v369, %v1181
      %v1236 = vadd.f32 %v370, %v1184
      %v1237 = vadd.f32 %v371, %v1189
      %v1238 = vadd.f32 %v372, %v1192
      %v1239 = vadd.f32 %v373, %v1197
      %v1240 = vadd.f32 %v374, %v1200
      %v1241 = vadd.f32 %v375, %v1205
      %v1242 = vadd.f32 %v376, %v1208
      %1243 = vst [vmem:[#allocation2] sm:$0xff] %v1211
      %1244 = vst [vmem:[#allocation2 + $0x8] sm:$0xff] %v1212
      %1245 = vst [vmem:[#allocation2 + $0x10] sm:$0xff] %v1213
      %1246 = vst [vmem:[#allocation2 + $0x18] sm:$0xff] %v1214
      %1247 = vst [vmem:[#allocation2 + $0x20] sm:$0xff] %v1215
      %1248 = vst [vmem:[#allocation2 + $0x28] sm:$0xff] %v1216
      %1249 = vst [vmem:[#allocation2 + $0x30] sm:$0xff] %v1217
      %1250 = vst [vmem:[#allocation2 + $0x38] sm:$0xff] %v1218
      %1251 = vst [vmem:[#allocation2 + $0x40] sm:$0xff] %v1219
      %1252 = vst [vmem:[#allocation2 + $0x48] sm:$0xff] %v1220
      %1253 = vst [vmem:[#allocation2 + $0x50] sm:$0xff] %v1221
      %1254 = vst [vmem:[#allocation2 + $0x58] sm:$0xff] %v1222
      %1255 = vst [vmem:[#allocation2 + $0x60] sm:$0xff] %v1223
      %1256 = vst [vmem:[#allocation2 + $0x68] sm:$0xff] %v1224
      %1257 = vst [vmem:[#allocation2 + $0x70] sm:$0xff] %v1225
      %1258 = vst [vmem:[#allocation2 + $0x78] sm:$0xff] %v1226
      %1259 = vst [vmem:[#allocation2 + $0x80] sm:$0xff] %v1227
      %1260 = vst [vmem:[#allocation2 + $0x88] sm:$0xff] %v1228
      %1261 = vst [vmem:[#allocation2 + $0x90] sm:$0xff] %v1229
      %1262 = vst [vmem:[#allocation2 + $0x98] sm:$0xff] %v1230
      %1263 = vst [vmem:[#allocation2 + $0xa0] sm:$0xff] %v1231
      %1264 = vst [vmem:[#allocation2 + $0xa8] sm:$0xff] %v1232
      %1265 = vst [vmem:[#allocation2 + $0xb0] sm:$0xff] %v1233
      %1266 = vst [vmem:[#allocation2 + $0xb8] sm:$0xff] %v1234
      %1267 = vst [vmem:[#allocation2 + $0xc0] sm:$0xff] %v1235
      %1268 = vst [vmem:[#allocation2 + $0xc8] sm:$0xff] %v1236
      %1269 = vst [vmem:[#allocation2 + $0xd0] sm:$0xff] %v1237
      %1270 = vst [vmem:[#allocation2 + $0xd8] sm:$0xff] %v1238
      %1271 = vst [vmem:[#allocation2 + $0xe0] sm:$0xff] %v1239
      %1272 = vst [vmem:[#allocation2 + $0xe8] sm:$0xff] %v1240
      %1273 = vst [vmem:[#allocation2 + $0xf0] sm:$0xff] %v1241
      %1274 = vst [vmem:[#allocation2 + $0xf8] sm:$0xff] %v1242
      // Predicated region
      $region41: #{forward.18} parent=35 // pred_check
        %p1275 = pneg %p309
      $region42: #{forward.18} parent=35 // pred_check_branch
        %1277 = sbr.rel (%p1275) target = $region44
      $region43: #{forward.18} parent=35 // pred_region
        %v1278 = vld [vmem:[#allocation2] sm:$0xff]
        %v1279 = vld [vmem:[#allocation2 + $0x8] sm:$0xff]
        %v1280 = vld [vmem:[#allocation2 + $0x10] sm:$0xff]
        %v1281 = vld [vmem:[#allocation2 + $0x18] sm:$0xff]
        %v1282 = vld [vmem:[#allocation2 + $0x20] sm:$0xff]
        %v1283 = vld [vmem:[#allocation2 + $0x28] sm:$0xff]
        %v1284 = vld [vmem:[#allocation2 + $0x30] sm:$0xff]
        %v1285 = vld [vmem:[#allocation2 + $0x38] sm:$0xff]
        %v1286 = vld [vmem:[#allocation2 + $0x40] sm:$0xff]
        %v1287 = vld [vmem:[#allocation2 + $0x48] sm:$0xff]
        %v1288 = vld [vmem:[#allocation2 + $0x50] sm:$0xff]
        %v1289 = vld [vmem:[#allocation2 + $0x58] sm:$0xff]
        %v1290 = vld [vmem:[#allocation2 + $0x60] sm:$0xff]
        %v1291 = vld [vmem:[#allocation2 + $0x68] sm:$0xff]
        %v1292 = vld [vmem:[#allocation2 + $0x70] sm:$0xff]
        %v1293 = vld [vmem:[#allocation2 + $0x78] sm:$0xff]
        %v1294 = vld [vmem:[#allocation2 + $0x80] sm:$0xff]
        %v1295 = vld [vmem:[#allocation2 + $0x88] sm:$0xff]
        %v1296 = vld [vmem:[#allocation2 + $0x90] sm:$0xff]
        %v1297 = vld [vmem:[#allocation2 + $0x98] sm:$0xff]
        %v1298 = vld [vmem:[#allocation2 + $0xa0] sm:$0xff]
        %v1299 = vld [vmem:[#allocation2 + $0xa8] sm:$0xff]
        %v1300 = vld [vmem:[#allocation2 + $0xb0] sm:$0xff]
        %v1301 = vld [vmem:[#allocation2 + $0xb8] sm:$0xff]
        %v1302 = vld [vmem:[#allocation2 + $0xc0] sm:$0xff]
        %v1303 = vld [vmem:[#allocation2 + $0xc8] sm:$0xff]
        %v1304 = vld [vmem:[#allocation2 + $0xd0] sm:$0xff]
        %v1305 = vld [vmem:[#allocation2 + $0xd8] sm:$0xff]
        %v1306 = vld [vmem:[#allocation2 + $0xe0] sm:$0xff]
        %v1307 = vld [vmem:[#allocation2 + $0xe8] sm:$0xff]
        %v1308 = vld [vmem:[#allocation2 + $0xf0] sm:$0xff]
        %v1309 = vld [vmem:[#allocation2 + $0xf8] sm:$0xff]
        %v1310 = vld [vmem:[%s295] sm:$0x1]
        %v1312 = vlaneseq
        %v1313 = vshrl.u32 %v1312, 7
        %v1314 = vsub.s32 0, %v1313
        %v1315 = vrot.slane %v1310, %v1314
        %v1317 = vmul.f32 %v1278, %v1315
        %v1318 = vmul.f32 %v1279, %v1315
        %v1319 = vmul.f32 %v1280, %v1315
        %v1320 = vmul.f32 %v1281, %v1315
        %v1321 = vmul.f32 %v1282, %v1315
        %v1322 = vmul.f32 %v1283, %v1315
        %v1323 = vmul.f32 %v1284, %v1315
        %v1324 = vmul.f32 %v1285, %v1315
        %v1325 = vmul.f32 %v1286, %v1315
        %v1326 = vmul.f32 %v1287, %v1315
        %v1327 = vmul.f32 %v1288, %v1315
        %v1328 = vmul.f32 %v1289, %v1315
        %v1329 = vmul.f32 %v1290, %v1315
        %v1330 = vmul.f32 %v1291, %v1315
        %v1331 = vmul.f32 %v1292, %v1315
        %v1332 = vmul.f32 %v1293, %v1315
        %v1333 = vmul.f32 %v1294, %v1315
        %v1334 = vmul.f32 %v1295, %v1315
        %v1335 = vmul.f32 %v1296, %v1315
        %v1336 = vmul.f32 %v1297, %v1315
        %v1337 = vmul.f32 %v1298, %v1315
        %v1338 = vmul.f32 %v1299, %v1315
        %v1339 = vmul.f32 %v1300, %v1315
        %v1340 = vmul.f32 %v1301, %v1315
        %v1341 = vmul.f32 %v1302, %v1315
        %v1342 = vmul.f32 %v1303, %v1315
        %v1343 = vmul.f32 %v1304, %v1315
        %v1344 = vmul.f32 %v1305, %v1315
        %v1345 = vmul.f32 %v1306, %v1315
        %v1346 = vmul.f32 %v1307, %v1315
        %v1347 = vmul.f32 %v1308, %v1315
        %v1348 = vmul.f32 %v1309, %v1315
        %v1349 = vld [vmem:[%s298] sm:$0x1]
        %v1351 = vlaneseq
        %v1352 = vshrl.u32 %v1351, 7
        %v1353 = vsub.s32 0, %v1352
        %v1354 = vrot.slane %v1349, %v1353
        %v1356 = vadd.f32 %v1317, %v1354
        %v1357 = vadd.f32 %v1318, %v1354
        %v1358 = vadd.f32 %v1319, %v1354
        %v1359 = vadd.f32 %v1320, %v1354
        %v1360 = vadd.f32 %v1321, %v1354
        %v1361 = vadd.f32 %v1322, %v1354
        %v1362 = vadd.f32 %v1323, %v1354
        %v1363 = vadd.f32 %v1324, %v1354
        %v1364 = vadd.f32 %v1325, %v1354
        %v1365 = vadd.f32 %v1326, %v1354
        %v1366 = vadd.f32 %v1327, %v1354
        %v1367 = vadd.f32 %v1328, %v1354
        %v1368 = vadd.f32 %v1329, %v1354
        %v1369 = vadd.f32 %v1330, %v1354
        %v1370 = vadd.f32 %v1331, %v1354
        %v1371 = vadd.f32 %v1332, %v1354
        %v1372 = vadd.f32 %v1333, %v1354
        %v1373 = vadd.f32 %v1334, %v1354
        %v1374 = vadd.f32 %v1335, %v1354
        %v1375 = vadd.f32 %v1336, %v1354
        %v1376 = vadd.f32 %v1337, %v1354
        %v1377 = vadd.f32 %v1338, %v1354
        %v1378 = vadd.f32 %v1339, %v1354
        %v1379 = vadd.f32 %v1340, %v1354
        %v1380 = vadd.f32 %v1341, %v1354
        %v1381 = vadd.f32 %v1342, %v1354
        %v1382 = vadd.f32 %v1343, %v1354
        %v1383 = vadd.f32 %v1344, %v1354
        %v1384 = vadd.f32 %v1345, %v1354
        %v1385 = vadd.f32 %v1346, %v1354
        %v1386 = vadd.f32 %v1347, %v1354
        %v1387 = vadd.f32 %v1348, %v1354
        %v1388 = vmax.f32 %v1356, 0.0
        %v1389 = vmax.f32 %v1357, 0.0
        %v1390 = vmax.f32 %v1358, 0.0
        %v1391 = vmax.f32 %v1359, 0.0
        %v1392 = vmax.f32 %v1360, 0.0
        %v1393 = vmax.f32 %v1361, 0.0
        %v1394 = vmax.f32 %v1362, 0.0
        %v1395 = vmax.f32 %v1363, 0.0
        %v1396 = vmax.f32 %v1364, 0.0
        %v1397 = vmax.f32 %v1365, 0.0
        %v1398 = vmax.f32 %v1366, 0.0
        %v1399 = vmax.f32 %v1367, 0.0
        %v1400 = vmax.f32 %v1368, 0.0
        %v1401 = vmax.f32 %v1369, 0.0
        %v1402 = vmax.f32 %v1370, 0.0
        %v1403 = vmax.f32 %v1371, 0.0
        %v1404 = vmax.f32 %v1372, 0.0
        %v1405 = vmax.f32 %v1373, 0.0
        %v1406 = vmax.f32 %v1374, 0.0
        %v1407 = vmax.f32 %v1375, 0.0
        %v1408 = vmax.f32 %v1376, 0.0
        %v1409 = vmax.f32 %v1377, 0.0
        %v1410 = vmax.f32 %v1378, 0.0
        %v1411 = vmax.f32 %v1379, 0.0
        %v1412 = vmax.f32 %v1380, 0.0
        %v1413 = vmax.f32 %v1381, 0.0
        %v1414 = vmax.f32 %v1382, 0.0
        %v1415 = vmax.f32 %v1383, 0.0
        %v1416 = vmax.f32 %v1384, 0.0
        %v1417 = vmax.f32 %v1385, 0.0
        %v1418 = vmax.f32 %v1386, 0.0
        %v1419 = vmax.f32 %v1387, 0.0
        %v1420 = vpack.c.bf16 %v1389, %v1388
        %v1421 = vpack.c.bf16 %v1391, %v1390
        %v1422 = vpack.c.bf16 %v1393, %v1392
        %v1423 = vpack.c.bf16 %v1395, %v1394
        %v1424 = vpack.c.bf16 %v1397, %v1396
        %v1425 = vpack.c.bf16 %v1399, %v1398
        %v1426 = vpack.c.bf16 %v1401, %v1400
        %v1427 = vpack.c.bf16 %v1403, %v1402
        %v1428 = vpack.c.bf16 %v1405, %v1404
        %v1429 = vpack.c.bf16 %v1407, %v1406
        %v1430 = vpack.c.bf16 %v1409, %v1408
        %v1431 = vpack.c.bf16 %v1411, %v1410
        %v1432 = vpack.c.bf16 %v1413, %v1412
        %v1433 = vpack.c.bf16 %v1415, %v1414
        %v1434 = vpack.c.bf16 %v1417, %v1416
        %v1435 = vpack.c.bf16 %v1419, %v1418
        %v1452 = vunpack.c.l.b16 %v1420
        %v1453 = vunpack.c.h.b16 %v1420
        %v1454 = vunpack.c.l.b16 %v1421
        %v1455 = vunpack.c.h.b16 %v1421
        %v1456 = vunpack.c.l.b16 %v1422
        %v1457 = vunpack.c.h.b16 %v1422
        %v1458 = vunpack.c.l.b16 %v1423
        %v1459 = vunpack.c.h.b16 %v1423
        %v1460 = vunpack.c.l.b16 %v1424
        %v1461 = vunpack.c.h.b16 %v1424
        %v1462 = vunpack.c.l.b16 %v1425
        %v1463 = vunpack.c.h.b16 %v1425
        %v1464 = vunpack.c.l.b16 %v1426
        %v1465 = vunpack.c.h.b16 %v1426
        %v1466 = vunpack.c.l.b16 %v1427
        %v1467 = vunpack.c.h.b16 %v1427
        %v1468 = vunpack.c.l.b16 %v1428
        %v1469 = vunpack.c.h.b16 %v1428
        %v1470 = vunpack.c.l.b16 %v1429
        %v1471 = vunpack.c.h.b16 %v1429
        %v1472 = vunpack.c.l.b16 %v1430
        %v1473 = vunpack.c.h.b16 %v1430
        %v1474 = vunpack.c.l.b16 %v1431
        %v1475 = vunpack.c.h.b16 %v1431
        %v1476 = vunpack.c.l.b16 %v1432
        %v1477 = vunpack.c.h.b16 %v1432
        %v1478 = vunpack.c.l.b16 %v1433
        %v1479 = vunpack.c.h.b16 %v1433
        %v1480 = vunpack.c.l.b16 %v1434
        %v1481 = vunpack.c.h.b16 %v1434
        %v1482 = vunpack.c.l.b16 %v1435
        %v1483 = vunpack.c.h.b16 %v1435
        %v1484 = vpack.c.b16 %v1452, %v1452
        %v1485 = vpack.c.b16 %v1453, %v1453
        %v1486 = vpack.c.b16 %v1454, %v1454
        %v1487 = vpack.c.b16 %v1455, %v1455
        %v1488 = vpack.c.b16 %v1456, %v1456
        %v1489 = vpack.c.b16 %v1457, %v1457
        %v1490 = vpack.c.b16 %v1458, %v1458
        %v1491 = vpack.c.b16 %v1459, %v1459
        %v1492 = vpack.c.b16 %v1460, %v1460
        %v1493 = vpack.c.b16 %v1461, %v1461
        %v1494 = vpack.c.b16 %v1462, %v1462
        %v1495 = vpack.c.b16 %v1463, %v1463
        %v1496 = vpack.c.b16 %v1464, %v1464
        %v1497 = vpack.c.b16 %v1465, %v1465
        %v1498 = vpack.c.b16 %v1466, %v1466
        %v1499 = vpack.c.b16 %v1467, %v1467
        %v1500 = vpack.c.b16 %v1468, %v1468
        %v1501 = vpack.c.b16 %v1469, %v1469
        %v1502 = vpack.c.b16 %v1470, %v1470
        %v1503 = vpack.c.b16 %v1471, %v1471
        %v1504 = vpack.c.b16 %v1472, %v1472
        %v1505 = vpack.c.b16 %v1473, %v1473
        %v1506 = vpack.c.b16 %v1474, %v1474
        %v1507 = vpack.c.b16 %v1475, %v1475
        %v1508 = vpack.c.b16 %v1476, %v1476
        %v1509 = vpack.c.b16 %v1477, %v1477
        %v1510 = vpack.c.b16 %v1478, %v1478
        %v1511 = vpack.c.b16 %v1479, %v1479
        %v1512 = vpack.c.b16 %v1480, %v1480
        %v1513 = vpack.c.b16 %v1481, %v1481
        %v1514 = vpack.c.b16 %v1482, %v1482
        %v1515 = vpack.c.b16 %v1483, %v1483
        %1548 = vst [vmem:[%s306] sm:$0xf] %v1484
        %1549 = vst [vmem:[%s306 + $0x4] sm:$0xf] %v1485
        %1550 = vst [vmem:[%s306 + $0x8] sm:$0xf] %v1486
        %1551 = vst [vmem:[%s306 + $0xc] sm:$0xf] %v1487
        %1552 = vst [vmem:[%s306 + $0x10] sm:$0xf] %v1488
        %1553 = vst [vmem:[%s306 + $0x14] sm:$0xf] %v1489
        %1554 = vst [vmem:[%s306 + $0x18] sm:$0xf] %v1490
        %1555 = vst [vmem:[%s306 + $0x1c] sm:$0xf] %v1491
        %1556 = vst [vmem:[%s306 + $0x20] sm:$0xf] %v1492
        %1557 = vst [vmem:[%s306 + $0x24] sm:$0xf] %v1493
        %1558 = vst [vmem:[%s306 + $0x28] sm:$0xf] %v1494
        %1559 = vst [vmem:[%s306 + $0x2c] sm:$0xf] %v1495
        %1560 = vst [vmem:[%s306 + $0x30] sm:$0xf] %v1496
        %1561 = vst [vmem:[%s306 + $0x34] sm:$0xf] %v1497
        %1562 = vst [vmem:[%s306 + $0x38] sm:$0xf] %v1498
        %1563 = vst [vmem:[%s306 + $0x3c] sm:$0xf] %v1499
        %1564 = vst [vmem:[%s306 + $0x40] sm:$0xf] %v1500
        %1565 = vst [vmem:[%s306 + $0x44] sm:$0xf] %v1501
        %1566 = vst [vmem:[%s306 + $0x48] sm:$0xf] %v1502
        %1567 = vst [vmem:[%s306 + $0x4c] sm:$0xf] %v1503
        %1568 = vst [vmem:[%s306 + $0x50] sm:$0xf] %v1504
        %1569 = vst [vmem:[%s306 + $0x54] sm:$0xf] %v1505
        %1570 = vst [vmem:[%s306 + $0x58] sm:$0xf] %v1506
        %1571 = vst [vmem:[%s306 + $0x5c] sm:$0xf] %v1507
        %1572 = vst [vmem:[%s306 + $0x60] sm:$0xf] %v1508
        %1573 = vst [vmem:[%s306 + $0x64] sm:$0xf] %v1509
        %1574 = vst [vmem:[%s306 + $0x68] sm:$0xf] %v1510
        %1575 = vst [vmem:[%s306 + $0x6c] sm:$0xf] %v1511
        %1576 = vst [vmem:[%s306 + $0x70] sm:$0xf] %v1512
        %1577 = vst [vmem:[%s306 + $0x74] sm:$0xf] %v1513
        %1578 = vst [vmem:[%s306 + $0x78] sm:$0xf] %v1514
        %1579 = vst [vmem:[%s306 + $0x7c] sm:$0xf] %v1515
      $region44: #{forward.18} parent=35 // pred_fallthru
        _
      %s1580 = smul.u32 32, %s20
      %p1581 = scmp.lt.s32.totalorder %s1580, 63
      %s1582 = scalar_select %p1581, %s1580, 63
      %p1583 = scmp.lt.s32.totalorder %s21, 0
      %s1584 = scalar_select %p1583, %s21, 0
      %s1585 = sadd.s32 %s1584, %s1582
      %s1586 = smul.addr %s1585, 4
      %s1587 = scalar_lea.vmem %s4, %s1586
      // Predicated region
      $region45: #{forward.18} parent=35 // pred_check
        %p1588 = pneg %p162
      $region46: #{forward.18} parent=35 // pred_check_branch
        %1590 = sbr.rel (%p1588) target = $region48
      $region47: #{forward.18} parent=35 // pred_region
        %s1591 = smul.u32 32, %s20
      $region48: #{forward.18} parent=35 // pred_fallthru
        _
    $region36: #{forward.18} parent=5 // pred_fallthru
      _
    %p1592 = scmp.le.s32.totalorder 2, %s10
    // Predicated region
    $region49: #{forward.18} parent=5 // pred_check
      %p1593 = pneg %p1592
    $region50: #{forward.18} parent=5 // pred_check_branch
      %1595 = sbr.rel (%p1593) target = $region52
    $region51: #{forward.18} parent=5 // pred_region
      %s1596 = ssub.s32 %s10, 2
      // Predicated region
      $region53: #{forward.18} parent=51 // pred_check
        %p1597 = pneg %p168
      $region54: #{forward.18} parent=51 // pred_check_branch
        %1599 = sbr.rel (%p1597) target = $region56
      $region55: #{forward.18} parent=51 // pred_region
        %s1600 = smul.u32 32, %s23
        %p1601 = scmp.lt.s32.totalorder %s1600, 63
        %s1602 = scalar_select %p1601, %s1600, 63
        %p1603 = scmp.lt.s32.totalorder %s24, 0
        %s1604 = scalar_select %p1603, %s24, 0
        %s1605 = sadd.s32 %s1604, %s1602
        %s1606 = smul.addr %s1605, 4
        %s1607 = scalar_lea.vmem %s4, %s1606
      $region56: #{forward.18} parent=51 // pred_fallthru
        _
    $region52: #{forward.18} parent=5 // pred_fallthru
      _
  $region6: #{forward.18} parent=0 // loop_footer
    %s14 = sadd.s32 1, %s10
  $region7: #{forward.18} parent=0 // loop_footer_branch
    %9 = sbr.rel target = $region3
  $region8: #{forward.18} parent=0 // loop_exit
    _

// kernel: forward.19
$region0: #{forward.19}
  #allocation0 [shape = 'u32[]', space=smem, size = 0x4, offset = 0x4, fixed_abs, tag = 'smem constant byte address 0x4 - core index']
  #allocation1 [shape = 'u32[144,128]{1,0:T(1,128)}', space=vmem, size = 0x12000, scoped, tag = 'internal scratch']
  #allocation2 [shape = 'f32[128,128]{1,0:T(8,128)}', space=vmem, size = 0x10000, scoped, tag = 'scratch operand']
  %s0 = inlined_call_operand.vmem [shape: bf16[128,384], index: 0, kind: input, shape index: {}]
  %s1 = inlined_call_operand.vmem [shape: bf16[384,128], index: 1, kind: input, shape index: {}]
  %s2 = inlined_call_operand.vmem [shape: f32[1,128], index: 2, kind: input, shape index: {}]
  %s3 = inlined_call_operand.vmem [shape: f32[1,128], index: 3, kind: input, shape index: {}]
  %s4 = inlined_call_operand.vmem [shape: bf16[128,128], index: 4, kind: output, shape index: {}]
  %s5 = sld [smem:[#allocation0]]
  $region34: #{forward.19} parent=0
    _
  %s7 = ssub.s32 1, %s5
  %s8 = scalar_select 0, %s7, %s5
  // Predicated region
  $region2: #{forward.19} parent=0 // pred_check
    _
  $region3: #{forward.19} parent=0 // pred_check_branch
    %10 = sbr.rel (0) target = $region5
  $region4: #{forward.19} parent=0 // pred_region
    _
  $region5: #{forward.19} parent=0 // pred_fallthru
    _
  // Predicated region
  $region6: #{forward.19} parent=0 // pred_check
    _
  $region7: #{forward.19} parent=0 // pred_check_branch
    %12 = sbr.rel (0) target = $region9
  $region8: #{forward.19} parent=0 // pred_region
    _
  $region9: #{forward.19} parent=0 // pred_fallthru
    _
  // Predicated region
  $region10: #{forward.19} parent=0 // pred_check
    _
  $region11: #{forward.19} parent=0 // pred_check_branch
    %14 = sbr.rel (0) target = $region13
  $region12: #{forward.19} parent=0 // pred_region
    _
  $region13: #{forward.19} parent=0 // pred_fallthru
    _
  // Predicated region
  $region14: #{forward.19} parent=0 // pred_check
    _
  $region15: #{forward.19} parent=0 // pred_check_branch
    %16 = sbr.rel (0) target = $region17
  $region16: #{forward.19} parent=0 // pred_region
    _
  $region17: #{forward.19} parent=0 // pred_fallthru
    _
  %p18 = scmp.eq.s32.totalorder 0, 0
  // Predicated region
  $region18: #{forward.19} parent=0 // pred_check
    %p19 = pneg %p18
  $region19: #{forward.19} parent=0 // pred_check_branch
    %21 = sbr.rel (%p19) target = $region21
  $region20: #{forward.19} parent=0 // pred_region
    %22 = vst [vmem:[#allocation2] sm:$0xff] 0.0
    %23 = vst [vmem:[#allocation2 + $0x8] sm:$0xff] 0.0
    %24 = vst [vmem:[#allocation2 + $0x10] sm:$0xff] 0.0
    %25 = vst [vmem:[#allocation2 + $0x18] sm:$0xff] 0.0
    %26 = vst [vmem:[#allocation2 + $0x20] sm:$0xff] 0.0
    %27 = vst [vmem:[#allocation2 + $0x28] sm:$0xff] 0.0
    %28 = vst [vmem:[#allocation2 + $0x30] sm:$0xff] 0.0
    %29 = vst [vmem:[#allocation2 + $0x38] sm:$0xff] 0.0
    %30 = vst [vmem:[#allocation2 + $0x40] sm:$0xff] 0.0
    %31 = vst [vmem:[#allocation2 + $0x48] sm:$0xff] 0.0
    %32 = vst [vmem:[#allocation2 + $0x50] sm:$0xff] 0.0
    %33 = vst [vmem:[#allocation2 + $0x58] sm:$0xff] 0.0
    %34 = vst [vmem:[#allocation2 + $0x60] sm:$0xff] 0.0
    %35 = vst [vmem:[#allocation2 + $0x68] sm:$0xff] 0.0
    %36 = vst [vmem:[#allocation2 + $0x70] sm:$0xff] 0.0
    %37 = vst [vmem:[#allocation2 + $0x78] sm:$0xff] 0.0
  $region21: #{forward.19} parent=0 // pred_fallthru
    _
  %v38 = vld [vmem:[#allocation2] sm:$0xff]
  %v39 = vld [vmem:[#allocation2 + $0x8] sm:$0xff]
  %v40 = vld [vmem:[#allocation2 + $0x10] sm:$0xff]
  %v41 = vld [vmem:[#allocation2 + $0x18] sm:$0xff]
  %v42 = vld [vmem:[#allocation2 + $0x20] sm:$0xff]
  %v43 = vld [vmem:[#allocation2 + $0x28] sm:$0xff]
  %v44 = vld [vmem:[#allocation2 + $0x30] sm:$0xff]
  %v45 = vld [vmem:[#allocation2 + $0x38] sm:$0xff]
  %v46 = vld [vmem:[#allocation2 + $0x40] sm:$0xff]
  %v47 = vld [vmem:[#allocation2 + $0x48] sm:$0xff]
  %v48 = vld [vmem:[#allocation2 + $0x50] sm:$0xff]
  %v49 = vld [vmem:[#allocation2 + $0x58] sm:$0xff]
  %v50 = vld [vmem:[#allocation2 + $0x60] sm:$0xff]
  %v51 = vld [vmem:[#allocation2 + $0x68] sm:$0xff]
  %v52 = vld [vmem:[#allocation2 + $0x70] sm:$0xff]
  %v53 = vld [vmem:[#allocation2 + $0x78] sm:$0xff]
  %v54 = vld [vmem:[%s0] sm:$0xff]
  %v55 = vld [vmem:[%s0 + $0x8] sm:$0xf]
  %v56 = vld [vmem:[%s0 + $0xc] sm:$0xff]
  %v57 = vld [vmem:[%s0 + $0x14] sm:$0xf]
  %v58 = vld [vmem:[%s0 + $0x18] sm:$0xff]
  %v59 = vld [vmem:[%s0 + $0x20] sm:$0xf]
  %v60 = vld [vmem:[%s0 + $0x24] sm:$0xff]
  %v61 = vld [vmem:[%s0 + $0x2c] sm:$0xf]
  %v62 = vld [vmem:[%s0 + $0x30] sm:$0xff]
  %v63 = vld [vmem:[%s0 + $0x38] sm:$0xf]
  %v64 = vld [vmem:[%s0 + $0x3c] sm:$0xff]
  %v65 = vld [vmem:[%s0 + $0x44] sm:$0xf]
  %v66 = vld [vmem:[%s0 + $0x48] sm:$0xff]
  %v67 = vld [vmem:[%s0 + $0x50] sm:$0xf]
  %v68 = vld [vmem:[%s0 + $0x54] sm:$0xff]
  %v69 = vld [vmem:[%s0 + $0x5c] sm:$0xf]
  %v70 = vld [vmem:[%s0 + $0x60] sm:$0xff]
  %v71 = vld [vmem:[%s0 + $0x68] sm:$0xf]
  %v72 = vld [vmem:[%s0 + $0x6c] sm:$0xff]
  %v73 = vld [vmem:[%s0 + $0x74] sm:$0xf]
  %v74 = vld [vmem:[%s0 + $0x78] sm:$0xff]
  %v75 = vld [vmem:[%s0 + $0x80] sm:$0xf]
  %v76 = vld [vmem:[%s0 + $0x84] sm:$0xff]
  %v77 = vld [vmem:[%s0 + $0x8c] sm:$0xf]
  %v78 = vld [vmem:[%s0 + $0x90] sm:$0xff]
  %v79 = vld [vmem:[%s0 + $0x98] sm:$0xf]
  %v80 = vld [vmem:[%s0 + $0x9c] sm:$0xff]
  %v81 = vld [vmem:[%s0 + $0xa4] sm:$0xf]
  %v82 = vld [vmem:[%s0 + $0xa8] sm:$0xff]
  %v83 = vld [vmem:[%s0 + $0xb0] sm:$0xf]
  %v84 = vld [vmem:[%s0 + $0xb4] sm:$0xff]
  %v85 = vld [vmem:[%s0 + $0xbc] sm:$0xf]
  %v86 = vld [vmem:[%s1] sm:$0xf]
  %v87 = vld [vmem:[%s1 + $0x4] sm:$0xf]
  %v88 = vld [vmem:[%s1 + $0x8] sm:$0xf]
  %v89 = vld [vmem:[%s1 + $0xc] sm:$0xf]
  %v90 = vld [vmem:[%s1 + $0x10] sm:$0xf]
  %v91 = vld [vmem:[%s1 + $0x14] sm:$0xf]
  %v92 = vld [vmem:[%s1 + $0x18] sm:$0xf]
  %v93 = vld [vmem:[%s1 + $0x1c] sm:$0xf]
  %v94 = vld [vmem:[%s1 + $0x20] sm:$0xf]
  %v95 = vld [vmem:[%s1 + $0x24] sm:$0xf]
  %v96 = vld [vmem:[%s1 + $0x28] sm:$0xf]
  %v97 = vld [vmem:[%s1 + $0x2c] sm:$0xf]
  %v98 = vld [vmem:[%s1 + $0x30] sm:$0xf]
  %v99 = vld [vmem:[%s1 + $0x34] sm:$0xf]
  %v100 = vld [vmem:[%s1 + $0x38] sm:$0xf]
  %v101 = vld [vmem:[%s1 + $0x3c] sm:$0xf]
  %v102 = vld [vmem:[%s1 + $0x40] sm:$0xf]
  %v103 = vld [vmem:[%s1 + $0x44] sm:$0xf]
  %v104 = vld [vmem:[%s1 + $0x48] sm:$0xf]
  %v105 = vld [vmem:[%s1 + $0x4c] sm:$0xf]
  %v106 = vld [vmem:[%s1 + $0x50] sm:$0xf]
  %v107 = vld [vmem:[%s1 + $0x54] sm:$0xf]
  %v108 = vld [vmem:[%s1 + $0x58] sm:$0xf]
  %v109 = vld [vmem:[%s1 + $0x5c] sm:$0xf]
  %v110 = vld [vmem:[%s1 + $0x60] sm:$0xf]
  %v111 = vld [vmem:[%s1 + $0x64] sm:$0xf]
  %v112 = vld [vmem:[%s1 + $0x68] sm:$0xf]
  %v113 = vld [vmem:[%s1 + $0x6c] sm:$0xf]
  %v114 = vld [vmem:[%s1 + $0x70] sm:$0xf]
  %v115 = vld [vmem:[%s1 + $0x74] sm:$0xf]
  %v116 = vld [vmem:[%s1 + $0x78] sm:$0xf]
  %v117 = vld [vmem:[%s1 + $0x7c] sm:$0xf]
  %v118 = vld [vmem:[%s1 + $0x80] sm:$0xf]
  %v119 = vld [vmem:[%s1 + $0x84] sm:$0xf]
  %v120 = vld [vmem:[%s1 + $0x88] sm:$0xf]
  %v121 = vld [vmem:[%s1 + $0x8c] sm:$0xf]
  %v122 = vld [vmem:[%s1 + $0x90] sm:$0xf]
  %v123 = vld [vmem:[%s1 + $0x94] sm:$0xf]
  %v124 = vld [vmem:[%s1 + $0x98] sm:$0xf]
  %v125 = vld [vmem:[%s1 + $0x9c] sm:$0xf]
  %v126 = vld [vmem:[%s1 + $0xa0] sm:$0xf]
  %v127 = vld [vmem:[%s1 + $0xa4] sm:$0xf]
  %v128 = vld [vmem:[%s1 + $0xa8] sm:$0xf]
  %v129 = vld [vmem:[%s1 + $0xac] sm:$0xf]
  %v130 = vld [vmem:[%s1 + $0xb0] sm:$0xf]
  %v131 = vld [vmem:[%s1 + $0xb4] sm:$0xf]
  %v132 = vld [vmem:[%s1 + $0xb8] sm:$0xf]
  %v133 = vld [vmem:[%s1 + $0xbc] sm:$0xf]
  %v166 = vunpack.c.l.b16 %v54
  %v167 = vunpack.c.h.b16 %v54
  %v168 = vunpack.c.l.b16 %v55
  %v169 = vunpack.c.l.b16 %v56
  %v170 = vunpack.c.h.b16 %v56
  %v171 = vunpack.c.l.b16 %v57
  %v172 = vunpack.c.l.b16 %v58
  %v173 = vunpack.c.h.b16 %v58
  %v174 = vunpack.c.l.b16 %v59
  %v175 = vunpack.c.l.b16 %v60
  %v176 = vunpack.c.h.b16 %v60
  %v177 = vunpack.c.l.b16 %v61
  %v178 = vunpack.c.l.b16 %v62
  %v179 = vunpack.c.h.b16 %v62
  %v180 = vunpack.c.l.b16 %v63
  %v181 = vunpack.c.l.b16 %v64
  %v182 = vunpack.c.h.b16 %v64
  %v183 = vunpack.c.l.b16 %v65
  %v184 = vunpack.c.l.b16 %v66
  %v185 = vunpack.c.h.b16 %v66
  %v186 = vunpack.c.l.b16 %v67
  %v187 = vunpack.c.l.b16 %v68
  %v188 = vunpack.c.h.b16 %v68
  %v189 = vunpack.c.l.b16 %v69
  %v190 = vunpack.c.l.b16 %v70
  %v191 = vunpack.c.h.b16 %v70
  %v192 = vunpack.c.l.b16 %v71
  %v193 = vunpack.c.l.b16 %v72
  %v194 = vunpack.c.h.b16 %v72
  %v195 = vunpack.c.l.b16 %v73
  %v196 = vunpack.c.l.b16 %v74
  %v197 = vunpack.c.h.b16 %v74
  %v198 = vunpack.c.l.b16 %v75
  %v199 = vunpack.c.l.b16 %v76
  %v200 = vunpack.c.h.b16 %v76
  %v201 = vunpack.c.l.b16 %v77
  %v202 = vunpack.c.l.b16 %v78
  %v203 = vunpack.c.h.b16 %v78
  %v204 = vunpack.c.l.b16 %v79
  %v205 = vunpack.c.l.b16 %v80
  %v206 = vunpack.c.h.b16 %v80
  %v207 = vunpack.c.l.b16 %v81
  %v208 = vunpack.c.l.b16 %v82
  %v209 = vunpack.c.h.b16 %v82
  %v210 = vunpack.c.l.b16 %v83
  %v211 = vunpack.c.l.b16 %v84
  %v212 = vunpack.c.h.b16 %v84
  %v213 = vunpack.c.l.b16 %v85
  %v214 = vpack.c.b16 %v169, %v166
  %v215 = vpack.c.b16 %v170, %v167
  %v216 = vpack.c.b16 %v171, %v168
  %v217 = vpack.c.b16 %v175, %v172
  %v218 = vpack.c.b16 %v176, %v173
  %v219 = vpack.c.b16 %v177, %v174
  %v220 = vpack.c.b16 %v181, %v178
  %v221 = vpack.c.b16 %v182, %v179
  %v222 = vpack.c.b16 %v183, %v180
  %v223 = vpack.c.b16 %v187, %v184
  %v224 = vpack.c.b16 %v188, %v185
  %v225 = vpack.c.b16 %v189, %v186
  %v226 = vpack.c.b16 %v193, %v190
  %v227 = vpack.c.b16 %v194, %v191
  %v228 = vpack.c.b16 %v195, %v192
  %v229 = vpack.c.b16 %v199, %v196
  %v230 = vpack.c.b16 %v200, %v197
  %v231 = vpack.c.b16 %v201, %v198
  %v232 = vpack.c.b16 %v205, %v202
  %v233 = vpack.c.b16 %v206, %v203
  %v234 = vpack.c.b16 %v207, %v204
  %v235 = vpack.c.b16 %v211, %v208
  %v236 = vpack.c.b16 %v212, %v209
  %v237 = vpack.c.b16 %v213, %v210
  %v310 = vunpack.c.l.b16 %v86
  %v311 = vunpack.c.l.b16 %v87
  %v312 = vunpack.c.l.b16 %v88
  %v313 = vunpack.c.l.b16 %v89
  %v314 = vunpack.c.l.b16 %v90
  %v315 = vunpack.c.l.b16 %v91
  %v316 = vunpack.c.l.b16 %v92
  %v317 = vunpack.c.l.b16 %v93
  %v318 = vunpack.c.l.b16 %v94
  %v319 = vunpack.c.l.b16 %v95
  %v320 = vunpack.c.l.b16 %v96
  %v321 = vunpack.c.l.b16 %v97
  %v322 = vunpack.c.l.b16 %v98
  %v323 = vunpack.c.l.b16 %v99
  %v324 = vunpack.c.l.b16 %v100
  %v325 = vunpack.c.l.b16 %v101
  %v326 = vunpack.c.l.b16 %v102
  %v327 = vunpack.c.l.b16 %v103
  %v328 = vunpack.c.l.b16 %v104
  %v329 = vunpack.c.l.b16 %v105
  %v330 = vunpack.c.l.b16 %v106
  %v331 = vunpack.c.l.b16 %v107
  %v332 = vunpack.c.l.b16 %v108
  %v333 = vunpack.c.l.b16 %v109
  %v334 = vunpack.c.l.b16 %v110
  %v335 = vunpack.c.l.b16 %v111
  %v336 = vunpack.c.l.b16 %v112
  %v337 = vunpack.c.l.b16 %v113
  %v338 = vunpack.c.l.b16 %v114
  %v339 = vunpack.c.l.b16 %v115
  %v340 = vunpack.c.l.b16 %v116
  %v341 = vunpack.c.l.b16 %v117
  %v342 = vunpack.c.l.b16 %v118
  %v343 = vunpack.c.l.b16 %v119
  %v344 = vunpack.c.l.b16 %v120
  %v345 = vunpack.c.l.b16 %v121
  %v346 = vunpack.c.l.b16 %v122
  %v347 = vunpack.c.l.b16 %v123
  %v348 = vunpack.c.l.b16 %v124
  %v349 = vunpack.c.l.b16 %v125
  %v350 = vunpack.c.l.b16 %v126
  %v351 = vunpack.c.l.b16 %v127
  %v352 = vunpack.c.l.b16 %v128
  %v353 = vunpack.c.l.b16 %v129
  %v354 = vunpack.c.l.b16 %v130
  %v355 = vunpack.c.l.b16 %v131
  %v356 = vunpack.c.l.b16 %v132
  %v357 = vunpack.c.l.b16 %v133
  %v358 = vpack.c.b16 %v311, %v310
  %v359 = vpack.c.b16 %v313, %v312
  %v360 = vpack.c.b16 %v315, %v314
  %v361 = vpack.c.b16 %v317, %v316
  %v362 = vpack.c.b16 %v319, %v318
  %v363 = vpack.c.b16 %v321, %v320
  %v364 = vpack.c.b16 %v323, %v322
  %v365 = vpack.c.b16 %v325, %v324
  %v366 = vpack.c.b16 %v327, %v326
  %v367 = vpack.c.b16 %v329, %v328
  %v368 = vpack.c.b16 %v331, %v330
  %v369 = vpack.c.b16 %v333, %v332
  %v370 = vpack.c.b16 %v335, %v334
  %v371 = vpack.c.b16 %v337, %v336
  %v372 = vpack.c.b16 %v339, %v338
  %v373 = vpack.c.b16 %v341, %v340
  %v374 = vpack.c.b16 %v343, %v342
  %v375 = vpack.c.b16 %v345, %v344
  %v376 = vpack.c.b16 %v347, %v346
  %v377 = vpack.c.b16 %v349, %v348
  %v378 = vpack.c.b16 %v351, %v350
  %v379 = vpack.c.b16 %v353, %v352
  %v380 = vpack.c.b16 %v355, %v354
  %v381 = vpack.c.b16 %v357, %v356
  %406 = vmatprep.subr.bf16.mxu0 0
  %407 = vmatpush1.bf16.msra.mxu0 %v358
  %408 = vmatprep.subr.bf16.mxu0 0
  %409 = vmatpush1.bf16.msra.mxu0 %v359
  %410 = vmatprep.subr.bf16.mxu0 0
  %411 = vmatpush1.bf16.msra.mxu0 %v360
  %412 = vmatprep.subr.bf16.mxu0 0
  %413 = vmatpush1.bf16.msra.mxu0 %v361
  %414 = vmatprep.subr.bf16.mxu0 0
  %415 = vmatpush1.bf16.msra.mxu0 %v362
  %416 = vmatprep.subr.bf16.mxu0 0
  %417 = vmatpush1.bf16.msra.mxu0 %v363
  %418 = vmatprep.subr.bf16.mxu0 0
  %419 = vmatpush1.bf16.msra.mxu0 %v364
  %420 = vmatprep.subr.bf16.mxu0 0
  %421 = vmatpush1.bf16.msra.mxu0 %v365
  %422 = vmatprep.subr.bf16.mxu0 0
  %423 = vmatpush1.bf16.msra.mxu0 %v366
  %424 = vmatprep.subr.bf16.mxu0 0
  %425 = vmatpush1.bf16.msra.mxu0 %v367
  %426 = vmatprep.subr.bf16.mxu0 0
  %427 = vmatpush1.bf16.msra.mxu0 %v368
  %428 = vmatprep.subr.bf16.mxu0 0
  %429 = vmatpush1.bf16.msra.mxu0 %v369
  %430 = vmatprep.subr.bf16.mxu0 0
  %431 = vmatpush1.bf16.msra.mxu0 %v370
  %432 = vmatprep.subr.bf16.mxu0 0
  %433 = vmatpush1.bf16.msra.mxu0 %v371
  %434 = vmatprep.subr.bf16.mxu0 0
  %435 = vmatpush1.bf16.msra.mxu0 %v372
  %436 = vmatprep.subr.bf16.mxu0 0
  %437 = vmatpush1.bf16.msra.mxu0 %v373
  %438 = vmatprep.mubr.bf16.mxu0 %v215
  %439 = vmatmul.mubr.bf16.gmra.mrb[0].mxu0 %v214
  %v440 = vpop.f32.mrb[0].mxu0
  %v441 = vadd.f32 0.0, %v440
  %v442 = vpop.f32.mrb[0].mxu0
  %v443 = vpop.f32.mrb[0].mxu0
  %v444 = vadd.f32 0.0, %v443
  %v445 = vpop.f32.mrb[0].mxu0
  %446 = vmatprep.mubr.bf16.mxu0 %v218
  %447 = vmatmul.mubr.bf16.gmra.mrb[0].mxu0 %v217
  %v448 = vpop.f32.mrb[0].mxu0
  %v449 = vadd.f32 0.0, %v448
  %v450 = vpop.f32.mrb[0].mxu0
  %v451 = vpop.f32.mrb[0].mxu0
  %v452 = vadd.f32 0.0, %v451
  %v453 = vpop.f32.mrb[0].mxu0
  %454 = vmatprep.mubr.bf16.mxu0 %v221
  %455 = vmatmul.mubr.bf16.gmra.mrb[0].mxu0 %v220
  %v456 = vpop.f32.mrb[0].mxu0
  %v457 = vadd.f32 0.0, %v456
  %v458 = vpop.f32.mrb[0].mxu0
  %v459 = vpop.f32.mrb[0].mxu0
  %v460 = vadd.f32 0.0, %v459
  %v461 = vpop.f32.mrb[0].mxu0
  %462 = vmatprep.mubr.bf16.mxu0 %v224
  %463 = vmatmul.mubr.bf16.gmra.mrb[0].mxu0 %v223
  %v464 = vpop.f32.mrb[0].mxu0
  %v465 = vadd.f32 0.0, %v464
  %v466 = vpop.f32.mrb[0].mxu0
  %v467 = vpop.f32.mrb[0].mxu0
  %v468 = vadd.f32 0.0, %v467
  %v469 = vpop.f32.mrb[0].mxu0
  %470 = vmatprep.mubr.bf16.mxu0 %v227
  %471 = vmatmul.mubr.bf16.gmra.mrb[0].mxu0 %v226
  %v472 = vpop.f32.mrb[0].mxu0
  %v473 = vadd.f32 0.0, %v472
  %v474 = vpop.f32.mrb[0].mxu0
  %v475 = vpop.f32.mrb[0].mxu0
  %v476 = vadd.f32 0.0, %v475
  %v477 = vpop.f32.mrb[0].mxu0
  %478 = vmatprep.mubr.bf16.mxu0 %v230
  %479 = vmatmul.mubr.bf16.gmra.mrb[0].mxu0 %v229
  %v480 = vpop.f32.mrb[0].mxu0
  %v481 = vadd.f32 0.0, %v480
  %v482 = vpop.f32.mrb[0].mxu0
  %v483 = vpop.f32.mrb[0].mxu0
  %v484 = vadd.f32 0.0, %v483
  %v485 = vpop.f32.mrb[0].mxu0
  %486 = vmatprep.mubr.bf16.mxu0 %v233
  %487 = vmatmul.mubr.bf16.gmra.mrb[0].mxu0 %v232
  %v488 = vpop.f32.mrb[0].mxu0
  %v489 = vadd.f32 0.0, %v488
  %v490 = vpop.f32.mrb[0].mxu0
  %v491 = vpop.f32.mrb[0].mxu0
  %v492 = vadd.f32 0.0, %v491
  %v493 = vpop.f32.mrb[0].mxu0
  %494 = vmatprep.mubr.bf16.mxu0 %v236
  %495 = vmatmul.mubr.bf16.gmra.mrb[0].mxu0 %v235
  %v496 = vpop.f32.mrb[0].mxu0
  %v497 = vadd.f32 0.0, %v496
  %v498 = vpop.f32.mrb[0].mxu0
  %v499 = vpop.f32.mrb[0].mxu0
  %v500 = vadd.f32 0.0, %v499
  %v501 = vpop.f32.mrb[0].mxu0
  %502 = vdwg.mxu0
  %503 = vmatprep.subr.bf16.mxu0 0
  %504 = vmatpush1.bf16.msra.mxu0 %v374
  %505 = vmatprep.subr.bf16.mxu0 0
  %506 = vmatpush1.bf16.msra.mxu0 %v375
  %507 = vmatprep.subr.bf16.mxu0 0
  %508 = vmatpush1.bf16.msra.mxu0 %v376
  %509 = vmatprep.subr.bf16.mxu0 0
  %510 = vmatpush1.bf16.msra.mxu0 %v377
  %511 = vmatprep.subr.bf16.mxu0 0
  %512 = vmatpush1.bf16.msra.mxu0 %v378
  %513 = vmatprep.subr.bf16.mxu0 0
  %514 = vmatpush1.bf16.msra.mxu0 %v379
  %515 = vmatprep.subr.bf16.mxu0 0
  %516 = vmatpush1.bf16.msra.mxu0 %v380
  %517 = vmatprep.subr.bf16.mxu0 0
  %518 = vmatpush1.bf16.msra.mxu0 %v381
  %519 = vmatprep.subr.bf16.mxu0 0
  %520 = vmatpush1.bf16.msra.mxu0 0
  %521 = vmatprep.subr.bf16.mxu0 0
  %522 = vmatpush1.bf16.msra.mxu0 0
  %523 = vmatprep.subr.bf16.mxu0 0
  %524 = vmatpush1.bf16.msra.mxu0 0
  %525 = vmatprep.subr.bf16.mxu0 0
  %526 = vmatpush1.bf16.msra.mxu0 0
  %527 = vmatprep.subr.bf16.mxu0 0
  %528 = vmatpush1.bf16.msra.mxu0 0
  %529 = vmatprep.subr.bf16.mxu0 0
  %530 = vmatpush1.bf16.msra.mxu0 0
  %531 = vmatprep.subr.bf16.mxu0 0
  %532 = vmatpush1.bf16.msra.mxu0 0
  %533 = vmatprep.subr.bf16.mxu0 0
  %534 = vmatpush1.bf16.msra.mxu0 0
  %535 = vmatprep.mubr.bf16.mxu0 0
  %536 = vmatmul.mubr.bf16.gmra.mrb[0].mxu0 %v216
  %v537 = vpop.f32.mrb[0].mxu0
  %v538 = vadd.f32 %v441, %v537
  %v539 = vpop.f32.mrb[0].mxu0
  %v540 = vpop.f32.mrb[0].mxu0
  %v541 = vadd.f32 %v444, %v540
  %v542 = vpop.f32.mrb[0].mxu0
  %543 = vmatprep.mubr.bf16.mxu0 0
  %544 = vmatmul.mubr.bf16.gmra.mrb[0].mxu0 %v219
  %v545 = vpop.f32.mrb[0].mxu0
  %v546 = vadd.f32 %v449, %v545
  %v547 = vpop.f32.mrb[0].mxu0
  %v548 = vpop.f32.mrb[0].mxu0
  %v549 = vadd.f32 %v452, %v548
  %v550 = vpop.f32.mrb[0].mxu0
  %551 = vmatprep.mubr.bf16.mxu0 0
  %552 = vmatmul.mubr.bf16.gmra.mrb[0].mxu0 %v222
  %v553 = vpop.f32.mrb[0].mxu0
  %v554 = vadd.f32 %v457, %v553
  %v555 = vpop.f32.mrb[0].mxu0
  %v556 = vpop.f32.mrb[0].mxu0
  %v557 = vadd.f32 %v460, %v556
  %v558 = vpop.f32.mrb[0].mxu0
  %559 = vmatprep.mubr.bf16.mxu0 0
  %560 = vmatmul.mubr.bf16.gmra.mrb[0].mxu0 %v225
  %v561 = vpop.f32.mrb[0].mxu0
  %v562 = vadd.f32 %v465, %v561
  %v563 = vpop.f32.mrb[0].mxu0
  %v564 = vpop.f32.mrb[0].mxu0
  %v565 = vadd.f32 %v468, %v564
  %v566 = vpop.f32.mrb[0].mxu0
  %567 = vmatprep.mubr.bf16.mxu0 0
  %568 = vmatmul.mubr.bf16.gmra.mrb[0].mxu0 %v228
  %v569 = vpop.f32.mrb[0].mxu0
  %v570 = vadd.f32 %v473, %v569
  %v571 = vpop.f32.mrb[0].mxu0
  %v572 = vpop.f32.mrb[0].mxu0
  %v573 = vadd.f32 %v476, %v572
  %v574 = vpop.f32.mrb[0].mxu0
  %575 = vmatprep.mubr.bf16.mxu0 0
  %576 = vmatmul.mubr.bf16.gmra.mrb[0].mxu0 %v231
  %v577 = vpop.f32.mrb[0].mxu0
  %v578 = vadd.f32 %v481, %v577
  %v579 = vpop.f32.mrb[0].mxu0
  %v580 = vpop.f32.mrb[0].mxu0
  %v581 = vadd.f32 %v484, %v580
  %v582 = vpop.f32.mrb[0].mxu0
  %583 = vmatprep.mubr.bf16.mxu0 0
  %584 = vmatmul.mubr.bf16.gmra.mrb[0].mxu0 %v234
  %v585 = vpop.f32.mrb[0].mxu0
  %v586 = vadd.f32 %v489, %v585
  %v587 = vpop.f32.mrb[0].mxu0
  %v588 = vpop.f32.mrb[0].mxu0
  %v589 = vadd.f32 %v492, %v588
  %v590 = vpop.f32.mrb[0].mxu0
  %591 = vmatprep.mubr.bf16.mxu0 0
  %592 = vmatmul.mubr.bf16.gmra.mrb[0].mxu0 %v237
  %v593 = vpop.f32.mrb[0].mxu0
  %v594 = vadd.f32 %v497, %v593
  %v595 = vpop.f32.mrb[0].mxu0
  %v596 = vpop.f32.mrb[0].mxu0
  %v597 = vadd.f32 %v500, %v596
  %v598 = vpop.f32.mrb[0].mxu0
  %599 = vdwg.mxu0
  %v600 = vadd.f32 %v38, %v538
  %v601 = vadd.f32 %v39, %v541
  %v602 = vadd.f32 %v40, %v546
  %v603 = vadd.f32 %v41, %v549
  %v604 = vadd.f32 %v42, %v554
  %v605 = vadd.f32 %v43, %v557
  %v606 = vadd.f32 %v44, %v562
  %v607 = vadd.f32 %v45, %v565
  %v608 = vadd.f32 %v46, %v570
  %v609 = vadd.f32 %v47, %v573
  %v610 = vadd.f32 %v48, %v578
  %v611 = vadd.f32 %v49, %v581
  %v612 = vadd.f32 %v50, %v586
  %v613 = vadd.f32 %v51, %v589
  %v614 = vadd.f32 %v52, %v594
  %v615 = vadd.f32 %v53, %v597
  %616 = vst [vmem:[#allocation2] sm:$0xff] %v600
  %617 = vst [vmem:[#allocation2 + $0x8] sm:$0xff] %v601
  %618 = vst [vmem:[#allocation2 + $0x10] sm:$0xff] %v602
  %619 = vst [vmem:[#allocation2 + $0x18] sm:$0xff] %v603
  %620 = vst [vmem:[#allocation2 + $0x20] sm:$0xff] %v604
  %621 = vst [vmem:[#allocation2 + $0x28] sm:$0xff] %v605
  %622 = vst [vmem:[#allocation2 + $0x30] sm:$0xff] %v606
  %623 = vst [vmem:[#allocation2 + $0x38] sm:$0xff] %v607
  %624 = vst [vmem:[#allocation2 + $0x40] sm:$0xff] %v608
  %625 = vst [vmem:[#allocation2 + $0x48] sm:$0xff] %v609
  %626 = vst [vmem:[#allocation2 + $0x50] sm:$0xff] %v610
  %627 = vst [vmem:[#allocation2 + $0x58] sm:$0xff] %v611
  %628 = vst [vmem:[#allocation2 + $0x60] sm:$0xff] %v612
  %629 = vst [vmem:[#allocation2 + $0x68] sm:$0xff] %v613
  %630 = vst [vmem:[#allocation2 + $0x70] sm:$0xff] %v614
  %631 = vst [vmem:[#allocation2 + $0x78] sm:$0xff] %v615
  // Predicated region
  $region22: #{forward.19} parent=0 // pred_check
    %p632 = pneg %p18
  $region23: #{forward.19} parent=0 // pred_check_branch
    %634 = sbr.rel (%p632) target = $region25
  $region24: #{forward.19} parent=0 // pred_region
    %v635 = vld [vmem:[#allocation2] sm:$0xff]
    %v636 = vld [vmem:[#allocation2 + $0x8] sm:$0xff]
    %v637 = vld [vmem:[#allocation2 + $0x10] sm:$0xff]
    %v638 = vld [vmem:[#allocation2 + $0x18] sm:$0xff]
    %v639 = vld [vmem:[#allocation2 + $0x20] sm:$0xff]
    %v640 = vld [vmem:[#allocation2 + $0x28] sm:$0xff]
    %v641 = vld [vmem:[#allocation2 + $0x30] sm:$0xff]
    %v642 = vld [vmem:[#allocation2 + $0x38] sm:$0xff]
    %v643 = vld [vmem:[#allocation2 + $0x40] sm:$0xff]
    %v644 = vld [vmem:[#allocation2 + $0x48] sm:$0xff]
    %v645 = vld [vmem:[#allocation2 + $0x50] sm:$0xff]
    %v646 = vld [vmem:[#allocation2 + $0x58] sm:$0xff]
    %v647 = vld [vmem:[#allocation2 + $0x60] sm:$0xff]
    %v648 = vld [vmem:[#allocation2 + $0x68] sm:$0xff]
    %v649 = vld [vmem:[#allocation2 + $0x70] sm:$0xff]
    %v650 = vld [vmem:[#allocation2 + $0x78] sm:$0xff]
    %v651 = vld [vmem:[%s2] sm:$0x1]
    %v653 = vlaneseq
    %v654 = vshrl.u32 %v653, 7
    %v655 = vsub.s32 0, %v654
    %v656 = vrot.slane %v651, %v655
    %v658 = vmul.f32 %v635, %v656
    %v659 = vmul.f32 %v636, %v656
    %v660 = vmul.f32 %v637, %v656
    %v661 = vmul.f32 %v638, %v656
    %v662 = vmul.f32 %v639, %v656
    %v663 = vmul.f32 %v640, %v656
    %v664 = vmul.f32 %v641, %v656
    %v665 = vmul.f32 %v642, %v656
    %v666 = vmul.f32 %v643, %v656
    %v667 = vmul.f32 %v644, %v656
    %v668 = vmul.f32 %v645, %v656
    %v669 = vmul.f32 %v646, %v656
    %v670 = vmul.f32 %v647, %v656
    %v671 = vmul.f32 %v648, %v656
    %v672 = vmul.f32 %v649, %v656
    %v673 = vmul.f32 %v650, %v656
    %v674 = vld [vmem:[%s3] sm:$0x1]
    %v676 = vlaneseq
    %v677 = vshrl.u32 %v676, 7
    %v678 = vsub.s32 0, %v677
    %v679 = vrot.slane %v674, %v678
    %v681 = vadd.f32 %v658, %v679
    %v682 = vadd.f32 %v659, %v679
    %v683 = vadd.f32 %v660, %v679
    %v684 = vadd.f32 %v661, %v679
    %v685 = vadd.f32 %v662, %v679
    %v686 = vadd.f32 %v663, %v679
    %v687 = vadd.f32 %v664, %v679
    %v688 = vadd.f32 %v665, %v679
    %v689 = vadd.f32 %v666, %v679
    %v690 = vadd.f32 %v667, %v679
    %v691 = vadd.f32 %v668, %v679
    %v692 = vadd.f32 %v669, %v679
    %v693 = vadd.f32 %v670, %v679
    %v694 = vadd.f32 %v671, %v679
    %v695 = vadd.f32 %v672, %v679
    %v696 = vadd.f32 %v673, %v679
    %v697 = vmax.f32 %v681, 0.0
    %v698 = vmax.f32 %v682, 0.0
    %v699 = vmax.f32 %v683, 0.0
    %v700 = vmax.f32 %v684, 0.0
    %v701 = vmax.f32 %v685, 0.0
    %v702 = vmax.f32 %v686, 0.0
    %v703 = vmax.f32 %v687, 0.0
    %v704 = vmax.f32 %v688, 0.0
    %v705 = vmax.f32 %v689, 0.0
    %v706 = vmax.f32 %v690, 0.0
    %v707 = vmax.f32 %v691, 0.0
    %v708 = vmax.f32 %v692, 0.0
    %v709 = vmax.f32 %v693, 0.0
    %v710 = vmax.f32 %v694, 0.0
    %v711 = vmax.f32 %v695, 0.0
    %v712 = vmax.f32 %v696, 0.0
    %v713 = vpack.c.bf16 %v698, %v697
    %v714 = vpack.c.bf16 %v700, %v699
    %v715 = vpack.c.bf16 %v702, %v701
    %v716 = vpack.c.bf16 %v704, %v703
    %v717 = vpack.c.bf16 %v706, %v705
    %v718 = vpack.c.bf16 %v708, %v707
    %v719 = vpack.c.bf16 %v710, %v709
    %v720 = vpack.c.bf16 %v712, %v711
    %v729 = vunpack.c.l.b16 %v713
    %v730 = vunpack.c.h.b16 %v713
    %v731 = vunpack.c.l.b16 %v714
    %v732 = vunpack.c.h.b16 %v714
    %v733 = vunpack.c.l.b16 %v715
    %v734 = vunpack.c.h.b16 %v715
    %v735 = vunpack.c.l.b16 %v716
    %v736 = vunpack.c.h.b16 %v716
    %v737 = vunpack.c.l.b16 %v717
    %v738 = vunpack.c.h.b16 %v717
    %v739 = vunpack.c.l.b16 %v718
    %v740 = vunpack.c.h.b16 %v718
    %v741 = vunpack.c.l.b16 %v719
    %v742 = vunpack.c.h.b16 %v719
    %v743 = vunpack.c.l.b16 %v720
    %v744 = vunpack.c.h.b16 %v720
    %v745 = vpack.c.b16 %v729, %v729
    %v746 = vpack.c.b16 %v730, %v730
    %v747 = vpack.c.b16 %v731, %v731
    %v748 = vpack.c.b16 %v732, %v732
    %v749 = vpack.c.b16 %v733, %v733
    %v750 = vpack.c.b16 %v734, %v734
    %v751 = vpack.c.b16 %v735, %v735
    %v752 = vpack.c.b16 %v736, %v736
    %v753 = vpack.c.b16 %v737, %v737
    %v754 = vpack.c.b16 %v738, %v738
    %v755 = vpack.c.b16 %v739, %v739
    %v756 = vpack.c.b16 %v740, %v740
    %v757 = vpack.c.b16 %v741, %v741
    %v758 = vpack.c.b16 %v742, %v742
    %v759 = vpack.c.b16 %v743, %v743
    %v760 = vpack.c.b16 %v744, %v744
    %777 = vst [vmem:[%s4] sm:$0xf] %v745
    %778 = vst [vmem:[%s4 + $0x4] sm:$0xf] %v746
    %779 = vst [vmem:[%s4 + $0x8] sm:$0xf] %v747
    %780 = vst [vmem:[%s4 + $0xc] sm:$0xf] %v748
    %781 = vst [vmem:[%s4 + $0x10] sm:$0xf] %v749
    %782 = vst [vmem:[%s4 + $0x14] sm:$0xf] %v750
    %783 = vst [vmem:[%s4 + $0x18] sm:$0xf] %v751
    %784 = vst [vmem:[%s4 + $0x1c] sm:$0xf] %v752
    %785 = vst [vmem:[%s4 + $0x20] sm:$0xf] %v753
    %786 = vst [vmem:[%s4 + $0x24] sm:$0xf] %v754
    %787 = vst [vmem:[%s4 + $0x28] sm:$0xf] %v755
    %788 = vst [vmem:[%s4 + $0x2c] sm:$0xf] %v756
    %789 = vst [vmem:[%s4 + $0x30] sm:$0xf] %v757
    %790 = vst [vmem:[%s4 + $0x34] sm:$0xf] %v758
    %791 = vst [vmem:[%s4 + $0x38] sm:$0xf] %v759
    %792 = vst [vmem:[%s4 + $0x3c] sm:$0xf] %v760
  $region25: #{forward.19} parent=0 // pred_fallthru
    _
  // Predicated region
  $region26: #{forward.19} parent=0 // pred_check
    _
  $region27: #{forward.19} parent=0 // pred_check_branch
    %794 = sbr.rel (0) target = $region29
  $region28: #{forward.19} parent=0 // pred_region
    _
  $region29: #{forward.19} parent=0 // pred_fallthru
    _
  // Predicated region
  $region30: #{forward.19} parent=0 // pred_check
    _
  $region31: #{forward.19} parent=0 // pred_check_branch
    %796 = sbr.rel (0) target = $region33
  $region32: #{forward.19} parent=0 // pred_region
    _
  $region33: #{forward.19} parent=0 // pred_fallthru
    _

// kernel: forward.20
$region0: #{forward.20}
  #allocation0 [shape = 'u32[]', space=smem, size = 0x4, offset = 0x4, fixed_abs, tag = 'smem constant byte address 0x4 - core index']
  #allocation1 [shape = 'u32[144,128]{1,0:T(1,128)}', space=vmem, size = 0x12000, scoped, tag = 'internal scratch']
  #allocation2 [shape = 'f32[128,128]{1,0:T(8,128)}', space=vmem, size = 0x10000, scoped, tag = 'scratch operand']
  %s0 = inlined_call_operand.vmem [shape: bf16[128,640], index: 0, kind: input, shape index: {}]
  %s1 = inlined_call_operand.vmem [shape: bf16[640,128], index: 1, kind: input, shape index: {}]
  %s2 = inlined_call_operand.vmem [shape: f32[1,128], index: 2, kind: input, shape index: {}]
  %s3 = inlined_call_operand.vmem [shape: f32[1,128], index: 3, kind: input, shape index: {}]
  %s4 = inlined_call_operand.vmem [shape: bf16[128,128], index: 4, kind: output, shape index: {}]
  %s5 = sld [smem:[#allocation0]]
  $region34: #{forward.20} parent=0
    _
  %s7 = ssub.s32 1, %s5
  %s8 = scalar_select 0, %s7, %s5
  // Predicated region
  $region2: #{forward.20} parent=0 // pred_check
    _
  $region3: #{forward.20} parent=0 // pred_check_branch
    %10 = sbr.rel (0) target = $region5
  $region4: #{forward.20} parent=0 // pred_region
    _
  $region5: #{forward.20} parent=0 // pred_fallthru
    _
  // Predicated region
  $region6: #{forward.20} parent=0 // pred_check
    _
  $region7: #{forward.20} parent=0 // pred_check_branch
    %12 = sbr.rel (0) target = $region9
  $region8: #{forward.20} parent=0 // pred_region
    _
  $region9: #{forward.20} parent=0 // pred_fallthru
    _
  // Predicated region
  $region10: #{forward.20} parent=0 // pred_check
    _
  $region11: #{forward.20} parent=0 // pred_check_branch
    %14 = sbr.rel (0) target = $region13
  $region12: #{forward.20} parent=0 // pred_region
    _
  $region13: #{forward.20} parent=0 // pred_fallthru
    _
  // Predicated region
  $region14: #{forward.20} parent=0 // pred_check
    _
  $region15: #{forward.20} parent=0 // pred_check_branch
    %16 = sbr.rel (0) target = $region17
  $region16: #{forward.20} parent=0 // pred_region
    _
  $region17: #{forward.20} parent=0 // pred_fallthru
    _
  %p18 = scmp.eq.s32.totalorder 0, 0
  // Predicated region
  $region18: #{forward.20} parent=0 // pred_check
    %p19 = pneg %p18
  $region19: #{forward.20} parent=0 // pred_check_branch
    %21 = sbr.rel (%p19) target = $region21
  $region20: #{forward.20} parent=0 // pred_region
    %22 = vst [vmem:[#allocation2] sm:$0xff] 0.0
    %23 = vst [vmem:[#allocation2 + $0x8] sm:$0xff] 0.0
    %24 = vst [vmem:[#allocation2 + $0x10] sm:$0xff] 0.0
    %25 = vst [vmem:[#allocation2 + $0x18] sm:$0xff] 0.0
    %26 = vst [vmem:[#allocation2 + $0x20] sm:$0xff] 0.0
    %27 = vst [vmem:[#allocation2 + $0x28] sm:$0xff] 0.0
    %28 = vst [vmem:[#allocation2 + $0x30] sm:$0xff] 0.0
    %29 = vst [vmem:[#allocation2 + $0x38] sm:$0xff] 0.0
    %30 = vst [vmem:[#allocation2 + $0x40] sm:$0xff] 0.0
    %31 = vst [vmem:[#allocation2 + $0x48] sm:$0xff] 0.0
    %32 = vst [vmem:[#allocation2 + $0x50] sm:$0xff] 0.0
    %33 = vst [vmem:[#allocation2 + $0x58] sm:$0xff] 0.0
    %34 = vst [vmem:[#allocation2 + $0x60] sm:$0xff] 0.0
    %35 = vst [vmem:[#allocation2 + $0x68] sm:$0xff] 0.0
    %36 = vst [vmem:[#allocation2 + $0x70] sm:$0xff] 0.0
    %37 = vst [vmem:[#allocation2 + $0x78] sm:$0xff] 0.0
  $region21: #{forward.20} parent=0 // pred_fallthru
    _
  %v38 = vld [vmem:[#allocation2] sm:$0xff]
  %v39 = vld [vmem:[#allocation2 + $0x8] sm:$0xff]
  %v40 = vld [vmem:[#allocation2 + $0x10] sm:$0xff]
  %v41 = vld [vmem:[#allocation2 + $0x18] sm:$0xff]
  %v42 = vld [vmem:[#allocation2 + $0x20] sm:$0xff]
  %v43 = vld [vmem:[#allocation2 + $0x28] sm:$0xff]
  %v44 = vld [vmem:[#allocation2 + $0x30] sm:$0xff]
  %v45 = vld [vmem:[#allocation2 + $0x38] sm:$0xff]
  %v46 = vld [vmem:[#allocation2 + $0x40] sm:$0xff]
  %v47 = vld [vmem:[#allocation2 + $0x48] sm:$0xff]
  %v48 = vld [vmem:[#allocation2 + $0x50] sm:$0xff]
  %v49 = vld [vmem:[#allocation2 + $0x58] sm:$0xff]
  %v50 = vld [vmem:[#allocation2 + $0x60] sm:$0xff]
  %v51 = vld [vmem:[#allocation2 + $0x68] sm:$0xff]
  %v52 = vld [vmem:[#allocation2 + $0x70] sm:$0xff]
  %v53 = vld [vmem:[#allocation2 + $0x78] sm:$0xff]
  %v54 = vld [vmem:[%s0] sm:$0xff]
  %v55 = vld [vmem:[%s0 + $0x8] sm:$0xff]
  %v56 = vld [vmem:[%s0 + $0x10] sm:$0xf]
  %v57 = vld [vmem:[%s0 + $0x14] sm:$0xff]
  %v58 = vld [vmem:[%s0 + $0x1c] sm:$0xff]
  %v59 = vld [vmem:[%s0 + $0x24] sm:$0xf]
  %v60 = vld [vmem:[%s0 + $0x28] sm:$0xff]
  %v61 = vld [vmem:[%s0 + $0x30] sm:$0xff]
  %v62 = vld [vmem:[%s0 + $0x38] sm:$0xf]
  %v63 = vld [vmem:[%s0 + $0x3c] sm:$0xff]
  %v64 = vld [vmem:[%s0 + $0x44] sm:$0xff]
  %v65 = vld [vmem:[%s0 + $0x4c] sm:$0xf]
  %v66 = vld [vmem:[%s0 + $0x50] sm:$0xff]
  %v67 = vld [vmem:[%s0 + $0x58] sm:$0xff]
  %v68 = vld [vmem:[%s0 + $0x60] sm:$0xf]
  %v69 = vld [vmem:[%s0 + $0x64] sm:$0xff]
  %v70 = vld [vmem:[%s0 + $0x6c] sm:$0xff]
  %v71 = vld [vmem:[%s0 + $0x74] sm:$0xf]
  %v72 = vld [vmem:[%s0 + $0x78] sm:$0xff]
  %v73 = vld [vmem:[%s0 + $0x80] sm:$0xff]
  %v74 = vld [vmem:[%s0 + $0x88] sm:$0xf]
  %v75 = vld [vmem:[%s0 + $0x8c] sm:$0xff]
  %v76 = vld [vmem:[%s0 + $0x94] sm:$0xff]
  %v77 = vld [vmem:[%s0 + $0x9c] sm:$0xf]
  %v78 = vld [vmem:[%s0 + $0xa0] sm:$0xff]
  %v79 = vld [vmem:[%s0 + $0xa8] sm:$0xff]
  %v80 = vld [vmem:[%s0 + $0xb0] sm:$0xf]
  %v81 = vld [vmem:[%s0 + $0xb4] sm:$0xff]
  %v82 = vld [vmem:[%s0 + $0xbc] sm:$0xff]
  %v83 = vld [vmem:[%s0 + $0xc4] sm:$0xf]
  %v84 = vld [vmem:[%s0 + $0xc8] sm:$0xff]
  %v85 = vld [vmem:[%s0 + $0xd0] sm:$0xff]
  %v86 = vld [vmem:[%s0 + $0xd8] sm:$0xf]
  %v87 = vld [vmem:[%s0 + $0xdc] sm:$0xff]
  %v88 = vld [vmem:[%s0 + $0xe4] sm:$0xff]
  %v89 = vld [vmem:[%s0 + $0xec] sm:$0xf]
  %v90 = vld [vmem:[%s0 + $0xf0] sm:$0xff]
  %v91 = vld [vmem:[%s0 + $0xf8] sm:$0xff]
  %v92 = vld [vmem:[%s0 + $0x100] sm:$0xf]
  %v93 = vld [vmem:[%s0 + $0x104] sm:$0xff]
  %v94 = vld [vmem:[%s0 + $0x10c] sm:$0xff]
  %v95 = vld [vmem:[%s0 + $0x114] sm:$0xf]
  %v96 = vld [vmem:[%s0 + $0x118] sm:$0xff]
  %v97 = vld [vmem:[%s0 + $0x120] sm:$0xff]
  %v98 = vld [vmem:[%s0 + $0x128] sm:$0xf]
  %v99 = vld [vmem:[%s0 + $0x12c] sm:$0xff]
  %v100 = vld [vmem:[%s0 + $0x134] sm:$0xff]
  %v101 = vld [vmem:[%s0 + $0x13c] sm:$0xf]
  %v102 = vld [vmem:[%s1] sm:$0xf]
  %v103 = vld [vmem:[%s1 + $0x4] sm:$0xf]
  %v104 = vld [vmem:[%s1 + $0x8] sm:$0xf]
  %v105 = vld [vmem:[%s1 + $0xc] sm:$0xf]
  %v106 = vld [vmem:[%s1 + $0x10] sm:$0xf]
  %v107 = vld [vmem:[%s1 + $0x14] sm:$0xf]
  %v108 = vld [vmem:[%s1 + $0x18] sm:$0xf]
  %v109 = vld [vmem:[%s1 + $0x1c] sm:$0xf]
  %v110 = vld [vmem:[%s1 + $0x20] sm:$0xf]
  %v111 = vld [vmem:[%s1 + $0x24] sm:$0xf]
  %v112 = vld [vmem:[%s1 + $0x28] sm:$0xf]
  %v113 = vld [vmem:[%s1 + $0x2c] sm:$0xf]
  %v114 = vld [vmem:[%s1 + $0x30] sm:$0xf]
  %v115 = vld [vmem:[%s1 + $0x34] sm:$0xf]
  %v116 = vld [vmem:[%s1 + $0x38] sm:$0xf]
  %v117 = vld [vmem:[%s1 + $0x3c] sm:$0xf]
  %v118 = vld [vmem:[%s1 + $0x40] sm:$0xf]
  %v119 = vld [vmem:[%s1 + $0x44] sm:$0xf]
  %v120 = vld [vmem:[%s1 + $0x48] sm:$0xf]
  %v121 = vld [vmem:[%s1 + $0x4c] sm:$0xf]
  %v122 = vld [vmem:[%s1 + $0x50] sm:$0xf]
  %v123 = vld [vmem:[%s1 + $0x54] sm:$0xf]
  %v124 = vld [vmem:[%s1 + $0x58] sm:$0xf]
  %v125 = vld [vmem:[%s1 + $0x5c] sm:$0xf]
  %v126 = vld [vmem:[%s1 + $0x60] sm:$0xf]
  %v127 = vld [vmem:[%s1 + $0x64] sm:$0xf]
  %v128 = vld [vmem:[%s1 + $0x68] sm:$0xf]
  %v129 = vld [vmem:[%s1 + $0x6c] sm:$0xf]
  %v130 = vld [vmem:[%s1 + $0x70] sm:$0xf]
  %v131 = vld [vmem:[%s1 + $0x74] sm:$0xf]
  %v132 = vld [vmem:[%s1 + $0x78] sm:$0xf]
  %v133 = vld [vmem:[%s1 + $0x7c] sm:$0xf]
  %v134 = vld [vmem:[%s1 + $0x80] sm:$0xf]
  %v135 = vld [vmem:[%s1 + $0x84] sm:$0xf]
  %v136 = vld [vmem:[%s1 + $0x88] sm:$0xf]
  %v137 = vld [vmem:[%s1 + $0x8c] sm:$0xf]
  %v138 = vld [vmem:[%s1 + $0x90] sm:$0xf]
  %v139 = vld [vmem:[%s1 + $0x94] sm:$0xf]
  %v140 = vld [vmem:[%s1 + $0x98] sm:$0xf]
  %v141 = vld [vmem:[%s1 + $0x9c] sm:$0xf]
  %v142 = vld [vmem:[%s1 + $0xa0] sm:$0xf]
  %v143 = vld [vmem:[%s1 + $0xa4] sm:$0xf]
  %v144 = vld [vmem:[%s1 + $0xa8] sm:$0xf]
  %v145 = vld [vmem:[%s1 + $0xac] sm:$0xf]
  %v146 = vld [vmem:[%s1 + $0xb0] sm:$0xf]
  %v147 = vld [vmem:[%s1 + $0xb4] sm:$0xf]
  %v148 = vld [vmem:[%s1 + $0xb8] sm:$0xf]
  %v149 = vld [vmem:[%s1 + $0xbc] sm:$0xf]
  %v150 = vld [vmem:[%s1 + $0xc0] sm:$0xf]
  %v151 = vld [vmem:[%s1 + $0xc4] sm:$0xf]
  %v152 = vld [vmem:[%s1 + $0xc8] sm:$0xf]
  %v153 = vld [vmem:[%s1 + $0xcc] sm:$0xf]
  %v154 = vld [vmem:[%s1 + $0xd0] sm:$0xf]
  %v155 = vld [vmem:[%s1 + $0xd4] sm:$0xf]
  %v156 = vld [vmem:[%s1 + $0xd8] sm:$0xf]
  %v157 = vld [vmem:[%s1 + $0xdc] sm:$0xf]
  %v158 = vld [vmem:[%s1 + $0xe0] sm:$0xf]
  %v159 = vld [vmem:[%s1 + $0xe4] sm:$0xf]
  %v160 = vld [vmem:[%s1 + $0xe8] sm:$0xf]
  %v161 = vld [vmem:[%s1 + $0xec] sm:$0xf]
  %v162 = vld [vmem:[%s1 + $0xf0] sm:$0xf]
  %v163 = vld [vmem:[%s1 + $0xf4] sm:$0xf]
  %v164 = vld [vmem:[%s1 + $0xf8] sm:$0xf]
  %v165 = vld [vmem:[%s1 + $0xfc] sm:$0xf]
  %v166 = vld [vmem:[%s1 + $0x100] sm:$0xf]
  %v167 = vld [vmem:[%s1 + $0x104] sm:$0xf]
  %v168 = vld [vmem:[%s1 + $0x108] sm:$0xf]
  %v169 = vld [vmem:[%s1 + $0x10c] sm:$0xf]
  %v170 = vld [vmem:[%s1 + $0x110] sm:$0xf]
  %v171 = vld [vmem:[%s1 + $0x114] sm:$0xf]
  %v172 = vld [vmem:[%s1 + $0x118] sm:$0xf]
  %v173 = vld [vmem:[%s1 + $0x11c] sm:$0xf]
  %v174 = vld [vmem:[%s1 + $0x120] sm:$0xf]
  %v175 = vld [vmem:[%s1 + $0x124] sm:$0xf]
  %v176 = vld [vmem:[%s1 + $0x128] sm:$0xf]
  %v177 = vld [vmem:[%s1 + $0x12c] sm:$0xf]
  %v178 = vld [vmem:[%s1 + $0x130] sm:$0xf]
  %v179 = vld [vmem:[%s1 + $0x134] sm:$0xf]
  %v180 = vld [vmem:[%s1 + $0x138] sm:$0xf]
  %v181 = vld [vmem:[%s1 + $0x13c] sm:$0xf]
  %v230 = vunpack.c.l.b16 %v54
  %v231 = vunpack.c.h.b16 %v54
  %v232 = vunpack.c.l.b16 %v55
  %v233 = vunpack.c.h.b16 %v55
  %v234 = vunpack.c.l.b16 %v56
  %v235 = vunpack.c.l.b16 %v57
  %v236 = vunpack.c.h.b16 %v57
  %v237 = vunpack.c.l.b16 %v58
  %v238 = vunpack.c.h.b16 %v58
  %v239 = vunpack.c.l.b16 %v59
  %v240 = vunpack.c.l.b16 %v60
  %v241 = vunpack.c.h.b16 %v60
  %v242 = vunpack.c.l.b16 %v61
  %v243 = vunpack.c.h.b16 %v61
  %v244 = vunpack.c.l.b16 %v62
  %v245 = vunpack.c.l.b16 %v63
  %v246 = vunpack.c.h.b16 %v63
  %v247 = vunpack.c.l.b16 %v64
  %v248 = vunpack.c.h.b16 %v64
  %v249 = vunpack.c.l.b16 %v65
  %v250 = vunpack.c.l.b16 %v66
  %v251 = vunpack.c.h.b16 %v66
  %v252 = vunpack.c.l.b16 %v67
  %v253 = vunpack.c.h.b16 %v67
  %v254 = vunpack.c.l.b16 %v68
  %v255 = vunpack.c.l.b16 %v69
  %v256 = vunpack.c.h.b16 %v69
  %v257 = vunpack.c.l.b16 %v70
  %v258 = vunpack.c.h.b16 %v70
  %v259 = vunpack.c.l.b16 %v71
  %v260 = vunpack.c.l.b16 %v72
  %v261 = vunpack.c.h.b16 %v72
  %v262 = vunpack.c.l.b16 %v73
  %v263 = vunpack.c.h.b16 %v73
  %v264 = vunpack.c.l.b16 %v74
  %v265 = vunpack.c.l.b16 %v75
  %v266 = vunpack.c.h.b16 %v75
  %v267 = vunpack.c.l.b16 %v76
  %v268 = vunpack.c.h.b16 %v76
  %v269 = vunpack.c.l.b16 %v77
  %v270 = vunpack.c.l.b16 %v78
  %v271 = vunpack.c.h.b16 %v78
  %v272 = vunpack.c.l.b16 %v79
  %v273 = vunpack.c.h.b16 %v79
  %v274 = vunpack.c.l.b16 %v80
  %v275 = vunpack.c.l.b16 %v81
  %v276 = vunpack.c.h.b16 %v81
  %v277 = vunpack.c.l.b16 %v82
  %v278 = vunpack.c.h.b16 %v82
  %v279 = vunpack.c.l.b16 %v83
  %v280 = vunpack.c.l.b16 %v84
  %v281 = vunpack.c.h.b16 %v84
  %v282 = vunpack.c.l.b16 %v85
  %v283 = vunpack.c.h.b16 %v85
  %v284 = vunpack.c.l.b16 %v86
  %v285 = vunpack.c.l.b16 %v87
  %v286 = vunpack.c.h.b16 %v87
  %v287 = vunpack.c.l.b16 %v88
  %v288 = vunpack.c.h.b16 %v88
  %v289 = vunpack.c.l.b16 %v89
  %v290 = vunpack.c.l.b16 %v90
  %v291 = vunpack.c.h.b16 %v90
  %v292 = vunpack.c.l.b16 %v91
  %v293 = vunpack.c.h.b16 %v91
  %v294 = vunpack.c.l.b16 %v92
  %v295 = vunpack.c.l.b16 %v93
  %v296 = vunpack.c.h.b16 %v93
  %v297 = vunpack.c.l.b16 %v94
  %v298 = vunpack.c.h.b16 %v94
  %v299 = vunpack.c.l.b16 %v95
  %v300 = vunpack.c.l.b16 %v96
  %v301 = vunpack.c.h.b16 %v96
  %v302 = vunpack.c.l.b16 %v97
  %v303 = vunpack.c.h.b16 %v97
  %v304 = vunpack.c.l.b16 %v98
  %v305 = vunpack.c.l.b16 %v99
  %v306 = vunpack.c.h.b16 %v99
  %v307 = vunpack.c.l.b16 %v100
  %v308 = vunpack.c.h.b16 %v100
  %v309 = vunpack.c.l.b16 %v101
  %v310 = vpack.c.b16 %v235, %v230
  %v311 = vpack.c.b16 %v236, %v231
  %v312 = vpack.c.b16 %v237, %v232
  %v313 = vpack.c.b16 %v238, %v233
  %v314 = vpack.c.b16 %v239, %v234
  %v315 = vpack.c.b16 %v245, %v240
  %v316 = vpack.c.b16 %v246, %v241
  %v317 = vpack.c.b16 %v247, %v242
  %v318 = vpack.c.b16 %v248, %v243
  %v319 = vpack.c.b16 %v249, %v244
  %v320 = vpack.c.b16 %v255, %v250
  %v321 = vpack.c.b16 %v256, %v251
  %v322 = vpack.c.b16 %v257, %v252
  %v323 = vpack.c.b16 %v258, %v253
  %v324 = vpack.c.b16 %v259, %v254
  %v325 = vpack.c.b16 %v265, %v260
  %v326 = vpack.c.b16 %v266, %v261
  %v327 = vpack.c.b16 %v267, %v262
  %v328 = vpack.c.b16 %v268, %v263
  %v329 = vpack.c.b16 %v269, %v264
  %v330 = vpack.c.b16 %v275, %v270
  %v331 = vpack.c.b16 %v276, %v271
  %v332 = vpack.c.b16 %v277, %v272
  %v333 = vpack.c.b16 %v278, %v273
  %v334 = vpack.c.b16 %v279, %v274
  %v335 = vpack.c.b16 %v285, %v280
  %v336 = vpack.c.b16 %v286, %v281
  %v337 = vpack.c.b16 %v287, %v282
  %v338 = vpack.c.b16 %v288, %v283
  %v339 = vpack.c.b16 %v289, %v284
  %v340 = vpack.c.b16 %v295, %v290
  %v341 = vpack.c.b16 %v296, %v291
  %v342 = vpack.c.b16 %v297, %v292
  %v343 = vpack.c.b16 %v298, %v293
  %v344 = vpack.c.b16 %v299, %v294
  %v345 = vpack.c.b16 %v305, %v300
  %v346 = vpack.c.b16 %v306, %v301
  %v347 = vpack.c.b16 %v307, %v302
  %v348 = vpack.c.b16 %v308, %v303
  %v349 = vpack.c.b16 %v309, %v304
  %v470 = vunpack.c.l.b16 %v102
  %v471 = vunpack.c.l.b16 %v103
  %v472 = vunpack.c.l.b16 %v104
  %v473 = vunpack.c.l.b16 %v105
  %v474 = vunpack.c.l.b16 %v106
  %v475 = vunpack.c.l.b16 %v107
  %v476 = vunpack.c.l.b16 %v108
  %v477 = vunpack.c.l.b16 %v109
  %v478 = vunpack.c.l.b16 %v110
  %v479 = vunpack.c.l.b16 %v111
  %v480 = vunpack.c.l.b16 %v112
  %v481 = vunpack.c.l.b16 %v113
  %v482 = vunpack.c.l.b16 %v114
  %v483 = vunpack.c.l.b16 %v115
  %v484 = vunpack.c.l.b16 %v116
  %v485 = vunpack.c.l.b16 %v117
  %v486 = vunpack.c.l.b16 %v118
  %v487 = vunpack.c.l.b16 %v119
  %v488 = vunpack.c.l.b16 %v120
  %v489 = vunpack.c.l.b16 %v121
  %v490 = vunpack.c.l.b16 %v122
  %v491 = vunpack.c.l.b16 %v123
  %v492 = vunpack.c.l.b16 %v124
  %v493 = vunpack.c.l.b16 %v125
  %v494 = vunpack.c.l.b16 %v126
  %v495 = vunpack.c.l.b16 %v127
  %v496 = vunpack.c.l.b16 %v128
  %v497 = vunpack.c.l.b16 %v129
  %v498 = vunpack.c.l.b16 %v130
  %v499 = vunpack.c.l.b16 %v131
  %v500 = vunpack.c.l.b16 %v132
  %v501 = vunpack.c.l.b16 %v133
  %v502 = vunpack.c.l.b16 %v134
  %v503 = vunpack.c.l.b16 %v135
  %v504 = vunpack.c.l.b16 %v136
  %v505 = vunpack.c.l.b16 %v137
  %v506 = vunpack.c.l.b16 %v138
  %v507 = vunpack.c.l.b16 %v139
  %v508 = vunpack.c.l.b16 %v140
  %v509 = vunpack.c.l.b16 %v141
  %v510 = vunpack.c.l.b16 %v142
  %v511 = vunpack.c.l.b16 %v143
  %v512 = vunpack.c.l.b16 %v144
  %v513 = vunpack.c.l.b16 %v145
  %v514 = vunpack.c.l.b16 %v146
  %v515 = vunpack.c.l.b16 %v147
  %v516 = vunpack.c.l.b16 %v148
  %v517 = vunpack.c.l.b16 %v149
  %v518 = vunpack.c.l.b16 %v150
  %v519 = vunpack.c.l.b16 %v151
  %v520 = vunpack.c.l.b16 %v152
  %v521 = vunpack.c.l.b16 %v153
  %v522 = vunpack.c.l.b16 %v154
  %v523 = vunpack.c.l.b16 %v155
  %v524 = vunpack.c.l.b16 %v156
  %v525 = vunpack.c.l.b16 %v157
  %v526 = vunpack.c.l.b16 %v158
  %v527 = vunpack.c.l.b16 %v159
  %v528 = vunpack.c.l.b16 %v160
  %v529 = vunpack.c.l.b16 %v161
  %v530 = vunpack.c.l.b16 %v162
  %v531 = vunpack.c.l.b16 %v163
  %v532 = vunpack.c.l.b16 %v164
  %v533 = vunpack.c.l.b16 %v165
  %v534 = vunpack.c.l.b16 %v166
  %v535 = vunpack.c.l.b16 %v167
  %v536 = vunpack.c.l.b16 %v168
  %v537 = vunpack.c.l.b16 %v169
  %v538 = vunpack.c.l.b16 %v170
  %v539 = vunpack.c.l.b16 %v171
  %v540 = vunpack.c.l.b16 %v172
  %v541 = vunpack.c.l.b16 %v173
  %v542 = vunpack.c.l.b16 %v174
  %v543 = vunpack.c.l.b16 %v175
  %v544 = vunpack.c.l.b16 %v176
  %v545 = vunpack.c.l.b16 %v177
  %v546 = vunpack.c.l.b16 %v178
  %v547 = vunpack.c.l.b16 %v179
  %v548 = vunpack.c.l.b16 %v180
  %v549 = vunpack.c.l.b16 %v181
  %v550 = vpack.c.b16 %v471, %v470
  %v551 = vpack.c.b16 %v473, %v472
  %v552 = vpack.c.b16 %v475, %v474
  %v553 = vpack.c.b16 %v477, %v476
  %v554 = vpack.c.b16 %v479, %v478
  %v555 = vpack.c.b16 %v481, %v480
  %v556 = vpack.c.b16 %v483, %v482
  %v557 = vpack.c.b16 %v485, %v484
  %v558 = vpack.c.b16 %v487, %v486
  %v559 = vpack.c.b16 %v489, %v488
  %v560 = vpack.c.b16 %v491, %v490
  %v561 = vpack.c.b16 %v493, %v492
  %v562 = vpack.c.b16 %v495, %v494
  %v563 = vpack.c.b16 %v497, %v496
  %v564 = vpack.c.b16 %v499, %v498
  %v565 = vpack.c.b16 %v501, %v500
  %v566 = vpack.c.b16 %v503, %v502
  %v567 = vpack.c.b16 %v505, %v504
  %v568 = vpack.c.b16 %v507, %v506
  %v569 = vpack.c.b16 %v509, %v508
  %v570 = vpack.c.b16 %v511, %v510
  %v571 = vpack.c.b16 %v513, %v512
  %v572 = vpack.c.b16 %v515, %v514
  %v573 = vpack.c.b16 %v517, %v516
  %v574 = vpack.c.b16 %v519, %v518
  %v575 = vpack.c.b16 %v521, %v520
  %v576 = vpack.c.b16 %v523, %v522
  %v577 = vpack.c.b16 %v525, %v524
  %v578 = vpack.c.b16 %v527, %v526
  %v579 = vpack.c.b16 %v529, %v528
  %v580 = vpack.c.b16 %v531, %v530
  %v581 = vpack.c.b16 %v533, %v532
  %v582 = vpack.c.b16 %v535, %v534
  %v583 = vpack.c.b16 %v537, %v536
  %v584 = vpack.c.b16 %v539, %v538
  %v585 = vpack.c.b16 %v541, %v540
  %v586 = vpack.c.b16 %v543, %v542
  %v587 = vpack.c.b16 %v545, %v544
  %v588 = vpack.c.b16 %v547, %v546
  %v589 = vpack.c.b16 %v549, %v548
  %630 = vmatprep.subr.bf16.mxu0 0
  %631 = vmatpush1.bf16.msra.mxu0 %v550
  %632 = vmatprep.subr.bf16.mxu0 0
  %633 = vmatpush1.bf16.msra.mxu0 %v551
  %634 = vmatprep.subr.bf16.mxu0 0
  %635 = vmatpush1.bf16.msra.mxu0 %v552
  %636 = vmatprep.subr.bf16.mxu0 0
  %637 = vmatpush1.bf16.msra.mxu0 %v553
  %638 = vmatprep.subr.bf16.mxu0 0
  %639 = vmatpush1.bf16.msra.mxu0 %v554
  %640 = vmatprep.subr.bf16.mxu0 0
  %641 = vmatpush1.bf16.msra.mxu0 %v555
  %642 = vmatprep.subr.bf16.mxu0 0
  %643 = vmatpush1.bf16.msra.mxu0 %v556
  %644 = vmatprep.subr.bf16.mxu0 0
  %645 = vmatpush1.bf16.msra.mxu0 %v557
  %646 = vmatprep.subr.bf16.mxu0 0
  %647 = vmatpush1.bf16.msra.mxu0 %v558
  %648 = vmatprep.subr.bf16.mxu0 0
  %649 = vmatpush1.bf16.msra.mxu0 %v559
  %650 = vmatprep.subr.bf16.mxu0 0
  %651 = vmatpush1.bf16.msra.mxu0 %v560
  %652 = vmatprep.subr.bf16.mxu0 0
  %653 = vmatpush1.bf16.msra.mxu0 %v561
  %654 = vmatprep.subr.bf16.mxu0 0
  %655 = vmatpush1.bf16.msra.mxu0 %v562
  %656 = vmatprep.subr.bf16.mxu0 0
  %657 = vmatpush1.bf16.msra.mxu0 %v563
  %658 = vmatprep.subr.bf16.mxu0 0
  %659 = vmatpush1.bf16.msra.mxu0 %v564
  %660 = vmatprep.subr.bf16.mxu0 0
  %661 = vmatpush1.bf16.msra.mxu0 %v565
  %662 = vmatprep.mubr.bf16.mxu0 %v311
  %663 = vmatmul.mubr.bf16.gmra.mrb[0].mxu0 %v310
  %v664 = vpop.f32.mrb[0].mxu0
  %v665 = vadd.f32 0.0, %v664
  %v666 = vpop.f32.mrb[0].mxu0
  %v667 = vpop.f32.mrb[0].mxu0
  %v668 = vadd.f32 0.0, %v667
  %v669 = vpop.f32.mrb[0].mxu0
  %670 = vmatprep.mubr.bf16.mxu0 %v316
  %671 = vmatmul.mubr.bf16.gmra.mrb[0].mxu0 %v315
  %v672 = vpop.f32.mrb[0].mxu0
  %v673 = vadd.f32 0.0, %v672
  %v674 = vpop.f32.mrb[0].mxu0
  %v675 = vpop.f32.mrb[0].mxu0
  %v676 = vadd.f32 0.0, %v675
  %v677 = vpop.f32.mrb[0].mxu0
  %678 = vmatprep.mubr.bf16.mxu0 %v321
  %679 = vmatmul.mubr.bf16.gmra.mrb[0].mxu0 %v320
  %v680 = vpop.f32.mrb[0].mxu0
  %v681 = vadd.f32 0.0, %v680
  %v682 = vpop.f32.mrb[0].mxu0
  %v683 = vpop.f32.mrb[0].mxu0
  %v684 = vadd.f32 0.0, %v683
  %v685 = vpop.f32.mrb[0].mxu0
  %686 = vmatprep.mubr.bf16.mxu0 %v326
  %687 = vmatmul.mubr.bf16.gmra.mrb[0].mxu0 %v325
  %v688 = vpop.f32.mrb[0].mxu0
  %v689 = vadd.f32 0.0, %v688
  %v690 = vpop.f32.mrb[0].mxu0
  %v691 = vpop.f32.mrb[0].mxu0
  %v692 = vadd.f32 0.0, %v691
  %v693 = vpop.f32.mrb[0].mxu0
  %694 = vmatprep.mubr.bf16.mxu0 %v331
  %695 = vmatmul.mubr.bf16.gmra.mrb[0].mxu0 %v330
  %v696 = vpop.f32.mrb[0].mxu0
  %v697 = vadd.f32 0.0, %v696
  %v698 = vpop.f32.mrb[0].mxu0
  %v699 = vpop.f32.mrb[0].mxu0
  %v700 = vadd.f32 0.0, %v699
  %v701 = vpop.f32.mrb[0].mxu0
  %702 = vmatprep.mubr.bf16.mxu0 %v336
  %703 = vmatmul.mubr.bf16.gmra.mrb[0].mxu0 %v335
  %v704 = vpop.f32.mrb[0].mxu0
  %v705 = vadd.f32 0.0, %v704
  %v706 = vpop.f32.mrb[0].mxu0
  %v707 = vpop.f32.mrb[0].mxu0
  %v708 = vadd.f32 0.0, %v707
  %v709 = vpop.f32.mrb[0].mxu0
  %710 = vmatprep.mubr.bf16.mxu0 %v341
  %711 = vmatmul.mubr.bf16.gmra.mrb[0].mxu0 %v340
  %v712 = vpop.f32.mrb[0].mxu0
  %v713 = vadd.f32 0.0, %v712
  %v714 = vpop.f32.mrb[0].mxu0
  %v715 = vpop.f32.mrb[0].mxu0
  %v716 = vadd.f32 0.0, %v715
  %v717 = vpop.f32.mrb[0].mxu0
  %718 = vmatprep.mubr.bf16.mxu0 %v346
  %719 = vmatmul.mubr.bf16.gmra.mrb[0].mxu0 %v345
  %v720 = vpop.f32.mrb[0].mxu0
  %v721 = vadd.f32 0.0, %v720
  %v722 = vpop.f32.mrb[0].mxu0
  %v723 = vpop.f32.mrb[0].mxu0
  %v724 = vadd.f32 0.0, %v723
  %v725 = vpop.f32.mrb[0].mxu0
  %726 = vdwg.mxu0
  %727 = vmatprep.subr.bf16.mxu0 0
  %728 = vmatpush1.bf16.msra.mxu0 %v566
  %729 = vmatprep.subr.bf16.mxu0 0
  %730 = vmatpush1.bf16.msra.mxu0 %v567
  %731 = vmatprep.subr.bf16.mxu0 0
  %732 = vmatpush1.bf16.msra.mxu0 %v568
  %733 = vmatprep.subr.bf16.mxu0 0
  %734 = vmatpush1.bf16.msra.mxu0 %v569
  %735 = vmatprep.subr.bf16.mxu0 0
  %736 = vmatpush1.bf16.msra.mxu0 %v570
  %737 = vmatprep.subr.bf16.mxu0 0
  %738 = vmatpush1.bf16.msra.mxu0 %v571
  %739 = vmatprep.subr.bf16.mxu0 0
  %740 = vmatpush1.bf16.msra.mxu0 %v572
  %741 = vmatprep.subr.bf16.mxu0 0
  %742 = vmatpush1.bf16.msra.mxu0 %v573
  %743 = vmatprep.subr.bf16.mxu0 0
  %744 = vmatpush1.bf16.msra.mxu0 %v574
  %745 = vmatprep.subr.bf16.mxu0 0
  %746 = vmatpush1.bf16.msra.mxu0 %v575
  %747 = vmatprep.subr.bf16.mxu0 0
  %748 = vmatpush1.bf16.msra.mxu0 %v576
  %749 = vmatprep.subr.bf16.mxu0 0
  %750 = vmatpush1.bf16.msra.mxu0 %v577
  %751 = vmatprep.subr.bf16.mxu0 0
  %752 = vmatpush1.bf16.msra.mxu0 %v578
  %753 = vmatprep.subr.bf16.mxu0 0
  %754 = vmatpush1.bf16.msra.mxu0 %v579
  %755 = vmatprep.subr.bf16.mxu0 0
  %756 = vmatpush1.bf16.msra.mxu0 %v580
  %757 = vmatprep.subr.bf16.mxu0 0
  %758 = vmatpush1.bf16.msra.mxu0 %v581
  %759 = vmatprep.mubr.bf16.mxu0 %v313
  %760 = vmatmul.mubr.bf16.gmra.mrb[0].mxu0 %v312
  %v761 = vpop.f32.mrb[0].mxu0
  %v762 = vadd.f32 %v665, %v761
  %v763 = vpop.f32.mrb[0].mxu0
  %v764 = vpop.f32.mrb[0].mxu0
  %v765 = vadd.f32 %v668, %v764
  %v766 = vpop.f32.mrb[0].mxu0
  %767 = vmatprep.mubr.bf16.mxu0 %v318
  %768 = vmatmul.mubr.bf16.gmra.mrb[0].mxu0 %v317
  %v769 = vpop.f32.mrb[0].mxu0
  %v770 = vadd.f32 %v673, %v769
  %v771 = vpop.f32.mrb[0].mxu0
  %v772 = vpop.f32.mrb[0].mxu0
  %v773 = vadd.f32 %v676, %v772
  %v774 = vpop.f32.mrb[0].mxu0
  %775 = vmatprep.mubr.bf16.mxu0 %v323
  %776 = vmatmul.mubr.bf16.gmra.mrb[0].mxu0 %v322
  %v777 = vpop.f32.mrb[0].mxu0
  %v778 = vadd.f32 %v681, %v777
  %v779 = vpop.f32.mrb[0].mxu0
  %v780 = vpop.f32.mrb[0].mxu0
  %v781 = vadd.f32 %v684, %v780
  %v782 = vpop.f32.mrb[0].mxu0
  %783 = vmatprep.mubr.bf16.mxu0 %v328
  %784 = vmatmul.mubr.bf16.gmra.mrb[0].mxu0 %v327
  %v785 = vpop.f32.mrb[0].mxu0
  %v786 = vadd.f32 %v689, %v785
  %v787 = vpop.f32.mrb[0].mxu0
  %v788 = vpop.f32.mrb[0].mxu0
  %v789 = vadd.f32 %v692, %v788
  %v790 = vpop.f32.mrb[0].mxu0
  %791 = vmatprep.mubr.bf16.mxu0 %v333
  %792 = vmatmul.mubr.bf16.gmra.mrb[0].mxu0 %v332
  %v793 = vpop.f32.mrb[0].mxu0
  %v794 = vadd.f32 %v697, %v793
  %v795 = vpop.f32.mrb[0].mxu0
  %v796 = vpop.f32.mrb[0].mxu0
  %v797 = vadd.f32 %v700, %v796
  %v798 = vpop.f32.mrb[0].mxu0
  %799 = vmatprep.mubr.bf16.mxu0 %v338
  %800 = vmatmul.mubr.bf16.gmra.mrb[0].mxu0 %v337
  %v801 = vpop.f32.mrb[0].mxu0
  %v802 = vadd.f32 %v705, %v801
  %v803 = vpop.f32.mrb[0].mxu0
  %v804 = vpop.f32.mrb[0].mxu0
  %v805 = vadd.f32 %v708, %v804
  %v806 = vpop.f32.mrb[0].mxu0
  %807 = vmatprep.mubr.bf16.mxu0 %v343
  %808 = vmatmul.mubr.bf16.gmra.mrb[0].mxu0 %v342
  %v809 = vpop.f32.mrb[0].mxu0
  %v810 = vadd.f32 %v713, %v809
  %v811 = vpop.f32.mrb[0].mxu0
  %v812 = vpop.f32.mrb[0].mxu0
  %v813 = vadd.f32 %v716, %v812
  %v814 = vpop.f32.mrb[0].mxu0
  %815 = vmatprep.mubr.bf16.mxu0 %v348
  %816 = vmatmul.mubr.bf16.gmra.mrb[0].mxu0 %v347
  %v817 = vpop.f32.mrb[0].mxu0
  %v818 = vadd.f32 %v721, %v817
  %v819 = vpop.f32.mrb[0].mxu0
  %v820 = vpop.f32.mrb[0].mxu0
  %v821 = vadd.f32 %v724, %v820
  %v822 = vpop.f32.mrb[0].mxu0
  %823 = vdwg.mxu0
  %824 = vmatprep.subr.bf16.mxu0 0
  %825 = vmatpush1.bf16.msra.mxu0 %v582
  %826 = vmatprep.subr.bf16.mxu0 0
  %827 = vmatpush1.bf16.msra.mxu0 %v583
  %828 = vmatprep.subr.bf16.mxu0 0
  %829 = vmatpush1.bf16.msra.mxu0 %v584
  %830 = vmatprep.subr.bf16.mxu0 0
  %831 = vmatpush1.bf16.msra.mxu0 %v585
  %832 = vmatprep.subr.bf16.mxu0 0
  %833 = vmatpush1.bf16.msra.mxu0 %v586
  %834 = vmatprep.subr.bf16.mxu0 0
  %835 = vmatpush1.bf16.msra.mxu0 %v587
  %836 = vmatprep.subr.bf16.mxu0 0
  %837 = vmatpush1.bf16.msra.mxu0 %v588
  %838 = vmatprep.subr.bf16.mxu0 0
  %839 = vmatpush1.bf16.msra.mxu0 %v589
  %840 = vmatprep.subr.bf16.mxu0 0
  %841 = vmatpush1.bf16.msra.mxu0 0
  %842 = vmatprep.subr.bf16.mxu0 0
  %843 = vmatpush1.bf16.msra.mxu0 0
  %844 = vmatprep.subr.bf16.mxu0 0
  %845 = vmatpush1.bf16.msra.mxu0 0
  %846 = vmatprep.subr.bf16.mxu0 0
  %847 = vmatpush1.bf16.msra.mxu0 0
  %848 = vmatprep.subr.bf16.mxu0 0
  %849 = vmatpush1.bf16.msra.mxu0 0
  %850 = vmatprep.subr.bf16.mxu0 0
  %851 = vmatpush1.bf16.msra.mxu0 0
  %852 = vmatprep.subr.bf16.mxu0 0
  %853 = vmatpush1.bf16.msra.mxu0 0
  %854 = vmatprep.subr.bf16.mxu0 0
  %855 = vmatpush1.bf16.msra.mxu0 0
  %856 = vmatprep.mubr.bf16.mxu0 0
  %857 = vmatmul.mubr.bf16.gmra.mrb[0].mxu0 %v314
  %v858 = vpop.f32.mrb[0].mxu0
  %v859 = vadd.f32 %v762, %v858
  %v860 = vpop.f32.mrb[0].mxu0
  %v861 = vpop.f32.mrb[0].mxu0
  %v862 = vadd.f32 %v765, %v861
  %v863 = vpop.f32.mrb[0].mxu0
  %864 = vmatprep.mubr.bf16.mxu0 0
  %865 = vmatmul.mubr.bf16.gmra.mrb[0].mxu0 %v319
  %v866 = vpop.f32.mrb[0].mxu0
  %v867 = vadd.f32 %v770, %v866
  %v868 = vpop.f32.mrb[0].mxu0
  %v869 = vpop.f32.mrb[0].mxu0
  %v870 = vadd.f32 %v773, %v869
  %v871 = vpop.f32.mrb[0].mxu0
  %872 = vmatprep.mubr.bf16.mxu0 0
  %873 = vmatmul.mubr.bf16.gmra.mrb[0].mxu0 %v324
  %v874 = vpop.f32.mrb[0].mxu0
  %v875 = vadd.f32 %v778, %v874
  %v876 = vpop.f32.mrb[0].mxu0
  %v877 = vpop.f32.mrb[0].mxu0
  %v878 = vadd.f32 %v781, %v877
  %v879 = vpop.f32.mrb[0].mxu0
  %880 = vmatprep.mubr.bf16.mxu0 0
  %881 = vmatmul.mubr.bf16.gmra.mrb[0].mxu0 %v329
  %v882 = vpop.f32.mrb[0].mxu0
  %v883 = vadd.f32 %v786, %v882
  %v884 = vpop.f32.mrb[0].mxu0
  %v885 = vpop.f32.mrb[0].mxu0
  %v886 = vadd.f32 %v789, %v885
  %v887 = vpop.f32.mrb[0].mxu0
  %888 = vmatprep.mubr.bf16.mxu0 0
  %889 = vmatmul.mubr.bf16.gmra.mrb[0].mxu0 %v334
  %v890 = vpop.f32.mrb[0].mxu0
  %v891 = vadd.f32 %v794, %v890
  %v892 = vpop.f32.mrb[0].mxu0
  %v893 = vpop.f32.mrb[0].mxu0
  %v894 = vadd.f32 %v797, %v893
  %v895 = vpop.f32.mrb[0].mxu0
  %896 = vmatprep.mubr.bf16.mxu0 0
  %897 = vmatmul.mubr.bf16.gmra.mrb[0].mxu0 %v339
  %v898 = vpop.f32.mrb[0].mxu0
  %v899 = vadd.f32 %v802, %v898
  %v900 = vpop.f32.mrb[0].mxu0
  %v901 = vpop.f32.mrb[0].mxu0
  %v902 = vadd.f32 %v805, %v901
  %v903 = vpop.f32.mrb[0].mxu0
  %904 = vmatprep.mubr.bf16.mxu0 0
  %905 = vmatmul.mubr.bf16.gmra.mrb[0].mxu0 %v344
  %v906 = vpop.f32.mrb[0].mxu0
  %v907 = vadd.f32 %v810, %v906
  %v908 = vpop.f32.mrb[0].mxu0
  %v909 = vpop.f32.mrb[0].mxu0
  %v910 = vadd.f32 %v813, %v909
  %v911 = vpop.f32.mrb[0].mxu0
  %912 = vmatprep.mubr.bf16.mxu0 0
  %913 = vmatmul.mubr.bf16.gmra.mrb[0].mxu0 %v349
  %v914 = vpop.f32.mrb[0].mxu0
  %v915 = vadd.f32 %v818, %v914
  %v916 = vpop.f32.mrb[0].mxu0
  %v917 = vpop.f32.mrb[0].mxu0
  %v918 = vadd.f32 %v821, %v917
  %v919 = vpop.f32.mrb[0].mxu0
  %920 = vdwg.mxu0
  %v921 = vadd.f32 %v38, %v859
  %v922 = vadd.f32 %v39, %v862
  %v923 = vadd.f32 %v40, %v867
  %v924 = vadd.f32 %v41, %v870
  %v925 = vadd.f32 %v42, %v875
  %v926 = vadd.f32 %v43, %v878
  %v927 = vadd.f32 %v44, %v883
  %v928 = vadd.f32 %v45, %v886
  %v929 = vadd.f32 %v46, %v891
  %v930 = vadd.f32 %v47, %v894
  %v931 = vadd.f32 %v48, %v899
  %v932 = vadd.f32 %v49, %v902
  %v933 = vadd.f32 %v50, %v907
  %v934 = vadd.f32 %v51, %v910
  %v935 = vadd.f32 %v52, %v915
  %v936 = vadd.f32 %v53, %v918
  %937 = vst [vmem:[#allocation2] sm:$0xff] %v921
  %938 = vst [vmem:[#allocation2 + $0x8] sm:$0xff] %v922
  %939 = vst [vmem:[#allocation2 + $0x10] sm:$0xff] %v923
  %940 = vst [vmem:[#allocation2 + $0x18] sm:$0xff] %v924
  %941 = vst [vmem:[#allocation2 + $0x20] sm:$0xff] %v925
  %942 = vst [vmem:[#allocation2 + $0x28] sm:$0xff] %v926
  %943 = vst [vmem:[#allocation2 + $0x30] sm:$0xff] %v927
  %944 = vst [vmem:[#allocation2 + $0x38] sm:$0xff] %v928
  %945 = vst [vmem:[#allocation2 + $0x40] sm:$0xff] %v929
  %946 = vst [vmem:[#allocation2 + $0x48] sm:$0xff] %v930
  %947 = vst [vmem:[#allocation2 + $0x50] sm:$0xff] %v931
  %948 = vst [vmem:[#allocation2 + $0x58] sm:$0xff] %v932
  %949 = vst [vmem:[#allocation2 + $0x60] sm:$0xff] %v933
  %950 = vst [vmem:[#allocation2 + $0x68] sm:$0xff] %v934
  %951 = vst [vmem:[#allocation2 + $0x70] sm:$0xff] %v935
  %952 = vst [vmem:[#allocation2 + $0x78] sm:$0xff] %v936
  // Predicated region
  $region22: #{forward.20} parent=0 // pred_check
    %p953 = pneg %p18
  $region23: #{forward.20} parent=0 // pred_check_branch
    %955 = sbr.rel (%p953) target = $region25
  $region24: #{forward.20} parent=0 // pred_region
    %v956 = vld [vmem:[#allocation2] sm:$0xff]
    %v957 = vld [vmem:[#allocation2 + $0x8] sm:$0xff]
    %v958 = vld [vmem:[#allocation2 + $0x10] sm:$0xff]
    %v959 = vld [vmem:[#allocation2 + $0x18] sm:$0xff]
    %v960 = vld [vmem:[#allocation2 + $0x20] sm:$0xff]
    %v961 = vld [vmem:[#allocation2 + $0x28] sm:$0xff]
    %v962 = vld [vmem:[#allocation2 + $0x30] sm:$0xff]
    %v963 = vld [vmem:[#allocation2 + $0x38] sm:$0xff]
    %v964 = vld [vmem:[#allocation2 + $0x40] sm:$0xff]
    %v965 = vld [vmem:[#allocation2 + $0x48] sm:$0xff]
    %v966 = vld [vmem:[#allocation2 + $0x50] sm:$0xff]
    %v967 = vld [vmem:[#allocation2 + $0x58] sm:$0xff]
    %v968 = vld [vmem:[#allocation2 + $0x60] sm:$0xff]
    %v969 = vld [vmem:[#allocation2 + $0x68] sm:$0xff]
    %v970 = vld [vmem:[#allocation2 + $0x70] sm:$0xff]
    %v971 = vld [vmem:[#allocation2 + $0x78] sm:$0xff]
    %v972 = vld [vmem:[%s2] sm:$0x1]
    %v974 = vlaneseq
    %v975 = vshrl.u32 %v974, 7
    %v976 = vsub.s32 0, %v975
    %v977 = vrot.slane %v972, %v976
    %v979 = vmul.f32 %v956, %v977
    %v980 = vmul.f32 %v957, %v977
    %v981 = vmul.f32 %v958, %v977
    %v982 = vmul.f32 %v959, %v977
    %v983 = vmul.f32 %v960, %v977
    %v984 = vmul.f32 %v961, %v977
    %v985 = vmul.f32 %v962, %v977
    %v986 = vmul.f32 %v963, %v977
    %v987 = vmul.f32 %v964, %v977
    %v988 = vmul.f32 %v965, %v977
    %v989 = vmul.f32 %v966, %v977
    %v990 = vmul.f32 %v967, %v977
    %v991 = vmul.f32 %v968, %v977
    %v992 = vmul.f32 %v969, %v977
    %v993 = vmul.f32 %v970, %v977
    %v994 = vmul.f32 %v971, %v977
    %v995 = vld [vmem:[%s3] sm:$0x1]
    %v997 = vlaneseq
    %v998 = vshrl.u32 %v997, 7
    %v999 = vsub.s32 0, %v998
    %v1000 = vrot.slane %v995, %v999
    %v1002 = vadd.f32 %v979, %v1000
    %v1003 = vadd.f32 %v980, %v1000
    %v1004 = vadd.f32 %v981, %v1000
    %v1005 = vadd.f32 %v982, %v1000
    %v1006 = vadd.f32 %v983, %v1000
    %v1007 = vadd.f32 %v984, %v1000
    %v1008 = vadd.f32 %v985, %v1000
    %v1009 = vadd.f32 %v986, %v1000
    %v1010 = vadd.f32 %v987, %v1000
    %v1011 = vadd.f32 %v988, %v1000
    %v1012 = vadd.f32 %v989, %v1000
    %v1013 = vadd.f32 %v990, %v1000
    %v1014 = vadd.f32 %v991, %v1000
    %v1015 = vadd.f32 %v992, %v1000
    %v1016 = vadd.f32 %v993, %v1000
    %v1017 = vadd.f32 %v994, %v1000
    %v1018 = vmax.f32 %v1002, 0.0
    %v1019 = vmax.f32 %v1003, 0.0
    %v1020 = vmax.f32 %v1004, 0.0
    %v1021 = vmax.f32 %v1005, 0.0
    %v1022 = vmax.f32 %v1006, 0.0
    %v1023 = vmax.f32 %v1007, 0.0
    %v1024 = vmax.f32 %v1008, 0.0
    %v1025 = vmax.f32 %v1009, 0.0
    %v1026 = vmax.f32 %v1010, 0.0
    %v1027 = vmax.f32 %v1011, 0.0
    %v1028 = vmax.f32 %v1012, 0.0
    %v1029 = vmax.f32 %v1013, 0.0
    %v1030 = vmax.f32 %v1014, 0.0
    %v1031 = vmax.f32 %v1015, 0.0
    %v1032 = vmax.f32 %v1016, 0.0
    %v1033 = vmax.f32 %v1017, 0.0
    %v1034 = vpack.c.bf16 %v1019, %v1018
    %v1035 = vpack.c.bf16 %v1021, %v1020
    %v1036 = vpack.c.bf16 %v1023, %v1022
    %v1037 = vpack.c.bf16 %v1025, %v1024
    %v1038 = vpack.c.bf16 %v1027, %v1026
    %v1039 = vpack.c.bf16 %v1029, %v1028
    %v1040 = vpack.c.bf16 %v1031, %v1030
    %v1041 = vpack.c.bf16 %v1033, %v1032
    %v1050 = vunpack.c.l.b16 %v1034
    %v1051 = vunpack.c.h.b16 %v1034
    %v1052 = vunpack.c.l.b16 %v1035
    %v1053 = vunpack.c.h.b16 %v1035
    %v1054 = vunpack.c.l.b16 %v1036
    %v1055 = vunpack.c.h.b16 %v1036
    %v1056 = vunpack.c.l.b16 %v1037
    %v1057 = vunpack.c.h.b16 %v1037
    %v1058 = vunpack.c.l.b16 %v1038
    %v1059 = vunpack.c.h.b16 %v1038
    %v1060 = vunpack.c.l.b16 %v1039
    %v1061 = vunpack.c.h.b16 %v1039
    %v1062 = vunpack.c.l.b16 %v1040
    %v1063 = vunpack.c.h.b16 %v1040
    %v1064 = vunpack.c.l.b16 %v1041
    %v1065 = vunpack.c.h.b16 %v1041
    %v1066 = vpack.c.b16 %v1050, %v1050
    %v1067 = vpack.c.b16 %v1051, %v1051
    %v1068 = vpack.c.b16 %v1052, %v1052
    %v1069 = vpack.c.b16 %v1053, %v1053
    %v1070 = vpack.c.b16 %v1054, %v1054
    %v1071 = vpack.c.b16 %v1055, %v1055
    %v1072 = vpack.c.b16 %v1056, %v1056
    %v1073 = vpack.c.b16 %v1057, %v1057
    %v1074 = vpack.c.b16 %v1058, %v1058
    %v1075 = vpack.c.b16 %v1059, %v1059
    %v1076 = vpack.c.b16 %v1060, %v1060
    %v1077 = vpack.c.b16 %v1061, %v1061
    %v1078 = vpack.c.b16 %v1062, %v1062
    %v1079 = vpack.c.b16 %v1063, %v1063
    %v1080 = vpack.c.b16 %v1064, %v1064
    %v1081 = vpack.c.b16 %v1065, %v1065
    %1098 = vst [vmem:[%s4] sm:$0xf] %v1066
    %1099 = vst [vmem:[%s4 + $0x4] sm:$0xf] %v1067
    %1100 = vst [vmem:[%s4 + $0x8] sm:$0xf] %v1068
    %1101 = vst [vmem:[%s4 + $0xc] sm:$0xf] %v1069
    %1102 = vst [vmem:[%s4 + $0x10] sm:$0xf] %v1070
    %1103 = vst [vmem:[%s4 + $0x14] sm:$0xf] %v1071
    %1104 = vst [vmem:[%s4 + $0x18] sm:$0xf] %v1072
    %1105 = vst [vmem:[%s4 + $0x1c] sm:$0xf] %v1073
    %1106 = vst [vmem:[%s4 + $0x20] sm:$0xf] %v1074
    %1107 = vst [vmem:[%s4 + $0x24] sm:$0xf] %v1075
    %1108 = vst [vmem:[%s4 + $0x28] sm:$0xf] %v1076
    %1109 = vst [vmem:[%s4 + $0x2c] sm:$0xf] %v1077
    %1110 = vst [vmem:[%s4 + $0x30] sm:$0xf] %v1078
    %1111 = vst [vmem:[%s4 + $0x34] sm:$0xf] %v1079
    %1112 = vst [vmem:[%s4 + $0x38] sm:$0xf] %v1080
    %1113 = vst [vmem:[%s4 + $0x3c] sm:$0xf] %v1081
  $region25: #{forward.20} parent=0 // pred_fallthru
    _
  // Predicated region
  $region26: #{forward.20} parent=0 // pred_check
    _
  $region27: #{forward.20} parent=0 // pred_check_branch
    %1115 = sbr.rel (0) target = $region29
  $region28: #{forward.20} parent=0 // pred_region
    _
  $region29: #{forward.20} parent=0 // pred_fallthru
    _
  // Predicated region
  $region30: #{forward.20} parent=0 // pred_check
    _
  $region31: #{forward.20} parent=0 // pred_check_branch
    %1117 = sbr.rel (0) target = $region33
  $region32: #{forward.20} parent=0 // pred_region
    _
  $region33: #{forward.20} parent=0 // pred_fallthru
    _

// kernel: forward.21
$region0: #{forward.21}
  #allocation0 [shape = 'u32[]', space=smem, size = 0x4, offset = 0x4, fixed_abs, tag = 'smem constant byte address 0x4 - core index']
  #allocation1 [shape = 'u32[144,128]{1,0:T(1,128)}', space=vmem, size = 0x12000, scoped, tag = 'internal scratch']
  #allocation2 [shape = 'f32[32,128]{1,0:T(8,128)}', space=vmem, size = 0x4000, scoped, tag = 'scratch operand']
  %s0 = inlined_call_operand.vmem [shape: bf16[32,640], index: 0, kind: input, shape index: {}]
  %s1 = inlined_call_operand.vmem [shape: bf16[640,128], index: 1, kind: input, shape index: {}]
  %s2 = inlined_call_operand.vmem [shape: f32[1,128], index: 2, kind: input, shape index: {}]
  %s3 = inlined_call_operand.vmem [shape: f32[1,128], index: 3, kind: input, shape index: {}]
  %s4 = inlined_call_operand.vmem [shape: bf16[32,128], index: 4, kind: output, shape index: {}]
  %s5 = sld [smem:[#allocation0]]
  $region34: #{forward.21} parent=0
    _
  %s7 = ssub.s32 1, %s5
  %s8 = scalar_select 0, %s7, %s5
  // Predicated region
  $region2: #{forward.21} parent=0 // pred_check
    _
  $region3: #{forward.21} parent=0 // pred_check_branch
    %10 = sbr.rel (0) target = $region5
  $region4: #{forward.21} parent=0 // pred_region
    _
  $region5: #{forward.21} parent=0 // pred_fallthru
    _
  // Predicated region
  $region6: #{forward.21} parent=0 // pred_check
    _
  $region7: #{forward.21} parent=0 // pred_check_branch
    %12 = sbr.rel (0) target = $region9
  $region8: #{forward.21} parent=0 // pred_region
    _
  $region9: #{forward.21} parent=0 // pred_fallthru
    _
  // Predicated region
  $region10: #{forward.21} parent=0 // pred_check
    _
  $region11: #{forward.21} parent=0 // pred_check_branch
    %14 = sbr.rel (0) target = $region13
  $region12: #{forward.21} parent=0 // pred_region
    _
  $region13: #{forward.21} parent=0 // pred_fallthru
    _
  // Predicated region
  $region14: #{forward.21} parent=0 // pred_check
    _
  $region15: #{forward.21} parent=0 // pred_check_branch
    %16 = sbr.rel (0) target = $region17
  $region16: #{forward.21} parent=0 // pred_region
    _
  $region17: #{forward.21} parent=0 // pred_fallthru
    _
  %p18 = scmp.eq.s32.totalorder 0, 0
  // Predicated region
  $region18: #{forward.21} parent=0 // pred_check
    %p19 = pneg %p18
  $region19: #{forward.21} parent=0 // pred_check_branch
    %21 = sbr.rel (%p19) target = $region21
  $region20: #{forward.21} parent=0 // pred_region
    %22 = vst [vmem:[#allocation2] sm:$0xff] 0.0
    %23 = vst [vmem:[#allocation2 + $0x8] sm:$0xff] 0.0
    %24 = vst [vmem:[#allocation2 + $0x10] sm:$0xff] 0.0
    %25 = vst [vmem:[#allocation2 + $0x18] sm:$0xff] 0.0
  $region21: #{forward.21} parent=0 // pred_fallthru
    _
  %v26 = vld [vmem:[#allocation2] sm:$0xff]
  %v27 = vld [vmem:[#allocation2 + $0x8] sm:$0xff]
  %v28 = vld [vmem:[#allocation2 + $0x10] sm:$0xff]
  %v29 = vld [vmem:[#allocation2 + $0x18] sm:$0xff]
  %v30 = vld [vmem:[%s0] sm:$0xff]
  %v31 = vld [vmem:[%s0 + $0x8] sm:$0xff]
  %v32 = vld [vmem:[%s0 + $0x10] sm:$0xf]
  %v33 = vld [vmem:[%s0 + $0x14] sm:$0xff]
  %v34 = vld [vmem:[%s0 + $0x1c] sm:$0xff]
  %v35 = vld [vmem:[%s0 + $0x24] sm:$0xf]
  %v36 = vld [vmem:[%s0 + $0x28] sm:$0xff]
  %v37 = vld [vmem:[%s0 + $0x30] sm:$0xff]
  %v38 = vld [vmem:[%s0 + $0x38] sm:$0xf]
  %v39 = vld [vmem:[%s0 + $0x3c] sm:$0xff]
  %v40 = vld [vmem:[%s0 + $0x44] sm:$0xff]
  %v41 = vld [vmem:[%s0 + $0x4c] sm:$0xf]
  %v42 = vld [vmem:[%s1] sm:$0xf]
  %v43 = vld [vmem:[%s1 + $0x4] sm:$0xf]
  %v44 = vld [vmem:[%s1 + $0x8] sm:$0xf]
  %v45 = vld [vmem:[%s1 + $0xc] sm:$0xf]
  %v46 = vld [vmem:[%s1 + $0x10] sm:$0xf]
  %v47 = vld [vmem:[%s1 + $0x14] sm:$0xf]
  %v48 = vld [vmem:[%s1 + $0x18] sm:$0xf]
  %v49 = vld [vmem:[%s1 + $0x1c] sm:$0xf]
  %v50 = vld [vmem:[%s1 + $0x20] sm:$0xf]
  %v51 = vld [vmem:[%s1 + $0x24] sm:$0xf]
  %v52 = vld [vmem:[%s1 + $0x28] sm:$0xf]
  %v53 = vld [vmem:[%s1 + $0x2c] sm:$0xf]
  %v54 = vld [vmem:[%s1 + $0x30] sm:$0xf]
  %v55 = vld [vmem:[%s1 + $0x34] sm:$0xf]
  %v56 = vld [vmem:[%s1 + $0x38] sm:$0xf]
  %v57 = vld [vmem:[%s1 + $0x3c] sm:$0xf]
  %v58 = vld [vmem:[%s1 + $0x40] sm:$0xf]
  %v59 = vld [vmem:[%s1 + $0x44] sm:$0xf]
  %v60 = vld [vmem:[%s1 + $0x48] sm:$0xf]
  %v61 = vld [vmem:[%s1 + $0x4c] sm:$0xf]
  %v62 = vld [vmem:[%s1 + $0x50] sm:$0xf]
  %v63 = vld [vmem:[%s1 + $0x54] sm:$0xf]
  %v64 = vld [vmem:[%s1 + $0x58] sm:$0xf]
  %v65 = vld [vmem:[%s1 + $0x5c] sm:$0xf]
  %v66 = vld [vmem:[%s1 + $0x60] sm:$0xf]
  %v67 = vld [vmem:[%s1 + $0x64] sm:$0xf]
  %v68 = vld [vmem:[%s1 + $0x68] sm:$0xf]
  %v69 = vld [vmem:[%s1 + $0x6c] sm:$0xf]
  %v70 = vld [vmem:[%s1 + $0x70] sm:$0xf]
  %v71 = vld [vmem:[%s1 + $0x74] sm:$0xf]
  %v72 = vld [vmem:[%s1 + $0x78] sm:$0xf]
  %v73 = vld [vmem:[%s1 + $0x7c] sm:$0xf]
  %v74 = vld [vmem:[%s1 + $0x80] sm:$0xf]
  %v75 = vld [vmem:[%s1 + $0x84] sm:$0xf]
  %v76 = vld [vmem:[%s1 + $0x88] sm:$0xf]
  %v77 = vld [vmem:[%s1 + $0x8c] sm:$0xf]
  %v78 = vld [vmem:[%s1 + $0x90] sm:$0xf]
  %v79 = vld [vmem:[%s1 + $0x94] sm:$0xf]
  %v80 = vld [vmem:[%s1 + $0x98] sm:$0xf]
  %v81 = vld [vmem:[%s1 + $0x9c] sm:$0xf]
  %v82 = vld [vmem:[%s1 + $0xa0] sm:$0xf]
  %v83 = vld [vmem:[%s1 + $0xa4] sm:$0xf]
  %v84 = vld [vmem:[%s1 + $0xa8] sm:$0xf]
  %v85 = vld [vmem:[%s1 + $0xac] sm:$0xf]
  %v86 = vld [vmem:[%s1 + $0xb0] sm:$0xf]
  %v87 = vld [vmem:[%s1 + $0xb4] sm:$0xf]
  %v88 = vld [vmem:[%s1 + $0xb8] sm:$0xf]
  %v89 = vld [vmem:[%s1 + $0xbc] sm:$0xf]
  %v90 = vld [vmem:[%s1 + $0xc0] sm:$0xf]
  %v91 = vld [vmem:[%s1 + $0xc4] sm:$0xf]
  %v92 = vld [vmem:[%s1 + $0xc8] sm:$0xf]
  %v93 = vld [vmem:[%s1 + $0xcc] sm:$0xf]
  %v94 = vld [vmem:[%s1 + $0xd0] sm:$0xf]
  %v95 = vld [vmem:[%s1 + $0xd4] sm:$0xf]
  %v96 = vld [vmem:[%s1 + $0xd8] sm:$0xf]
  %v97 = vld [vmem:[%s1 + $0xdc] sm:$0xf]
  %v98 = vld [vmem:[%s1 + $0xe0] sm:$0xf]
  %v99 = vld [vmem:[%s1 + $0xe4] sm:$0xf]
  %v100 = vld [vmem:[%s1 + $0xe8] sm:$0xf]
  %v101 = vld [vmem:[%s1 + $0xec] sm:$0xf]
  %v102 = vld [vmem:[%s1 + $0xf0] sm:$0xf]
  %v103 = vld [vmem:[%s1 + $0xf4] sm:$0xf]
  %v104 = vld [vmem:[%s1 + $0xf8] sm:$0xf]
  %v105 = vld [vmem:[%s1 + $0xfc] sm:$0xf]
  %v106 = vld [vmem:[%s1 + $0x100] sm:$0xf]
  %v107 = vld [vmem:[%s1 + $0x104] sm:$0xf]
  %v108 = vld [vmem:[%s1 + $0x108] sm:$0xf]
  %v109 = vld [vmem:[%s1 + $0x10c] sm:$0xf]
  %v110 = vld [vmem:[%s1 + $0x110] sm:$0xf]
  %v111 = vld [vmem:[%s1 + $0x114] sm:$0xf]
  %v112 = vld [vmem:[%s1 + $0x118] sm:$0xf]
  %v113 = vld [vmem:[%s1 + $0x11c] sm:$0xf]
  %v114 = vld [vmem:[%s1 + $0x120] sm:$0xf]
  %v115 = vld [vmem:[%s1 + $0x124] sm:$0xf]
  %v116 = vld [vmem:[%s1 + $0x128] sm:$0xf]
  %v117 = vld [vmem:[%s1 + $0x12c] sm:$0xf]
  %v118 = vld [vmem:[%s1 + $0x130] sm:$0xf]
  %v119 = vld [vmem:[%s1 + $0x134] sm:$0xf]
  %v120 = vld [vmem:[%s1 + $0x138] sm:$0xf]
  %v121 = vld [vmem:[%s1 + $0x13c] sm:$0xf]
  %v134 = vunpack.c.l.b16 %v30
  %v135 = vunpack.c.h.b16 %v30
  %v136 = vunpack.c.l.b16 %v31
  %v137 = vunpack.c.h.b16 %v31
  %v138 = vunpack.c.l.b16 %v32
  %v139 = vunpack.c.l.b16 %v33
  %v140 = vunpack.c.h.b16 %v33
  %v141 = vunpack.c.l.b16 %v34
  %v142 = vunpack.c.h.b16 %v34
  %v143 = vunpack.c.l.b16 %v35
  %v144 = vunpack.c.l.b16 %v36
  %v145 = vunpack.c.h.b16 %v36
  %v146 = vunpack.c.l.b16 %v37
  %v147 = vunpack.c.h.b16 %v37
  %v148 = vunpack.c.l.b16 %v38
  %v149 = vunpack.c.l.b16 %v39
  %v150 = vunpack.c.h.b16 %v39
  %v151 = vunpack.c.l.b16 %v40
  %v152 = vunpack.c.h.b16 %v40
  %v153 = vunpack.c.l.b16 %v41
  %v154 = vpack.c.b16 %v139, %v134
  %v155 = vpack.c.b16 %v140, %v135
  %v156 = vpack.c.b16 %v141, %v136
  %v157 = vpack.c.b16 %v142, %v137
  %v158 = vpack.c.b16 %v143, %v138
  %v159 = vpack.c.b16 %v149, %v144
  %v160 = vpack.c.b16 %v150, %v145
  %v161 = vpack.c.b16 %v151, %v146
  %v162 = vpack.c.b16 %v152, %v147
  %v163 = vpack.c.b16 %v153, %v148
  %v254 = vunpack.c.l.b16 %v42
  %v255 = vunpack.c.l.b16 %v43
  %v256 = vunpack.c.l.b16 %v44
  %v257 = vunpack.c.l.b16 %v45
  %v258 = vunpack.c.l.b16 %v46
  %v259 = vunpack.c.l.b16 %v47
  %v260 = vunpack.c.l.b16 %v48
  %v261 = vunpack.c.l.b16 %v49
  %v262 = vunpack.c.l.b16 %v50
  %v263 = vunpack.c.l.b16 %v51
  %v264 = vunpack.c.l.b16 %v52
  %v265 = vunpack.c.l.b16 %v53
  %v266 = vunpack.c.l.b16 %v54
  %v267 = vunpack.c.l.b16 %v55
  %v268 = vunpack.c.l.b16 %v56
  %v269 = vunpack.c.l.b16 %v57
  %v270 = vunpack.c.l.b16 %v58
  %v271 = vunpack.c.l.b16 %v59
  %v272 = vunpack.c.l.b16 %v60
  %v273 = vunpack.c.l.b16 %v61
  %v274 = vunpack.c.l.b16 %v62
  %v275 = vunpack.c.l.b16 %v63
  %v276 = vunpack.c.l.b16 %v64
  %v277 = vunpack.c.l.b16 %v65
  %v278 = vunpack.c.l.b16 %v66
  %v279 = vunpack.c.l.b16 %v67
  %v280 = vunpack.c.l.b16 %v68
  %v281 = vunpack.c.l.b16 %v69
  %v282 = vunpack.c.l.b16 %v70
  %v283 = vunpack.c.l.b16 %v71
  %v284 = vunpack.c.l.b16 %v72
  %v285 = vunpack.c.l.b16 %v73
  %v286 = vunpack.c.l.b16 %v74
  %v287 = vunpack.c.l.b16 %v75
  %v288 = vunpack.c.l.b16 %v76
  %v289 = vunpack.c.l.b16 %v77
  %v290 = vunpack.c.l.b16 %v78
  %v291 = vunpack.c.l.b16 %v79
  %v292 = vunpack.c.l.b16 %v80
  %v293 = vunpack.c.l.b16 %v81
  %v294 = vunpack.c.l.b16 %v82
  %v295 = vunpack.c.l.b16 %v83
  %v296 = vunpack.c.l.b16 %v84
  %v297 = vunpack.c.l.b16 %v85
  %v298 = vunpack.c.l.b16 %v86
  %v299 = vunpack.c.l.b16 %v87
  %v300 = vunpack.c.l.b16 %v88
  %v301 = vunpack.c.l.b16 %v89
  %v302 = vunpack.c.l.b16 %v90
  %v303 = vunpack.c.l.b16 %v91
  %v304 = vunpack.c.l.b16 %v92
  %v305 = vunpack.c.l.b16 %v93
  %v306 = vunpack.c.l.b16 %v94
  %v307 = vunpack.c.l.b16 %v95
  %v308 = vunpack.c.l.b16 %v96
  %v309 = vunpack.c.l.b16 %v97
  %v310 = vunpack.c.l.b16 %v98
  %v311 = vunpack.c.l.b16 %v99
  %v312 = vunpack.c.l.b16 %v100
  %v313 = vunpack.c.l.b16 %v101
  %v314 = vunpack.c.l.b16 %v102
  %v315 = vunpack.c.l.b16 %v103
  %v316 = vunpack.c.l.b16 %v104
  %v317 = vunpack.c.l.b16 %v105
  %v318 = vunpack.c.l.b16 %v106
  %v319 = vunpack.c.l.b16 %v107
  %v320 = vunpack.c.l.b16 %v108
  %v321 = vunpack.c.l.b16 %v109
  %v322 = vunpack.c.l.b16 %v110
  %v323 = vunpack.c.l.b16 %v111
  %v324 = vunpack.c.l.b16 %v112
  %v325 = vunpack.c.l.b16 %v113
  %v326 = vunpack.c.l.b16 %v114
  %v327 = vunpack.c.l.b16 %v115
  %v328 = vunpack.c.l.b16 %v116
  %v329 = vunpack.c.l.b16 %v117
  %v330 = vunpack.c.l.b16 %v118
  %v331 = vunpack.c.l.b16 %v119
  %v332 = vunpack.c.l.b16 %v120
  %v333 = vunpack.c.l.b16 %v121
  %v334 = vpack.c.b16 %v255, %v254
  %v335 = vpack.c.b16 %v257, %v256
  %v336 = vpack.c.b16 %v259, %v258
  %v337 = vpack.c.b16 %v261, %v260
  %v338 = vpack.c.b16 %v263, %v262
  %v339 = vpack.c.b16 %v265, %v264
  %v340 = vpack.c.b16 %v267, %v266
  %v341 = vpack.c.b16 %v269, %v268
  %v342 = vpack.c.b16 %v271, %v270
  %v343 = vpack.c.b16 %v273, %v272
  %v344 = vpack.c.b16 %v275, %v274
  %v345 = vpack.c.b16 %v277, %v276
  %v346 = vpack.c.b16 %v279, %v278
  %v347 = vpack.c.b16 %v281, %v280
  %v348 = vpack.c.b16 %v283, %v282
  %v349 = vpack.c.b16 %v285, %v284
  %v350 = vpack.c.b16 %v287, %v286
  %v351 = vpack.c.b16 %v289, %v288
  %v352 = vpack.c.b16 %v291, %v290
  %v353 = vpack.c.b16 %v293, %v292
  %v354 = vpack.c.b16 %v295, %v294
  %v355 = vpack.c.b16 %v297, %v296
  %v356 = vpack.c.b16 %v299, %v298
  %v357 = vpack.c.b16 %v301, %v300
  %v358 = vpack.c.b16 %v303, %v302
  %v359 = vpack.c.b16 %v305, %v304
  %v360 = vpack.c.b16 %v307, %v306
  %v361 = vpack.c.b16 %v309, %v308
  %v362 = vpack.c.b16 %v311, %v310
  %v363 = vpack.c.b16 %v313, %v312
  %v364 = vpack.c.b16 %v315, %v314
  %v365 = vpack.c.b16 %v317, %v316
  %v366 = vpack.c.b16 %v319, %v318
  %v367 = vpack.c.b16 %v321, %v320
  %v368 = vpack.c.b16 %v323, %v322
  %v369 = vpack.c.b16 %v325, %v324
  %v370 = vpack.c.b16 %v327, %v326
  %v371 = vpack.c.b16 %v329, %v328
  %v372 = vpack.c.b16 %v331, %v330
  %v373 = vpack.c.b16 %v333, %v332
  %414 = vmatprep.subr.bf16.mxu0 0
  %415 = vmatpush1.bf16.msra.mxu0 %v334
  %416 = vmatprep.subr.bf16.mxu0 0
  %417 = vmatpush1.bf16.msra.mxu0 %v335
  %418 = vmatprep.subr.bf16.mxu0 0
  %419 = vmatpush1.bf16.msra.mxu0 %v336
  %420 = vmatprep.subr.bf16.mxu0 0
  %421 = vmatpush1.bf16.msra.mxu0 %v337
  %422 = vmatprep.subr.bf16.mxu0 0
  %423 = vmatpush1.bf16.msra.mxu0 %v338
  %424 = vmatprep.subr.bf16.mxu0 0
  %425 = vmatpush1.bf16.msra.mxu0 %v339
  %426 = vmatprep.subr.bf16.mxu0 0
  %427 = vmatpush1.bf16.msra.mxu0 %v340
  %428 = vmatprep.subr.bf16.mxu0 0
  %429 = vmatpush1.bf16.msra.mxu0 %v341
  %430 = vmatprep.subr.bf16.mxu0 0
  %431 = vmatpush1.bf16.msra.mxu0 %v342
  %432 = vmatprep.subr.bf16.mxu0 0
  %433 = vmatpush1.bf16.msra.mxu0 %v343
  %434 = vmatprep.subr.bf16.mxu0 0
  %435 = vmatpush1.bf16.msra.mxu0 %v344
  %436 = vmatprep.subr.bf16.mxu0 0
  %437 = vmatpush1.bf16.msra.mxu0 %v345
  %438 = vmatprep.subr.bf16.mxu0 0
  %439 = vmatpush1.bf16.msra.mxu0 %v346
  %440 = vmatprep.subr.bf16.mxu0 0
  %441 = vmatpush1.bf16.msra.mxu0 %v347
  %442 = vmatprep.subr.bf16.mxu0 0
  %443 = vmatpush1.bf16.msra.mxu0 %v348
  %444 = vmatprep.subr.bf16.mxu0 0
  %445 = vmatpush1.bf16.msra.mxu0 %v349
  %446 = vmatprep.mubr.bf16.mxu0 %v155
  %447 = vmatmul.mubr.bf16.gmra.mrb[0].mxu0 %v154
  %v448 = vpop.f32.mrb[0].mxu0
  %v449 = vadd.f32 0.0, %v448
  %v450 = vpop.f32.mrb[0].mxu0
  %v451 = vpop.f32.mrb[0].mxu0
  %v452 = vadd.f32 0.0, %v451
  %v453 = vpop.f32.mrb[0].mxu0
  %454 = vmatprep.mubr.bf16.mxu0 %v160
  %455 = vmatmul.mubr.bf16.gmra.mrb[0].mxu0 %v159
  %v456 = vpop.f32.mrb[0].mxu0
  %v457 = vadd.f32 0.0, %v456
  %v458 = vpop.f32.mrb[0].mxu0
  %v459 = vpop.f32.mrb[0].mxu0
  %v460 = vadd.f32 0.0, %v459
  %v461 = vpop.f32.mrb[0].mxu0
  %462 = vdwg.mxu0
  %463 = vmatprep.subr.bf16.mxu0 0
  %464 = vmatpush1.bf16.msra.mxu0 %v350
  %465 = vmatprep.subr.bf16.mxu0 0
  %466 = vmatpush1.bf16.msra.mxu0 %v351
  %467 = vmatprep.subr.bf16.mxu0 0
  %468 = vmatpush1.bf16.msra.mxu0 %v352
  %469 = vmatprep.subr.bf16.mxu0 0
  %470 = vmatpush1.bf16.msra.mxu0 %v353
  %471 = vmatprep.subr.bf16.mxu0 0
  %472 = vmatpush1.bf16.msra.mxu0 %v354
  %473 = vmatprep.subr.bf16.mxu0 0
  %474 = vmatpush1.bf16.msra.mxu0 %v355
  %475 = vmatprep.subr.bf16.mxu0 0
  %476 = vmatpush1.bf16.msra.mxu0 %v356
  %477 = vmatprep.subr.bf16.mxu0 0
  %478 = vmatpush1.bf16.msra.mxu0 %v357
  %479 = vmatprep.subr.bf16.mxu0 0
  %480 = vmatpush1.bf16.msra.mxu0 %v358
  %481 = vmatprep.subr.bf16.mxu0 0
  %482 = vmatpush1.bf16.msra.mxu0 %v359
  %483 = vmatprep.subr.bf16.mxu0 0
  %484 = vmatpush1.bf16.msra.mxu0 %v360
  %485 = vmatprep.subr.bf16.mxu0 0
  %486 = vmatpush1.bf16.msra.mxu0 %v361
  %487 = vmatprep.subr.bf16.mxu0 0
  %488 = vmatpush1.bf16.msra.mxu0 %v362
  %489 = vmatprep.subr.bf16.mxu0 0
  %490 = vmatpush1.bf16.msra.mxu0 %v363
  %491 = vmatprep.subr.bf16.mxu0 0
  %492 = vmatpush1.bf16.msra.mxu0 %v364
  %493 = vmatprep.subr.bf16.mxu0 0
  %494 = vmatpush1.bf16.msra.mxu0 %v365
  %495 = vmatprep.mubr.bf16.mxu0 %v157
  %496 = vmatmul.mubr.bf16.gmra.mrb[0].mxu0 %v156
  %v497 = vpop.f32.mrb[0].mxu0
  %v498 = vadd.f32 %v449, %v497
  %v499 = vpop.f32.mrb[0].mxu0
  %v500 = vpop.f32.mrb[0].mxu0
  %v501 = vadd.f32 %v452, %v500
  %v502 = vpop.f32.mrb[0].mxu0
  %503 = vmatprep.mubr.bf16.mxu0 %v162
  %504 = vmatmul.mubr.bf16.gmra.mrb[0].mxu0 %v161
  %v505 = vpop.f32.mrb[0].mxu0
  %v506 = vadd.f32 %v457, %v505
  %v507 = vpop.f32.mrb[0].mxu0
  %v508 = vpop.f32.mrb[0].mxu0
  %v509 = vadd.f32 %v460, %v508
  %v510 = vpop.f32.mrb[0].mxu0
  %511 = vdwg.mxu0
  %512 = vmatprep.subr.bf16.mxu0 0
  %513 = vmatpush1.bf16.msra.mxu0 %v366
  %514 = vmatprep.subr.bf16.mxu0 0
  %515 = vmatpush1.bf16.msra.mxu0 %v367
  %516 = vmatprep.subr.bf16.mxu0 0
  %517 = vmatpush1.bf16.msra.mxu0 %v368
  %518 = vmatprep.subr.bf16.mxu0 0
  %519 = vmatpush1.bf16.msra.mxu0 %v369
  %520 = vmatprep.subr.bf16.mxu0 0
  %521 = vmatpush1.bf16.msra.mxu0 %v370
  %522 = vmatprep.subr.bf16.mxu0 0
  %523 = vmatpush1.bf16.msra.mxu0 %v371
  %524 = vmatprep.subr.bf16.mxu0 0
  %525 = vmatpush1.bf16.msra.mxu0 %v372
  %526 = vmatprep.subr.bf16.mxu0 0
  %527 = vmatpush1.bf16.msra.mxu0 %v373
  %528 = vmatprep.subr.bf16.mxu0 0
  %529 = vmatpush1.bf16.msra.mxu0 0
  %530 = vmatprep.subr.bf16.mxu0 0
  %531 = vmatpush1.bf16.msra.mxu0 0
  %532 = vmatprep.subr.bf16.mxu0 0
  %533 = vmatpush1.bf16.msra.mxu0 0
  %534 = vmatprep.subr.bf16.mxu0 0
  %535 = vmatpush1.bf16.msra.mxu0 0
  %536 = vmatprep.subr.bf16.mxu0 0
  %537 = vmatpush1.bf16.msra.mxu0 0
  %538 = vmatprep.subr.bf16.mxu0 0
  %539 = vmatpush1.bf16.msra.mxu0 0
  %540 = vmatprep.subr.bf16.mxu0 0
  %541 = vmatpush1.bf16.msra.mxu0 0
  %542 = vmatprep.subr.bf16.mxu0 0
  %543 = vmatpush1.bf16.msra.mxu0 0
  %544 = vmatprep.mubr.bf16.mxu0 0
  %545 = vmatmul.mubr.bf16.gmra.mrb[0].mxu0 %v158
  %v546 = vpop.f32.mrb[0].mxu0
  %v547 = vadd.f32 %v498, %v546
  %v548 = vpop.f32.mrb[0].mxu0
  %v549 = vpop.f32.mrb[0].mxu0
  %v550 = vadd.f32 %v501, %v549
  %v551 = vpop.f32.mrb[0].mxu0
  %552 = vmatprep.mubr.bf16.mxu0 0
  %553 = vmatmul.mubr.bf16.gmra.mrb[0].mxu0 %v163
  %v554 = vpop.f32.mrb[0].mxu0
  %v555 = vadd.f32 %v506, %v554
  %v556 = vpop.f32.mrb[0].mxu0
  %v557 = vpop.f32.mrb[0].mxu0
  %v558 = vadd.f32 %v509, %v557
  %v559 = vpop.f32.mrb[0].mxu0
  %560 = vdwg.mxu0
  %v561 = vadd.f32 %v26, %v547
  %v562 = vadd.f32 %v27, %v550
  %v563 = vadd.f32 %v28, %v555
  %v564 = vadd.f32 %v29, %v558
  %565 = vst [vmem:[#allocation2] sm:$0xff] %v561
  %566 = vst [vmem:[#allocation2 + $0x8] sm:$0xff] %v562
  %567 = vst [vmem:[#allocation2 + $0x10] sm:$0xff] %v563
  %568 = vst [vmem:[#allocation2 + $0x18] sm:$0xff] %v564
  // Predicated region
  $region22: #{forward.21} parent=0 // pred_check
    %p569 = pneg %p18
  $region23: #{forward.21} parent=0 // pred_check_branch
    %571 = sbr.rel (%p569) target = $region25
  $region24: #{forward.21} parent=0 // pred_region
    %v572 = vld [vmem:[#allocation2] sm:$0xff]
    %v573 = vld [vmem:[#allocation2 + $0x8] sm:$0xff]
    %v574 = vld [vmem:[#allocation2 + $0x10] sm:$0xff]
    %v575 = vld [vmem:[#allocation2 + $0x18] sm:$0xff]
    %v576 = vld [vmem:[%s2] sm:$0x1]
    %v578 = vlaneseq
    %v579 = vshrl.u32 %v578, 7
    %v580 = vsub.s32 0, %v579
    %v581 = vrot.slane %v576, %v580
    %v583 = vmul.f32 %v572, %v581
    %v584 = vmul.f32 %v573, %v581
    %v585 = vmul.f32 %v574, %v581
    %v586 = vmul.f32 %v575, %v581
    %v587 = vld [vmem:[%s3] sm:$0x1]
    %v589 = vlaneseq
    %v590 = vshrl.u32 %v589, 7
    %v591 = vsub.s32 0, %v590
    %v592 = vrot.slane %v587, %v591
    %v594 = vadd.f32 %v583, %v592
    %v595 = vadd.f32 %v584, %v592
    %v596 = vadd.f32 %v585, %v592
    %v597 = vadd.f32 %v586, %v592
    %v598 = vmax.f32 %v594, 0.0
    %v599 = vmax.f32 %v595, 0.0
    %v600 = vmax.f32 %v596, 0.0
    %v601 = vmax.f32 %v597, 0.0
    %v602 = vpack.c.bf16 %v599, %v598
    %v603 = vpack.c.bf16 %v601, %v600
    %v606 = vunpack.c.l.b16 %v602
    %v607 = vunpack.c.h.b16 %v602
    %v608 = vunpack.c.l.b16 %v603
    %v609 = vunpack.c.h.b16 %v603
    %v610 = vpack.c.b16 %v606, %v606
    %v611 = vpack.c.b16 %v607, %v607
    %v612 = vpack.c.b16 %v608, %v608
    %v613 = vpack.c.b16 %v609, %v609
    %618 = vst [vmem:[%s4] sm:$0xf] %v610
    %619 = vst [vmem:[%s4 + $0x4] sm:$0xf] %v611
    %620 = vst [vmem:[%s4 + $0x8] sm:$0xf] %v612
    %621 = vst [vmem:[%s4 + $0xc] sm:$0xf] %v613
  $region25: #{forward.21} parent=0 // pred_fallthru
    _
  // Predicated region
  $region26: #{forward.21} parent=0 // pred_check
    _
  $region27: #{forward.21} parent=0 // pred_check_branch
    %623 = sbr.rel (0) target = $region29
  $region28: #{forward.21} parent=0 // pred_region
    _
  $region29: #{forward.21} parent=0 // pred_fallthru
    _
  // Predicated region
  $region30: #{forward.21} parent=0 // pred_check
    _
  $region31: #{forward.21} parent=0 // pred_check_branch
    %625 = sbr.rel (0) target = $region33
  $region32: #{forward.21} parent=0 // pred_region
    _
  $region33: #{forward.21} parent=0 // pred_fallthru
    _

// kernel: forward.23
$region0: #{forward.23}
  #allocation0 [shape = 'u32[]', space=smem, size = 0x4, offset = 0x4, fixed_abs, tag = 'smem constant byte address 0x4 - core index']
  #allocation1 [shape = 'u32[144,128]{1,0:T(1,128)}', space=vmem, size = 0x12000, scoped, tag = 'internal scratch']
  #allocation2 [shape = 'f32[16,128]{1,0:T(8,128)}', space=vmem, size = 0x2000, scoped, tag = 'scratch operand']
  %s0 = inlined_call_operand.vmem [shape: bf16[16,640], index: 0, kind: input, shape index: {}]
  %s1 = inlined_call_operand.vmem [shape: bf16[640,128], index: 1, kind: input, shape index: {}]
  %s2 = inlined_call_operand.vmem [shape: f32[1,128], index: 2, kind: input, shape index: {}]
  %s3 = inlined_call_operand.vmem [shape: f32[1,128], index: 3, kind: input, shape index: {}]
  %s4 = inlined_call_operand.vmem [shape: bf16[16,128], index: 4, kind: output, shape index: {}]
  %s5 = sld [smem:[#allocation0]]
  $region34: #{forward.23} parent=0
    _
  %s7 = ssub.s32 1, %s5
  %s8 = scalar_select 0, %s7, %s5
  // Predicated region
  $region2: #{forward.23} parent=0 // pred_check
    _
  $region3: #{forward.23} parent=0 // pred_check_branch
    %10 = sbr.rel (0) target = $region5
  $region4: #{forward.23} parent=0 // pred_region
    _
  $region5: #{forward.23} parent=0 // pred_fallthru
    _
  // Predicated region
  $region6: #{forward.23} parent=0 // pred_check
    _
  $region7: #{forward.23} parent=0 // pred_check_branch
    %12 = sbr.rel (0) target = $region9
  $region8: #{forward.23} parent=0 // pred_region
    _
  $region9: #{forward.23} parent=0 // pred_fallthru
    _
  // Predicated region
  $region10: #{forward.23} parent=0 // pred_check
    _
  $region11: #{forward.23} parent=0 // pred_check_branch
    %14 = sbr.rel (0) target = $region13
  $region12: #{forward.23} parent=0 // pred_region
    _
  $region13: #{forward.23} parent=0 // pred_fallthru
    _
  // Predicated region
  $region14: #{forward.23} parent=0 // pred_check
    _
  $region15: #{forward.23} parent=0 // pred_check_branch
    %16 = sbr.rel (0) target = $region17
  $region16: #{forward.23} parent=0 // pred_region
    _
  $region17: #{forward.23} parent=0 // pred_fallthru
    _
  %p18 = scmp.eq.s32.totalorder 0, 0
  // Predicated region
  $region18: #{forward.23} parent=0 // pred_check
    %p19 = pneg %p18
  $region19: #{forward.23} parent=0 // pred_check_branch
    %21 = sbr.rel (%p19) target = $region21
  $region20: #{forward.23} parent=0 // pred_region
    %22 = vst [vmem:[#allocation2] sm:$0xff] 0.0
    %23 = vst [vmem:[#allocation2 + $0x8] sm:$0xff] 0.0
  $region21: #{forward.23} parent=0 // pred_fallthru
    _
  %v24 = vld [vmem:[#allocation2] sm:$0xff]
  %v25 = vld [vmem:[#allocation2 + $0x8] sm:$0xff]
  %v26 = vld [vmem:[%s0] sm:$0xff]
  %v27 = vld [vmem:[%s0 + $0x8] sm:$0xff]
  %v28 = vld [vmem:[%s0 + $0x10] sm:$0xf]
  %v29 = vld [vmem:[%s0 + $0x14] sm:$0xff]
  %v30 = vld [vmem:[%s0 + $0x1c] sm:$0xff]
  %v31 = vld [vmem:[%s0 + $0x24] sm:$0xf]
  %v32 = vld [vmem:[%s1] sm:$0xf]
  %v33 = vld [vmem:[%s1 + $0x4] sm:$0xf]
  %v34 = vld [vmem:[%s1 + $0x8] sm:$0xf]
  %v35 = vld [vmem:[%s1 + $0xc] sm:$0xf]
  %v36 = vld [vmem:[%s1 + $0x10] sm:$0xf]
  %v37 = vld [vmem:[%s1 + $0x14] sm:$0xf]
  %v38 = vld [vmem:[%s1 + $0x18] sm:$0xf]
  %v39 = vld [vmem:[%s1 + $0x1c] sm:$0xf]
  %v40 = vld [vmem:[%s1 + $0x20] sm:$0xf]
  %v41 = vld [vmem:[%s1 + $0x24] sm:$0xf]
  %v42 = vld [vmem:[%s1 + $0x28] sm:$0xf]
  %v43 = vld [vmem:[%s1 + $0x2c] sm:$0xf]
  %v44 = vld [vmem:[%s1 + $0x30] sm:$0xf]
  %v45 = vld [vmem:[%s1 + $0x34] sm:$0xf]
  %v46 = vld [vmem:[%s1 + $0x38] sm:$0xf]
  %v47 = vld [vmem:[%s1 + $0x3c] sm:$0xf]
  %v48 = vld [vmem:[%s1 + $0x40] sm:$0xf]
  %v49 = vld [vmem:[%s1 + $0x44] sm:$0xf]
  %v50 = vld [vmem:[%s1 + $0x48] sm:$0xf]
  %v51 = vld [vmem:[%s1 + $0x4c] sm:$0xf]
  %v52 = vld [vmem:[%s1 + $0x50] sm:$0xf]
  %v53 = vld [vmem:[%s1 + $0x54] sm:$0xf]
  %v54 = vld [vmem:[%s1 + $0x58] sm:$0xf]
  %v55 = vld [vmem:[%s1 + $0x5c] sm:$0xf]
  %v56 = vld [vmem:[%s1 + $0x60] sm:$0xf]
  %v57 = vld [vmem:[%s1 + $0x64] sm:$0xf]
  %v58 = vld [vmem:[%s1 + $0x68] sm:$0xf]
  %v59 = vld [vmem:[%s1 + $0x6c] sm:$0xf]
  %v60 = vld [vmem:[%s1 + $0x70] sm:$0xf]
  %v61 = vld [vmem:[%s1 + $0x74] sm:$0xf]
  %v62 = vld [vmem:[%s1 + $0x78] sm:$0xf]
  %v63 = vld [vmem:[%s1 + $0x7c] sm:$0xf]
  %v64 = vld [vmem:[%s1 + $0x80] sm:$0xf]
  %v65 = vld [vmem:[%s1 + $0x84] sm:$0xf]
  %v66 = vld [vmem:[%s1 + $0x88] sm:$0xf]
  %v67 = vld [vmem:[%s1 + $0x8c] sm:$0xf]
  %v68 = vld [vmem:[%s1 + $0x90] sm:$0xf]
  %v69 = vld [vmem:[%s1 + $0x94] sm:$0xf]
  %v70 = vld [vmem:[%s1 + $0x98] sm:$0xf]
  %v71 = vld [vmem:[%s1 + $0x9c] sm:$0xf]
  %v72 = vld [vmem:[%s1 + $0xa0] sm:$0xf]
  %v73 = vld [vmem:[%s1 + $0xa4] sm:$0xf]
  %v74 = vld [vmem:[%s1 + $0xa8] sm:$0xf]
  %v75 = vld [vmem:[%s1 + $0xac] sm:$0xf]
  %v76 = vld [vmem:[%s1 + $0xb0] sm:$0xf]
  %v77 = vld [vmem:[%s1 + $0xb4] sm:$0xf]
  %v78 = vld [vmem:[%s1 + $0xb8] sm:$0xf]
  %v79 = vld [vmem:[%s1 + $0xbc] sm:$0xf]
  %v80 = vld [vmem:[%s1 + $0xc0] sm:$0xf]
  %v81 = vld [vmem:[%s1 + $0xc4] sm:$0xf]
  %v82 = vld [vmem:[%s1 + $0xc8] sm:$0xf]
  %v83 = vld [vmem:[%s1 + $0xcc] sm:$0xf]
  %v84 = vld [vmem:[%s1 + $0xd0] sm:$0xf]
  %v85 = vld [vmem:[%s1 + $0xd4] sm:$0xf]
  %v86 = vld [vmem:[%s1 + $0xd8] sm:$0xf]
  %v87 = vld [vmem:[%s1 + $0xdc] sm:$0xf]
  %v88 = vld [vmem:[%s1 + $0xe0] sm:$0xf]
  %v89 = vld [vmem:[%s1 + $0xe4] sm:$0xf]
  %v90 = vld [vmem:[%s1 + $0xe8] sm:$0xf]
  %v91 = vld [vmem:[%s1 + $0xec] sm:$0xf]
  %v92 = vld [vmem:[%s1 + $0xf0] sm:$0xf]
  %v93 = vld [vmem:[%s1 + $0xf4] sm:$0xf]
  %v94 = vld [vmem:[%s1 + $0xf8] sm:$0xf]
  %v95 = vld [vmem:[%s1 + $0xfc] sm:$0xf]
  %v96 = vld [vmem:[%s1 + $0x100] sm:$0xf]
  %v97 = vld [vmem:[%s1 + $0x104] sm:$0xf]
  %v98 = vld [vmem:[%s1 + $0x108] sm:$0xf]
  %v99 = vld [vmem:[%s1 + $0x10c] sm:$0xf]
  %v100 = vld [vmem:[%s1 + $0x110] sm:$0xf]
  %v101 = vld [vmem:[%s1 + $0x114] sm:$0xf]
  %v102 = vld [vmem:[%s1 + $0x118] sm:$0xf]
  %v103 = vld [vmem:[%s1 + $0x11c] sm:$0xf]
  %v104 = vld [vmem:[%s1 + $0x120] sm:$0xf]
  %v105 = vld [vmem:[%s1 + $0x124] sm:$0xf]
  %v106 = vld [vmem:[%s1 + $0x128] sm:$0xf]
  %v107 = vld [vmem:[%s1 + $0x12c] sm:$0xf]
  %v108 = vld [vmem:[%s1 + $0x130] sm:$0xf]
  %v109 = vld [vmem:[%s1 + $0x134] sm:$0xf]
  %v110 = vld [vmem:[%s1 + $0x138] sm:$0xf]
  %v111 = vld [vmem:[%s1 + $0x13c] sm:$0xf]
  %v118 = vunpack.c.l.b16 %v26
  %v119 = vunpack.c.h.b16 %v26
  %v120 = vunpack.c.l.b16 %v27
  %v121 = vunpack.c.h.b16 %v27
  %v122 = vunpack.c.l.b16 %v28
  %v123 = vunpack.c.l.b16 %v29
  %v124 = vunpack.c.h.b16 %v29
  %v125 = vunpack.c.l.b16 %v30
  %v126 = vunpack.c.h.b16 %v30
  %v127 = vunpack.c.l.b16 %v31
  %v128 = vpack.c.b16 %v123, %v118
  %v129 = vpack.c.b16 %v124, %v119
  %v130 = vpack.c.b16 %v125, %v120
  %v131 = vpack.c.b16 %v126, %v121
  %v132 = vpack.c.b16 %v127, %v122
  %v218 = vunpack.c.l.b16 %v32
  %v219 = vunpack.c.l.b16 %v33
  %v220 = vunpack.c.l.b16 %v34
  %v221 = vunpack.c.l.b16 %v35
  %v222 = vunpack.c.l.b16 %v36
  %v223 = vunpack.c.l.b16 %v37
  %v224 = vunpack.c.l.b16 %v38
  %v225 = vunpack.c.l.b16 %v39
  %v226 = vunpack.c.l.b16 %v40
  %v227 = vunpack.c.l.b16 %v41
  %v228 = vunpack.c.l.b16 %v42
  %v229 = vunpack.c.l.b16 %v43
  %v230 = vunpack.c.l.b16 %v44
  %v231 = vunpack.c.l.b16 %v45
  %v232 = vunpack.c.l.b16 %v46
  %v233 = vunpack.c.l.b16 %v47
  %v234 = vunpack.c.l.b16 %v48
  %v235 = vunpack.c.l.b16 %v49
  %v236 = vunpack.c.l.b16 %v50
  %v237 = vunpack.c.l.b16 %v51
  %v238 = vunpack.c.l.b16 %v52
  %v239 = vunpack.c.l.b16 %v53
  %v240 = vunpack.c.l.b16 %v54
  %v241 = vunpack.c.l.b16 %v55
  %v242 = vunpack.c.l.b16 %v56
  %v243 = vunpack.c.l.b16 %v57
  %v244 = vunpack.c.l.b16 %v58
  %v245 = vunpack.c.l.b16 %v59
  %v246 = vunpack.c.l.b16 %v60
  %v247 = vunpack.c.l.b16 %v61
  %v248 = vunpack.c.l.b16 %v62
  %v249 = vunpack.c.l.b16 %v63
  %v250 = vunpack.c.l.b16 %v64
  %v251 = vunpack.c.l.b16 %v65
  %v252 = vunpack.c.l.b16 %v66
  %v253 = vunpack.c.l.b16 %v67
  %v254 = vunpack.c.l.b16 %v68
  %v255 = vunpack.c.l.b16 %v69
  %v256 = vunpack.c.l.b16 %v70
  %v257 = vunpack.c.l.b16 %v71
  %v258 = vunpack.c.l.b16 %v72
  %v259 = vunpack.c.l.b16 %v73
  %v260 = vunpack.c.l.b16 %v74
  %v261 = vunpack.c.l.b16 %v75
  %v262 = vunpack.c.l.b16 %v76
  %v263 = vunpack.c.l.b16 %v77
  %v264 = vunpack.c.l.b16 %v78
  %v265 = vunpack.c.l.b16 %v79
  %v266 = vunpack.c.l.b16 %v80
  %v267 = vunpack.c.l.b16 %v81
  %v268 = vunpack.c.l.b16 %v82
  %v269 = vunpack.c.l.b16 %v83
  %v270 = vunpack.c.l.b16 %v84
  %v271 = vunpack.c.l.b16 %v85
  %v272 = vunpack.c.l.b16 %v86
  %v273 = vunpack.c.l.b16 %v87
  %v274 = vunpack.c.l.b16 %v88
  %v275 = vunpack.c.l.b16 %v89
  %v276 = vunpack.c.l.b16 %v90
  %v277 = vunpack.c.l.b16 %v91
  %v278 = vunpack.c.l.b16 %v92
  %v279 = vunpack.c.l.b16 %v93
  %v280 = vunpack.c.l.b16 %v94
  %v281 = vunpack.c.l.b16 %v95
  %v282 = vunpack.c.l.b16 %v96
  %v283 = vunpack.c.l.b16 %v97
  %v284 = vunpack.c.l.b16 %v98
  %v285 = vunpack.c.l.b16 %v99
  %v286 = vunpack.c.l.b16 %v100
  %v287 = vunpack.c.l.b16 %v101
  %v288 = vunpack.c.l.b16 %v102
  %v289 = vunpack.c.l.b16 %v103
  %v290 = vunpack.c.l.b16 %v104
  %v291 = vunpack.c.l.b16 %v105
  %v292 = vunpack.c.l.b16 %v106
  %v293 = vunpack.c.l.b16 %v107
  %v294 = vunpack.c.l.b16 %v108
  %v295 = vunpack.c.l.b16 %v109
  %v296 = vunpack.c.l.b16 %v110
  %v297 = vunpack.c.l.b16 %v111
  %v298 = vpack.c.b16 %v219, %v218
  %v299 = vpack.c.b16 %v221, %v220
  %v300 = vpack.c.b16 %v223, %v222
  %v301 = vpack.c.b16 %v225, %v224
  %v302 = vpack.c.b16 %v227, %v226
  %v303 = vpack.c.b16 %v229, %v228
  %v304 = vpack.c.b16 %v231, %v230
  %v305 = vpack.c.b16 %v233, %v232
  %v306 = vpack.c.b16 %v235, %v234
  %v307 = vpack.c.b16 %v237, %v236
  %v308 = vpack.c.b16 %v239, %v238
  %v309 = vpack.c.b16 %v241, %v240
  %v310 = vpack.c.b16 %v243, %v242
  %v311 = vpack.c.b16 %v245, %v244
  %v312 = vpack.c.b16 %v247, %v246
  %v313 = vpack.c.b16 %v249, %v248
  %v314 = vpack.c.b16 %v251, %v250
  %v315 = vpack.c.b16 %v253, %v252
  %v316 = vpack.c.b16 %v255, %v254
  %v317 = vpack.c.b16 %v257, %v256
  %v318 = vpack.c.b16 %v259, %v258
  %v319 = vpack.c.b16 %v261, %v260
  %v320 = vpack.c.b16 %v263, %v262
  %v321 = vpack.c.b16 %v265, %v264
  %v322 = vpack.c.b16 %v267, %v266
  %v323 = vpack.c.b16 %v269, %v268
  %v324 = vpack.c.b16 %v271, %v270
  %v325 = vpack.c.b16 %v273, %v272
  %v326 = vpack.c.b16 %v275, %v274
  %v327 = vpack.c.b16 %v277, %v276
  %v328 = vpack.c.b16 %v279, %v278
  %v329 = vpack.c.b16 %v281, %v280
  %v330 = vpack.c.b16 %v283, %v282
  %v331 = vpack.c.b16 %v285, %v284
  %v332 = vpack.c.b16 %v287, %v286
  %v333 = vpack.c.b16 %v289, %v288
  %v334 = vpack.c.b16 %v291, %v290
  %v335 = vpack.c.b16 %v293, %v292
  %v336 = vpack.c.b16 %v295, %v294
  %v337 = vpack.c.b16 %v297, %v296
  %378 = vmatprep.subr.bf16.mxu0 0
  %379 = vmatpush1.bf16.msra.mxu0 %v298
  %380 = vmatprep.subr.bf16.mxu0 0
  %381 = vmatpush1.bf16.msra.mxu0 %v299
  %382 = vmatprep.subr.bf16.mxu0 0
  %383 = vmatpush1.bf16.msra.mxu0 %v300
  %384 = vmatprep.subr.bf16.mxu0 0
  %385 = vmatpush1.bf16.msra.mxu0 %v301
  %386 = vmatprep.subr.bf16.mxu0 0
  %387 = vmatpush1.bf16.msra.mxu0 %v302
  %388 = vmatprep.subr.bf16.mxu0 0
  %389 = vmatpush1.bf16.msra.mxu0 %v303
  %390 = vmatprep.subr.bf16.mxu0 0
  %391 = vmatpush1.bf16.msra.mxu0 %v304
  %392 = vmatprep.subr.bf16.mxu0 0
  %393 = vmatpush1.bf16.msra.mxu0 %v305
  %394 = vmatprep.subr.bf16.mxu0 0
  %395 = vmatpush1.bf16.msra.mxu0 %v306
  %396 = vmatprep.subr.bf16.mxu0 0
  %397 = vmatpush1.bf16.msra.mxu0 %v307
  %398 = vmatprep.subr.bf16.mxu0 0
  %399 = vmatpush1.bf16.msra.mxu0 %v308
  %400 = vmatprep.subr.bf16.mxu0 0
  %401 = vmatpush1.bf16.msra.mxu0 %v309
  %402 = vmatprep.subr.bf16.mxu0 0
  %403 = vmatpush1.bf16.msra.mxu0 %v310
  %404 = vmatprep.subr.bf16.mxu0 0
  %405 = vmatpush1.bf16.msra.mxu0 %v311
  %406 = vmatprep.subr.bf16.mxu0 0
  %407 = vmatpush1.bf16.msra.mxu0 %v312
  %408 = vmatprep.subr.bf16.mxu0 0
  %409 = vmatpush1.bf16.msra.mxu0 %v313
  %410 = vmatprep.mubr.bf16.mxu0 %v129
  %411 = vmatmul.mubr.bf16.gmra.mrb[0].mxu0 %v128
  %v412 = vpop.f32.mrb[0].mxu0
  %v413 = vadd.f32 0.0, %v412
  %v414 = vpop.f32.mrb[0].mxu0
  %v415 = vpop.f32.mrb[0].mxu0
  %v416 = vadd.f32 0.0, %v415
  %v417 = vpop.f32.mrb[0].mxu0
  %418 = vdwg.mxu0
  %419 = vmatprep.subr.bf16.mxu0 0
  %420 = vmatpush1.bf16.msra.mxu0 %v314
  %421 = vmatprep.subr.bf16.mxu0 0
  %422 = vmatpush1.bf16.msra.mxu0 %v315
  %423 = vmatprep.subr.bf16.mxu0 0
  %424 = vmatpush1.bf16.msra.mxu0 %v316
  %425 = vmatprep.subr.bf16.mxu0 0
  %426 = vmatpush1.bf16.msra.mxu0 %v317
  %427 = vmatprep.subr.bf16.mxu0 0
  %428 = vmatpush1.bf16.msra.mxu0 %v318
  %429 = vmatprep.subr.bf16.mxu0 0
  %430 = vmatpush1.bf16.msra.mxu0 %v319
  %431 = vmatprep.subr.bf16.mxu0 0
  %432 = vmatpush1.bf16.msra.mxu0 %v320
  %433 = vmatprep.subr.bf16.mxu0 0
  %434 = vmatpush1.bf16.msra.mxu0 %v321
  %435 = vmatprep.subr.bf16.mxu0 0
  %436 = vmatpush1.bf16.msra.mxu0 %v322
  %437 = vmatprep.subr.bf16.mxu0 0
  %438 = vmatpush1.bf16.msra.mxu0 %v323
  %439 = vmatprep.subr.bf16.mxu0 0
  %440 = vmatpush1.bf16.msra.mxu0 %v324
  %441 = vmatprep.subr.bf16.mxu0 0
  %442 = vmatpush1.bf16.msra.mxu0 %v325
  %443 = vmatprep.subr.bf16.mxu0 0
  %444 = vmatpush1.bf16.msra.mxu0 %v326
  %445 = vmatprep.subr.bf16.mxu0 0
  %446 = vmatpush1.bf16.msra.mxu0 %v327
  %447 = vmatprep.subr.bf16.mxu0 0
  %448 = vmatpush1.bf16.msra.mxu0 %v328
  %449 = vmatprep.subr.bf16.mxu0 0
  %450 = vmatpush1.bf16.msra.mxu0 %v329
  %451 = vmatprep.mubr.bf16.mxu0 %v131
  %452 = vmatmul.mubr.bf16.gmra.mrb[0].mxu0 %v130
  %v453 = vpop.f32.mrb[0].mxu0
  %v454 = vadd.f32 %v413, %v453
  %v455 = vpop.f32.mrb[0].mxu0
  %v456 = vpop.f32.mrb[0].mxu0
  %v457 = vadd.f32 %v416, %v456
  %v458 = vpop.f32.mrb[0].mxu0
  %459 = vdwg.mxu0
  %460 = vmatprep.subr.bf16.mxu0 0
  %461 = vmatpush1.bf16.msra.mxu0 %v330
  %462 = vmatprep.subr.bf16.mxu0 0
  %463 = vmatpush1.bf16.msra.mxu0 %v331
  %464 = vmatprep.subr.bf16.mxu0 0
  %465 = vmatpush1.bf16.msra.mxu0 %v332
  %466 = vmatprep.subr.bf16.mxu0 0
  %467 = vmatpush1.bf16.msra.mxu0 %v333
  %468 = vmatprep.subr.bf16.mxu0 0
  %469 = vmatpush1.bf16.msra.mxu0 %v334
  %470 = vmatprep.subr.bf16.mxu0 0
  %471 = vmatpush1.bf16.msra.mxu0 %v335
  %472 = vmatprep.subr.bf16.mxu0 0
  %473 = vmatpush1.bf16.msra.mxu0 %v336
  %474 = vmatprep.subr.bf16.mxu0 0
  %475 = vmatpush1.bf16.msra.mxu0 %v337
  %476 = vmatprep.subr.bf16.mxu0 0
  %477 = vmatpush1.bf16.msra.mxu0 0
  %478 = vmatprep.subr.bf16.mxu0 0
  %479 = vmatpush1.bf16.msra.mxu0 0
  %480 = vmatprep.subr.bf16.mxu0 0
  %481 = vmatpush1.bf16.msra.mxu0 0
  %482 = vmatprep.subr.bf16.mxu0 0
  %483 = vmatpush1.bf16.msra.mxu0 0
  %484 = vmatprep.subr.bf16.mxu0 0
  %485 = vmatpush1.bf16.msra.mxu0 0
  %486 = vmatprep.subr.bf16.mxu0 0
  %487 = vmatpush1.bf16.msra.mxu0 0
  %488 = vmatprep.subr.bf16.mxu0 0
  %489 = vmatpush1.bf16.msra.mxu0 0
  %490 = vmatprep.subr.bf16.mxu0 0
  %491 = vmatpush1.bf16.msra.mxu0 0
  %492 = vmatprep.mubr.bf16.mxu0 0
  %493 = vmatmul.mubr.bf16.gmra.mrb[0].mxu0 %v132
  %v494 = vpop.f32.mrb[0].mxu0
  %v495 = vadd.f32 %v454, %v494
  %v496 = vpop.f32.mrb[0].mxu0
  %v497 = vpop.f32.mrb[0].mxu0
  %v498 = vadd.f32 %v457, %v497
  %v499 = vpop.f32.mrb[0].mxu0
  %500 = vdwg.mxu0
  %v501 = vadd.f32 %v24, %v495
  %v502 = vadd.f32 %v25, %v498
  %503 = vst [vmem:[#allocation2] sm:$0xff] %v501
  %504 = vst [vmem:[#allocation2 + $0x8] sm:$0xff] %v502
  // Predicated region
  $region22: #{forward.23} parent=0 // pred_check
    %p505 = pneg %p18
  $region23: #{forward.23} parent=0 // pred_check_branch
    %507 = sbr.rel (%p505) target = $region25
  $region24: #{forward.23} parent=0 // pred_region
    %v508 = vld [vmem:[#allocation2] sm:$0xff]
    %v509 = vld [vmem:[#allocation2 + $0x8] sm:$0xff]
    %v510 = vld [vmem:[%s2] sm:$0x1]
    %v512 = vlaneseq
    %v513 = vshrl.u32 %v512, 7
    %v514 = vsub.s32 0, %v513
    %v515 = vrot.slane %v510, %v514
    %v517 = vmul.f32 %v508, %v515
    %v518 = vmul.f32 %v509, %v515
    %v519 = vld [vmem:[%s3] sm:$0x1]
    %v521 = vlaneseq
    %v522 = vshrl.u32 %v521, 7
    %v523 = vsub.s32 0, %v522
    %v524 = vrot.slane %v519, %v523
    %v526 = vadd.f32 %v517, %v524
    %v527 = vadd.f32 %v518, %v524
    %v528 = vpack.c.bf16 %v527, %v526
    %v530 = vunpack.c.l.b16 %v528
    %v531 = vunpack.c.h.b16 %v528
    %v532 = vpack.c.b16 %v530, %v530
    %v533 = vpack.c.b16 %v531, %v531
    %536 = vst [vmem:[%s4] sm:$0xf] %v532
    %537 = vst [vmem:[%s4 + $0x4] sm:$0xf] %v533
  $region25: #{forward.23} parent=0 // pred_fallthru
    _
  // Predicated region
  $region26: #{forward.23} parent=0 // pred_check
    _
  $region27: #{forward.23} parent=0 // pred_check_branch
    %539 = sbr.rel (0) target = $region29
  $region28: #{forward.23} parent=0 // pred_region
    _
  $region29: #{forward.23} parent=0 // pred_fallthru
    _
  // Predicated region
  $region30: #{forward.23} parent=0 // pred_check
    _
  $region31: #{forward.23} parent=0 // pred_check_branch
    %541 = sbr.rel (0) target = $region33
  $region32: #{forward.23} parent=0 // pred_region
    _
  $region33: #{forward.23} parent=0 // pred_fallthru
    _

// kernel: forward.24
$region0: #{forward.24}
  #allocation0 [shape = 'u32[]', space=smem, size = 0x4, offset = 0x4, fixed_abs, tag = 'smem constant byte address 0x4 - core index']
  #allocation1 [shape = 'u32[144,128]{1,0:T(1,128)}', space=vmem, size = 0x12000, scoped, tag = 'internal scratch']
  #allocation2 [shape = 'f32[16,128]{1,0:T(8,128)}', space=vmem, size = 0x2000, scoped, tag = 'scratch operand']
  %s0 = inlined_call_operand.vmem [shape: bf16[16,128], index: 0, kind: input, shape index: {}]
  %s1 = inlined_call_operand.vmem [shape: bf16[128,128], index: 1, kind: input, shape index: {}]
  %s2 = inlined_call_operand.vmem [shape: f32[1,128], index: 2, kind: input, shape index: {}]
  %s3 = inlined_call_operand.vmem [shape: f32[1,128], index: 3, kind: input, shape index: {}]
  %s4 = inlined_call_operand.vmem [shape: bf16[16,128], index: 4, kind: output, shape index: {}]
  %s5 = sld [smem:[#allocation0]]
  $region34: #{forward.24} parent=0
    _
  %s7 = ssub.s32 1, %s5
  %s8 = scalar_select 0, %s7, %s5
  // Predicated region
  $region2: #{forward.24} parent=0 // pred_check
    _
  $region3: #{forward.24} parent=0 // pred_check_branch
    %10 = sbr.rel (0) target = $region5
  $region4: #{forward.24} parent=0 // pred_region
    _
  $region5: #{forward.24} parent=0 // pred_fallthru
    _
  // Predicated region
  $region6: #{forward.24} parent=0 // pred_check
    _
  $region7: #{forward.24} parent=0 // pred_check_branch
    %12 = sbr.rel (0) target = $region9
  $region8: #{forward.24} parent=0 // pred_region
    _
  $region9: #{forward.24} parent=0 // pred_fallthru
    _
  // Predicated region
  $region10: #{forward.24} parent=0 // pred_check
    _
  $region11: #{forward.24} parent=0 // pred_check_branch
    %14 = sbr.rel (0) target = $region13
  $region12: #{forward.24} parent=0 // pred_region
    _
  $region13: #{forward.24} parent=0 // pred_fallthru
    _
  // Predicated region
  $region14: #{forward.24} parent=0 // pred_check
    _
  $region15: #{forward.24} parent=0 // pred_check_branch
    %16 = sbr.rel (0) target = $region17
  $region16: #{forward.24} parent=0 // pred_region
    _
  $region17: #{forward.24} parent=0 // pred_fallthru
    _
  %p18 = scmp.eq.s32.totalorder 0, 0
  // Predicated region
  $region18: #{forward.24} parent=0 // pred_check
    %p19 = pneg %p18
  $region19: #{forward.24} parent=0 // pred_check_branch
    %21 = sbr.rel (%p19) target = $region21
  $region20: #{forward.24} parent=0 // pred_region
    %22 = vst [vmem:[#allocation2] sm:$0xff] 0.0
    %23 = vst [vmem:[#allocation2 + $0x8] sm:$0xff] 0.0
  $region21: #{forward.24} parent=0 // pred_fallthru
    _
  %v24 = vld [vmem:[#allocation2] sm:$0xff]
  %v25 = vld [vmem:[#allocation2 + $0x8] sm:$0xff]
  %v26 = vld [vmem:[%s0] sm:$0xf]
  %v27 = vld [vmem:[%s0 + $0x4] sm:$0xf]
  %v28 = vld [vmem:[%s1] sm:$0xf]
  %v29 = vld [vmem:[%s1 + $0x4] sm:$0xf]
  %v30 = vld [vmem:[%s1 + $0x8] sm:$0xf]
  %v31 = vld [vmem:[%s1 + $0xc] sm:$0xf]
  %v32 = vld [vmem:[%s1 + $0x10] sm:$0xf]
  %v33 = vld [vmem:[%s1 + $0x14] sm:$0xf]
  %v34 = vld [vmem:[%s1 + $0x18] sm:$0xf]
  %v35 = vld [vmem:[%s1 + $0x1c] sm:$0xf]
  %v36 = vld [vmem:[%s1 + $0x20] sm:$0xf]
  %v37 = vld [vmem:[%s1 + $0x24] sm:$0xf]
  %v38 = vld [vmem:[%s1 + $0x28] sm:$0xf]
  %v39 = vld [vmem:[%s1 + $0x2c] sm:$0xf]
  %v40 = vld [vmem:[%s1 + $0x30] sm:$0xf]
  %v41 = vld [vmem:[%s1 + $0x34] sm:$0xf]
  %v42 = vld [vmem:[%s1 + $0x38] sm:$0xf]
  %v43 = vld [vmem:[%s1 + $0x3c] sm:$0xf]
  %v46 = vunpack.c.l.b16 %v26
  %v47 = vunpack.c.l.b16 %v27
  %v48 = vpack.c.b16 %v47, %v46
  %v66 = vunpack.c.l.b16 %v28
  %v67 = vunpack.c.l.b16 %v29
  %v68 = vunpack.c.l.b16 %v30
  %v69 = vunpack.c.l.b16 %v31
  %v70 = vunpack.c.l.b16 %v32
  %v71 = vunpack.c.l.b16 %v33
  %v72 = vunpack.c.l.b16 %v34
  %v73 = vunpack.c.l.b16 %v35
  %v74 = vunpack.c.l.b16 %v36
  %v75 = vunpack.c.l.b16 %v37
  %v76 = vunpack.c.l.b16 %v38
  %v77 = vunpack.c.l.b16 %v39
  %v78 = vunpack.c.l.b16 %v40
  %v79 = vunpack.c.l.b16 %v41
  %v80 = vunpack.c.l.b16 %v42
  %v81 = vunpack.c.l.b16 %v43
  %v82 = vpack.c.b16 %v67, %v66
  %v83 = vpack.c.b16 %v69, %v68
  %v84 = vpack.c.b16 %v71, %v70
  %v85 = vpack.c.b16 %v73, %v72
  %v86 = vpack.c.b16 %v75, %v74
  %v87 = vpack.c.b16 %v77, %v76
  %v88 = vpack.c.b16 %v79, %v78
  %v89 = vpack.c.b16 %v81, %v80
  %98 = vmatprep.subr.bf16.mxu0 0
  %99 = vmatpush1.bf16.msra.mxu0 %v82
  %100 = vmatprep.subr.bf16.mxu0 0
  %101 = vmatpush1.bf16.msra.mxu0 %v83
  %102 = vmatprep.subr.bf16.mxu0 0
  %103 = vmatpush1.bf16.msra.mxu0 %v84
  %104 = vmatprep.subr.bf16.mxu0 0
  %105 = vmatpush1.bf16.msra.mxu0 %v85
  %106 = vmatprep.subr.bf16.mxu0 0
  %107 = vmatpush1.bf16.msra.mxu0 %v86
  %108 = vmatprep.subr.bf16.mxu0 0
  %109 = vmatpush1.bf16.msra.mxu0 %v87
  %110 = vmatprep.subr.bf16.mxu0 0
  %111 = vmatpush1.bf16.msra.mxu0 %v88
  %112 = vmatprep.subr.bf16.mxu0 0
  %113 = vmatpush1.bf16.msra.mxu0 %v89
  %114 = vmatprep.subr.bf16.mxu0 0
  %115 = vmatpush1.bf16.msra.mxu0 0
  %116 = vmatprep.subr.bf16.mxu0 0
  %117 = vmatpush1.bf16.msra.mxu0 0
  %118 = vmatprep.subr.bf16.mxu0 0
  %119 = vmatpush1.bf16.msra.mxu0 0
  %120 = vmatprep.subr.bf16.mxu0 0
  %121 = vmatpush1.bf16.msra.mxu0 0
  %122 = vmatprep.subr.bf16.mxu0 0
  %123 = vmatpush1.bf16.msra.mxu0 0
  %124 = vmatprep.subr.bf16.mxu0 0
  %125 = vmatpush1.bf16.msra.mxu0 0
  %126 = vmatprep.subr.bf16.mxu0 0
  %127 = vmatpush1.bf16.msra.mxu0 0
  %128 = vmatprep.subr.bf16.mxu0 0
  %129 = vmatpush1.bf16.msra.mxu0 0
  %130 = vmatprep.mubr.bf16.mxu0 0
  %131 = vmatmul.mubr.bf16.gmra.mrb[0].mxu0 %v48
  %v132 = vpop.f32.mrb[0].mxu0
  %v133 = vadd.f32 0.0, %v132
  %v134 = vpop.f32.mrb[0].mxu0
  %v135 = vpop.f32.mrb[0].mxu0
  %v136 = vadd.f32 0.0, %v135
  %v137 = vpop.f32.mrb[0].mxu0
  %138 = vdwg.mxu0
  %v139 = vadd.f32 %v24, %v133
  %v140 = vadd.f32 %v25, %v136
  %141 = vst [vmem:[#allocation2] sm:$0xff] %v139
  %142 = vst [vmem:[#allocation2 + $0x8] sm:$0xff] %v140
  // Predicated region
  $region22: #{forward.24} parent=0 // pred_check
    %p143 = pneg %p18
  $region23: #{forward.24} parent=0 // pred_check_branch
    %145 = sbr.rel (%p143) target = $region25
  $region24: #{forward.24} parent=0 // pred_region
    %v146 = vld [vmem:[#allocation2] sm:$0xff]
    %v147 = vld [vmem:[#allocation2 + $0x8] sm:$0xff]
    %v148 = vld [vmem:[%s2] sm:$0x1]
    %v150 = vlaneseq
    %v151 = vshrl.u32 %v150, 7
    %v152 = vsub.s32 0, %v151
    %v153 = vrot.slane %v148, %v152
    %v155 = vmul.f32 %v146, %v153
    %v156 = vmul.f32 %v147, %v153
    %v157 = vld [vmem:[%s3] sm:$0x1]
    %v159 = vlaneseq
    %v160 = vshrl.u32 %v159, 7
    %v161 = vsub.s32 0, %v160
    %v162 = vrot.slane %v157, %v161
    %v164 = vadd.f32 %v155, %v162
    %v165 = vadd.f32 %v156, %v162
    %v166 = vpack.c.bf16 %v165, %v164
    %v168 = vunpack.c.l.b16 %v166
    %v169 = vunpack.c.h.b16 %v166
    %v170 = vpack.c.b16 %v168, %v168
    %v171 = vpack.c.b16 %v169, %v169
    %174 = vst [vmem:[%s4] sm:$0xf] %v170
    %175 = vst [vmem:[%s4 + $0x4] sm:$0xf] %v171
  $region25: #{forward.24} parent=0 // pred_fallthru
    _
  // Predicated region
  $region26: #{forward.24} parent=0 // pred_check
    _
  $region27: #{forward.24} parent=0 // pred_check_branch
    %177 = sbr.rel (0) target = $region29
  $region28: #{forward.24} parent=0 // pred_region
    _
  $region29: #{forward.24} parent=0 // pred_fallthru
    _
  // Predicated region
  $region30: #{forward.24} parent=0 // pred_check
    _
  $region31: #{forward.24} parent=0 // pred_check_branch
    %179 = sbr.rel (0) target = $region33
  $region32: #{forward.24} parent=0 // pred_region
    _
  $region33: #{forward.24} parent=0 // pred_fallthru
    _

// kernel: forward.25
$region0: #{forward.25}
  #allocation0 [shape = 'u32[]', space=smem, size = 0x4, offset = 0x4, fixed_abs, tag = 'smem constant byte address 0x4 - core index']
  #allocation1 [shape = 'u32[144,128]{1,0:T(1,128)}', space=vmem, size = 0x12000, scoped, tag = 'internal scratch']
  #allocation2 [shape = 'f32[16,512]{1,0:T(8,128)}', space=vmem, size = 0x8000, scoped, tag = 'scratch operand']
  %s0 = inlined_call_operand.vmem [shape: bf16[16,128], index: 0, kind: input, shape index: {}]
  %s1 = inlined_call_operand.vmem [shape: bf16[128,512], index: 1, kind: input, shape index: {}]
  %s2 = inlined_call_operand.vmem [shape: f32[1,512], index: 2, kind: input, shape index: {}]
  %s3 = inlined_call_operand.vmem [shape: f32[1,512], index: 3, kind: input, shape index: {}]
  %s4 = inlined_call_operand.vmem [shape: f32[16,512], index: 4, kind: output, shape index: {}]
  %s5 = sld [smem:[#allocation0]]
  $region34: #{forward.25} parent=0
    _
  %s7 = ssub.s32 1, %s5
  %s8 = scalar_select 0, %s7, %s5
  // Predicated region
  $region2: #{forward.25} parent=0 // pred_check
    _
  $region3: #{forward.25} parent=0 // pred_check_branch
    %10 = sbr.rel (0) target = $region5
  $region4: #{forward.25} parent=0 // pred_region
    _
  $region5: #{forward.25} parent=0 // pred_fallthru
    _
  // Predicated region
  $region6: #{forward.25} parent=0 // pred_check
    _
  $region7: #{forward.25} parent=0 // pred_check_branch
    %12 = sbr.rel (0) target = $region9
  $region8: #{forward.25} parent=0 // pred_region
    _
  $region9: #{forward.25} parent=0 // pred_fallthru
    _
  // Predicated region
  $region10: #{forward.25} parent=0 // pred_check
    _
  $region11: #{forward.25} parent=0 // pred_check_branch
    %14 = sbr.rel (0) target = $region13
  $region12: #{forward.25} parent=0 // pred_region
    _
  $region13: #{forward.25} parent=0 // pred_fallthru
    _
  // Predicated region
  $region14: #{forward.25} parent=0 // pred_check
    _
  $region15: #{forward.25} parent=0 // pred_check_branch
    %16 = sbr.rel (0) target = $region17
  $region16: #{forward.25} parent=0 // pred_region
    _
  $region17: #{forward.25} parent=0 // pred_fallthru
    _
  %p18 = scmp.eq.s32.totalorder 0, 0
  // Predicated region
  $region18: #{forward.25} parent=0 // pred_check
    %p19 = pneg %p18
  $region19: #{forward.25} parent=0 // pred_check_branch
    %21 = sbr.rel (%p19) target = $region21
  $region20: #{forward.25} parent=0 // pred_region
    %22 = vst [vmem:[#allocation2] sm:$0xff] 0.0
    %23 = vst [vmem:[#allocation2 + $0x8] sm:$0xff] 0.0
    %24 = vst [vmem:[#allocation2 + $0x10] sm:$0xff] 0.0
    %25 = vst [vmem:[#allocation2 + $0x18] sm:$0xff] 0.0
    %26 = vst [vmem:[#allocation2 + $0x20] sm:$0xff] 0.0
    %27 = vst [vmem:[#allocation2 + $0x28] sm:$0xff] 0.0
    %28 = vst [vmem:[#allocation2 + $0x30] sm:$0xff] 0.0
    %29 = vst [vmem:[#allocation2 + $0x38] sm:$0xff] 0.0
  $region21: #{forward.25} parent=0 // pred_fallthru
    _
  %v30 = vld [vmem:[#allocation2] sm:$0xff]
  %v31 = vld [vmem:[#allocation2 + $0x8] sm:$0xff]
  %v32 = vld [vmem:[#allocation2 + $0x10] sm:$0xff]
  %v33 = vld [vmem:[#allocation2 + $0x18] sm:$0xff]
  %v34 = vld [vmem:[#allocation2 + $0x20] sm:$0xff]
  %v35 = vld [vmem:[#allocation2 + $0x28] sm:$0xff]
  %v36 = vld [vmem:[#allocation2 + $0x30] sm:$0xff]
  %v37 = vld [vmem:[#allocation2 + $0x38] sm:$0xff]
  %v38 = vld [vmem:[%s0] sm:$0xf]
  %v39 = vld [vmem:[%s0 + $0x4] sm:$0xf]
  %v40 = vld [vmem:[%s1] sm:$0xff]
  %v41 = vld [vmem:[%s1 + $0x8] sm:$0xff]
  %v42 = vld [vmem:[%s1 + $0x10] sm:$0xff]
  %v43 = vld [vmem:[%s1 + $0x18] sm:$0xff]
  %v44 = vld [vmem:[%s1 + $0x20] sm:$0xff]
  %v45 = vld [vmem:[%s1 + $0x28] sm:$0xff]
  %v46 = vld [vmem:[%s1 + $0x30] sm:$0xff]
  %v47 = vld [vmem:[%s1 + $0x38] sm:$0xff]
  %v48 = vld [vmem:[%s1 + $0x40] sm:$0xff]
  %v49 = vld [vmem:[%s1 + $0x48] sm:$0xff]
  %v50 = vld [vmem:[%s1 + $0x50] sm:$0xff]
  %v51 = vld [vmem:[%s1 + $0x58] sm:$0xff]
  %v52 = vld [vmem:[%s1 + $0x60] sm:$0xff]
  %v53 = vld [vmem:[%s1 + $0x68] sm:$0xff]
  %v54 = vld [vmem:[%s1 + $0x70] sm:$0xff]
  %v55 = vld [vmem:[%s1 + $0x78] sm:$0xff]
  %v56 = vld [vmem:[%s1 + $0x80] sm:$0xff]
  %v57 = vld [vmem:[%s1 + $0x88] sm:$0xff]
  %v58 = vld [vmem:[%s1 + $0x90] sm:$0xff]
  %v59 = vld [vmem:[%s1 + $0x98] sm:$0xff]
  %v60 = vld [vmem:[%s1 + $0xa0] sm:$0xff]
  %v61 = vld [vmem:[%s1 + $0xa8] sm:$0xff]
  %v62 = vld [vmem:[%s1 + $0xb0] sm:$0xff]
  %v63 = vld [vmem:[%s1 + $0xb8] sm:$0xff]
  %v64 = vld [vmem:[%s1 + $0xc0] sm:$0xff]
  %v65 = vld [vmem:[%s1 + $0xc8] sm:$0xff]
  %v66 = vld [vmem:[%s1 + $0xd0] sm:$0xff]
  %v67 = vld [vmem:[%s1 + $0xd8] sm:$0xff]
  %v68 = vld [vmem:[%s1 + $0xe0] sm:$0xff]
  %v69 = vld [vmem:[%s1 + $0xe8] sm:$0xff]
  %v70 = vld [vmem:[%s1 + $0xf0] sm:$0xff]
  %v71 = vld [vmem:[%s1 + $0xf8] sm:$0xff]
  %v74 = vunpack.c.l.b16 %v38
  %v75 = vunpack.c.l.b16 %v39
  %v76 = vpack.c.b16 %v75, %v74
  %v110 = vunpack.c.l.b16 %v40
  %v111 = vunpack.c.h.b16 %v40
  %v112 = vunpack.c.l.b16 %v41
  %v113 = vunpack.c.h.b16 %v41
  %v114 = vunpack.c.l.b16 %v42
  %v115 = vunpack.c.h.b16 %v42
  %v116 = vunpack.c.l.b16 %v43
  %v117 = vunpack.c.h.b16 %v43
  %v118 = vunpack.c.l.b16 %v44
  %v119 = vunpack.c.h.b16 %v44
  %v120 = vunpack.c.l.b16 %v45
  %v121 = vunpack.c.h.b16 %v45
  %v122 = vunpack.c.l.b16 %v46
  %v123 = vunpack.c.h.b16 %v46
  %v124 = vunpack.c.l.b16 %v47
  %v125 = vunpack.c.h.b16 %v47
  %v126 = vunpack.c.l.b16 %v48
  %v127 = vunpack.c.h.b16 %v48
  %v128 = vunpack.c.l.b16 %v49
  %v129 = vunpack.c.h.b16 %v49
  %v130 = vunpack.c.l.b16 %v50
  %v131 = vunpack.c.h.b16 %v50
  %v132 = vunpack.c.l.b16 %v51
  %v133 = vunpack.c.h.b16 %v51
  %v134 = vunpack.c.l.b16 %v52
  %v135 = vunpack.c.h.b16 %v52
  %v136 = vunpack.c.l.b16 %v53
  %v137 = vunpack.c.h.b16 %v53
  %v138 = vunpack.c.l.b16 %v54
  %v139 = vunpack.c.h.b16 %v54
  %v140 = vunpack.c.l.b16 %v55
  %v141 = vunpack.c.h.b16 %v55
  %v142 = vunpack.c.l.b16 %v56
  %v143 = vunpack.c.h.b16 %v56
  %v144 = vunpack.c.l.b16 %v57
  %v145 = vunpack.c.h.b16 %v57
  %v146 = vunpack.c.l.b16 %v58
  %v147 = vunpack.c.h.b16 %v58
  %v148 = vunpack.c.l.b16 %v59
  %v149 = vunpack.c.h.b16 %v59
  %v150 = vunpack.c.l.b16 %v60
  %v151 = vunpack.c.h.b16 %v60
  %v152 = vunpack.c.l.b16 %v61
  %v153 = vunpack.c.h.b16 %v61
  %v154 = vunpack.c.l.b16 %v62
  %v155 = vunpack.c.h.b16 %v62
  %v156 = vunpack.c.l.b16 %v63
  %v157 = vunpack.c.h.b16 %v63
  %v158 = vunpack.c.l.b16 %v64
  %v159 = vunpack.c.h.b16 %v64
  %v160 = vunpack.c.l.b16 %v65
  %v161 = vunpack.c.h.b16 %v65
  %v162 = vunpack.c.l.b16 %v66
  %v163 = vunpack.c.h.b16 %v66
  %v164 = vunpack.c.l.b16 %v67
  %v165 = vunpack.c.h.b16 %v67
  %v166 = vunpack.c.l.b16 %v68
  %v167 = vunpack.c.h.b16 %v68
  %v168 = vunpack.c.l.b16 %v69
  %v169 = vunpack.c.h.b16 %v69
  %v170 = vunpack.c.l.b16 %v70
  %v171 = vunpack.c.h.b16 %v70
  %v172 = vunpack.c.l.b16 %v71
  %v173 = vunpack.c.h.b16 %v71
  %v174 = vpack.c.b16 %v114, %v110
  %v175 = vpack.c.b16 %v115, %v111
  %v176 = vpack.c.b16 %v116, %v112
  %v177 = vpack.c.b16 %v117, %v113
  %v178 = vpack.c.b16 %v122, %v118
  %v179 = vpack.c.b16 %v123, %v119
  %v180 = vpack.c.b16 %v124, %v120
  %v181 = vpack.c.b16 %v125, %v121
  %v182 = vpack.c.b16 %v130, %v126
  %v183 = vpack.c.b16 %v131, %v127
  %v184 = vpack.c.b16 %v132, %v128
  %v185 = vpack.c.b16 %v133, %v129
  %v186 = vpack.c.b16 %v138, %v134
  %v187 = vpack.c.b16 %v139, %v135
  %v188 = vpack.c.b16 %v140, %v136
  %v189 = vpack.c.b16 %v141, %v137
  %v190 = vpack.c.b16 %v146, %v142
  %v191 = vpack.c.b16 %v147, %v143
  %v192 = vpack.c.b16 %v148, %v144
  %v193 = vpack.c.b16 %v149, %v145
  %v194 = vpack.c.b16 %v154, %v150
  %v195 = vpack.c.b16 %v155, %v151
  %v196 = vpack.c.b16 %v156, %v152
  %v197 = vpack.c.b16 %v157, %v153
  %v198 = vpack.c.b16 %v162, %v158
  %v199 = vpack.c.b16 %v163, %v159
  %v200 = vpack.c.b16 %v164, %v160
  %v201 = vpack.c.b16 %v165, %v161
  %v202 = vpack.c.b16 %v170, %v166
  %v203 = vpack.c.b16 %v171, %v167
  %v204 = vpack.c.b16 %v172, %v168
  %v205 = vpack.c.b16 %v173, %v169
  %238 = vmatprep.subr.bf16.mxu0 %v175
  %239 = vmatpush1.bf16.msra.mxu0 %v174
  %240 = vmatprep.subr.bf16.mxu0 %v179
  %241 = vmatpush1.bf16.msra.mxu0 %v178
  %242 = vmatprep.subr.bf16.mxu0 %v183
  %243 = vmatpush1.bf16.msra.mxu0 %v182
  %244 = vmatprep.subr.bf16.mxu0 %v187
  %245 = vmatpush1.bf16.msra.mxu0 %v186
  %246 = vmatprep.subr.bf16.mxu0 %v191
  %247 = vmatpush1.bf16.msra.mxu0 %v190
  %248 = vmatprep.subr.bf16.mxu0 %v195
  %249 = vmatpush1.bf16.msra.mxu0 %v194
  %250 = vmatprep.subr.bf16.mxu0 %v199
  %251 = vmatpush1.bf16.msra.mxu0 %v198
  %252 = vmatprep.subr.bf16.mxu0 %v203
  %253 = vmatpush1.bf16.msra.mxu0 %v202
  %254 = vmatprep.subr.bf16.mxu0 0
  %255 = vmatpush1.bf16.msra.mxu0 0
  %256 = vmatprep.subr.bf16.mxu0 0
  %257 = vmatpush1.bf16.msra.mxu0 0
  %258 = vmatprep.subr.bf16.mxu0 0
  %259 = vmatpush1.bf16.msra.mxu0 0
  %260 = vmatprep.subr.bf16.mxu0 0
  %261 = vmatpush1.bf16.msra.mxu0 0
  %262 = vmatprep.subr.bf16.mxu0 0
  %263 = vmatpush1.bf16.msra.mxu0 0
  %264 = vmatprep.subr.bf16.mxu0 0
  %265 = vmatpush1.bf16.msra.mxu0 0
  %266 = vmatprep.subr.bf16.mxu0 0
  %267 = vmatpush1.bf16.msra.mxu0 0
  %268 = vmatprep.subr.bf16.mxu0 0
  %269 = vmatpush1.bf16.msra.mxu0 0
  %270 = vmatprep.mubr.bf16.mxu0 0
  %271 = vmatmul.mubr.bf16.gmra.mrb[0].mxu0 %v76
  %v272 = vpop.f32.mrb[0].mxu0
  %v273 = vadd.f32 0.0, %v272
  %v274 = vpop.f32.mrb[0].mxu0
  %v275 = vadd.f32 0.0, %v274
  %v276 = vpop.f32.mrb[0].mxu0
  %v277 = vadd.f32 0.0, %v276
  %v278 = vpop.f32.mrb[0].mxu0
  %v279 = vadd.f32 0.0, %v278
  %280 = vdwg.mxu0
  %281 = vmatprep.subr.bf16.mxu0 %v177
  %282 = vmatpush1.bf16.msra.mxu0 %v176
  %283 = vmatprep.subr.bf16.mxu0 %v181
  %284 = vmatpush1.bf16.msra.mxu0 %v180
  %285 = vmatprep.subr.bf16.mxu0 %v185
  %286 = vmatpush1.bf16.msra.mxu0 %v184
  %287 = vmatprep.subr.bf16.mxu0 %v189
  %288 = vmatpush1.bf16.msra.mxu0 %v188
  %289 = vmatprep.subr.bf16.mxu0 %v193
  %290 = vmatpush1.bf16.msra.mxu0 %v192
  %291 = vmatprep.subr.bf16.mxu0 %v197
  %292 = vmatpush1.bf16.msra.mxu0 %v196
  %293 = vmatprep.subr.bf16.mxu0 %v201
  %294 = vmatpush1.bf16.msra.mxu0 %v200
  %295 = vmatprep.subr.bf16.mxu0 %v205
  %296 = vmatpush1.bf16.msra.mxu0 %v204
  %297 = vmatprep.subr.bf16.mxu0 0
  %298 = vmatpush1.bf16.msra.mxu0 0
  %299 = vmatprep.subr.bf16.mxu0 0
  %300 = vmatpush1.bf16.msra.mxu0 0
  %301 = vmatprep.subr.bf16.mxu0 0
  %302 = vmatpush1.bf16.msra.mxu0 0
  %303 = vmatprep.subr.bf16.mxu0 0
  %304 = vmatpush1.bf16.msra.mxu0 0
  %305 = vmatprep.subr.bf16.mxu0 0
  %306 = vmatpush1.bf16.msra.mxu0 0
  %307 = vmatprep.subr.bf16.mxu0 0
  %308 = vmatpush1.bf16.msra.mxu0 0
  %309 = vmatprep.subr.bf16.mxu0 0
  %310 = vmatpush1.bf16.msra.mxu0 0
  %311 = vmatprep.subr.bf16.mxu0 0
  %312 = vmatpush1.bf16.msra.mxu0 0
  %313 = vmatprep.mubr.bf16.mxu0 0
  %314 = vmatmul.mubr.bf16.gmra.mrb[0].mxu0 %v76
  %v315 = vpop.f32.mrb[0].mxu0
  %v316 = vadd.f32 0.0, %v315
  %v317 = vpop.f32.mrb[0].mxu0
  %v318 = vadd.f32 0.0, %v317
  %v319 = vpop.f32.mrb[0].mxu0
  %v320 = vadd.f32 0.0, %v319
  %v321 = vpop.f32.mrb[0].mxu0
  %v322 = vadd.f32 0.0, %v321
  %323 = vdwg.mxu0
  %v324 = vadd.f32 %v30, %v273
  %v325 = vadd.f32 %v31, %v275
  %v326 = vadd.f32 %v32, %v316
  %v327 = vadd.f32 %v33, %v318
  %v328 = vadd.f32 %v34, %v277
  %v329 = vadd.f32 %v35, %v279
  %v330 = vadd.f32 %v36, %v320
  %v331 = vadd.f32 %v37, %v322
  %332 = vst [vmem:[#allocation2] sm:$0xff] %v324
  %333 = vst [vmem:[#allocation2 + $0x8] sm:$0xff] %v325
  %334 = vst [vmem:[#allocation2 + $0x10] sm:$0xff] %v326
  %335 = vst [vmem:[#allocation2 + $0x18] sm:$0xff] %v327
  %336 = vst [vmem:[#allocation2 + $0x20] sm:$0xff] %v328
  %337 = vst [vmem:[#allocation2 + $0x28] sm:$0xff] %v329
  %338 = vst [vmem:[#allocation2 + $0x30] sm:$0xff] %v330
  %339 = vst [vmem:[#allocation2 + $0x38] sm:$0xff] %v331
  // Predicated region
  $region22: #{forward.25} parent=0 // pred_check
    %p340 = pneg %p18
  $region23: #{forward.25} parent=0 // pred_check_branch
    %342 = sbr.rel (%p340) target = $region25
  $region24: #{forward.25} parent=0 // pred_region
    %v343 = vld [vmem:[#allocation2] sm:$0xff]
    %v344 = vld [vmem:[#allocation2 + $0x8] sm:$0xff]
    %v345 = vld [vmem:[#allocation2 + $0x10] sm:$0xff]
    %v346 = vld [vmem:[#allocation2 + $0x18] sm:$0xff]
    %v347 = vld [vmem:[#allocation2 + $0x20] sm:$0xff]
    %v348 = vld [vmem:[#allocation2 + $0x28] sm:$0xff]
    %v349 = vld [vmem:[#allocation2 + $0x30] sm:$0xff]
    %v350 = vld [vmem:[#allocation2 + $0x38] sm:$0xff]
    %v351 = vld [vmem:[%s2] sm:$0xf]
    %v353 = vlaneseq
    %v354 = vshrl.u32 %v353, 7
    %v355 = vsub.s32 0, %v354
    %v356 = vrot.slane %v351, %v355
    %v357 = vlaneseq
    %v358 = vshrl.u32 %v357, 7
    %v359 = vsub.s32 1, %v358
    %v360 = vrot.slane %v351, %v359
    %v361 = vlaneseq
    %v362 = vshrl.u32 %v361, 7
    %v363 = vsub.s32 2, %v362
    %v364 = vrot.slane %v351, %v363
    %v365 = vlaneseq
    %v366 = vshrl.u32 %v365, 7
    %v367 = vsub.s32 3, %v366
    %v368 = vrot.slane %v351, %v367
    %v373 = vmul.f32 %v343, %v356
    %v374 = vmul.f32 %v344, %v360
    %v375 = vmul.f32 %v345, %v364
    %v376 = vmul.f32 %v346, %v368
    %v377 = vmul.f32 %v347, %v356
    %v378 = vmul.f32 %v348, %v360
    %v379 = vmul.f32 %v349, %v364
    %v380 = vmul.f32 %v350, %v368
    %v381 = vld [vmem:[%s3] sm:$0xf]
    %v383 = vlaneseq
    %v384 = vshrl.u32 %v383, 7
    %v385 = vsub.s32 0, %v384
    %v386 = vrot.slane %v381, %v385
    %v387 = vlaneseq
    %v388 = vshrl.u32 %v387, 7
    %v389 = vsub.s32 1, %v388
    %v390 = vrot.slane %v381, %v389
    %v391 = vlaneseq
    %v392 = vshrl.u32 %v391, 7
    %v393 = vsub.s32 2, %v392
    %v394 = vrot.slane %v381, %v393
    %v395 = vlaneseq
    %v396 = vshrl.u32 %v395, 7
    %v397 = vsub.s32 3, %v396
    %v398 = vrot.slane %v381, %v397
    %v403 = vadd.f32 %v373, %v386
    %v404 = vadd.f32 %v374, %v390
    %v405 = vadd.f32 %v375, %v394
    %v406 = vadd.f32 %v376, %v398
    %v407 = vadd.f32 %v377, %v386
    %v408 = vadd.f32 %v378, %v390
    %v409 = vadd.f32 %v379, %v394
    %v410 = vadd.f32 %v380, %v398
    %411 = vst [vmem:[%s4] sm:$0xff] %v403
    %412 = vst [vmem:[%s4 + $0x8] sm:$0xff] %v404
    %413 = vst [vmem:[%s4 + $0x10] sm:$0xff] %v405
    %414 = vst [vmem:[%s4 + $0x18] sm:$0xff] %v406
    %415 = vst [vmem:[%s4 + $0x20] sm:$0xff] %v407
    %416 = vst [vmem:[%s4 + $0x28] sm:$0xff] %v408
    %417 = vst [vmem:[%s4 + $0x30] sm:$0xff] %v409
    %418 = vst [vmem:[%s4 + $0x38] sm:$0xff] %v410
  $region25: #{forward.25} parent=0 // pred_fallthru
    _
  // Predicated region
  $region26: #{forward.25} parent=0 // pred_check
    _
  $region27: #{forward.25} parent=0 // pred_check_branch
    %420 = sbr.rel (0) target = $region29
  $region28: #{forward.25} parent=0 // pred_region
    _
  $region29: #{forward.25} parent=0 // pred_fallthru
    _
  // Predicated region
  $region30: #{forward.25} parent=0 // pred_check
    _
  $region31: #{forward.25} parent=0 // pred_check_branch
    %422 = sbr.rel (0) target = $region33
  $region32: #{forward.25} parent=0 // pred_region
    _
  $region33: #{forward.25} parent=0 // pred_fallthru
    _

// kernel: forward.29
$region0: #{forward.29}
  #allocation0 [shape = 'u32[]', space=smem, size = 0x4, offset = 0x4, fixed_abs, tag = 'smem constant byte address 0x4 - core index']
  #allocation1 [shape = 'u32[144,128]{1,0:T(1,128)}', space=vmem, size = 0x12000, scoped, tag = 'internal scratch']
  %s0 = inlined_call_operand.vmem [shape: bf16[16,128], index: 0, kind: input, shape index: {}]
  %s1 = inlined_call_operand.vmem [shape: bf16[128,128], index: 1, kind: input, shape index: {}]
  %s2 = inlined_call_operand.vmem [shape: f32[1,128], index: 2, kind: input, shape index: {}]
  %s3 = inlined_call_operand.vmem [shape: bf16[128,128], index: 3, kind: input, shape index: {}]
  %s4 = inlined_call_operand.vmem [shape: f32[1,128], index: 4, kind: input, shape index: {}]
  %s5 = inlined_call_operand.vmem [shape: f32[16,128], index: 5, kind: output, shape index: {}]
  %s6 = sld [smem:[#allocation0]]
  $region30: #{forward.29} parent=0
    _
  %s8 = ssub.s32 1, %s6
  %s9 = scalar_select 0, %s8, %s6
  // Predicated region
  $region2: #{forward.29} parent=0 // pred_check
    _
  $region3: #{forward.29} parent=0 // pred_check_branch
    %11 = sbr.rel (0) target = $region5
  $region4: #{forward.29} parent=0 // pred_region
    _
  $region5: #{forward.29} parent=0 // pred_fallthru
    _
  // Predicated region
  $region6: #{forward.29} parent=0 // pred_check
    _
  $region7: #{forward.29} parent=0 // pred_check_branch
    %13 = sbr.rel (0) target = $region9
  $region8: #{forward.29} parent=0 // pred_region
    _
  $region9: #{forward.29} parent=0 // pred_fallthru
    _
  // Predicated region
  $region10: #{forward.29} parent=0 // pred_check
    _
  $region11: #{forward.29} parent=0 // pred_check_branch
    %15 = sbr.rel (0) target = $region13
  $region12: #{forward.29} parent=0 // pred_region
    _
  $region13: #{forward.29} parent=0 // pred_fallthru
    _
  // Predicated region
  $region14: #{forward.29} parent=0 // pred_check
    _
  $region15: #{forward.29} parent=0 // pred_check_branch
    %17 = sbr.rel (0) target = $region17
  $region16: #{forward.29} parent=0 // pred_region
    _
  $region17: #{forward.29} parent=0 // pred_fallthru
    _
  // Predicated region
  $region18: #{forward.29} parent=0 // pred_check
    _
  $region19: #{forward.29} parent=0 // pred_check_branch
    %19 = sbr.rel (0) target = $region21
  $region20: #{forward.29} parent=0 // pred_region
    _
  $region21: #{forward.29} parent=0 // pred_fallthru
    _
  %v21 = vld [vmem:[%s0] sm:$0xf]
  %v22 = vld [vmem:[%s0 + $0x4] sm:$0xf]
  %v23 = vld [vmem:[%s1] sm:$0xf]
  %v24 = vld [vmem:[%s1 + $0x4] sm:$0xf]
  %v25 = vld [vmem:[%s1 + $0x8] sm:$0xf]
  %v26 = vld [vmem:[%s1 + $0xc] sm:$0xf]
  %v27 = vld [vmem:[%s1 + $0x10] sm:$0xf]
  %v28 = vld [vmem:[%s1 + $0x14] sm:$0xf]
  %v29 = vld [vmem:[%s1 + $0x18] sm:$0xf]
  %v30 = vld [vmem:[%s1 + $0x1c] sm:$0xf]
  %v31 = vld [vmem:[%s1 + $0x20] sm:$0xf]
  %v32 = vld [vmem:[%s1 + $0x24] sm:$0xf]
  %v33 = vld [vmem:[%s1 + $0x28] sm:$0xf]
  %v34 = vld [vmem:[%s1 + $0x2c] sm:$0xf]
  %v35 = vld [vmem:[%s1 + $0x30] sm:$0xf]
  %v36 = vld [vmem:[%s1 + $0x34] sm:$0xf]
  %v37 = vld [vmem:[%s1 + $0x38] sm:$0xf]
  %v38 = vld [vmem:[%s1 + $0x3c] sm:$0xf]
  %v39 = vld [vmem:[%s2] sm:$0x1]
  %v41 = vlaneseq
  %v42 = vshrl.u32 %v41, 7
  %v43 = vsub.s32 0, %v42
  %v44 = vrot.slane %v39, %v43
  %v48 = vunpack.c.l.b16 %v21
  %v49 = vunpack.c.l.b16 %v22
  %v50 = vpack.c.b16 %v49, %v48
  %v68 = vunpack.c.l.b16 %v23
  %v69 = vunpack.c.l.b16 %v24
  %v70 = vunpack.c.l.b16 %v25
  %v71 = vunpack.c.l.b16 %v26
  %v72 = vunpack.c.l.b16 %v27
  %v73 = vunpack.c.l.b16 %v28
  %v74 = vunpack.c.l.b16 %v29
  %v75 = vunpack.c.l.b16 %v30
  %v76 = vunpack.c.l.b16 %v31
  %v77 = vunpack.c.l.b16 %v32
  %v78 = vunpack.c.l.b16 %v33
  %v79 = vunpack.c.l.b16 %v34
  %v80 = vunpack.c.l.b16 %v35
  %v81 = vunpack.c.l.b16 %v36
  %v82 = vunpack.c.l.b16 %v37
  %v83 = vunpack.c.l.b16 %v38
  %v84 = vpack.c.b16 %v69, %v68
  %v85 = vpack.c.b16 %v71, %v70
  %v86 = vpack.c.b16 %v73, %v72
  %v87 = vpack.c.b16 %v75, %v74
  %v88 = vpack.c.b16 %v77, %v76
  %v89 = vpack.c.b16 %v79, %v78
  %v90 = vpack.c.b16 %v81, %v80
  %v91 = vpack.c.b16 %v83, %v82
  %100 = vmatprep.subr.bf16.mxu0 0
  %101 = vmatpush1.bf16.msra.mxu0 %v84
  %102 = vmatprep.subr.bf16.mxu0 0
  %103 = vmatpush1.bf16.msra.mxu0 %v85
  %104 = vmatprep.subr.bf16.mxu0 0
  %105 = vmatpush1.bf16.msra.mxu0 %v86
  %106 = vmatprep.subr.bf16.mxu0 0
  %107 = vmatpush1.bf16.msra.mxu0 %v87
  %108 = vmatprep.subr.bf16.mxu0 0
  %109 = vmatpush1.bf16.msra.mxu0 %v88
  %110 = vmatprep.subr.bf16.mxu0 0
  %111 = vmatpush1.bf16.msra.mxu0 %v89
  %112 = vmatprep.subr.bf16.mxu0 0
  %113 = vmatpush1.bf16.msra.mxu0 %v90
  %114 = vmatprep.subr.bf16.mxu0 0
  %115 = vmatpush1.bf16.msra.mxu0 %v91
  %116 = vmatprep.subr.bf16.mxu0 0
  %117 = vmatpush1.bf16.msra.mxu0 0
  %118 = vmatprep.subr.bf16.mxu0 0
  %119 = vmatpush1.bf16.msra.mxu0 0
  %120 = vmatprep.subr.bf16.mxu0 0
  %121 = vmatpush1.bf16.msra.mxu0 0
  %122 = vmatprep.subr.bf16.mxu0 0
  %123 = vmatpush1.bf16.msra.mxu0 0
  %124 = vmatprep.subr.bf16.mxu0 0
  %125 = vmatpush1.bf16.msra.mxu0 0
  %126 = vmatprep.subr.bf16.mxu0 0
  %127 = vmatpush1.bf16.msra.mxu0 0
  %128 = vmatprep.subr.bf16.mxu0 0
  %129 = vmatpush1.bf16.msra.mxu0 0
  %130 = vmatprep.subr.bf16.mxu0 0
  %131 = vmatpush1.bf16.msra.mxu0 0
  %132 = vmatprep.mubr.bf16.mxu0 0
  %133 = vmatmul.mubr.bf16.gmra.mrb[0].mxu0 %v50
  %v134 = vpop.f32.mrb[0].mxu0
  %v135 = vadd.f32 %v44, %v134
  %v136 = vpop.f32.mrb[0].mxu0
  %v137 = vpop.f32.mrb[0].mxu0
  %v138 = vadd.f32 %v44, %v137
  %v139 = vpop.f32.mrb[0].mxu0
  %140 = vdwg.mxu0
  %v141 = vmax.f32 %v135, 0.0
  %v142 = vmax.f32 %v138, 0.0
  %v143 = vpack.c.bf16 %v142, %v141
  %v144 = vld [vmem:[%s3] sm:$0xf]
  %v145 = vld [vmem:[%s3 + $0x4] sm:$0xf]
  %v146 = vld [vmem:[%s3 + $0x8] sm:$0xf]
  %v147 = vld [vmem:[%s3 + $0xc] sm:$0xf]
  %v148 = vld [vmem:[%s3 + $0x10] sm:$0xf]
  %v149 = vld [vmem:[%s3 + $0x14] sm:$0xf]
  %v150 = vld [vmem:[%s3 + $0x18] sm:$0xf]
  %v151 = vld [vmem:[%s3 + $0x1c] sm:$0xf]
  %v152 = vld [vmem:[%s3 + $0x20] sm:$0xf]
  %v153 = vld [vmem:[%s3 + $0x24] sm:$0xf]
  %v154 = vld [vmem:[%s3 + $0x28] sm:$0xf]
  %v155 = vld [vmem:[%s3 + $0x2c] sm:$0xf]
  %v156 = vld [vmem:[%s3 + $0x30] sm:$0xf]
  %v157 = vld [vmem:[%s3 + $0x34] sm:$0xf]
  %v158 = vld [vmem:[%s3 + $0x38] sm:$0xf]
  %v159 = vld [vmem:[%s3 + $0x3c] sm:$0xf]
  %v160 = vld [vmem:[%s4] sm:$0x1]
  %v162 = vlaneseq
  %v163 = vshrl.u32 %v162, 7
  %v164 = vsub.s32 0, %v163
  %v165 = vrot.slane %v160, %v164
  %v183 = vunpack.c.l.b16 %v144
  %v184 = vunpack.c.l.b16 %v145
  %v185 = vunpack.c.l.b16 %v146
  %v186 = vunpack.c.l.b16 %v147
  %v187 = vunpack.c.l.b16 %v148
  %v188 = vunpack.c.l.b16 %v149
  %v189 = vunpack.c.l.b16 %v150
  %v190 = vunpack.c.l.b16 %v151
  %v191 = vunpack.c.l.b16 %v152
  %v192 = vunpack.c.l.b16 %v153
  %v193 = vunpack.c.l.b16 %v154
  %v194 = vunpack.c.l.b16 %v155
  %v195 = vunpack.c.l.b16 %v156
  %v196 = vunpack.c.l.b16 %v157
  %v197 = vunpack.c.l.b16 %v158
  %v198 = vunpack.c.l.b16 %v159
  %v199 = vpack.c.b16 %v184, %v183
  %v200 = vpack.c.b16 %v186, %v185
  %v201 = vpack.c.b16 %v188, %v187
  %v202 = vpack.c.b16 %v190, %v189
  %v203 = vpack.c.b16 %v192, %v191
  %v204 = vpack.c.b16 %v194, %v193
  %v205 = vpack.c.b16 %v196, %v195
  %v206 = vpack.c.b16 %v198, %v197
  %215 = vmatprep.subr.bf16.mxu0 0
  %216 = vmatpush1.bf16.msra.mxu0 %v199
  %217 = vmatprep.subr.bf16.mxu0 0
  %218 = vmatpush1.bf16.msra.mxu0 %v200
  %219 = vmatprep.subr.bf16.mxu0 0
  %220 = vmatpush1.bf16.msra.mxu0 %v201
  %221 = vmatprep.subr.bf16.mxu0 0
  %222 = vmatpush1.bf16.msra.mxu0 %v202
  %223 = vmatprep.subr.bf16.mxu0 0
  %224 = vmatpush1.bf16.msra.mxu0 %v203
  %225 = vmatprep.subr.bf16.mxu0 0
  %226 = vmatpush1.bf16.msra.mxu0 %v204
  %227 = vmatprep.subr.bf16.mxu0 0
  %228 = vmatpush1.bf16.msra.mxu0 %v205
  %229 = vmatprep.subr.bf16.mxu0 0
  %230 = vmatpush1.bf16.msra.mxu0 %v206
  %231 = vmatprep.subr.bf16.mxu0 0
  %232 = vmatpush1.bf16.msra.mxu0 0
  %233 = vmatprep.subr.bf16.mxu0 0
  %234 = vmatpush1.bf16.msra.mxu0 0
  %235 = vmatprep.subr.bf16.mxu0 0
  %236 = vmatpush1.bf16.msra.mxu0 0
  %237 = vmatprep.subr.bf16.mxu0 0
  %238 = vmatpush1.bf16.msra.mxu0 0
  %239 = vmatprep.subr.bf16.mxu0 0
  %240 = vmatpush1.bf16.msra.mxu0 0
  %241 = vmatprep.subr.bf16.mxu0 0
  %242 = vmatpush1.bf16.msra.mxu0 0
  %243 = vmatprep.subr.bf16.mxu0 0
  %244 = vmatpush1.bf16.msra.mxu0 0
  %245 = vmatprep.subr.bf16.mxu0 0
  %246 = vmatpush1.bf16.msra.mxu0 0
  %247 = vmatprep.mubr.bf16.mxu0 0
  %248 = vmatmul.mubr.bf16.gmra.mrb[0].mxu0 %v143
  %v249 = vpop.f32.mrb[0].mxu0
  %v250 = vadd.f32 %v165, %v249
  %v251 = vpop.f32.mrb[0].mxu0
  %v252 = vpop.f32.mrb[0].mxu0
  %v253 = vadd.f32 %v165, %v252
  %v254 = vpop.f32.mrb[0].mxu0
  %255 = vdwg.mxu0
  %256 = vst [vmem:[%s5] sm:$0xff] %v250
  %257 = vst [vmem:[%s5 + $0x8] sm:$0xff] %v253
  // Predicated region
  $region22: #{forward.29} parent=0 // pred_check
    _
  $region23: #{forward.29} parent=0 // pred_check_branch
    %259 = sbr.rel (0) target = $region25
  $region24: #{forward.29} parent=0 // pred_region
    _
  $region25: #{forward.29} parent=0 // pred_fallthru
    _
  // Predicated region
  $region26: #{forward.29} parent=0 // pred_check
    _
  $region27: #{forward.29} parent=0 // pred_check_branch
    %261 = sbr.rel (0) target = $region29
  $region28: #{forward.29} parent=0 // pred_region
    _
  $region29: #{forward.29} parent=0 // pred_fallthru
    _

// kernel: forward.26
$region0: #{forward.26}
  #allocation0 [shape = 'u32[]', space=smem, size = 0x4, offset = 0x4, fixed_abs, tag = 'smem constant byte address 0x4 - core index']
  #allocation1 [shape = 'u32[144,128]{1,0:T(1,128)}', space=vmem, size = 0x12000, scoped, tag = 'internal scratch']
  #allocation2 [shape = 'f32[2,128]{1,0:T(2,128)}', space=vmem, size = 0x400, scoped, tag = 'scratch operand']
  #allocation3 [shape = 'f32[2,128]{1,0:T(2,128)}', space=vmem, size = 0x400, scoped, tag = 'scratch operand']
  %s0 = inlined_call_operand.vmem [shape: f32[4,2,512], index: 0, kind: input, shape index: {}]
  %s1 = inlined_call_operand.vmem [shape: bf16[128,512], index: 1, kind: input, shape index: {}]
  %s2 = inlined_call_operand.vmem [shape: bf16[4,2,128], index: 2, kind: output, shape index: {}]
  %s3 = sld [smem:[#allocation0]]
  $region45: #{forward.26} parent=0
    _
  %s5 = ssub.s32 1, %s3
  %s6 = scalar_select 0, %s5, %s3
  loop: start=0, step=1, limit=6
  $region2: #{forward.26} parent=0 // loop_pre_header
    _
  $region3: #{forward.26} parent=0 // loop_header
    %s8 = sphi 0, %s12
    %p9 = scmp.ge.s32.totalorder %s8, 6
    %s18 = sphi 0, %s20
    %s21 = sphi 0, %s18
    %s22 = sphi 0, %s21
    %s38 = sphi 0, %s22
    %s42 = sphi 0, %s42
    %s44 = sphi 0, %s42
    %s45 = sphi 0, %s44
    %s59 = sphi 0, %s45
    %s65 = sphi 0, %s67
    %s68 = sphi 0, %s65
    %s69 = sphi 0, %s68
    %s85 = sphi 0, %s69
  $region4: #{forward.26} parent=0 // loop_header_branch
    %11 = sbr.rel (%p9) target = $region8
  $region5: #{forward.26} parent=0 // loop_body
    %s13 = ssub.s32 %s8, 1
    %s14 = ssub.s32 %s8, 2
    %s15 = sadd.s32 %s8, 1
    %s16 = ssub.s32 %s8, %s15
    %p17 = scmp.eq.s32.totalorder %s16, 0
    %s19 = sadd.s32 %s18, 1
    %s20 = scalar_select %p17, %s18, %s19
    %p23 = pneg %p17
    %p24 = scmp.eq.s32.totalorder %s8, 3
    %p25 = por %p23, %p24
    %p26 = scmp.ne.s32.totalorder %s18, %s21
    %p27 = scmp.eq.s32.totalorder %s8, 0
    %p28 = por %p26, %p27
    %p29 = scmp.ne.s32.totalorder %s18, %s21
    %p30 = scmp.eq.s32.totalorder %s13, 3
    %p31 = por %p29, %p30
    %p32 = scmp.ne.s32.totalorder %s21, %s22
    %p33 = scmp.eq.s32.totalorder %s13, 0
    %p34 = por %p32, %p33
    %p35 = scmp.ne.s32.totalorder %s21, %s22
    %p36 = scmp.eq.s32.totalorder %s14, 3
    %p37 = por %p35, %p36
    %p39 = scmp.ne.s32.totalorder %s22, %s38
    %p40 = scmp.eq.s32.totalorder %s14, 0
    %p41 = por %p39, %p40
    %s43 = sadd.s32 %s42, 1
    %p46 = scmp.eq.s32.totalorder %s8, 3
    %p47 = scmp.ne.s32.totalorder %s42, %s44
    %p48 = scmp.eq.s32.totalorder %s8, 0
    %p49 = por %p47, %p48
    %p50 = scmp.ne.s32.totalorder %s42, %s44
    %p51 = scmp.eq.s32.totalorder %s13, 3
    %p52 = por %p50, %p51
    %p53 = scmp.ne.s32.totalorder %s44, %s45
    %p54 = scmp.eq.s32.totalorder %s13, 0
    %p55 = por %p53, %p54
    %p56 = scmp.ne.s32.totalorder %s44, %s45
    %p57 = scmp.eq.s32.totalorder %s14, 3
    %p58 = por %p56, %p57
    %p60 = scmp.ne.s32.totalorder %s45, %s59
    %p61 = scmp.eq.s32.totalorder %s14, 0
    %p62 = por %p60, %p61
    %s63 = ssub.s32 %s8, %s15
    %p64 = scmp.eq.s32.totalorder %s63, 0
    %s66 = sadd.s32 %s65, 1
    %s67 = scalar_select %p64, %s65, %s66
    %p70 = pneg %p64
    %p71 = scmp.eq.s32.totalorder %s8, 3
    %p72 = por %p70, %p71
    %p73 = scmp.ne.s32.totalorder %s65, %s68
    %p74 = scmp.eq.s32.totalorder %s8, 0
    %p75 = por %p73, %p74
    %p76 = scmp.ne.s32.totalorder %s65, %s68
    %p77 = scmp.eq.s32.totalorder %s13, 3
    %p78 = por %p76, %p77
    %p79 = scmp.ne.s32.totalorder %s68, %s69
    %p80 = scmp.eq.s32.totalorder %s13, 0
    %p81 = por %p79, %p80
    %p82 = scmp.ne.s32.totalorder %s68, %s69
    %p83 = scmp.eq.s32.totalorder %s14, 3
    %p84 = por %p82, %p83
    %p86 = scmp.ne.s32.totalorder %s69, %s85
    %p87 = scmp.eq.s32.totalorder %s14, 0
    %p88 = por %p86, %p87
    %p89 = scmp.le.s32.totalorder 1, %s8
    %p90 = scmp.lt.s32.totalorder %s8, 5
    %p91 = pnand %p89, %p90
    %p92 = pneg %p91
    // Predicated region
    $region9: #{forward.26} parent=5 // pred_check
      _
    $region10: #{forward.26} parent=5 // pred_check_branch
      %94 = sbr.rel (%p91) target = $region12
    $region11: #{forward.26} parent=5 // pred_region
      %s95 = ssub.s32 %s8, 1
      // Predicated region
      $region13: #{forward.26} parent=11 // pred_check
        %p96 = pneg %p55
      $region14: #{forward.26} parent=11 // pred_check_branch
        %98 = sbr.rel (%p96) target = $region16
      $region15: #{forward.26} parent=11 // pred_region
        _
      $region16: #{forward.26} parent=11 // pred_fallthru
        _
    $region12: #{forward.26} parent=5 // pred_fallthru
      _
    %p99 = scmp.lt.s32.totalorder %s8, 4
    // Predicated region
    $region17: #{forward.26} parent=5 // pred_check
      %p100 = pneg %p99
    $region18: #{forward.26} parent=5 // pred_check_branch
      %102 = sbr.rel (%p100) target = $region20
    $region19: #{forward.26} parent=5 // pred_region
      // Predicated region
      $region21: #{forward.26} parent=19 // pred_check
        %p103 = pneg %p28
      $region22: #{forward.26} parent=19 // pred_check_branch
        %105 = sbr.rel (%p103) target = $region24
      $region23: #{forward.26} parent=19 // pred_region
        %p106 = scmp.lt.s32.totalorder %s8, 3
        %s107 = scalar_select %p106, %s8, 3
        %s108 = smul.addr %s107, 4
        %s109 = smul.addr %s108, 2
        %s110 = scalar_lea.vmem %s0, %s109
      $region24: #{forward.26} parent=19 // pred_fallthru
        _
    $region20: #{forward.26} parent=5 // pred_fallthru
      _
    %p111 = scmp.le.s32.totalorder 1, %s8
    %p112 = scmp.lt.s32.totalorder %s8, 5
    %p113 = pnand %p111, %p112
    %p114 = pneg %p113
    // Predicated region
    $region25: #{forward.26} parent=5 // pred_check
      _
    $region26: #{forward.26} parent=5 // pred_check_branch
      %116 = sbr.rel (%p113) target = $region28
    $region27: #{forward.26} parent=5 // pred_region
      %s117 = ssub.s32 %s8, 1
      %p118 = scmp.lt.s32.totalorder %s13, 3
      %s119 = scalar_select %p118, %s13, 3
      %s120 = smul.addr %s119, 4
      %s121 = smul.addr %s120, 2
      %s122 = scalar_lea.vmem %s0, %s121
      %p123 = pneg %p34
      %p124 = pneg %p31
      %p125 = pneg %p55
      %p126 = pneg %p52
      %p127 = pneg %p81
      %p128 = pneg %p78
      %p129 = scmp.lt.s32.totalorder %s13, 3
      %s130 = scalar_select %p129, %s13, 3
      %s131 = scalar_lea.vmem %s2, %s130
      %p132 = scmp.lt.s32.totalorder %s13, 3
      %s133 = scalar_select %p132, %s13, 3
      %s134 = smul.addr %s133, 4
      %s135 = smul.addr %s134, 2
      %s136 = scalar_lea.vmem %s0, %s135
      %p137 = scmp.lt.s32.totalorder %s13, 3
      %s138 = scalar_select %p137, %s13, 3
      %s139 = scalar_lea.vmem %s2, %s138
      %p141 = scmp.eq.s32.totalorder %s13, 0
      // Predicated region
      $region29: #{forward.26} parent=27 // pred_check
        %p142 = pneg %p141
      $region30: #{forward.26} parent=27 // pred_check_branch
        %144 = sbr.rel (%p142) target = $region32
      $region31: #{forward.26} parent=27 // pred_region
        %145 = vst [vmem:[#allocation2] sm:$0x3] 0.0
        %146 = vst [vmem:[#allocation3] sm:$0x3] 0.0
      $region32: #{forward.26} parent=27 // pred_fallthru
        _
      %v147 = vld [vmem:[%s136] sm:$0xff]
      %v148 = vld [vmem:[#allocation2] sm:$0x3]
      %v149 = vpack.c.bf16 %v148, %v148
      %v150 = vld [vmem:[%s1] sm:$0xff]
      %v151 = vld [vmem:[%s1 + $0x8] sm:$0xff]
      %v152 = vld [vmem:[%s1 + $0x10] sm:$0xff]
      %v153 = vld [vmem:[%s1 + $0x18] sm:$0xff]
      %v154 = vld [vmem:[%s1 + $0x20] sm:$0xff]
      %v155 = vld [vmem:[%s1 + $0x28] sm:$0xff]
      %v156 = vld [vmem:[%s1 + $0x30] sm:$0xff]
      %v157 = vld [vmem:[%s1 + $0x38] sm:$0xff]
      %v158 = vld [vmem:[%s1 + $0x40] sm:$0xff]
      %v159 = vld [vmem:[%s1 + $0x48] sm:$0xff]
      %v160 = vld [vmem:[%s1 + $0x50] sm:$0xff]
      %v161 = vld [vmem:[%s1 + $0x58] sm:$0xff]
      %v162 = vld [vmem:[%s1 + $0x60] sm:$0xff]
      %v163 = vld [vmem:[%s1 + $0x68] sm:$0xff]
      %v164 = vld [vmem:[%s1 + $0x70] sm:$0xff]
      %v165 = vld [vmem:[%s1 + $0x78] sm:$0xff]
      %v166 = vld [vmem:[%s1 + $0x80] sm:$0xff]
      %v167 = vld [vmem:[%s1 + $0x88] sm:$0xff]
      %v168 = vld [vmem:[%s1 + $0x90] sm:$0xff]
      %v169 = vld [vmem:[%s1 + $0x98] sm:$0xff]
      %v170 = vld [vmem:[%s1 + $0xa0] sm:$0xff]
      %v171 = vld [vmem:[%s1 + $0xa8] sm:$0xff]
      %v172 = vld [vmem:[%s1 + $0xb0] sm:$0xff]
      %v173 = vld [vmem:[%s1 + $0xb8] sm:$0xff]
      %v174 = vld [vmem:[%s1 + $0xc0] sm:$0xff]
      %v175 = vld [vmem:[%s1 + $0xc8] sm:$0xff]
      %v176 = vld [vmem:[%s1 + $0xd0] sm:$0xff]
      %v177 = vld [vmem:[%s1 + $0xd8] sm:$0xff]
      %v178 = vld [vmem:[%s1 + $0xe0] sm:$0xff]
      %v179 = vld [vmem:[%s1 + $0xe8] sm:$0xff]
      %v180 = vld [vmem:[%s1 + $0xf0] sm:$0xff]
      %v181 = vld [vmem:[%s1 + $0xf8] sm:$0xff]
      %v214 = vunpack.c.l.b16 %v150
      %v215 = vunpack.c.h.b16 %v150
      %v216 = vunpack.c.l.b16 %v151
      %v217 = vunpack.c.h.b16 %v151
      %v218 = vunpack.c.l.b16 %v152
      %v219 = vunpack.c.h.b16 %v152
      %v220 = vunpack.c.l.b16 %v153
      %v221 = vunpack.c.h.b16 %v153
      %v222 = vunpack.c.l.b16 %v154
      %v223 = vunpack.c.h.b16 %v154
      %v224 = vunpack.c.l.b16 %v155
      %v225 = vunpack.c.h.b16 %v155
      %v226 = vunpack.c.l.b16 %v156
      %v227 = vunpack.c.h.b16 %v156
      %v228 = vunpack.c.l.b16 %v157
      %v229 = vunpack.c.h.b16 %v157
      %v230 = vunpack.c.l.b16 %v158
      %v231 = vunpack.c.h.b16 %v158
      %v232 = vunpack.c.l.b16 %v159
      %v233 = vunpack.c.h.b16 %v159
      %v234 = vunpack.c.l.b16 %v160
      %v235 = vunpack.c.h.b16 %v160
      %v236 = vunpack.c.l.b16 %v161
      %v237 = vunpack.c.h.b16 %v161
      %v238 = vunpack.c.l.b16 %v162
      %v239 = vunpack.c.h.b16 %v162
      %v240 = vunpack.c.l.b16 %v163
      %v241 = vunpack.c.h.b16 %v163
      %v242 = vunpack.c.l.b16 %v164
      %v243 = vunpack.c.h.b16 %v164
      %v244 = vunpack.c.l.b16 %v165
      %v245 = vunpack.c.h.b16 %v165
      %v246 = vunpack.c.l.b16 %v166
      %v247 = vunpack.c.h.b16 %v166
      %v248 = vunpack.c.l.b16 %v167
      %v249 = vunpack.c.h.b16 %v167
      %v250 = vunpack.c.l.b16 %v168
      %v251 = vunpack.c.h.b16 %v168
      %v252 = vunpack.c.l.b16 %v169
      %v253 = vunpack.c.h.b16 %v169
      %v254 = vunpack.c.l.b16 %v170
      %v255 = vunpack.c.h.b16 %v170
      %v256 = vunpack.c.l.b16 %v171
      %v257 = vunpack.c.h.b16 %v171
      %v258 = vunpack.c.l.b16 %v172
      %v259 = vunpack.c.h.b16 %v172
      %v260 = vunpack.c.l.b16 %v173
      %v261 = vunpack.c.h.b16 %v173
      %v262 = vunpack.c.l.b16 %v174
      %v263 = vunpack.c.h.b16 %v174
      %v264 = vunpack.c.l.b16 %v175
      %v265 = vunpack.c.h.b16 %v175
      %v266 = vunpack.c.l.b16 %v176
      %v267 = vunpack.c.h.b16 %v176
      %v268 = vunpack.c.l.b16 %v177
      %v269 = vunpack.c.h.b16 %v177
      %v270 = vunpack.c.l.b16 %v178
      %v271 = vunpack.c.h.b16 %v178
      %v272 = vunpack.c.l.b16 %v179
      %v273 = vunpack.c.h.b16 %v179
      %v274 = vunpack.c.l.b16 %v180
      %v275 = vunpack.c.h.b16 %v180
      %v276 = vunpack.c.l.b16 %v181
      %v277 = vunpack.c.h.b16 %v181
      %v278 = vpack.c.b16 %v218, %v214
      %v279 = vpack.c.b16 %v219, %v215
      %v280 = vpack.c.b16 %v220, %v216
      %v281 = vpack.c.b16 %v221, %v217
      %v282 = vpack.c.b16 %v226, %v222
      %v283 = vpack.c.b16 %v227, %v223
      %v284 = vpack.c.b16 %v228, %v224
      %v285 = vpack.c.b16 %v229, %v225
      %v286 = vpack.c.b16 %v234, %v230
      %v287 = vpack.c.b16 %v235, %v231
      %v288 = vpack.c.b16 %v236, %v232
      %v289 = vpack.c.b16 %v237, %v233
      %v290 = vpack.c.b16 %v242, %v238
      %v291 = vpack.c.b16 %v243, %v239
      %v292 = vpack.c.b16 %v244, %v240
      %v293 = vpack.c.b16 %v245, %v241
      %v294 = vpack.c.b16 %v250, %v246
      %v295 = vpack.c.b16 %v251, %v247
      %v296 = vpack.c.b16 %v252, %v248
      %v297 = vpack.c.b16 %v253, %v249
      %v298 = vpack.c.b16 %v258, %v254
      %v299 = vpack.c.b16 %v259, %v255
      %v300 = vpack.c.b16 %v260, %v256
      %v301 = vpack.c.b16 %v261, %v257
      %v302 = vpack.c.b16 %v266, %v262
      %v303 = vpack.c.b16 %v267, %v263
      %v304 = vpack.c.b16 %v268, %v264
      %v305 = vpack.c.b16 %v269, %v265
      %v306 = vpack.c.b16 %v274, %v270
      %v307 = vpack.c.b16 %v275, %v271
      %v308 = vpack.c.b16 %v276, %v272
      %v309 = vpack.c.b16 %v277, %v273
      %342 = vmatprep.subr.bf16.mxu0 %v279
      %343 = vmatpush1.bf16.msra.mxu0 %v278
      %344 = vmatprep.subr.bf16.mxu0 %v283
      %345 = vmatpush1.bf16.msra.mxu0 %v282
      %346 = vmatprep.subr.bf16.mxu0 %v287
      %347 = vmatpush1.bf16.msra.mxu0 %v286
      %348 = vmatprep.subr.bf16.mxu0 %v291
      %349 = vmatpush1.bf16.msra.mxu0 %v290
      %350 = vmatprep.subr.bf16.mxu0 %v295
      %351 = vmatpush1.bf16.msra.mxu0 %v294
      %352 = vmatprep.subr.bf16.mxu0 %v299
      %353 = vmatpush1.bf16.msra.mxu0 %v298
      %354 = vmatprep.subr.bf16.mxu0 %v303
      %355 = vmatpush1.bf16.msra.mxu0 %v302
      %356 = vmatprep.subr.bf16.mxu0 %v307
      %357 = vmatpush1.bf16.msra.mxu0 %v306
      %358 = vmatprep.subr.bf16.mxu0 0
      %359 = vmatpush1.bf16.msra.mxu0 0
      %360 = vmatprep.subr.bf16.mxu0 0
      %361 = vmatpush1.bf16.msra.mxu0 0
      %362 = vmatprep.subr.bf16.mxu0 0
      %363 = vmatpush1.bf16.msra.mxu0 0
      %364 = vmatprep.subr.bf16.mxu0 0
      %365 = vmatpush1.bf16.msra.mxu0 0
      %366 = vmatprep.subr.bf16.mxu0 0
      %367 = vmatpush1.bf16.msra.mxu0 0
      %368 = vmatprep.subr.bf16.mxu0 0
      %369 = vmatpush1.bf16.msra.mxu0 0
      %370 = vmatprep.subr.bf16.mxu0 0
      %371 = vmatpush1.bf16.msra.mxu0 0
      %372 = vmatprep.subr.bf16.mxu0 0
      %373 = vmatpush1.bf16.msra.mxu0 0
      %374 = vmatprep.mubr.bf16.mxu0 0
      %375 = vmatmul.mubr.bf16.gmra.mrb[0].mxu0 %v149
      %v376 = vpop.f32.mrb[0].mxu0
      %v377 = vadd.f32 0.0, %v376
      %v378 = vpop.f32.mrb[0].mxu0
      %v379 = vadd.f32 0.0, %v378
      %v380 = vpop.f32.mrb[0].mxu0
      %v381 = vpop.f32.mrb[0].mxu0
      %382 = vdwg.mxu0
      %383 = vmatprep.subr.bf16.mxu0 %v281
      %384 = vmatpush1.bf16.msra.mxu0 %v280
      %385 = vmatprep.subr.bf16.mxu0 %v285
      %386 = vmatpush1.bf16.msra.mxu0 %v284
      %387 = vmatprep.subr.bf16.mxu0 %v289
      %388 = vmatpush1.bf16.msra.mxu0 %v288
      %389 = vmatprep.subr.bf16.mxu0 %v293
      %390 = vmatpush1.bf16.msra.mxu0 %v292
      %391 = vmatprep.subr.bf16.mxu0 %v297
      %392 = vmatpush1.bf16.msra.mxu0 %v296
      %393 = vmatprep.subr.bf16.mxu0 %v301
      %394 = vmatpush1.bf16.msra.mxu0 %v300
      %395 = vmatprep.subr.bf16.mxu0 %v305
      %396 = vmatpush1.bf16.msra.mxu0 %v304
      %397 = vmatprep.subr.bf16.mxu0 %v309
      %398 = vmatpush1.bf16.msra.mxu0 %v308
      %399 = vmatprep.subr.bf16.mxu0 0
      %400 = vmatpush1.bf16.msra.mxu0 0
      %401 = vmatprep.subr.bf16.mxu0 0
      %402 = vmatpush1.bf16.msra.mxu0 0
      %403 = vmatprep.subr.bf16.mxu0 0
      %404 = vmatpush1.bf16.msra.mxu0 0
      %405 = vmatprep.subr.bf16.mxu0 0
      %406 = vmatpush1.bf16.msra.mxu0 0
      %407 = vmatprep.subr.bf16.mxu0 0
      %408 = vmatpush1.bf16.msra.mxu0 0
      %409 = vmatprep.subr.bf16.mxu0 0
      %410 = vmatpush1.bf16.msra.mxu0 0
      %411 = vmatprep.subr.bf16.mxu0 0
      %412 = vmatpush1.bf16.msra.mxu0 0
      %413 = vmatprep.subr.bf16.mxu0 0
      %414 = vmatpush1.bf16.msra.mxu0 0
      %415 = vmatprep.mubr.bf16.mxu0 0
      %416 = vmatmul.mubr.bf16.gmra.mrb[0].mxu0 %v149
      %v417 = vpop.f32.mrb[0].mxu0
      %v418 = vadd.f32 0.0, %v417
      %v419 = vpop.f32.mrb[0].mxu0
      %v420 = vadd.f32 0.0, %v419
      %v421 = vpop.f32.mrb[0].mxu0
      %v422 = vpop.f32.mrb[0].mxu0
      %423 = vdwg.mxu0
      %v428 = vcombine.low %v377, %v379
      %v429 = vcombine.low %v418, %v420
      %v431 = vunpack.c.l.s4 1983009808
      %v432 = vunpack.c.0.s8 %v431
      %v433 = vlaneseq
      %v434 = vshrl.u32 %v433, 7
      %v435 = vsub.s32 %v432, %v434
      %v436 = vrot.slane %v428, %v435
      %v438 = vunpack.c.l.s4 1983009808
      %v439 = vunpack.c.0.s8 %v438
      %v440 = vlaneseq
      %v441 = vshrl.u32 %v440, 7
      %v442 = vsub.s32 %v439, %v441
      %v443 = vrot.slane %v429, %v442
      %v444 = vcombine.low %v436, %v443
      %v446 = vadd.f32 %v147, %v444
      %v447 = vxor.u32 %v446, 2147483648
      %v448 = vmul.f32 %v447, 1.442695
      %v449 = vpow.pop %v448
      %v450 = vadd.f32 %v449, 1.0
      %v451 = vrcp.pop %v450
      %v452 = vmul.f32 1.0, %v451
      %v454 = vrot.slane %v446, 2
      %v456 = vxor.u32 %v454, 2147483648
      %v457 = vmul.f32 %v456, 1.442695
      %v458 = vpow.pop %v457
      %v459 = vadd.f32 %v458, 1.0
      %v460 = vrcp.pop %v459
      %v461 = vmul.f32 1.0, %v460
      %v462 = vrot.slane %v446, 4
      %v464 = vtanh.pop %v462
      %v465 = vrot.slane %v446, 6
      %v467 = vxor.u32 %v465, 2147483648
      %v468 = vmul.f32 %v467, 1.442695
      %v469 = vpow.pop %v468
      %v470 = vadd.f32 %v469, 1.0
      %v471 = vrcp.pop %v470
      %v472 = vmul.f32 1.0, %v471
      %v473 = vld [vmem:[#allocation3] sm:$0x3]
      %v474 = vmul.f32 %v461, %v473
      %v475 = vmul.f32 %v452, %v464
      %v476 = vadd.f32 %v474, %v475
      %v477 = vtanh.pop %v476
      %v478 = vmul.f32 %v472, %v477
      %479 = vst [vmem:[#allocation3] sm:$0x3] %v476
      %480 = vst [vmem:[#allocation2] sm:$0x3] %v478
      %v481 = vpack.c.bf16 %v478, %v478
      %482 = vst [vmem:[%s139] sm:$0x1] %v481
      %p483 = scmp.lt.s32.totalorder %s13, 3
      %s484 = scalar_select %p483, %s13, 3
      %s485 = scalar_lea.vmem %s2, %s484
      // Predicated region
      $region33: #{forward.26} parent=27 // pred_check
        %p486 = pneg %p78
      $region34: #{forward.26} parent=27 // pred_check_branch
        %488 = sbr.rel (%p486) target = $region36
      $region35: #{forward.26} parent=27 // pred_region
        _
      $region36: #{forward.26} parent=27 // pred_fallthru
        _
    $region28: #{forward.26} parent=5 // pred_fallthru
      _
    %p489 = scmp.le.s32.totalorder 2, %s8
    // Predicated region
    $region37: #{forward.26} parent=5 // pred_check
      %p490 = pneg %p489
    $region38: #{forward.26} parent=5 // pred_check_branch
      %492 = sbr.rel (%p490) target = $region40
    $region39: #{forward.26} parent=5 // pred_region
      %s493 = ssub.s32 %s8, 2
      // Predicated region
      $region41: #{forward.26} parent=39 // pred_check
        %p494 = pneg %p84
      $region42: #{forward.26} parent=39 // pred_check_branch
        %496 = sbr.rel (%p494) target = $region44
      $region43: #{forward.26} parent=39 // pred_region
        %p497 = scmp.lt.s32.totalorder %s14, 3
        %s498 = scalar_select %p497, %s14, 3
        %s499 = scalar_lea.vmem %s2, %s498
      $region44: #{forward.26} parent=39 // pred_fallthru
        _
    $region40: #{forward.26} parent=5 // pred_fallthru
      _
  $region6: #{forward.26} parent=0 // loop_footer
    %s12 = sadd.s32 1, %s8
  $region7: #{forward.26} parent=0 // loop_footer_branch
    %7 = sbr.rel target = $region3
  $region8: #{forward.26} parent=0 // loop_exit
    _

</llo_original>
